<compile_context>
chip_gen: v7x
topology: tpu7x:2x2x1
jax: 0.10.0
libtpu: 0.0.40
codegen_flags: <defaults>
</compile_context>

<pallas_src>
import functools

import jax
import jax.numpy as jnp
from jax.experimental import pallas as pl
from jax.experimental.pallas import tpu as pltpu

_BF16 = 2  # bytes per bf16 element


# ----------------------------------------------------------------------------- kernels
def _ffn_kernel_resident(x_ref, w1_ref, b1_ref, w2_ref, b2_ref, o_ref):
    # x_ref : [tm, d_model] bf16     w1_ref: [d_model, dff] bf16 (VMEM-resident)
    # b1_ref: [1, dff]      f32      w2_ref: [dff, d_model] bf16 (VMEM-resident)
    # b2_ref: [1, d_model]  f32      o_ref : [tm, d_model]
    h = jnp.dot(x_ref[...], w1_ref[...], preferred_element_type=jnp.float32)
    h = jnp.maximum(h + b1_ref[...], 0.0)          # ReLU; dropout p=0 -> identity
    y = jnp.dot(h.astype(w2_ref.dtype), w2_ref[...],
                preferred_element_type=jnp.float32)
    o_ref[...] = (y + b2_ref[...]).astype(o_ref.dtype)


def _ffn_kernel_streaming(x_ref, w1_ref, b1_ref, w2_ref, b2_ref, o_ref, acc_ref):
    # grid = (token tiles i, out-column tiles j, dff tiles k); k (reduction axis of
    # the 2nd matmul) is innermost/"arbitrary"; the output block is resident over k.
    k = pl.program_id(2)

    @pl.when(k == 0)
    def _():
        acc_ref[...] = jnp.zeros_like(acc_ref)

    h = jnp.dot(x_ref[...], w1_ref[...], preferred_element_type=jnp.float32)
    h = jnp.maximum(h + b1_ref[...], 0.0)          # ReLU is elementwise over dff
    acc_ref[...] += jnp.dot(h.astype(w2_ref.dtype), w2_ref[...],
                            preferred_element_type=jnp.float32)

    @pl.when(k == pl.num_programs(2) - 1)
    def _():
        o_ref[...] = (acc_ref[...] + b2_ref[...]).astype(o_ref.dtype)


# ----------------------------------------------------------------------------- helpers
def _round_up(v, g):
    return -(-v // g) * g


def _round_down(v, g):
    return (v // g) * g


def _chip_profile():
    """(vmem_capacity_bytes, tensorcores_per_chip, mxu_row_granule, tm_cap)."""
    kind = ""
    try:
        kind = str(jax.devices()[0].device_kind).lower()
    except Exception:
        pass
    is_v7 = "v7" in kind
    is_v5e = ("v5e" in kind) or ("v5 lite" in kind) or ("v5litepod" in kind)
    try:
        vmem_cap = int(pltpu.get_tpu_info().vmem_capacity_bytes)
    except Exception:
        vmem_cap = (64 << 20) if is_v7 else (128 << 20)
    n_cores = 2 if is_v7 else 1                 # v7x has 2 TensorCores, v5e/v6e 1
    granule = 128 if is_v5e else 256            # MXU tile rows: 128 (v5e) / 256 (v6e/v7x)
    tm_cap = 512 if is_v7 else 1024             # 64 MiB VMEM/TC on v7x vs 128 MiB
    return vmem_cap, n_cores, granule, tm_cap


@functools.lru_cache(maxsize=1)
def _single_buffer_supported():
    """One-time probe: does pipeline_mode=pl.Buffered(1) (single-buffered
    grid-invariant operands) compile and produce correct results here?"""
    def _probe(a_ref, c_ref, o_ref):
        o_ref[...] = a_ref[...] + c_ref[...]

    try:
        fn = pl.pallas_call(
            _probe,
            out_shape=jax.ShapeDtypeStruct((16, 128), jnp.float32),
            grid=(2,),
            in_specs=[pl.BlockSpec((8, 128), lambda i: (i, 0)),
                      pl.BlockSpec((8, 128), lambda i: (0, 0),
                                   pipeline_mode=pl.Buffered(1))],
            out_specs=pl.BlockSpec((8, 128), lambda i: (i, 0)),
        )
        out = fn(jnp.ones((16, 128), jnp.float32), jnp.ones((8, 128), jnp.float32))
        return bool(jnp.allclose(jax.block_until_ready(out), 2.0))
    except Exception:
        # Broad catch is OK here: this is a tiny capability probe, it cannot mask a
        # genuine VMEM OOM / numerical failure of the real kernel.
        return False


def _resident_plan(M, d_model, dff, out_itemsize, budget, granule, tm_cap,
                   n_cores, w_buf):
    """Token tile for the resident-weight path, or None if it cannot fit VMEM."""
    fixed = w_buf * 2 * d_model * dff * _BF16            # W1 + W2 (bf16)
    fixed += 2 * (dff + d_model) * 4                      # biases (worst-case 2 bufs)
    per_row = (2 * d_model * _BF16                        # x tile, double-buffered
               + 2 * d_model * out_itemsize               # out tile, double-buffered
               + dff * (4 + _BF16))                       # f32 h + its bf16 cast copy
    tm_fit = (budget - fixed) // per_row
    if tm_fit < min(M, 16):
        return None
    if M <= granule:
        return M if tm_fit >= M else None                 # full-dim block
    if tm_fit < granule:
        return None
    tm = max(granule, _round_down(min(tm_fit, tm_cap, M), granule))
    if n_cores >= 2 and M >= 2 * n_cores * granule:
        # >= 2 token tiles per TensorCore so DMA overlaps compute on each core.
        tm = min(tm, max(granule, _round_down(M // (2 * n_cores), granule)))
    return tm


def _streaming_fits(tm, tn, tk, d_model, out_itemsize, budget):
    b = (2 * tm * d_model * _BF16        # x tile (double-buffered)
         + 2 * tm * tn * out_itemsize    # out tile (double-buffered)
         + tm * tn * 4                   # f32 accumulator scratch
         + 2 * d_model * tk * _BF16      # W1 chunk
         + 2 * tk * 4                    # b1 chunk
         + 2 * tk * tn * _BF16           # W2 chunk
         + 2 * tn * 4                    # b2 chunk
         + tm * tk * (4 + _BF16))        # f32 h chunk + bf16 cast copy
    return b <= budget


def _streaming_plan(M, d_model, dff, out_itemsize, budget, granule, tm_cap,
                    tm_req=None, tn_req=None, tk_req=None):
    """(tm, tn, tk) for the streaming path. Prefers tn = d_model (no recompute of
    the first matmul) and the largest tm / tk that fit the VMEM budget."""
    dff_128 = _round_up(max(dff, 1), 128)

    if tn_req is not None:
        tn_cands = [d_model if tn_req >= d_model else _round_up(tn_req, 128)]
    else:
        tn_cands = [d_model] + [t for t in (2048, 1024, 512, 256) if t < d_model]

    if tm_req is not None:
        t = min(tm_req, M)
        tm_cands = [t if t >= M else max(8, _round_down(t, 8))]
    elif M <= granule:
        tm_cands = [M]
    else:
        cap_m = max(granule, _round_down(M, granule))
        tm_cands = sorted({min(t, tm_cap, cap_m) for t in (1024, 512, 256, granule)
                           if t <= tm_cap}, reverse=True)

    if tk_req is not None:
        tk_cands = [min(_round_up(tk_req, 128), dff_128)]
    else:
        tk_cands = [dff_128] + [t for t in (2048, 1024, 512, 256, 128) if t < dff_128]

    for tn in tn_cands:
        for tm in tm_cands:
            for tk in tk_cands:
                if _streaming_fits(tm, tn, tk, d_model, out_itemsize, budget):
                    return tm, tn, tk
    # Last resort (extreme shapes): smallest candidates; the compiler may spill.
    return tm_cands[-1], tn_cands[-1], tk_cands[-1]


# ----------------------------------------------------------------------------- wrapper
def feed_forward_network(x, w1, b1, w2, b2, *, out_dtype=None,
                         compute_dtype=jnp.bfloat16, force_streaming=False,
                         tm=None, tn=None, tk=None):
    """x: [..., d_model]; w1: [d_model, dff]; b1: [dff]; w2: [dff, d_model]; b2: [d_model].
    tm/tn/tk are optional streaming-path tile overrides (testing only)."""
    orig_shape = x.shape
    d_model = x.shape[-1]
    dff = w1.shape[1]
    M = 1
    for s in orig_shape[:-1]:
        M *= int(s)
    out_dtype = x.dtype if out_dtype is None else jnp.dtype(out_dtype)
    out_itemsize = jnp.dtype(out_dtype).itemsize

    # bf16 activations/weights (native MXU path, halves weight DMA), f32 biases.
    xc = x.reshape(M, d_model).astype(compute_dtype)
    w1c = w1.astype(compute_dtype)
    w2c = w2.astype(compute_dtype)
    b1r = b1.reshape(1, dff).astype(jnp.float32)
    b2r = b2.reshape(1, d_model).astype(jnp.float32)

    vmem_cap, n_cores, granule, tm_cap = _chip_profile()
    vmem_limit = vmem_cap * 3 // 4            # scoped VMEM limit we request
    budget = int(vmem_limit * 0.85)           # what our buffers may actually consume

    single_buf = _single_buffer_supported()
    w_buf = 1 if single_buf else 2

    flops = 4 * M * d_model * dff             # two matmuls, 2 flops per MAC
    io_bytes = int(xc.size * _BF16 + (w1c.size + w2c.size) * _BF16
                   + (b1r.size + b2r.size) * 4 + M * d_model * out_itemsize)

    use_resident = (not force_streaming) and tm is None and tn is None and tk is None
    tm_res = None
    if use_resident:
        tm_res = _resident_plan(M, d_model, dff, out_itemsize, budget, granule,
                                tm_cap, n_cores, w_buf)

    if tm_res is not None:
        # ---- resident-weight fast path: weights stay in VMEM across token tiles.
        def build(const_kwargs):
            return pl.pallas_call(
                _ffn_kernel_resident,
                out_shape=jax.ShapeDtypeStruct((M, d_model), out_dtype),
                grid_spec=pltpu.PrefetchScalarGridSpec(
                    num_scalar_prefetch=0,
                    grid=(pl.cdiv(M, tm_res),),
                    in_specs=[
                        pl.BlockSpec((tm_res, d_model), lambda i: (i, 0)),          # x
                        pl.BlockSpec((d_model, dff), lambda i: (0, 0), **const_kwargs),  # W1
                        pl.BlockSpec((1, dff), lambda i: (0, 0), **const_kwargs),        # b1
                        pl.BlockSpec((dff, d_model), lambda i: (0, 0), **const_kwargs),  # W2
                        pl.BlockSpec((1, d_model), lambda i: (0, 0), **const_kwargs),    # b2
                    ],
                    out_specs=pl.BlockSpec((tm_res, d_model), lambda i: (i, 0)),
                ),
                compiler_params=pltpu.CompilerParams(
                    dimension_semantics=("parallel",),
                    vmem_limit_bytes=vmem_limit,
                ),
                cost_estimate=pl.CostEstimate(flops=int(flops), transcendentals=0,
                                              bytes_accessed=io_bytes),
            )

        if single_buf:
            try:
                out2d = build({"pipeline_mode": pl.Buffered(1)})(xc, w1c, b1r, w2c, b2r)
            except (pltpu.LoweringException, NotImplementedError):
                # Only the "Buffered(1) rejected in this context" case is retried;
                # genuine failures (e.g. VMEM OOM) surface to the caller.
                out2d = build({})(xc, w1c, b1r, w2c, b2r)
        else:
            out2d = build({})(xc, w1c, b1r, w2c, b2r)
        return out2d.reshape(orig_shape)

    # ---- streaming path: weights don't fit; tile dff (and d_model when needed). ----
    tm_s, tn_s, tk_s = _streaming_plan(M, d_model, dff, out_itemsize, budget,
                                       granule, tm_cap, tm, tn, tk)

    dff_p = _round_up(dff, tk_s)
    dm_p = _round_up(d_model, tn_s) if tn_s < d_model else d_model
    if dff_p != dff:
        # Zero-pad the reduction dim so the grid divides exactly; zero columns of
        # W1 / zero b1 give h=0 after ReLU and zero W2 rows contribute nothing.
        w1c = jnp.pad(w1c, ((0, 0), (0, dff_p - dff)))
        b1r = jnp.pad(b1r, ((0, 0), (0, dff_p - dff)))
        w2c = jnp.pad(w2c, ((0, dff_p - dff), (0, 0)))
    if dm_p != d_model:
        w2c = jnp.pad(w2c, ((0, 0), (0, dm_p - d_model)))
        b2r = jnp.pad(b2r, ((0, 0), (0, dm_p - d_model)))

    n_i = pl.cdiv(M, tm_s)
    n_j = dm_p // tn_s
    n_k = dff_p // tk_s

    flops_stream = int(2 * M * d_model * dff_p * n_j + 2 * M * dff_p * dm_p)
    io_stream = int(xc.size * _BF16 + M * dm_p * out_itemsize
                    + n_i * n_j * (w1c.size * _BF16 + b1r.size * 4)
                    + n_i * (w2c.size * _BF16 + b2r.size * 4))

    out2d = pl.pallas_call(
        _ffn_kernel_streaming,
        out_shape=jax.ShapeDtypeStruct((M, dm_p), out_dtype),
        grid_spec=pltpu.PrefetchScalarGridSpec(
            num_scalar_prefetch=0,
            grid=(n_i, n_j, n_k),
            in_specs=[
                pl.BlockSpec((tm_s, d_model), lambda i, j, k: (i, 0)),   # x tile
                pl.BlockSpec((d_model, tk_s), lambda i, j, k: (0, k)),   # W1 chunk
                pl.BlockSpec((1, tk_s), lambda i, j, k: (0, k)),         # b1 chunk
                pl.BlockSpec((tk_s, tn_s), lambda i, j, k: (k, j)),      # W2 chunk
                pl.BlockSpec((1, tn_s), lambda i, j, k: (0, j)),         # b2 chunk
            ],
            out_specs=pl.BlockSpec((tm_s, tn_s), lambda i, j, k: (i, j)),
            scratch_shapes=[pltpu.VMEM((tm_s, tn_s), jnp.float32)],
        ),
        compiler_params=pltpu.CompilerParams(
            dimension_semantics=("parallel", "parallel", "arbitrary"),
            vmem_limit_bytes=vmem_limit,
        ),
        cost_estimate=pl.CostEstimate(flops=flops_stream, transcendentals=0,
                                      bytes_accessed=io_stream),
    )(xc, w1c, b1r, w2c, b2r)

    if dm_p != d_model:
        out2d = out2d[:, :d_model]
    return out2d.reshape(orig_shape)


def init_params(key, d_model, dff, dtype=jnp.float32):
    """Deterministic init mimicking nn.Linear's U(-1/sqrt(fan_in), 1/sqrt(fan_in))."""
    k1, k2, k3, k4 = jax.random.split(key, 4)
    lim1 = 1.0 / (d_model ** 0.5)
    lim2 = 1.0 / (dff ** 0.5)
    # Stored already transposed relative to PyTorch's (out_features, in_features).
    w1 = jax.random.uniform(k1, (d_model, dff), dtype, -lim1, lim1)
    b1 = jax.random.uniform(k2, (dff,), dtype, -lim1, lim1)
    w2 = jax.random.uniform(k3, (dff, d_model), dtype, -lim2, lim2)
    b2 = jax.random.uniform(k4, (d_model,), dtype, -lim2, lim2)
    return w1, b1, w2, b2


if __name__ == "__main__":
    d_model, dff = 512, 2048
    B, S = 2, 8

    key = jax.random.PRNGKey(0)
    kx, kp = jax.random.split(key)
    x = jax.random.normal(kx, (B, S, d_model), jnp.float32)
    w1, b1, w2, b2 = init_params(kp, d_model, dff)

    # Reference computed with the same bf16-inputs / f32-accumulate recipe.
    # TODO(synk): dropout with p>0 (PRNG masking) is not implemented; the module
    # fixes dropout=0 so it is the identity here.
    xb, w1b, w2b = (t.astype(jnp.bfloat16) for t in (x, w1, w2))
    h_ref = jnp.maximum(
        jnp.dot(xb, w1b, preferred_element_type=jnp.float32) + b1, 0.0)
    ref = jnp.dot(h_ref.astype(jnp.bfloat16), w2b,
                  preferred_element_type=jnp.float32) + b2

    # Resident-weight fast path (what these sizes select automatically).
    out = feed_forward_network(x, w1, b1, w2, b2)
    out = jax.block_until_ready(out)
    assert out.shape == (B, S, d_model)
    assert out.dtype == x.dtype
    assert jnp.allclose(out, ref, atol=2e-2, rtol=2e-2), "resident-path mismatch"

    # Also exercise the streaming path (j and k tile axes + f32 accumulator), which
    # is selected automatically when weights can't stay resident (e.g. on v7x).
    out_s = feed_forward_network(x, w1, b1, w2, b2, force_streaming=True,
                                 tn=256, tk=512)
    out_s = jax.block_until_ready(out_s)
    assert jnp.allclose(out_s, ref, atol=2e-2, rtol=2e-2), "streaming-path mismatch"

    print("KERNEL_OK")
</pallas_src>

<mosaic_0001>
module attributes {stable_mosaic.version = 11 : i64} {
  func.func @_probe(%arg0: i32, %arg1: memref<8x128xf32, #tpu.memory_space<vmem>>, %arg2: memref<8x128xf32, #tpu.memory_space<vmem>>, %arg3: memref<8x128xf32, #tpu.memory_space<vmem>>) attributes {dimension_semantics = [#tpu.dimension_semantics<arbitrary>], iteration_bounds = array<i64: 2>, scalar_prefetch = 0 : i64, scratch_operands = 0 : i64, tpu.core_type = #tpu.core_type<tc>, window_params = [{transform_indices = @transform_0, window_bounds = array<i64: 8, 128>}, {pipeline_mode = #tpu.pipeline_mode<synchronous>, transform_indices = @transform_1, window_bounds = array<i64: 8, 128>}, {transform_indices = @transform_2, window_bounds = array<i64: 8, 128>}]} {
    %c0 = arith.constant 0 : index
    %c0_0 = arith.constant 0 : index
    %0 = vector.load %arg1[%c0, %c0_0] : memref<8x128xf32, #tpu.memory_space<vmem>>, vector<8x128xf32>
    %c0_1 = arith.constant 0 : index
    %c0_2 = arith.constant 0 : index
    %1 = vector.load %arg2[%c0_1, %c0_2] : memref<8x128xf32, #tpu.memory_space<vmem>>, vector<8x128xf32>
    %2 = arith.addf %0, %1 : vector<8x128xf32>
    %c0_3 = arith.constant 0 : index
    %c0_4 = arith.constant 0 : index
    %3 = vector.load %arg3[%c0_3, %c0_4] : memref<8x128xf32, #tpu.memory_space<vmem>>, vector<8x128xf32>
    tpu.vector_store %arg3[%c0_3, %c0_4], %2 {strides = array<i32>} : memref<8x128xf32, #tpu.memory_space<vmem>>, vector<8x128xf32>,
    return
  }
  func.func @transform_0(%arg0: i32) -> (i32, i32) {
    %c0_i32 = arith.constant 0 : i32
    %c0_i32_0 = arith.constant 0 : i32
    return %arg0, %c0_i32 : i32, i32
  }
  func.func @transform_1(%arg0: i32) -> (i32, i32) {
    %c0_i32 = arith.constant 0 : i32
    %c0_i32_0 = arith.constant 0 : i32
    %c0_i32_1 = arith.constant 0 : i32
    return %c0_i32, %c0_i32_0 : i32, i32
  }
  func.func @transform_2(%arg0: i32) -> (i32, i32) {
    %c0_i32 = arith.constant 0 : i32
    %c0_i32_0 = arith.constant 0 : i32
    return %arg0, %c0_i32 : i32, i32
  }
}

module attributes {stable_mosaic.version = 11 : i64} {
  func.func @_ffn_kernel_resident(%arg0: i32, %arg1: memref<16x512xbf16, #tpu.memory_space<vmem>>, %arg2: memref<512x2048xbf16, #tpu.memory_space<vmem>>, %arg3: memref<1x2048xf32, #tpu.memory_space<vmem>>, %arg4: memref<2048x512xbf16, #tpu.memory_space<vmem>>, %arg5: memref<1x512xf32, #tpu.memory_space<vmem>>, %arg6: memref<16x512xf32, #tpu.memory_space<vmem>>) attributes {dimension_semantics = [#tpu.dimension_semantics<parallel>], iteration_bounds = array<i64: 1>, scalar_prefetch = 0 : i64, scratch_operands = 0 : i64, tpu.core_type = #tpu.core_type<tc>, window_params = [{transform_indices = @transform_0, window_bounds = array<i64: 16, 512>}, {pipeline_mode = #tpu.pipeline_mode<synchronous>, transform_indices = @transform_1, window_bounds = array<i64: 512, 2048>}, {pipeline_mode = #tpu.pipeline_mode<synchronous>, transform_indices = @transform_2, window_bounds = array<i64: 1, 2048>}, {pipeline_mode = #tpu.pipeline_mode<synchronous>, transform_indices = @transform_3, window_bounds = array<i64: 2048, 512>}, {pipeline_mode = #tpu.pipeline_mode<synchronous>, transform_indices = @transform_4, window_bounds = array<i64: 1, 512>}, {transform_indices = @transform_5, window_bounds = array<i64: 16, 512>}]} {
    %c0 = arith.constant 0 : index
    %c0_0 = arith.constant 0 : index
    %0 = vector.load %arg1[%c0, %c0_0] : memref<16x512xbf16, #tpu.memory_space<vmem>>, vector<16x512xbf16>
    %c0_1 = arith.constant 0 : index
    %c0_2 = arith.constant 0 : index
    %1 = vector.load %arg2[%c0_1, %c0_2] : memref<512x2048xbf16, #tpu.memory_space<vmem>>, vector<512x2048xbf16>
    %cst = arith.constant dense<0.000000e+00> : vector<16x2048xf32>
    %2 = tpu.matmul %0, %1, %cst {dimension_numbers = #tpu.dot_dimension_numbers<[1], [0], [0], [1], [0, 0, 1, 1], [], []>} : vector<16x512xbf16>, vector<512x2048xbf16>, vector<16x2048xf32> -> vector<16x2048xf32>
    %c0_3 = arith.constant 0 : index
    %c0_4 = arith.constant 0 : index
    %3 = vector.load %arg3[%c0_3, %c0_4] : memref<1x2048xf32, #tpu.memory_space<vmem>>, vector<1x2048xf32>
    %4 = vector.broadcast %3 : vector<1x2048xf32> to vector<16x2048xf32>
    %5 = arith.addf %2, %4 : vector<16x2048xf32>
    %cst_5 = arith.constant 0.000000e+00 : f32
    %6 = vector.broadcast %cst_5 : f32 to vector<16x2048xf32>
    %7 = arith.maximumf %5, %6 : vector<16x2048xf32>
    %8 = arith.truncf %7 : vector<16x2048xf32> to vector<16x2048xbf16>
    %c0_6 = arith.constant 0 : index
    %c0_7 = arith.constant 0 : index
    %9 = vector.load %arg4[%c0_6, %c0_7] : memref<2048x512xbf16, #tpu.memory_space<vmem>>, vector<2048x512xbf16>
    %cst_8 = arith.constant dense<0.000000e+00> : vector<16x512xf32>
    %10 = tpu.matmul %8, %9, %cst_8 {dimension_numbers = #tpu.dot_dimension_numbers<[1], [0], [0], [1], [0, 0, 1, 1], [], []>} : vector<16x2048xbf16>, vector<2048x512xbf16>, vector<16x512xf32> -> vector<16x512xf32>
    %c0_9 = arith.constant 0 : index
    %c0_10 = arith.constant 0 : index
    %11 = vector.load %arg5[%c0_9, %c0_10] : memref<1x512xf32, #tpu.memory_space<vmem>>, vector<1x512xf32>
    %12 = vector.broadcast %11 : vector<1x512xf32> to vector<16x512xf32>
    %13 = arith.addf %10, %12 : vector<16x512xf32>
    %c0_11 = arith.constant 0 : index
    %c0_12 = arith.constant 0 : index
    %14 = vector.load %arg6[%c0_11, %c0_12] : memref<16x512xf32, #tpu.memory_space<vmem>>, vector<16x512xf32>
    tpu.vector_store %arg6[%c0_11, %c0_12], %13 {strides = array<i32>} : memref<16x512xf32, #tpu.memory_space<vmem>>, vector<16x512xf32>,
    return
  }
  func.func @transform_0(%arg0: i32) -> (i32, i32) {
    %c0_i32 = arith.constant 0 : i32
    %c0_i32_0 = arith.constant 0 : i32
    return %arg0, %c0_i32 : i32, i32
  }
  func.func @transform_1(%arg0: i32) -> (i32, i32) {
    %c0_i32 = arith.constant 0 : i32
    %c0_i32_0 = arith.constant 0 : i32
    %c0_i32_1 = arith.constant 0 : i32
    return %c0_i32, %c0_i32_0 : i32, i32
  }
  func.func @transform_2(%arg0: i32) -> (i32, i32) {
    %c0_i32 = arith.constant 0 : i32
    %c0_i32_0 = arith.constant 0 : i32
    %c0_i32_1 = arith.constant 0 : i32
    return %c0_i32, %c0_i32_0 : i32, i32
  }
  func.func @transform_3(%arg0: i32) -> (i32, i32) {
    %c0_i32 = arith.constant 0 : i32
    %c0_i32_0 = arith.constant 0 : i32
    %c0_i32_1 = arith.constant 0 : i32
    return %c0_i32, %c0_i32_0 : i32, i32
  }
  func.func @transform_4(%arg0: i32) -> (i32, i32) {
    %c0_i32 = arith.constant 0 : i32
    %c0_i32_0 = arith.constant 0 : i32
    %c0_i32_1 = arith.constant 0 : i32
    return %c0_i32, %c0_i32_0 : i32, i32
  }
  func.func @transform_5(%arg0: i32) -> (i32, i32) {
    %c0_i32 = arith.constant 0 : i32
    %c0_i32_0 = arith.constant 0 : i32
    return %arg0, %c0_i32 : i32, i32
  }
}

</mosaic_0001>

<llo_original>
// kernel: tpu_custom_call.1
$region0: #{tpu_custom_call.1}
  #allocation0 [shape = 'u32[]', space=smem, size = 0x4, offset = 0x4, fixed_abs, tag = 'smem constant byte address 0x4 - core index']
  #allocation1 [shape = 'u32[144,128]{1,0:T(1,128)}', space=vmem, size = 0x12000, scoped, tag = 'internal scratch']
  %s0 = inlined_call_operand.hbm [shape: f32[16,128], index: 0, kind: input, shape index: {}]
  %s1 = inlined_call_operand.hbm [shape: f32[8,128], index: 1, kind: input, shape index: {}]
  %s2 = inlined_call_operand.hbm [shape: f32[16,128], index: 2, kind: output, shape index: {}]
  %s3 = sld [smem:[#allocation0]]
  $region49: #{tpu_custom_call.1} parent=0
    _
  %s5 = ssub.s32 1, %s3
  %s6 = scalar_select 0, %s5, %s3
  $region1: #{tpu_custom_call.1} parent=0
    #allocation2 [shape = 'u8[8192]{0}', space=vmem, size = 0x2000, scoped, tag = 'input window, operand 0']
    #allocation3 [shape = 's32[2]{0}', space=sflag, size = 0x8, scoped, tag = 'scoped memory for tpu_custom_call.1']
    #allocation4 [shape = 's32[2]{0}', space=sflag, size = 0x8, scoped, tag = 'scoped memory for tpu_custom_call.1']
    #allocation5 [shape = 'u8[4096]{0}', space=vmem, size = 0x1000, scoped, tag = 'input window, operand 1, single buffered']
    #allocation6 [shape = 's32[1]{0}', space=sflag, size = 0x4, scoped, tag = 'scoped memory for tpu_custom_call.1']
    #allocation7 [shape = 'u8[8192]{0}', space=vmem, size = 0x2000, scoped, tag = 'output window, operand 0']
    %7 = vsyncpa [#allocation3], 0
    %s8 = scalar_lea.sflag [#allocation3], 1
    %9 = vsyncpa %s8, 0
    %10 = vsyncpa [#allocation6], 0
    %11 = vsyncpa [#allocation4], 0
    %s12 = scalar_lea.sflag [#allocation4], 1
    %13 = vsyncpa %s12, 0
    loop: start=0, step=1, limit=4
    $region2: #{tpu_custom_call.1} parent=1 // loop_pre_header
      _
    $region3: #{tpu_custom_call.1} parent=1 // loop_header
      %s15 = sphi 0, %s19
      %p16 = scmp.ge.s32.totalorder %s15, 4
      %s25 = sphi 0, %s27
      %s28 = sphi 0, %s25
      %s29 = sphi 0, %s28
      %s45 = sphi 0, %s29
      %s49 = sphi 0, %s49
      %s51 = sphi 0, %s49
      %s52 = sphi 0, %s51
      %s66 = sphi 0, %s52
      %s72 = sphi 0, %s74
      %s75 = sphi 0, %s72
      %s76 = sphi 0, %s75
      %s92 = sphi 0, %s76
    $region4: #{tpu_custom_call.1} parent=1 // loop_header_branch
      %18 = sbr.rel (%p16) target = $region8
    $region5: #{tpu_custom_call.1} parent=1 // loop_body
      %s20 = ssub.s32 %s15, 1
      %s21 = ssub.s32 %s15, 2
      %s22 = sadd.s32 %s15, 1
      %s23 = ssub.s32 %s15, %s22
      %p24 = scmp.eq.s32.totalorder %s23, 0
      %s26 = sadd.s32 %s25, 1
      %s27 = scalar_select %p24, %s25, %s26
      %p30 = pneg %p24
      %p31 = scmp.eq.s32.totalorder %s15, 1
      %p32 = por %p30, %p31
      %p33 = scmp.ne.s32.totalorder %s25, %s28
      %p34 = scmp.eq.s32.totalorder %s15, 0
      %p35 = por %p33, %p34
      %p36 = scmp.ne.s32.totalorder %s25, %s28
      %p37 = scmp.eq.s32.totalorder %s20, 1
      %p38 = por %p36, %p37
      %p39 = scmp.ne.s32.totalorder %s28, %s29
      %p40 = scmp.eq.s32.totalorder %s20, 0
      %p41 = por %p39, %p40
      %p42 = scmp.ne.s32.totalorder %s28, %s29
      %p43 = scmp.eq.s32.totalorder %s21, 1
      %p44 = por %p42, %p43
      %p46 = scmp.ne.s32.totalorder %s29, %s45
      %p47 = scmp.eq.s32.totalorder %s21, 0
      %p48 = por %p46, %p47
      %s50 = sadd.s32 %s49, 1
      %p53 = scmp.eq.s32.totalorder %s15, 1
      %p54 = scmp.ne.s32.totalorder %s49, %s51
      %p55 = scmp.eq.s32.totalorder %s15, 0
      %p56 = por %p54, %p55
      %p57 = scmp.ne.s32.totalorder %s49, %s51
      %p58 = scmp.eq.s32.totalorder %s20, 1
      %p59 = por %p57, %p58
      %p60 = scmp.ne.s32.totalorder %s51, %s52
      %p61 = scmp.eq.s32.totalorder %s20, 0
      %p62 = por %p60, %p61
      %p63 = scmp.ne.s32.totalorder %s51, %s52
      %p64 = scmp.eq.s32.totalorder %s21, 1
      %p65 = por %p63, %p64
      %p67 = scmp.ne.s32.totalorder %s52, %s66
      %p68 = scmp.eq.s32.totalorder %s21, 0
      %p69 = por %p67, %p68
      %s70 = ssub.s32 %s15, %s22
      %p71 = scmp.eq.s32.totalorder %s70, 0
      %s73 = sadd.s32 %s72, 1
      %s74 = scalar_select %p71, %s72, %s73
      %p77 = pneg %p71
      %p78 = scmp.eq.s32.totalorder %s15, 1
      %p79 = por %p77, %p78
      %p80 = scmp.ne.s32.totalorder %s72, %s75
      %p81 = scmp.eq.s32.totalorder %s15, 0
      %p82 = por %p80, %p81
      %p83 = scmp.ne.s32.totalorder %s72, %s75
      %p84 = scmp.eq.s32.totalorder %s20, 1
      %p85 = por %p83, %p84
      %p86 = scmp.ne.s32.totalorder %s75, %s76
      %p87 = scmp.eq.s32.totalorder %s20, 0
      %p88 = por %p86, %p87
      %p89 = scmp.ne.s32.totalorder %s75, %s76
      %p90 = scmp.eq.s32.totalorder %s21, 1
      %p91 = por %p89, %p90
      %p93 = scmp.ne.s32.totalorder %s76, %s92
      %p94 = scmp.eq.s32.totalorder %s21, 0
      %p95 = por %p93, %p94
      %p96 = scmp.le.s32.totalorder 1, %s15
      %p97 = scmp.lt.s32.totalorder %s15, 3
      %p98 = pnand %p96, %p97
      %p99 = pneg %p98
      // Predicated region
      $region9: #{tpu_custom_call.1} parent=5 // pred_check
        _
      $region10: #{tpu_custom_call.1} parent=5 // pred_check_branch
        %101 = sbr.rel (%p98) target = $region12
      $region11: #{tpu_custom_call.1} parent=5 // pred_region
        %s102 = ssub.s32 %s15, 1
        // Predicated region
        $region13: #{tpu_custom_call.1} parent=11 // pred_check
          %p103 = pneg %p62
        $region14: #{tpu_custom_call.1} parent=11 // pred_check_branch
          %105 = sbr.rel (%p103) target = $region16
        $region15: #{tpu_custom_call.1} parent=11 // pred_region
          %s107 = ssub.s32 128, 128
          %108 = vsyncadd [#allocation6], %s107
          %s110 = sshll.u32 [#allocation5], 4
          %s111 = int_to_ptr.vmem [resolvable:$true] %s110
          %113 = dma.hbm_to_vmem [thread:$0]  %s1, 128, %s111, [#allocation6]
        $region16: #{tpu_custom_call.1} parent=11 // pred_fallthru
          _
      $region12: #{tpu_custom_call.1} parent=5 // pred_fallthru
        _
      %p114 = scmp.lt.s32.totalorder %s15, 2
      // Predicated region
      $region17: #{tpu_custom_call.1} parent=5 // pred_check
        %p115 = pneg %p114
      $region18: #{tpu_custom_call.1} parent=5 // pred_check_branch
        %117 = sbr.rel (%p115) target = $region20
      $region19: #{tpu_custom_call.1} parent=5 // pred_region
        // Predicated region
        $region21: #{tpu_custom_call.1} parent=19 // pred_check
          %p118 = pneg %p35
        $region22: #{tpu_custom_call.1} parent=19 // pred_check_branch
          %120 = sbr.rel (%p118) target = $region24
        $region23: #{tpu_custom_call.1} parent=19 // pred_region
          %s121 = sand.u32 %s25, 1
          %s122 = scalar_lea.sflag [#allocation3], %s121
          %s123 = sand.u32 %s25, 1
          %s124 = smul.addr %s123, 8
          %s125 = scalar_lea.vmem [#allocation2], %s124
          %s127 = ssub.s32 128, 128
          %128 = vsyncadd %s122, %s127
          %s129 = smul.addr %s15, 128
          %s130 = scalar_lea.hbm %s0, %s129
          %s132 = sshll.u32 %s125, 4
          %s133 = int_to_ptr.vmem [resolvable:$true] %s132
          %135 = dma.hbm_to_vmem [thread:$0]  %s130, 128, %s133, %s122
        $region24: #{tpu_custom_call.1} parent=19 // pred_fallthru
          _
      $region20: #{tpu_custom_call.1} parent=5 // pred_fallthru
        _
      %p136 = scmp.le.s32.totalorder 1, %s15
      %p137 = scmp.lt.s32.totalorder %s15, 3
      %p138 = pnand %p136, %p137
      %p139 = pneg %p138
      // Predicated region
      $region25: #{tpu_custom_call.1} parent=5 // pred_check
        _
      $region26: #{tpu_custom_call.1} parent=5 // pred_check_branch
        %141 = sbr.rel (%p138) target = $region28
      $region27: #{tpu_custom_call.1} parent=5 // pred_region
        %s142 = ssub.s32 %s15, 1
        %s143 = sand.u32 %s28, 1
        %s144 = scalar_lea.sflag [#allocation3], %s143
        %s145 = sand.u32 %s28, 1
        %s146 = smul.addr %s145, 8
        %s147 = scalar_lea.vmem [#allocation2], %s146
        // Predicated region
        $region29: #{tpu_custom_call.1} parent=27 // pred_check
          %p148 = pneg %p41
        $region30: #{tpu_custom_call.1} parent=27 // pred_check_branch
          %150 = sbr.rel (%p148) target = $region32
        $region31: #{tpu_custom_call.1} parent=27 // pred_region
          %151 = dma.done %s144, 128
        $region32: #{tpu_custom_call.1} parent=27 // pred_fallthru
          _
        // Predicated region
        $region33: #{tpu_custom_call.1} parent=27 // pred_check
          %p152 = pneg %p62
        $region34: #{tpu_custom_call.1} parent=27 // pred_check_branch
          %154 = sbr.rel (%p152) target = $region36
        $region35: #{tpu_custom_call.1} parent=27 // pred_region
          %155 = dma.done [#allocation6], 128
        $region36: #{tpu_custom_call.1} parent=27 // pred_fallthru
          _
        %s156 = sand.u32 %s28, 1
        %s157 = scalar_lea.sflag [#allocation3], %s156
        %s158 = sand.u32 %s28, 1
        %s159 = smul.addr %s158, 8
        %s160 = scalar_lea.vmem [#allocation2], %s159
        %p161 = pneg %p41
        %p162 = pneg %p38
        %p163 = pneg %p62
        %p164 = pneg %p59
        %p165 = pneg %p88
        %p166 = pneg %p85
        %s167 = sand.u32 %s75, 1
        %s168 = scalar_lea.sflag [#allocation4], %s167
        %s169 = sand.u32 %s75, 1
        %s170 = smul.addr %s169, 8
        %s171 = scalar_lea.vmem [#allocation7], %s170
        %v172 = vld [vmem:[%s147] sm:$0xff]
        %v173 = vld [vmem:[#allocation5] sm:$0xff]
        %v174 = vadd.f32 %v172, %v173
        %175 = vst [vmem:[%s171] sm:$0xff] %v174
        %s176 = sand.u32 %s75, 1
        %s177 = scalar_lea.sflag [#allocation4], %s176
        %s178 = sand.u32 %s75, 1
        %s179 = smul.addr %s178, 8
        %s180 = scalar_lea.vmem [#allocation7], %s179
        // Predicated region
        $region37: #{tpu_custom_call.1} parent=27 // pred_check
          %p181 = pneg %p85
        $region38: #{tpu_custom_call.1} parent=27 // pred_check_branch
          %183 = sbr.rel (%p181) target = $region40
        $region39: #{tpu_custom_call.1} parent=27 // pred_region
          %s185 = ssub.s32 128, 128
          %186 = vsyncadd %s177, %s185
          %s187 = smul.addr %s20, 128
          %s188 = scalar_lea.hbm %s2, %s187
          %s190 = sshll.u32 %s180, 4
          %s191 = int_to_ptr.vmem [resolvable:$true] %s190
          %193 = dma.vmem_to_hbm [thread:$0]  %s191, 128, %s188, %s177
        $region40: #{tpu_custom_call.1} parent=27 // pred_fallthru
          _
      $region28: #{tpu_custom_call.1} parent=5 // pred_fallthru
        _
      %p194 = scmp.le.s32.totalorder 2, %s15
      // Predicated region
      $region41: #{tpu_custom_call.1} parent=5 // pred_check
        %p195 = pneg %p194
      $region42: #{tpu_custom_call.1} parent=5 // pred_check_branch
        %197 = sbr.rel (%p195) target = $region44
      $region43: #{tpu_custom_call.1} parent=5 // pred_region
        %s198 = ssub.s32 %s15, 2
        // Predicated region
        $region45: #{tpu_custom_call.1} parent=43 // pred_check
          %p199 = pneg %p91
        $region46: #{tpu_custom_call.1} parent=43 // pred_check_branch
          %201 = sbr.rel (%p199) target = $region48
        $region47: #{tpu_custom_call.1} parent=43 // pred_region
          %s202 = sand.u32 %s76, 1
          %s203 = scalar_lea.sflag [#allocation4], %s202
          %s204 = sand.u32 %s76, 1
          %s205 = smul.addr %s204, 8
          %s206 = scalar_lea.vmem [#allocation7], %s205
          %207 = dma.done %s203, 128
        $region48: #{tpu_custom_call.1} parent=43 // pred_fallthru
          _
      $region44: #{tpu_custom_call.1} parent=5 // pred_fallthru
        _
    $region6: #{tpu_custom_call.1} parent=1 // loop_footer
      %s19 = sadd.s32 1, %s15
    $region7: #{tpu_custom_call.1} parent=1 // loop_footer_branch
      %14 = sbr.rel target = $region3
    $region8: #{tpu_custom_call.1} parent=1 // loop_exit
      _
    %208 = vsyncpa [#allocation3], 1
    %s209 = scalar_lea.sflag [#allocation3], 1
    %210 = vsyncpa %s209, 1
    %211 = vsyncpa [#allocation6], 1
    %212 = vsyncpa [#allocation4], 1
    %s213 = scalar_lea.sflag [#allocation4], 1
    %214 = vsyncpa %s213, 1

// kernel: tpu_custom_call.1
$region0: #{tpu_custom_call.1}
  #allocation0 [shape = 'u32[]', space=smem, size = 0x4, offset = 0x4, fixed_abs, tag = 'smem constant byte address 0x4 - core index']
  #allocation1 [shape = 'u32[144,128]{1,0:T(1,128)}', space=vmem, size = 0x12000, scoped, tag = 'internal scratch']
  %s0 = inlined_call_operand.hbm [shape: bf16[16,512], index: 0, kind: input, shape index: {}]
  %s1 = inlined_call_operand.hbm [shape: bf16[512,2048], index: 1, kind: input, shape index: {}]
  %s2 = inlined_call_operand.hbm [shape: f32[1,2048], index: 2, kind: input, shape index: {}]
  %s3 = inlined_call_operand.hbm [shape: bf16[2048,512], index: 3, kind: input, shape index: {}]
  %s4 = inlined_call_operand.hbm [shape: f32[1,512], index: 4, kind: input, shape index: {}]
  %s5 = inlined_call_operand.hbm [shape: f32[16,512], index: 5, kind: output, shape index: {}]
  %s6 = sld [smem:[#allocation0]]
  $region50: #{tpu_custom_call.1} parent=0
    _
  %s8 = ssub.s32 1, %s6
  %s9 = scalar_select 0, %s8, %s6
  $region1: #{tpu_custom_call.1} parent=0
    #allocation2 [shape = 'u8[16384]{0}', space=vmem, size = 0x4000, scoped, tag = 'input window, operand 0, single buffered']
    #allocation3 [shape = 's32[1]{0}', space=sflag, size = 0x4, scoped, tag = 'scoped memory for tpu_custom_call.1']
    #allocation4 [shape = 's32[1]{0}', space=sflag, size = 0x4, scoped, tag = 'scoped memory for tpu_custom_call.1']
    #allocation5 [shape = 'u8[2097152]{0}', space=vmem, size = 0x200000, scoped, tag = 'input window, operand 1, single buffered']
    #allocation6 [shape = 's32[1]{0}', space=sflag, size = 0x4, scoped, tag = 'scoped memory for tpu_custom_call.1']
    #allocation7 [shape = 'u8[8192]{0}', space=vmem, size = 0x2000, scoped, tag = 'input window, operand 2, single buffered']
    #allocation8 [shape = 'u8[2097152]{0}', space=vmem, size = 0x200000, scoped, tag = 'input window, operand 3, single buffered']
    #allocation9 [shape = 's32[1]{0}', space=sflag, size = 0x4, scoped, tag = 'scoped memory for tpu_custom_call.1']
    #allocation10 [shape = 'u8[2048]{0}', space=vmem, size = 0x800, scoped, tag = 'input window, operand 4, single buffered']
    #allocation11 [shape = 'u8[32768]{0}', space=vmem, size = 0x8000, scoped, tag = 'output window, operand 0, single buffered']
    %10 = vsyncpa [#allocation3], 0
    %11 = vsyncpa [#allocation6], 0
    %12 = vsyncpa [#allocation9], 0
    %13 = vsyncpa [#allocation4], 0
    // Predicated region
    $region2: #{tpu_custom_call.1} parent=1 // pred_check
      _
    $region3: #{tpu_custom_call.1} parent=1 // pred_check_branch
      %15 = sbr.rel (0) target = $region5
    $region4: #{tpu_custom_call.1} parent=1 // pred_region
      %s17 = ssub.s32 512, 512
      %18 = vsyncadd [#allocation3], %s17
      %s19 = sshll.u32 [#allocation2], 4
      %s20 = int_to_ptr.vmem [resolvable:$true] %s19
      %25 = dma.hbm_to_vmem [thread:$0]  %s0, 512, %s20, [#allocation3], 256, 256, 16
    $region5: #{tpu_custom_call.1} parent=1 // pred_fallthru
      _
    // Predicated region
    $region6: #{tpu_custom_call.1} parent=1 // pred_check
      _
    $region7: #{tpu_custom_call.1} parent=1 // pred_check_branch
      %27 = sbr.rel (0) target = $region9
    $region8: #{tpu_custom_call.1} parent=1 // pred_region
      %s29 = ssub.s32 65536, 65536
      %30 = vsyncadd [#allocation6], %s29
      %s31 = sshll.u32 [#allocation5], 4
      %s32 = int_to_ptr.vmem [resolvable:$true] %s31
      %37 = dma.hbm_to_vmem [thread:$0]  %s1, 65536, %s32, [#allocation6], 1024, 1024, 64
    $region9: #{tpu_custom_call.1} parent=1 // pred_fallthru
      _
    // Predicated region
    $region10: #{tpu_custom_call.1} parent=1 // pred_check
      _
    $region11: #{tpu_custom_call.1} parent=1 // pred_check_branch
      %39 = sbr.rel (0) target = $region13
    $region12: #{tpu_custom_call.1} parent=1 // pred_region
      %s41 = ssub.s32 256, 256
      %42 = vsyncadd [#allocation6], %s41
      %s44 = sshll.u32 [#allocation7], 4
      %s45 = int_to_ptr.vmem [resolvable:$true] %s44
      %47 = dma.hbm_to_vmem [thread:$0]  %s2, 256, %s45, [#allocation6]
    $region13: #{tpu_custom_call.1} parent=1 // pred_fallthru
      _
    // Predicated region
    $region14: #{tpu_custom_call.1} parent=1 // pred_check
      _
    $region15: #{tpu_custom_call.1} parent=1 // pred_check_branch
      %49 = sbr.rel (0) target = $region17
    $region16: #{tpu_custom_call.1} parent=1 // pred_region
      %s51 = ssub.s32 65536, 65536
      %52 = vsyncadd [#allocation9], %s51
      %s53 = sshll.u32 [#allocation8], 4
      %s54 = int_to_ptr.vmem [resolvable:$true] %s53
      %59 = dma.hbm_to_vmem [thread:$0]  %s3, 65536, %s54, [#allocation9], 256, 256, 16
    $region17: #{tpu_custom_call.1} parent=1 // pred_fallthru
      _
    // Predicated region
    $region18: #{tpu_custom_call.1} parent=1 // pred_check
      _
    $region19: #{tpu_custom_call.1} parent=1 // pred_check_branch
      %61 = sbr.rel (0) target = $region21
    $region20: #{tpu_custom_call.1} parent=1 // pred_region
      %s63 = ssub.s32 64, 64
      %64 = vsyncadd [#allocation9], %s63
      %s66 = sshll.u32 [#allocation10], 4
      %s67 = int_to_ptr.vmem [resolvable:$true] %s66
      %69 = dma.hbm_to_vmem [thread:$0]  %s4, 64, %s67, [#allocation9]
    $region21: #{tpu_custom_call.1} parent=1 // pred_fallthru
      _
    // Predicated region
    $region22: #{tpu_custom_call.1} parent=1 // pred_check
      _
    $region23: #{tpu_custom_call.1} parent=1 // pred_check_branch
      %71 = sbr.rel (0) target = $region25
    $region24: #{tpu_custom_call.1} parent=1 // pred_region
      %72 = dma.done [#allocation3], 512
    $region25: #{tpu_custom_call.1} parent=1 // pred_fallthru
      _
    // Predicated region
    $region26: #{tpu_custom_call.1} parent=1 // pred_check
      _
    $region27: #{tpu_custom_call.1} parent=1 // pred_check_branch
      %74 = sbr.rel (0) target = $region29
    $region28: #{tpu_custom_call.1} parent=1 // pred_region
      %75 = dma.done [#allocation6], 65536
    $region29: #{tpu_custom_call.1} parent=1 // pred_fallthru
      _
    // Predicated region
    $region30: #{tpu_custom_call.1} parent=1 // pred_check
      _
    $region31: #{tpu_custom_call.1} parent=1 // pred_check_branch
      %77 = sbr.rel (0) target = $region33
    $region32: #{tpu_custom_call.1} parent=1 // pred_region
      %78 = dma.done [#allocation6], 256
    $region33: #{tpu_custom_call.1} parent=1 // pred_fallthru
      _
    // Predicated region
    $region34: #{tpu_custom_call.1} parent=1 // pred_check
      _
    $region35: #{tpu_custom_call.1} parent=1 // pred_check_branch
      %80 = sbr.rel (0) target = $region37
    $region36: #{tpu_custom_call.1} parent=1 // pred_region
      %81 = dma.done [#allocation9], 65536
    $region37: #{tpu_custom_call.1} parent=1 // pred_fallthru
      _
    // Predicated region
    $region38: #{tpu_custom_call.1} parent=1 // pred_check
      _
    $region39: #{tpu_custom_call.1} parent=1 // pred_check_branch
      %83 = sbr.rel (0) target = $region41
    $region40: #{tpu_custom_call.1} parent=1 // pred_region
      %84 = dma.done [#allocation9], 64
    $region41: #{tpu_custom_call.1} parent=1 // pred_fallthru
      _
    %v85 = vld [vmem:[#allocation2] sm:$0xff]
    %v86 = vld [vmem:[#allocation2 + $0x8] sm:$0xff]
    %v87 = vld [vmem:[#allocation2 + $0x10] sm:$0xff]
    %v88 = vld [vmem:[#allocation2 + $0x18] sm:$0xff]
    %v89 = vld [vmem:[#allocation5] sm:$0xff]
    %v90 = vld [vmem:[#allocation5 + $0x8] sm:$0xff]
    %v91 = vld [vmem:[#allocation5 + $0x10] sm:$0xff]
    %v92 = vld [vmem:[#allocation5 + $0x18] sm:$0xff]
    %v93 = vld [vmem:[#allocation5 + $0x20] sm:$0xff]
    %v94 = vld [vmem:[#allocation5 + $0x28] sm:$0xff]
    %v95 = vld [vmem:[#allocation5 + $0x30] sm:$0xff]
    %v96 = vld [vmem:[#allocation5 + $0x38] sm:$0xff]
    %v97 = vld [vmem:[#allocation5 + $0x40] sm:$0xff]
    %v98 = vld [vmem:[#allocation5 + $0x48] sm:$0xff]
    %v99 = vld [vmem:[#allocation5 + $0x50] sm:$0xff]
    %v100 = vld [vmem:[#allocation5 + $0x58] sm:$0xff]
    %v101 = vld [vmem:[#allocation5 + $0x60] sm:$0xff]
    %v102 = vld [vmem:[#allocation5 + $0x68] sm:$0xff]
    %v103 = vld [vmem:[#allocation5 + $0x70] sm:$0xff]
    %v104 = vld [vmem:[#allocation5 + $0x78] sm:$0xff]
    %v105 = vld [vmem:[#allocation5 + $0x80] sm:$0xff]
    %v106 = vld [vmem:[#allocation5 + $0x88] sm:$0xff]
    %v107 = vld [vmem:[#allocation5 + $0x90] sm:$0xff]
    %v108 = vld [vmem:[#allocation5 + $0x98] sm:$0xff]
    %v109 = vld [vmem:[#allocation5 + $0xa0] sm:$0xff]
    %v110 = vld [vmem:[#allocation5 + $0xa8] sm:$0xff]
    %v111 = vld [vmem:[#allocation5 + $0xb0] sm:$0xff]
    %v112 = vld [vmem:[#allocation5 + $0xb8] sm:$0xff]
    %v113 = vld [vmem:[#allocation5 + $0xc0] sm:$0xff]
    %v114 = vld [vmem:[#allocation5 + $0xc8] sm:$0xff]
    %v115 = vld [vmem:[#allocation5 + $0xd0] sm:$0xff]
    %v116 = vld [vmem:[#allocation5 + $0xd8] sm:$0xff]
    %v117 = vld [vmem:[#allocation5 + $0xe0] sm:$0xff]
    %v118 = vld [vmem:[#allocation5 + $0xe8] sm:$0xff]
    %v119 = vld [vmem:[#allocation5 + $0xf0] sm:$0xff]
    %v120 = vld [vmem:[#allocation5 + $0xf8] sm:$0xff]
    %v121 = vld [vmem:[#allocation5 + $0x100] sm:$0xff]
    %v122 = vld [vmem:[#allocation5 + $0x108] sm:$0xff]
    %v123 = vld [vmem:[#allocation5 + $0x110] sm:$0xff]
    %v124 = vld [vmem:[#allocation5 + $0x118] sm:$0xff]
    %v125 = vld [vmem:[#allocation5 + $0x120] sm:$0xff]
    %v126 = vld [vmem:[#allocation5 + $0x128] sm:$0xff]
    %v127 = vld [vmem:[#allocation5 + $0x130] sm:$0xff]
    %v128 = vld [vmem:[#allocation5 + $0x138] sm:$0xff]
    %v129 = vld [vmem:[#allocation5 + $0x140] sm:$0xff]
    %v130 = vld [vmem:[#allocation5 + $0x148] sm:$0xff]
    %v131 = vld [vmem:[#allocation5 + $0x150] sm:$0xff]
    %v132 = vld [vmem:[#allocation5 + $0x158] sm:$0xff]
    %v133 = vld [vmem:[#allocation5 + $0x160] sm:$0xff]
    %v134 = vld [vmem:[#allocation5 + $0x168] sm:$0xff]
    %v135 = vld [vmem:[#allocation5 + $0x170] sm:$0xff]
    %v136 = vld [vmem:[#allocation5 + $0x178] sm:$0xff]
    %v137 = vld [vmem:[#allocation5 + $0x180] sm:$0xff]
    %v138 = vld [vmem:[#allocation5 + $0x188] sm:$0xff]
    %v139 = vld [vmem:[#allocation5 + $0x190] sm:$0xff]
    %v140 = vld [vmem:[#allocation5 + $0x198] sm:$0xff]
    %v141 = vld [vmem:[#allocation5 + $0x1a0] sm:$0xff]
    %v142 = vld [vmem:[#allocation5 + $0x1a8] sm:$0xff]
    %v143 = vld [vmem:[#allocation5 + $0x1b0] sm:$0xff]
    %v144 = vld [vmem:[#allocation5 + $0x1b8] sm:$0xff]
    %v145 = vld [vmem:[#allocation5 + $0x1c0] sm:$0xff]
    %v146 = vld [vmem:[#allocation5 + $0x1c8] sm:$0xff]
    %v147 = vld [vmem:[#allocation5 + $0x1d0] sm:$0xff]
    %v148 = vld [vmem:[#allocation5 + $0x1d8] sm:$0xff]
    %v149 = vld [vmem:[#allocation5 + $0x1e0] sm:$0xff]
    %v150 = vld [vmem:[#allocation5 + $0x1e8] sm:$0xff]
    %v151 = vld [vmem:[#allocation5 + $0x1f0] sm:$0xff]
    %v152 = vld [vmem:[#allocation5 + $0x1f8] sm:$0xff]
    %v153 = vld [vmem:[#allocation5 + $0x200] sm:$0xff]
    %v154 = vld [vmem:[#allocation5 + $0x208] sm:$0xff]
    %v155 = vld [vmem:[#allocation5 + $0x210] sm:$0xff]
    %v156 = vld [vmem:[#allocation5 + $0x218] sm:$0xff]
    %v157 = vld [vmem:[#allocation5 + $0x220] sm:$0xff]
    %v158 = vld [vmem:[#allocation5 + $0x228] sm:$0xff]
    %v159 = vld [vmem:[#allocation5 + $0x230] sm:$0xff]
    %v160 = vld [vmem:[#allocation5 + $0x238] sm:$0xff]
    %v161 = vld [vmem:[#allocation5 + $0x240] sm:$0xff]
    %v162 = vld [vmem:[#allocation5 + $0x248] sm:$0xff]
    %v163 = vld [vmem:[#allocation5 + $0x250] sm:$0xff]
    %v164 = vld [vmem:[#allocation5 + $0x258] sm:$0xff]
    %v165 = vld [vmem:[#allocation5 + $0x260] sm:$0xff]
    %v166 = vld [vmem:[#allocation5 + $0x268] sm:$0xff]
    %v167 = vld [vmem:[#allocation5 + $0x270] sm:$0xff]
    %v168 = vld [vmem:[#allocation5 + $0x278] sm:$0xff]
    %v169 = vld [vmem:[#allocation5 + $0x280] sm:$0xff]
    %v170 = vld [vmem:[#allocation5 + $0x288] sm:$0xff]
    %v171 = vld [vmem:[#allocation5 + $0x290] sm:$0xff]
    %v172 = vld [vmem:[#allocation5 + $0x298] sm:$0xff]
    %v173 = vld [vmem:[#allocation5 + $0x2a0] sm:$0xff]
    %v174 = vld [vmem:[#allocation5 + $0x2a8] sm:$0xff]
    %v175 = vld [vmem:[#allocation5 + $0x2b0] sm:$0xff]
    %v176 = vld [vmem:[#allocation5 + $0x2b8] sm:$0xff]
    %v177 = vld [vmem:[#allocation5 + $0x2c0] sm:$0xff]
    %v178 = vld [vmem:[#allocation5 + $0x2c8] sm:$0xff]
    %v179 = vld [vmem:[#allocation5 + $0x2d0] sm:$0xff]
    %v180 = vld [vmem:[#allocation5 + $0x2d8] sm:$0xff]
    %v181 = vld [vmem:[#allocation5 + $0x2e0] sm:$0xff]
    %v182 = vld [vmem:[#allocation5 + $0x2e8] sm:$0xff]
    %v183 = vld [vmem:[#allocation5 + $0x2f0] sm:$0xff]
    %v184 = vld [vmem:[#allocation5 + $0x2f8] sm:$0xff]
    %v185 = vld [vmem:[#allocation5 + $0x300] sm:$0xff]
    %v186 = vld [vmem:[#allocation5 + $0x308] sm:$0xff]
    %v187 = vld [vmem:[#allocation5 + $0x310] sm:$0xff]
    %v188 = vld [vmem:[#allocation5 + $0x318] sm:$0xff]
    %v189 = vld [vmem:[#allocation5 + $0x320] sm:$0xff]
    %v190 = vld [vmem:[#allocation5 + $0x328] sm:$0xff]
    %v191 = vld [vmem:[#allocation5 + $0x330] sm:$0xff]
    %v192 = vld [vmem:[#allocation5 + $0x338] sm:$0xff]
    %v193 = vld [vmem:[#allocation5 + $0x340] sm:$0xff]
    %v194 = vld [vmem:[#allocation5 + $0x348] sm:$0xff]
    %v195 = vld [vmem:[#allocation5 + $0x350] sm:$0xff]
    %v196 = vld [vmem:[#allocation5 + $0x358] sm:$0xff]
    %v197 = vld [vmem:[#allocation5 + $0x360] sm:$0xff]
    %v198 = vld [vmem:[#allocation5 + $0x368] sm:$0xff]
    %v199 = vld [vmem:[#allocation5 + $0x370] sm:$0xff]
    %v200 = vld [vmem:[#allocation5 + $0x378] sm:$0xff]
    %v201 = vld [vmem:[#allocation5 + $0x380] sm:$0xff]
    %v202 = vld [vmem:[#allocation5 + $0x388] sm:$0xff]
    %v203 = vld [vmem:[#allocation5 + $0x390] sm:$0xff]
    %v204 = vld [vmem:[#allocation5 + $0x398] sm:$0xff]
    %v205 = vld [vmem:[#allocation5 + $0x3a0] sm:$0xff]
    %v206 = vld [vmem:[#allocation5 + $0x3a8] sm:$0xff]
    %v207 = vld [vmem:[#allocation5 + $0x3b0] sm:$0xff]
    %v208 = vld [vmem:[#allocation5 + $0x3b8] sm:$0xff]
    %v209 = vld [vmem:[#allocation5 + $0x3c0] sm:$0xff]
    %v210 = vld [vmem:[#allocation5 + $0x3c8] sm:$0xff]
    %v211 = vld [vmem:[#allocation5 + $0x3d0] sm:$0xff]
    %v212 = vld [vmem:[#allocation5 + $0x3d8] sm:$0xff]
    %v213 = vld [vmem:[#allocation5 + $0x3e0] sm:$0xff]
    %v214 = vld [vmem:[#allocation5 + $0x3e8] sm:$0xff]
    %v215 = vld [vmem:[#allocation5 + $0x3f0] sm:$0xff]
    %v216 = vld [vmem:[#allocation5 + $0x3f8] sm:$0xff]
    %v217 = vld [vmem:[#allocation5 + $0x400] sm:$0xff]
    %v218 = vld [vmem:[#allocation5 + $0x408] sm:$0xff]
    %v219 = vld [vmem:[#allocation5 + $0x410] sm:$0xff]
    %v220 = vld [vmem:[#allocation5 + $0x418] sm:$0xff]
    %v221 = vld [vmem:[#allocation5 + $0x420] sm:$0xff]
    %v222 = vld [vmem:[#allocation5 + $0x428] sm:$0xff]
    %v223 = vld [vmem:[#allocation5 + $0x430] sm:$0xff]
    %v224 = vld [vmem:[#allocation5 + $0x438] sm:$0xff]
    %v225 = vld [vmem:[#allocation5 + $0x440] sm:$0xff]
    %v226 = vld [vmem:[#allocation5 + $0x448] sm:$0xff]
    %v227 = vld [vmem:[#allocation5 + $0x450] sm:$0xff]
    %v228 = vld [vmem:[#allocation5 + $0x458] sm:$0xff]
    %v229 = vld [vmem:[#allocation5 + $0x460] sm:$0xff]
    %v230 = vld [vmem:[#allocation5 + $0x468] sm:$0xff]
    %v231 = vld [vmem:[#allocation5 + $0x470] sm:$0xff]
    %v232 = vld [vmem:[#allocation5 + $0x478] sm:$0xff]
    %v233 = vld [vmem:[#allocation5 + $0x480] sm:$0xff]
    %v234 = vld [vmem:[#allocation5 + $0x488] sm:$0xff]
    %v235 = vld [vmem:[#allocation5 + $0x490] sm:$0xff]
    %v236 = vld [vmem:[#allocation5 + $0x498] sm:$0xff]
    %v237 = vld [vmem:[#allocation5 + $0x4a0] sm:$0xff]
    %v238 = vld [vmem:[#allocation5 + $0x4a8] sm:$0xff]
    %v239 = vld [vmem:[#allocation5 + $0x4b0] sm:$0xff]
    %v240 = vld [vmem:[#allocation5 + $0x4b8] sm:$0xff]
    %v241 = vld [vmem:[#allocation5 + $0x4c0] sm:$0xff]
    %v242 = vld [vmem:[#allocation5 + $0x4c8] sm:$0xff]
    %v243 = vld [vmem:[#allocation5 + $0x4d0] sm:$0xff]
    %v244 = vld [vmem:[#allocation5 + $0x4d8] sm:$0xff]
    %v245 = vld [vmem:[#allocation5 + $0x4e0] sm:$0xff]
    %v246 = vld [vmem:[#allocation5 + $0x4e8] sm:$0xff]
    %v247 = vld [vmem:[#allocation5 + $0x4f0] sm:$0xff]
    %v248 = vld [vmem:[#allocation5 + $0x4f8] sm:$0xff]
    %v249 = vld [vmem:[#allocation5 + $0x500] sm:$0xff]
    %v250 = vld [vmem:[#allocation5 + $0x508] sm:$0xff]
    %v251 = vld [vmem:[#allocation5 + $0x510] sm:$0xff]
    %v252 = vld [vmem:[#allocation5 + $0x518] sm:$0xff]
    %v253 = vld [vmem:[#allocation5 + $0x520] sm:$0xff]
    %v254 = vld [vmem:[#allocation5 + $0x528] sm:$0xff]
    %v255 = vld [vmem:[#allocation5 + $0x530] sm:$0xff]
    %v256 = vld [vmem:[#allocation5 + $0x538] sm:$0xff]
    %v257 = vld [vmem:[#allocation5 + $0x540] sm:$0xff]
    %v258 = vld [vmem:[#allocation5 + $0x548] sm:$0xff]
    %v259 = vld [vmem:[#allocation5 + $0x550] sm:$0xff]
    %v260 = vld [vmem:[#allocation5 + $0x558] sm:$0xff]
    %v261 = vld [vmem:[#allocation5 + $0x560] sm:$0xff]
    %v262 = vld [vmem:[#allocation5 + $0x568] sm:$0xff]
    %v263 = vld [vmem:[#allocation5 + $0x570] sm:$0xff]
    %v264 = vld [vmem:[#allocation5 + $0x578] sm:$0xff]
    %v265 = vld [vmem:[#allocation5 + $0x580] sm:$0xff]
    %v266 = vld [vmem:[#allocation5 + $0x588] sm:$0xff]
    %v267 = vld [vmem:[#allocation5 + $0x590] sm:$0xff]
    %v268 = vld [vmem:[#allocation5 + $0x598] sm:$0xff]
    %v269 = vld [vmem:[#allocation5 + $0x5a0] sm:$0xff]
    %v270 = vld [vmem:[#allocation5 + $0x5a8] sm:$0xff]
    %v271 = vld [vmem:[#allocation5 + $0x5b0] sm:$0xff]
    %v272 = vld [vmem:[#allocation5 + $0x5b8] sm:$0xff]
    %v273 = vld [vmem:[#allocation5 + $0x5c0] sm:$0xff]
    %v274 = vld [vmem:[#allocation5 + $0x5c8] sm:$0xff]
    %v275 = vld [vmem:[#allocation5 + $0x5d0] sm:$0xff]
    %v276 = vld [vmem:[#allocation5 + $0x5d8] sm:$0xff]
    %v277 = vld [vmem:[#allocation5 + $0x5e0] sm:$0xff]
    %v278 = vld [vmem:[#allocation5 + $0x5e8] sm:$0xff]
    %v279 = vld [vmem:[#allocation5 + $0x5f0] sm:$0xff]
    %v280 = vld [vmem:[#allocation5 + $0x5f8] sm:$0xff]
    %v281 = vld [vmem:[#allocation5 + $0x600] sm:$0xff]
    %v282 = vld [vmem:[#allocation5 + $0x608] sm:$0xff]
    %v283 = vld [vmem:[#allocation5 + $0x610] sm:$0xff]
    %v284 = vld [vmem:[#allocation5 + $0x618] sm:$0xff]
    %v285 = vld [vmem:[#allocation5 + $0x620] sm:$0xff]
    %v286 = vld [vmem:[#allocation5 + $0x628] sm:$0xff]
    %v287 = vld [vmem:[#allocation5 + $0x630] sm:$0xff]
    %v288 = vld [vmem:[#allocation5 + $0x638] sm:$0xff]
    %v289 = vld [vmem:[#allocation5 + $0x640] sm:$0xff]
    %v290 = vld [vmem:[#allocation5 + $0x648] sm:$0xff]
    %v291 = vld [vmem:[#allocation5 + $0x650] sm:$0xff]
    %v292 = vld [vmem:[#allocation5 + $0x658] sm:$0xff]
    %v293 = vld [vmem:[#allocation5 + $0x660] sm:$0xff]
    %v294 = vld [vmem:[#allocation5 + $0x668] sm:$0xff]
    %v295 = vld [vmem:[#allocation5 + $0x670] sm:$0xff]
    %v296 = vld [vmem:[#allocation5 + $0x678] sm:$0xff]
    %v297 = vld [vmem:[#allocation5 + $0x680] sm:$0xff]
    %v298 = vld [vmem:[#allocation5 + $0x688] sm:$0xff]
    %v299 = vld [vmem:[#allocation5 + $0x690] sm:$0xff]
    %v300 = vld [vmem:[#allocation5 + $0x698] sm:$0xff]
    %v301 = vld [vmem:[#allocation5 + $0x6a0] sm:$0xff]
    %v302 = vld [vmem:[#allocation5 + $0x6a8] sm:$0xff]
    %v303 = vld [vmem:[#allocation5 + $0x6b0] sm:$0xff]
    %v304 = vld [vmem:[#allocation5 + $0x6b8] sm:$0xff]
    %v305 = vld [vmem:[#allocation5 + $0x6c0] sm:$0xff]
    %v306 = vld [vmem:[#allocation5 + $0x6c8] sm:$0xff]
    %v307 = vld [vmem:[#allocation5 + $0x6d0] sm:$0xff]
    %v308 = vld [vmem:[#allocation5 + $0x6d8] sm:$0xff]
    %v309 = vld [vmem:[#allocation5 + $0x6e0] sm:$0xff]
    %v310 = vld [vmem:[#allocation5 + $0x6e8] sm:$0xff]
    %v311 = vld [vmem:[#allocation5 + $0x6f0] sm:$0xff]
    %v312 = vld [vmem:[#allocation5 + $0x6f8] sm:$0xff]
    %v313 = vld [vmem:[#allocation5 + $0x700] sm:$0xff]
    %v314 = vld [vmem:[#allocation5 + $0x708] sm:$0xff]
    %v315 = vld [vmem:[#allocation5 + $0x710] sm:$0xff]
    %v316 = vld [vmem:[#allocation5 + $0x718] sm:$0xff]
    %v317 = vld [vmem:[#allocation5 + $0x720] sm:$0xff]
    %v318 = vld [vmem:[#allocation5 + $0x728] sm:$0xff]
    %v319 = vld [vmem:[#allocation5 + $0x730] sm:$0xff]
    %v320 = vld [vmem:[#allocation5 + $0x738] sm:$0xff]
    %v321 = vld [vmem:[#allocation5 + $0x740] sm:$0xff]
    %v322 = vld [vmem:[#allocation5 + $0x748] sm:$0xff]
    %v323 = vld [vmem:[#allocation5 + $0x750] sm:$0xff]
    %v324 = vld [vmem:[#allocation5 + $0x758] sm:$0xff]
    %v325 = vld [vmem:[#allocation5 + $0x760] sm:$0xff]
    %v326 = vld [vmem:[#allocation5 + $0x768] sm:$0xff]
    %v327 = vld [vmem:[#allocation5 + $0x770] sm:$0xff]
    %v328 = vld [vmem:[#allocation5 + $0x778] sm:$0xff]
    %v329 = vld [vmem:[#allocation5 + $0x780] sm:$0xff]
    %v330 = vld [vmem:[#allocation5 + $0x788] sm:$0xff]
    %v331 = vld [vmem:[#allocation5 + $0x790] sm:$0xff]
    %v332 = vld [vmem:[#allocation5 + $0x798] sm:$0xff]
    %v333 = vld [vmem:[#allocation5 + $0x7a0] sm:$0xff]
    %v334 = vld [vmem:[#allocation5 + $0x7a8] sm:$0xff]
    %v335 = vld [vmem:[#allocation5 + $0x7b0] sm:$0xff]
    %v336 = vld [vmem:[#allocation5 + $0x7b8] sm:$0xff]
    %v337 = vld [vmem:[#allocation5 + $0x7c0] sm:$0xff]
    %v338 = vld [vmem:[#allocation5 + $0x7c8] sm:$0xff]
    %v339 = vld [vmem:[#allocation5 + $0x7d0] sm:$0xff]
    %v340 = vld [vmem:[#allocation5 + $0x7d8] sm:$0xff]
    %v341 = vld [vmem:[#allocation5 + $0x7e0] sm:$0xff]
    %v342 = vld [vmem:[#allocation5 + $0x7e8] sm:$0xff]
    %v343 = vld [vmem:[#allocation5 + $0x7f0] sm:$0xff]
    %v344 = vld [vmem:[#allocation5 + $0x7f8] sm:$0xff]
    %v345 = vld [vmem:[#allocation5 + $0x800] sm:$0xff]
    %v346 = vld [vmem:[#allocation5 + $0x808] sm:$0xff]
    %v347 = vld [vmem:[#allocation5 + $0x810] sm:$0xff]
    %v348 = vld [vmem:[#allocation5 + $0x818] sm:$0xff]
    %v349 = vld [vmem:[#allocation5 + $0x820] sm:$0xff]
    %v350 = vld [vmem:[#allocation5 + $0x828] sm:$0xff]
    %v351 = vld [vmem:[#allocation5 + $0x830] sm:$0xff]
    %v352 = vld [vmem:[#allocation5 + $0x838] sm:$0xff]
    %v353 = vld [vmem:[#allocation5 + $0x840] sm:$0xff]
    %v354 = vld [vmem:[#allocation5 + $0x848] sm:$0xff]
    %v355 = vld [vmem:[#allocation5 + $0x850] sm:$0xff]
    %v356 = vld [vmem:[#allocation5 + $0x858] sm:$0xff]
    %v357 = vld [vmem:[#allocation5 + $0x860] sm:$0xff]
    %v358 = vld [vmem:[#allocation5 + $0x868] sm:$0xff]
    %v359 = vld [vmem:[#allocation5 + $0x870] sm:$0xff]
    %v360 = vld [vmem:[#allocation5 + $0x878] sm:$0xff]
    %v361 = vld [vmem:[#allocation5 + $0x880] sm:$0xff]
    %v362 = vld [vmem:[#allocation5 + $0x888] sm:$0xff]
    %v363 = vld [vmem:[#allocation5 + $0x890] sm:$0xff]
    %v364 = vld [vmem:[#allocation5 + $0x898] sm:$0xff]
    %v365 = vld [vmem:[#allocation5 + $0x8a0] sm:$0xff]
    %v366 = vld [vmem:[#allocation5 + $0x8a8] sm:$0xff]
    %v367 = vld [vmem:[#allocation5 + $0x8b0] sm:$0xff]
    %v368 = vld [vmem:[#allocation5 + $0x8b8] sm:$0xff]
    %v369 = vld [vmem:[#allocation5 + $0x8c0] sm:$0xff]
    %v370 = vld [vmem:[#allocation5 + $0x8c8] sm:$0xff]
    %v371 = vld [vmem:[#allocation5 + $0x8d0] sm:$0xff]
    %v372 = vld [vmem:[#allocation5 + $0x8d8] sm:$0xff]
    %v373 = vld [vmem:[#allocation5 + $0x8e0] sm:$0xff]
    %v374 = vld [vmem:[#allocation5 + $0x8e8] sm:$0xff]
    %v375 = vld [vmem:[#allocation5 + $0x8f0] sm:$0xff]
    %v376 = vld [vmem:[#allocation5 + $0x8f8] sm:$0xff]
    %v377 = vld [vmem:[#allocation5 + $0x900] sm:$0xff]
    %v378 = vld [vmem:[#allocation5 + $0x908] sm:$0xff]
    %v379 = vld [vmem:[#allocation5 + $0x910] sm:$0xff]
    %v380 = vld [vmem:[#allocation5 + $0x918] sm:$0xff]
    %v381 = vld [vmem:[#allocation5 + $0x920] sm:$0xff]
    %v382 = vld [vmem:[#allocation5 + $0x928] sm:$0xff]
    %v383 = vld [vmem:[#allocation5 + $0x930] sm:$0xff]
    %v384 = vld [vmem:[#allocation5 + $0x938] sm:$0xff]
    %v385 = vld [vmem:[#allocation5 + $0x940] sm:$0xff]
    %v386 = vld [vmem:[#allocation5 + $0x948] sm:$0xff]
    %v387 = vld [vmem:[#allocation5 + $0x950] sm:$0xff]
    %v388 = vld [vmem:[#allocation5 + $0x958] sm:$0xff]
    %v389 = vld [vmem:[#allocation5 + $0x960] sm:$0xff]
    %v390 = vld [vmem:[#allocation5 + $0x968] sm:$0xff]
    %v391 = vld [vmem:[#allocation5 + $0x970] sm:$0xff]
    %v392 = vld [vmem:[#allocation5 + $0x978] sm:$0xff]
    %v393 = vld [vmem:[#allocation5 + $0x980] sm:$0xff]
    %v394 = vld [vmem:[#allocation5 + $0x988] sm:$0xff]
    %v395 = vld [vmem:[#allocation5 + $0x990] sm:$0xff]
    %v396 = vld [vmem:[#allocation5 + $0x998] sm:$0xff]
    %v397 = vld [vmem:[#allocation5 + $0x9a0] sm:$0xff]
    %v398 = vld [vmem:[#allocation5 + $0x9a8] sm:$0xff]
    %v399 = vld [vmem:[#allocation5 + $0x9b0] sm:$0xff]
    %v400 = vld [vmem:[#allocation5 + $0x9b8] sm:$0xff]
    %v401 = vld [vmem:[#allocation5 + $0x9c0] sm:$0xff]
    %v402 = vld [vmem:[#allocation5 + $0x9c8] sm:$0xff]
    %v403 = vld [vmem:[#allocation5 + $0x9d0] sm:$0xff]
    %v404 = vld [vmem:[#allocation5 + $0x9d8] sm:$0xff]
    %v405 = vld [vmem:[#allocation5 + $0x9e0] sm:$0xff]
    %v406 = vld [vmem:[#allocation5 + $0x9e8] sm:$0xff]
    %v407 = vld [vmem:[#allocation5 + $0x9f0] sm:$0xff]
    %v408 = vld [vmem:[#allocation5 + $0x9f8] sm:$0xff]
    %v409 = vld [vmem:[#allocation5 + $0xa00] sm:$0xff]
    %v410 = vld [vmem:[#allocation5 + $0xa08] sm:$0xff]
    %v411 = vld [vmem:[#allocation5 + $0xa10] sm:$0xff]
    %v412 = vld [vmem:[#allocation5 + $0xa18] sm:$0xff]
    %v413 = vld [vmem:[#allocation5 + $0xa20] sm:$0xff]
    %v414 = vld [vmem:[#allocation5 + $0xa28] sm:$0xff]
    %v415 = vld [vmem:[#allocation5 + $0xa30] sm:$0xff]
    %v416 = vld [vmem:[#allocation5 + $0xa38] sm:$0xff]
    %v417 = vld [vmem:[#allocation5 + $0xa40] sm:$0xff]
    %v418 = vld [vmem:[#allocation5 + $0xa48] sm:$0xff]
    %v419 = vld [vmem:[#allocation5 + $0xa50] sm:$0xff]
    %v420 = vld [vmem:[#allocation5 + $0xa58] sm:$0xff]
    %v421 = vld [vmem:[#allocation5 + $0xa60] sm:$0xff]
    %v422 = vld [vmem:[#allocation5 + $0xa68] sm:$0xff]
    %v423 = vld [vmem:[#allocation5 + $0xa70] sm:$0xff]
    %v424 = vld [vmem:[#allocation5 + $0xa78] sm:$0xff]
    %v425 = vld [vmem:[#allocation5 + $0xa80] sm:$0xff]
    %v426 = vld [vmem:[#allocation5 + $0xa88] sm:$0xff]
    %v427 = vld [vmem:[#allocation5 + $0xa90] sm:$0xff]
    %v428 = vld [vmem:[#allocation5 + $0xa98] sm:$0xff]
    %v429 = vld [vmem:[#allocation5 + $0xaa0] sm:$0xff]
    %v430 = vld [vmem:[#allocation5 + $0xaa8] sm:$0xff]
    %v431 = vld [vmem:[#allocation5 + $0xab0] sm:$0xff]
    %v432 = vld [vmem:[#allocation5 + $0xab8] sm:$0xff]
    %v433 = vld [vmem:[#allocation5 + $0xac0] sm:$0xff]
    %v434 = vld [vmem:[#allocation5 + $0xac8] sm:$0xff]
    %v435 = vld [vmem:[#allocation5 + $0xad0] sm:$0xff]
    %v436 = vld [vmem:[#allocation5 + $0xad8] sm:$0xff]
    %v437 = vld [vmem:[#allocation5 + $0xae0] sm:$0xff]
    %v438 = vld [vmem:[#allocation5 + $0xae8] sm:$0xff]
    %v439 = vld [vmem:[#allocation5 + $0xaf0] sm:$0xff]
    %v440 = vld [vmem:[#allocation5 + $0xaf8] sm:$0xff]
    %v441 = vld [vmem:[#allocation5 + $0xb00] sm:$0xff]
    %v442 = vld [vmem:[#allocation5 + $0xb08] sm:$0xff]
    %v443 = vld [vmem:[#allocation5 + $0xb10] sm:$0xff]
    %v444 = vld [vmem:[#allocation5 + $0xb18] sm:$0xff]
    %v445 = vld [vmem:[#allocation5 + $0xb20] sm:$0xff]
    %v446 = vld [vmem:[#allocation5 + $0xb28] sm:$0xff]
    %v447 = vld [vmem:[#allocation5 + $0xb30] sm:$0xff]
    %v448 = vld [vmem:[#allocation5 + $0xb38] sm:$0xff]
    %v449 = vld [vmem:[#allocation5 + $0xb40] sm:$0xff]
    %v450 = vld [vmem:[#allocation5 + $0xb48] sm:$0xff]
    %v451 = vld [vmem:[#allocation5 + $0xb50] sm:$0xff]
    %v452 = vld [vmem:[#allocation5 + $0xb58] sm:$0xff]
    %v453 = vld [vmem:[#allocation5 + $0xb60] sm:$0xff]
    %v454 = vld [vmem:[#allocation5 + $0xb68] sm:$0xff]
    %v455 = vld [vmem:[#allocation5 + $0xb70] sm:$0xff]
    %v456 = vld [vmem:[#allocation5 + $0xb78] sm:$0xff]
    %v457 = vld [vmem:[#allocation5 + $0xb80] sm:$0xff]
    %v458 = vld [vmem:[#allocation5 + $0xb88] sm:$0xff]
    %v459 = vld [vmem:[#allocation5 + $0xb90] sm:$0xff]
    %v460 = vld [vmem:[#allocation5 + $0xb98] sm:$0xff]
    %v461 = vld [vmem:[#allocation5 + $0xba0] sm:$0xff]
    %v462 = vld [vmem:[#allocation5 + $0xba8] sm:$0xff]
    %v463 = vld [vmem:[#allocation5 + $0xbb0] sm:$0xff]
    %v464 = vld [vmem:[#allocation5 + $0xbb8] sm:$0xff]
    %v465 = vld [vmem:[#allocation5 + $0xbc0] sm:$0xff]
    %v466 = vld [vmem:[#allocation5 + $0xbc8] sm:$0xff]
    %v467 = vld [vmem:[#allocation5 + $0xbd0] sm:$0xff]
    %v468 = vld [vmem:[#allocation5 + $0xbd8] sm:$0xff]
    %v469 = vld [vmem:[#allocation5 + $0xbe0] sm:$0xff]
    %v470 = vld [vmem:[#allocation5 + $0xbe8] sm:$0xff]
    %v471 = vld [vmem:[#allocation5 + $0xbf0] sm:$0xff]
    %v472 = vld [vmem:[#allocation5 + $0xbf8] sm:$0xff]
    %v473 = vld [vmem:[#allocation5 + $0xc00] sm:$0xff]
    %v474 = vld [vmem:[#allocation5 + $0xc08] sm:$0xff]
    %v475 = vld [vmem:[#allocation5 + $0xc10] sm:$0xff]
    %v476 = vld [vmem:[#allocation5 + $0xc18] sm:$0xff]
    %v477 = vld [vmem:[#allocation5 + $0xc20] sm:$0xff]
    %v478 = vld [vmem:[#allocation5 + $0xc28] sm:$0xff]
    %v479 = vld [vmem:[#allocation5 + $0xc30] sm:$0xff]
    %v480 = vld [vmem:[#allocation5 + $0xc38] sm:$0xff]
    %v481 = vld [vmem:[#allocation5 + $0xc40] sm:$0xff]
    %v482 = vld [vmem:[#allocation5 + $0xc48] sm:$0xff]
    %v483 = vld [vmem:[#allocation5 + $0xc50] sm:$0xff]
    %v484 = vld [vmem:[#allocation5 + $0xc58] sm:$0xff]
    %v485 = vld [vmem:[#allocation5 + $0xc60] sm:$0xff]
    %v486 = vld [vmem:[#allocation5 + $0xc68] sm:$0xff]
    %v487 = vld [vmem:[#allocation5 + $0xc70] sm:$0xff]
    %v488 = vld [vmem:[#allocation5 + $0xc78] sm:$0xff]
    %v489 = vld [vmem:[#allocation5 + $0xc80] sm:$0xff]
    %v490 = vld [vmem:[#allocation5 + $0xc88] sm:$0xff]
    %v491 = vld [vmem:[#allocation5 + $0xc90] sm:$0xff]
    %v492 = vld [vmem:[#allocation5 + $0xc98] sm:$0xff]
    %v493 = vld [vmem:[#allocation5 + $0xca0] sm:$0xff]
    %v494 = vld [vmem:[#allocation5 + $0xca8] sm:$0xff]
    %v495 = vld [vmem:[#allocation5 + $0xcb0] sm:$0xff]
    %v496 = vld [vmem:[#allocation5 + $0xcb8] sm:$0xff]
    %v497 = vld [vmem:[#allocation5 + $0xcc0] sm:$0xff]
    %v498 = vld [vmem:[#allocation5 + $0xcc8] sm:$0xff]
    %v499 = vld [vmem:[#allocation5 + $0xcd0] sm:$0xff]
    %v500 = vld [vmem:[#allocation5 + $0xcd8] sm:$0xff]
    %v501 = vld [vmem:[#allocation5 + $0xce0] sm:$0xff]
    %v502 = vld [vmem:[#allocation5 + $0xce8] sm:$0xff]
    %v503 = vld [vmem:[#allocation5 + $0xcf0] sm:$0xff]
    %v504 = vld [vmem:[#allocation5 + $0xcf8] sm:$0xff]
    %v505 = vld [vmem:[#allocation5 + $0xd00] sm:$0xff]
    %v506 = vld [vmem:[#allocation5 + $0xd08] sm:$0xff]
    %v507 = vld [vmem:[#allocation5 + $0xd10] sm:$0xff]
    %v508 = vld [vmem:[#allocation5 + $0xd18] sm:$0xff]
    %v509 = vld [vmem:[#allocation5 + $0xd20] sm:$0xff]
    %v510 = vld [vmem:[#allocation5 + $0xd28] sm:$0xff]
    %v511 = vld [vmem:[#allocation5 + $0xd30] sm:$0xff]
    %v512 = vld [vmem:[#allocation5 + $0xd38] sm:$0xff]
    %v513 = vld [vmem:[#allocation5 + $0xd40] sm:$0xff]
    %v514 = vld [vmem:[#allocation5 + $0xd48] sm:$0xff]
    %v515 = vld [vmem:[#allocation5 + $0xd50] sm:$0xff]
    %v516 = vld [vmem:[#allocation5 + $0xd58] sm:$0xff]
    %v517 = vld [vmem:[#allocation5 + $0xd60] sm:$0xff]
    %v518 = vld [vmem:[#allocation5 + $0xd68] sm:$0xff]
    %v519 = vld [vmem:[#allocation5 + $0xd70] sm:$0xff]
    %v520 = vld [vmem:[#allocation5 + $0xd78] sm:$0xff]
    %v521 = vld [vmem:[#allocation5 + $0xd80] sm:$0xff]
    %v522 = vld [vmem:[#allocation5 + $0xd88] sm:$0xff]
    %v523 = vld [vmem:[#allocation5 + $0xd90] sm:$0xff]
    %v524 = vld [vmem:[#allocation5 + $0xd98] sm:$0xff]
    %v525 = vld [vmem:[#allocation5 + $0xda0] sm:$0xff]
    %v526 = vld [vmem:[#allocation5 + $0xda8] sm:$0xff]
    %v527 = vld [vmem:[#allocation5 + $0xdb0] sm:$0xff]
    %v528 = vld [vmem:[#allocation5 + $0xdb8] sm:$0xff]
    %v529 = vld [vmem:[#allocation5 + $0xdc0] sm:$0xff]
    %v530 = vld [vmem:[#allocation5 + $0xdc8] sm:$0xff]
    %v531 = vld [vmem:[#allocation5 + $0xdd0] sm:$0xff]
    %v532 = vld [vmem:[#allocation5 + $0xdd8] sm:$0xff]
    %v533 = vld [vmem:[#allocation5 + $0xde0] sm:$0xff]
    %v534 = vld [vmem:[#allocation5 + $0xde8] sm:$0xff]
    %v535 = vld [vmem:[#allocation5 + $0xdf0] sm:$0xff]
    %v536 = vld [vmem:[#allocation5 + $0xdf8] sm:$0xff]
    %v537 = vld [vmem:[#allocation5 + $0xe00] sm:$0xff]
    %v538 = vld [vmem:[#allocation5 + $0xe08] sm:$0xff]
    %v539 = vld [vmem:[#allocation5 + $0xe10] sm:$0xff]
    %v540 = vld [vmem:[#allocation5 + $0xe18] sm:$0xff]
    %v541 = vld [vmem:[#allocation5 + $0xe20] sm:$0xff]
    %v542 = vld [vmem:[#allocation5 + $0xe28] sm:$0xff]
    %v543 = vld [vmem:[#allocation5 + $0xe30] sm:$0xff]
    %v544 = vld [vmem:[#allocation5 + $0xe38] sm:$0xff]
    %v545 = vld [vmem:[#allocation5 + $0xe40] sm:$0xff]
    %v546 = vld [vmem:[#allocation5 + $0xe48] sm:$0xff]
    %v547 = vld [vmem:[#allocation5 + $0xe50] sm:$0xff]
    %v548 = vld [vmem:[#allocation5 + $0xe58] sm:$0xff]
    %v549 = vld [vmem:[#allocation5 + $0xe60] sm:$0xff]
    %v550 = vld [vmem:[#allocation5 + $0xe68] sm:$0xff]
    %v551 = vld [vmem:[#allocation5 + $0xe70] sm:$0xff]
    %v552 = vld [vmem:[#allocation5 + $0xe78] sm:$0xff]
    %v553 = vld [vmem:[#allocation5 + $0xe80] sm:$0xff]
    %v554 = vld [vmem:[#allocation5 + $0xe88] sm:$0xff]
    %v555 = vld [vmem:[#allocation5 + $0xe90] sm:$0xff]
    %v556 = vld [vmem:[#allocation5 + $0xe98] sm:$0xff]
    %v557 = vld [vmem:[#allocation5 + $0xea0] sm:$0xff]
    %v558 = vld [vmem:[#allocation5 + $0xea8] sm:$0xff]
    %v559 = vld [vmem:[#allocation5 + $0xeb0] sm:$0xff]
    %v560 = vld [vmem:[#allocation5 + $0xeb8] sm:$0xff]
    %v561 = vld [vmem:[#allocation5 + $0xec0] sm:$0xff]
    %v562 = vld [vmem:[#allocation5 + $0xec8] sm:$0xff]
    %v563 = vld [vmem:[#allocation5 + $0xed0] sm:$0xff]
    %v564 = vld [vmem:[#allocation5 + $0xed8] sm:$0xff]
    %v565 = vld [vmem:[#allocation5 + $0xee0] sm:$0xff]
    %v566 = vld [vmem:[#allocation5 + $0xee8] sm:$0xff]
    %v567 = vld [vmem:[#allocation5 + $0xef0] sm:$0xff]
    %v568 = vld [vmem:[#allocation5 + $0xef8] sm:$0xff]
    %v569 = vld [vmem:[#allocation5 + $0xf00] sm:$0xff]
    %v570 = vld [vmem:[#allocation5 + $0xf08] sm:$0xff]
    %v571 = vld [vmem:[#allocation5 + $0xf10] sm:$0xff]
    %v572 = vld [vmem:[#allocation5 + $0xf18] sm:$0xff]
    %v573 = vld [vmem:[#allocation5 + $0xf20] sm:$0xff]
    %v574 = vld [vmem:[#allocation5 + $0xf28] sm:$0xff]
    %v575 = vld [vmem:[#allocation5 + $0xf30] sm:$0xff]
    %v576 = vld [vmem:[#allocation5 + $0xf38] sm:$0xff]
    %v577 = vld [vmem:[#allocation5 + $0xf40] sm:$0xff]
    %v578 = vld [vmem:[#allocation5 + $0xf48] sm:$0xff]
    %v579 = vld [vmem:[#allocation5 + $0xf50] sm:$0xff]
    %v580 = vld [vmem:[#allocation5 + $0xf58] sm:$0xff]
    %v581 = vld [vmem:[#allocation5 + $0xf60] sm:$0xff]
    %v582 = vld [vmem:[#allocation5 + $0xf68] sm:$0xff]
    %v583 = vld [vmem:[#allocation5 + $0xf70] sm:$0xff]
    %v584 = vld [vmem:[#allocation5 + $0xf78] sm:$0xff]
    %v585 = vld [vmem:[#allocation5 + $0xf80] sm:$0xff]
    %v586 = vld [vmem:[#allocation5 + $0xf88] sm:$0xff]
    %v587 = vld [vmem:[#allocation5 + $0xf90] sm:$0xff]
    %v588 = vld [vmem:[#allocation5 + $0xf98] sm:$0xff]
    %v589 = vld [vmem:[#allocation5 + $0xfa0] sm:$0xff]
    %v590 = vld [vmem:[#allocation5 + $0xfa8] sm:$0xff]
    %v591 = vld [vmem:[#allocation5 + $0xfb0] sm:$0xff]
    %v592 = vld [vmem:[#allocation5 + $0xfb8] sm:$0xff]
    %v593 = vld [vmem:[#allocation5 + $0xfc0] sm:$0xff]
    %v594 = vld [vmem:[#allocation5 + $0xfc8] sm:$0xff]
    %v595 = vld [vmem:[#allocation5 + $0xfd0] sm:$0xff]
    %v596 = vld [vmem:[#allocation5 + $0xfd8] sm:$0xff]
    %v597 = vld [vmem:[#allocation5 + $0xfe0] sm:$0xff]
    %v598 = vld [vmem:[#allocation5 + $0xfe8] sm:$0xff]
    %v599 = vld [vmem:[#allocation5 + $0xff0] sm:$0xff]
    %v600 = vld [vmem:[#allocation5 + $0xff8] sm:$0xff]
    %v601 = vld [vmem:[#allocation7] sm:$0xff]
    %v602 = vld [vmem:[#allocation7 + $0x8] sm:$0xff]
    %v605 = vlaneseq
    %v606 = vshrl.u32 %v605, 7
    %v607 = vsub.s32 0, %v606
    %v608 = vrot.slane %v601, %v607
    %v609 = vlaneseq
    %v610 = vshrl.u32 %v609, 7
    %v611 = vsub.s32 1, %v610
    %v612 = vrot.slane %v601, %v611
    %v613 = vlaneseq
    %v614 = vshrl.u32 %v613, 7
    %v615 = vsub.s32 2, %v614
    %v616 = vrot.slane %v601, %v615
    %v617 = vlaneseq
    %v618 = vshrl.u32 %v617, 7
    %v619 = vsub.s32 3, %v618
    %v620 = vrot.slane %v601, %v619
    %v621 = vlaneseq
    %v622 = vshrl.u32 %v621, 7
    %v623 = vsub.s32 4, %v622
    %v624 = vrot.slane %v601, %v623
    %v625 = vlaneseq
    %v626 = vshrl.u32 %v625, 7
    %v627 = vsub.s32 5, %v626
    %v628 = vrot.slane %v601, %v627
    %v629 = vlaneseq
    %v630 = vshrl.u32 %v629, 7
    %v631 = vsub.s32 6, %v630
    %v632 = vrot.slane %v601, %v631
    %v633 = vlaneseq
    %v634 = vshrl.u32 %v633, 7
    %v635 = vsub.s32 7, %v634
    %v636 = vrot.slane %v601, %v635
    %v637 = vlaneseq
    %v638 = vshrl.u32 %v637, 7
    %v639 = vsub.s32 0, %v638
    %v640 = vrot.slane %v602, %v639
    %v641 = vlaneseq
    %v642 = vshrl.u32 %v641, 7
    %v643 = vsub.s32 1, %v642
    %v644 = vrot.slane %v602, %v643
    %v645 = vlaneseq
    %v646 = vshrl.u32 %v645, 7
    %v647 = vsub.s32 2, %v646
    %v648 = vrot.slane %v602, %v647
    %v649 = vlaneseq
    %v650 = vshrl.u32 %v649, 7
    %v651 = vsub.s32 3, %v650
    %v652 = vrot.slane %v602, %v651
    %v653 = vlaneseq
    %v654 = vshrl.u32 %v653, 7
    %v655 = vsub.s32 4, %v654
    %v656 = vrot.slane %v602, %v655
    %v657 = vlaneseq
    %v658 = vshrl.u32 %v657, 7
    %v659 = vsub.s32 5, %v658
    %v660 = vrot.slane %v602, %v659
    %v661 = vlaneseq
    %v662 = vshrl.u32 %v661, 7
    %v663 = vsub.s32 6, %v662
    %v664 = vrot.slane %v602, %v663
    %v665 = vlaneseq
    %v666 = vshrl.u32 %v665, 7
    %v667 = vsub.s32 7, %v666
    %v668 = vrot.slane %v602, %v667
    %v689 = vunpack.c.l.b16 %v85
    %v690 = vunpack.c.h.b16 %v85
    %v691 = vunpack.c.l.b16 %v86
    %v692 = vunpack.c.h.b16 %v86
    %v693 = vunpack.c.l.b16 %v87
    %v694 = vunpack.c.h.b16 %v87
    %v695 = vunpack.c.l.b16 %v88
    %v696 = vunpack.c.h.b16 %v88
    %v697 = vpack.c.b16 %v693, %v689
    %v698 = vpack.c.b16 %v694, %v690
    %v699 = vpack.c.b16 %v695, %v691
    %v700 = vpack.c.b16 %v696, %v692
    %v1217 = vunpack.c.l.b16 %v89
    %v1218 = vunpack.c.h.b16 %v89
    %v1219 = vunpack.c.l.b16 %v90
    %v1220 = vunpack.c.h.b16 %v90
    %v1221 = vunpack.c.l.b16 %v91
    %v1222 = vunpack.c.h.b16 %v91
    %v1223 = vunpack.c.l.b16 %v92
    %v1224 = vunpack.c.h.b16 %v92
    %v1225 = vunpack.c.l.b16 %v93
    %v1226 = vunpack.c.h.b16 %v93
    %v1227 = vunpack.c.l.b16 %v94
    %v1228 = vunpack.c.h.b16 %v94
    %v1229 = vunpack.c.l.b16 %v95
    %v1230 = vunpack.c.h.b16 %v95
    %v1231 = vunpack.c.l.b16 %v96
    %v1232 = vunpack.c.h.b16 %v96
    %v1233 = vunpack.c.l.b16 %v97
    %v1234 = vunpack.c.h.b16 %v97
    %v1235 = vunpack.c.l.b16 %v98
    %v1236 = vunpack.c.h.b16 %v98
    %v1237 = vunpack.c.l.b16 %v99
    %v1238 = vunpack.c.h.b16 %v99
    %v1239 = vunpack.c.l.b16 %v100
    %v1240 = vunpack.c.h.b16 %v100
    %v1241 = vunpack.c.l.b16 %v101
    %v1242 = vunpack.c.h.b16 %v101
    %v1243 = vunpack.c.l.b16 %v102
    %v1244 = vunpack.c.h.b16 %v102
    %v1245 = vunpack.c.l.b16 %v103
    %v1246 = vunpack.c.h.b16 %v103
    %v1247 = vunpack.c.l.b16 %v104
    %v1248 = vunpack.c.h.b16 %v104
    %v1249 = vunpack.c.l.b16 %v105
    %v1250 = vunpack.c.h.b16 %v105
    %v1251 = vunpack.c.l.b16 %v106
    %v1252 = vunpack.c.h.b16 %v106
    %v1253 = vunpack.c.l.b16 %v107
    %v1254 = vunpack.c.h.b16 %v107
    %v1255 = vunpack.c.l.b16 %v108
    %v1256 = vunpack.c.h.b16 %v108
    %v1257 = vunpack.c.l.b16 %v109
    %v1258 = vunpack.c.h.b16 %v109
    %v1259 = vunpack.c.l.b16 %v110
    %v1260 = vunpack.c.h.b16 %v110
    %v1261 = vunpack.c.l.b16 %v111
    %v1262 = vunpack.c.h.b16 %v111
    %v1263 = vunpack.c.l.b16 %v112
    %v1264 = vunpack.c.h.b16 %v112
    %v1265 = vunpack.c.l.b16 %v113
    %v1266 = vunpack.c.h.b16 %v113
    %v1267 = vunpack.c.l.b16 %v114
    %v1268 = vunpack.c.h.b16 %v114
    %v1269 = vunpack.c.l.b16 %v115
    %v1270 = vunpack.c.h.b16 %v115
    %v1271 = vunpack.c.l.b16 %v116
    %v1272 = vunpack.c.h.b16 %v116
    %v1273 = vunpack.c.l.b16 %v117
    %v1274 = vunpack.c.h.b16 %v117
    %v1275 = vunpack.c.l.b16 %v118
    %v1276 = vunpack.c.h.b16 %v118
    %v1277 = vunpack.c.l.b16 %v119
    %v1278 = vunpack.c.h.b16 %v119
    %v1279 = vunpack.c.l.b16 %v120
    %v1280 = vunpack.c.h.b16 %v120
    %v1281 = vunpack.c.l.b16 %v121
    %v1282 = vunpack.c.h.b16 %v121
    %v1283 = vunpack.c.l.b16 %v122
    %v1284 = vunpack.c.h.b16 %v122
    %v1285 = vunpack.c.l.b16 %v123
    %v1286 = vunpack.c.h.b16 %v123
    %v1287 = vunpack.c.l.b16 %v124
    %v1288 = vunpack.c.h.b16 %v124
    %v1289 = vunpack.c.l.b16 %v125
    %v1290 = vunpack.c.h.b16 %v125
    %v1291 = vunpack.c.l.b16 %v126
    %v1292 = vunpack.c.h.b16 %v126
    %v1293 = vunpack.c.l.b16 %v127
    %v1294 = vunpack.c.h.b16 %v127
    %v1295 = vunpack.c.l.b16 %v128
    %v1296 = vunpack.c.h.b16 %v128
    %v1297 = vunpack.c.l.b16 %v129
    %v1298 = vunpack.c.h.b16 %v129
    %v1299 = vunpack.c.l.b16 %v130
    %v1300 = vunpack.c.h.b16 %v130
    %v1301 = vunpack.c.l.b16 %v131
    %v1302 = vunpack.c.h.b16 %v131
    %v1303 = vunpack.c.l.b16 %v132
    %v1304 = vunpack.c.h.b16 %v132
    %v1305 = vunpack.c.l.b16 %v133
    %v1306 = vunpack.c.h.b16 %v133
    %v1307 = vunpack.c.l.b16 %v134
    %v1308 = vunpack.c.h.b16 %v134
    %v1309 = vunpack.c.l.b16 %v135
    %v1310 = vunpack.c.h.b16 %v135
    %v1311 = vunpack.c.l.b16 %v136
    %v1312 = vunpack.c.h.b16 %v136
    %v1313 = vunpack.c.l.b16 %v137
    %v1314 = vunpack.c.h.b16 %v137
    %v1315 = vunpack.c.l.b16 %v138
    %v1316 = vunpack.c.h.b16 %v138
    %v1317 = vunpack.c.l.b16 %v139
    %v1318 = vunpack.c.h.b16 %v139
    %v1319 = vunpack.c.l.b16 %v140
    %v1320 = vunpack.c.h.b16 %v140
    %v1321 = vunpack.c.l.b16 %v141
    %v1322 = vunpack.c.h.b16 %v141
    %v1323 = vunpack.c.l.b16 %v142
    %v1324 = vunpack.c.h.b16 %v142
    %v1325 = vunpack.c.l.b16 %v143
    %v1326 = vunpack.c.h.b16 %v143
    %v1327 = vunpack.c.l.b16 %v144
    %v1328 = vunpack.c.h.b16 %v144
    %v1329 = vunpack.c.l.b16 %v145
    %v1330 = vunpack.c.h.b16 %v145
    %v1331 = vunpack.c.l.b16 %v146
    %v1332 = vunpack.c.h.b16 %v146
    %v1333 = vunpack.c.l.b16 %v147
    %v1334 = vunpack.c.h.b16 %v147
    %v1335 = vunpack.c.l.b16 %v148
    %v1336 = vunpack.c.h.b16 %v148
    %v1337 = vunpack.c.l.b16 %v149
    %v1338 = vunpack.c.h.b16 %v149
    %v1339 = vunpack.c.l.b16 %v150
    %v1340 = vunpack.c.h.b16 %v150
    %v1341 = vunpack.c.l.b16 %v151
    %v1342 = vunpack.c.h.b16 %v151
    %v1343 = vunpack.c.l.b16 %v152
    %v1344 = vunpack.c.h.b16 %v152
    %v1345 = vunpack.c.l.b16 %v153
    %v1346 = vunpack.c.h.b16 %v153
    %v1347 = vunpack.c.l.b16 %v154
    %v1348 = vunpack.c.h.b16 %v154
    %v1349 = vunpack.c.l.b16 %v155
    %v1350 = vunpack.c.h.b16 %v155
    %v1351 = vunpack.c.l.b16 %v156
    %v1352 = vunpack.c.h.b16 %v156
    %v1353 = vunpack.c.l.b16 %v157
    %v1354 = vunpack.c.h.b16 %v157
    %v1355 = vunpack.c.l.b16 %v158
    %v1356 = vunpack.c.h.b16 %v158
    %v1357 = vunpack.c.l.b16 %v159
    %v1358 = vunpack.c.h.b16 %v159
    %v1359 = vunpack.c.l.b16 %v160
    %v1360 = vunpack.c.h.b16 %v160
    %v1361 = vunpack.c.l.b16 %v161
    %v1362 = vunpack.c.h.b16 %v161
    %v1363 = vunpack.c.l.b16 %v162
    %v1364 = vunpack.c.h.b16 %v162
    %v1365 = vunpack.c.l.b16 %v163
    %v1366 = vunpack.c.h.b16 %v163
    %v1367 = vunpack.c.l.b16 %v164
    %v1368 = vunpack.c.h.b16 %v164
    %v1369 = vunpack.c.l.b16 %v165
    %v1370 = vunpack.c.h.b16 %v165
    %v1371 = vunpack.c.l.b16 %v166
    %v1372 = vunpack.c.h.b16 %v166
    %v1373 = vunpack.c.l.b16 %v167
    %v1374 = vunpack.c.h.b16 %v167
    %v1375 = vunpack.c.l.b16 %v168
    %v1376 = vunpack.c.h.b16 %v168
    %v1377 = vunpack.c.l.b16 %v169
    %v1378 = vunpack.c.h.b16 %v169
    %v1379 = vunpack.c.l.b16 %v170
    %v1380 = vunpack.c.h.b16 %v170
    %v1381 = vunpack.c.l.b16 %v171
    %v1382 = vunpack.c.h.b16 %v171
    %v1383 = vunpack.c.l.b16 %v172
    %v1384 = vunpack.c.h.b16 %v172
    %v1385 = vunpack.c.l.b16 %v173
    %v1386 = vunpack.c.h.b16 %v173
    %v1387 = vunpack.c.l.b16 %v174
    %v1388 = vunpack.c.h.b16 %v174
    %v1389 = vunpack.c.l.b16 %v175
    %v1390 = vunpack.c.h.b16 %v175
    %v1391 = vunpack.c.l.b16 %v176
    %v1392 = vunpack.c.h.b16 %v176
    %v1393 = vunpack.c.l.b16 %v177
    %v1394 = vunpack.c.h.b16 %v177
    %v1395 = vunpack.c.l.b16 %v178
    %v1396 = vunpack.c.h.b16 %v178
    %v1397 = vunpack.c.l.b16 %v179
    %v1398 = vunpack.c.h.b16 %v179
    %v1399 = vunpack.c.l.b16 %v180
    %v1400 = vunpack.c.h.b16 %v180
    %v1401 = vunpack.c.l.b16 %v181
    %v1402 = vunpack.c.h.b16 %v181
    %v1403 = vunpack.c.l.b16 %v182
    %v1404 = vunpack.c.h.b16 %v182
    %v1405 = vunpack.c.l.b16 %v183
    %v1406 = vunpack.c.h.b16 %v183
    %v1407 = vunpack.c.l.b16 %v184
    %v1408 = vunpack.c.h.b16 %v184
    %v1409 = vunpack.c.l.b16 %v185
    %v1410 = vunpack.c.h.b16 %v185
    %v1411 = vunpack.c.l.b16 %v186
    %v1412 = vunpack.c.h.b16 %v186
    %v1413 = vunpack.c.l.b16 %v187
    %v1414 = vunpack.c.h.b16 %v187
    %v1415 = vunpack.c.l.b16 %v188
    %v1416 = vunpack.c.h.b16 %v188
    %v1417 = vunpack.c.l.b16 %v189
    %v1418 = vunpack.c.h.b16 %v189
    %v1419 = vunpack.c.l.b16 %v190
    %v1420 = vunpack.c.h.b16 %v190
    %v1421 = vunpack.c.l.b16 %v191
    %v1422 = vunpack.c.h.b16 %v191
    %v1423 = vunpack.c.l.b16 %v192
    %v1424 = vunpack.c.h.b16 %v192
    %v1425 = vunpack.c.l.b16 %v193
    %v1426 = vunpack.c.h.b16 %v193
    %v1427 = vunpack.c.l.b16 %v194
    %v1428 = vunpack.c.h.b16 %v194
    %v1429 = vunpack.c.l.b16 %v195
    %v1430 = vunpack.c.h.b16 %v195
    %v1431 = vunpack.c.l.b16 %v196
    %v1432 = vunpack.c.h.b16 %v196
    %v1433 = vunpack.c.l.b16 %v197
    %v1434 = vunpack.c.h.b16 %v197
    %v1435 = vunpack.c.l.b16 %v198
    %v1436 = vunpack.c.h.b16 %v198
    %v1437 = vunpack.c.l.b16 %v199
    %v1438 = vunpack.c.h.b16 %v199
    %v1439 = vunpack.c.l.b16 %v200
    %v1440 = vunpack.c.h.b16 %v200
    %v1441 = vunpack.c.l.b16 %v201
    %v1442 = vunpack.c.h.b16 %v201
    %v1443 = vunpack.c.l.b16 %v202
    %v1444 = vunpack.c.h.b16 %v202
    %v1445 = vunpack.c.l.b16 %v203
    %v1446 = vunpack.c.h.b16 %v203
    %v1447 = vunpack.c.l.b16 %v204
    %v1448 = vunpack.c.h.b16 %v204
    %v1449 = vunpack.c.l.b16 %v205
    %v1450 = vunpack.c.h.b16 %v205
    %v1451 = vunpack.c.l.b16 %v206
    %v1452 = vunpack.c.h.b16 %v206
    %v1453 = vunpack.c.l.b16 %v207
    %v1454 = vunpack.c.h.b16 %v207
    %v1455 = vunpack.c.l.b16 %v208
    %v1456 = vunpack.c.h.b16 %v208
    %v1457 = vunpack.c.l.b16 %v209
    %v1458 = vunpack.c.h.b16 %v209
    %v1459 = vunpack.c.l.b16 %v210
    %v1460 = vunpack.c.h.b16 %v210
    %v1461 = vunpack.c.l.b16 %v211
    %v1462 = vunpack.c.h.b16 %v211
    %v1463 = vunpack.c.l.b16 %v212
    %v1464 = vunpack.c.h.b16 %v212
    %v1465 = vunpack.c.l.b16 %v213
    %v1466 = vunpack.c.h.b16 %v213
    %v1467 = vunpack.c.l.b16 %v214
    %v1468 = vunpack.c.h.b16 %v214
    %v1469 = vunpack.c.l.b16 %v215
    %v1470 = vunpack.c.h.b16 %v215
    %v1471 = vunpack.c.l.b16 %v216
    %v1472 = vunpack.c.h.b16 %v216
    %v1473 = vunpack.c.l.b16 %v217
    %v1474 = vunpack.c.h.b16 %v217
    %v1475 = vunpack.c.l.b16 %v218
    %v1476 = vunpack.c.h.b16 %v218
    %v1477 = vunpack.c.l.b16 %v219
    %v1478 = vunpack.c.h.b16 %v219
    %v1479 = vunpack.c.l.b16 %v220
    %v1480 = vunpack.c.h.b16 %v220
    %v1481 = vunpack.c.l.b16 %v221
    %v1482 = vunpack.c.h.b16 %v221
    %v1483 = vunpack.c.l.b16 %v222
    %v1484 = vunpack.c.h.b16 %v222
    %v1485 = vunpack.c.l.b16 %v223
    %v1486 = vunpack.c.h.b16 %v223
    %v1487 = vunpack.c.l.b16 %v224
    %v1488 = vunpack.c.h.b16 %v224
    %v1489 = vunpack.c.l.b16 %v225
    %v1490 = vunpack.c.h.b16 %v225
    %v1491 = vunpack.c.l.b16 %v226
    %v1492 = vunpack.c.h.b16 %v226
    %v1493 = vunpack.c.l.b16 %v227
    %v1494 = vunpack.c.h.b16 %v227
    %v1495 = vunpack.c.l.b16 %v228
    %v1496 = vunpack.c.h.b16 %v228
    %v1497 = vunpack.c.l.b16 %v229
    %v1498 = vunpack.c.h.b16 %v229
    %v1499 = vunpack.c.l.b16 %v230
    %v1500 = vunpack.c.h.b16 %v230
    %v1501 = vunpack.c.l.b16 %v231
    %v1502 = vunpack.c.h.b16 %v231
    %v1503 = vunpack.c.l.b16 %v232
    %v1504 = vunpack.c.h.b16 %v232
    %v1505 = vunpack.c.l.b16 %v233
    %v1506 = vunpack.c.h.b16 %v233
    %v1507 = vunpack.c.l.b16 %v234
    %v1508 = vunpack.c.h.b16 %v234
    %v1509 = vunpack.c.l.b16 %v235
    %v1510 = vunpack.c.h.b16 %v235
    %v1511 = vunpack.c.l.b16 %v236
    %v1512 = vunpack.c.h.b16 %v236
    %v1513 = vunpack.c.l.b16 %v237
    %v1514 = vunpack.c.h.b16 %v237
    %v1515 = vunpack.c.l.b16 %v238
    %v1516 = vunpack.c.h.b16 %v238
    %v1517 = vunpack.c.l.b16 %v239
    %v1518 = vunpack.c.h.b16 %v239
    %v1519 = vunpack.c.l.b16 %v240
    %v1520 = vunpack.c.h.b16 %v240
    %v1521 = vunpack.c.l.b16 %v241
    %v1522 = vunpack.c.h.b16 %v241
    %v1523 = vunpack.c.l.b16 %v242
    %v1524 = vunpack.c.h.b16 %v242
    %v1525 = vunpack.c.l.b16 %v243
    %v1526 = vunpack.c.h.b16 %v243
    %v1527 = vunpack.c.l.b16 %v244
    %v1528 = vunpack.c.h.b16 %v244
    %v1529 = vunpack.c.l.b16 %v245
    %v1530 = vunpack.c.h.b16 %v245
    %v1531 = vunpack.c.l.b16 %v246
    %v1532 = vunpack.c.h.b16 %v246
    %v1533 = vunpack.c.l.b16 %v247
    %v1534 = vunpack.c.h.b16 %v247
    %v1535 = vunpack.c.l.b16 %v248
    %v1536 = vunpack.c.h.b16 %v248
    %v1537 = vunpack.c.l.b16 %v249
    %v1538 = vunpack.c.h.b16 %v249
    %v1539 = vunpack.c.l.b16 %v250
    %v1540 = vunpack.c.h.b16 %v250
    %v1541 = vunpack.c.l.b16 %v251
    %v1542 = vunpack.c.h.b16 %v251
    %v1543 = vunpack.c.l.b16 %v252
    %v1544 = vunpack.c.h.b16 %v252
    %v1545 = vunpack.c.l.b16 %v253
    %v1546 = vunpack.c.h.b16 %v253
    %v1547 = vunpack.c.l.b16 %v254
    %v1548 = vunpack.c.h.b16 %v254
    %v1549 = vunpack.c.l.b16 %v255
    %v1550 = vunpack.c.h.b16 %v255
    %v1551 = vunpack.c.l.b16 %v256
    %v1552 = vunpack.c.h.b16 %v256
    %v1553 = vunpack.c.l.b16 %v257
    %v1554 = vunpack.c.h.b16 %v257
    %v1555 = vunpack.c.l.b16 %v258
    %v1556 = vunpack.c.h.b16 %v258
    %v1557 = vunpack.c.l.b16 %v259
    %v1558 = vunpack.c.h.b16 %v259
    %v1559 = vunpack.c.l.b16 %v260
    %v1560 = vunpack.c.h.b16 %v260
    %v1561 = vunpack.c.l.b16 %v261
    %v1562 = vunpack.c.h.b16 %v261
    %v1563 = vunpack.c.l.b16 %v262
    %v1564 = vunpack.c.h.b16 %v262
    %v1565 = vunpack.c.l.b16 %v263
    %v1566 = vunpack.c.h.b16 %v263
    %v1567 = vunpack.c.l.b16 %v264
    %v1568 = vunpack.c.h.b16 %v264
    %v1569 = vunpack.c.l.b16 %v265
    %v1570 = vunpack.c.h.b16 %v265
    %v1571 = vunpack.c.l.b16 %v266
    %v1572 = vunpack.c.h.b16 %v266
    %v1573 = vunpack.c.l.b16 %v267
    %v1574 = vunpack.c.h.b16 %v267
    %v1575 = vunpack.c.l.b16 %v268
    %v1576 = vunpack.c.h.b16 %v268
    %v1577 = vunpack.c.l.b16 %v269
    %v1578 = vunpack.c.h.b16 %v269
    %v1579 = vunpack.c.l.b16 %v270
    %v1580 = vunpack.c.h.b16 %v270
    %v1581 = vunpack.c.l.b16 %v271
    %v1582 = vunpack.c.h.b16 %v271
    %v1583 = vunpack.c.l.b16 %v272
    %v1584 = vunpack.c.h.b16 %v272
    %v1585 = vunpack.c.l.b16 %v273
    %v1586 = vunpack.c.h.b16 %v273
    %v1587 = vunpack.c.l.b16 %v274
    %v1588 = vunpack.c.h.b16 %v274
    %v1589 = vunpack.c.l.b16 %v275
    %v1590 = vunpack.c.h.b16 %v275
    %v1591 = vunpack.c.l.b16 %v276
    %v1592 = vunpack.c.h.b16 %v276
    %v1593 = vunpack.c.l.b16 %v277
    %v1594 = vunpack.c.h.b16 %v277
    %v1595 = vunpack.c.l.b16 %v278
    %v1596 = vunpack.c.h.b16 %v278
    %v1597 = vunpack.c.l.b16 %v279
    %v1598 = vunpack.c.h.b16 %v279
    %v1599 = vunpack.c.l.b16 %v280
    %v1600 = vunpack.c.h.b16 %v280
    %v1601 = vunpack.c.l.b16 %v281
    %v1602 = vunpack.c.h.b16 %v281
    %v1603 = vunpack.c.l.b16 %v282
    %v1604 = vunpack.c.h.b16 %v282
    %v1605 = vunpack.c.l.b16 %v283
    %v1606 = vunpack.c.h.b16 %v283
    %v1607 = vunpack.c.l.b16 %v284
    %v1608 = vunpack.c.h.b16 %v284
    %v1609 = vunpack.c.l.b16 %v285
    %v1610 = vunpack.c.h.b16 %v285
    %v1611 = vunpack.c.l.b16 %v286
    %v1612 = vunpack.c.h.b16 %v286
    %v1613 = vunpack.c.l.b16 %v287
    %v1614 = vunpack.c.h.b16 %v287
    %v1615 = vunpack.c.l.b16 %v288
    %v1616 = vunpack.c.h.b16 %v288
    %v1617 = vunpack.c.l.b16 %v289
    %v1618 = vunpack.c.h.b16 %v289
    %v1619 = vunpack.c.l.b16 %v290
    %v1620 = vunpack.c.h.b16 %v290
    %v1621 = vunpack.c.l.b16 %v291
    %v1622 = vunpack.c.h.b16 %v291
    %v1623 = vunpack.c.l.b16 %v292
    %v1624 = vunpack.c.h.b16 %v292
    %v1625 = vunpack.c.l.b16 %v293
    %v1626 = vunpack.c.h.b16 %v293
    %v1627 = vunpack.c.l.b16 %v294
    %v1628 = vunpack.c.h.b16 %v294
    %v1629 = vunpack.c.l.b16 %v295
    %v1630 = vunpack.c.h.b16 %v295
    %v1631 = vunpack.c.l.b16 %v296
    %v1632 = vunpack.c.h.b16 %v296
    %v1633 = vunpack.c.l.b16 %v297
    %v1634 = vunpack.c.h.b16 %v297
    %v1635 = vunpack.c.l.b16 %v298
    %v1636 = vunpack.c.h.b16 %v298
    %v1637 = vunpack.c.l.b16 %v299
    %v1638 = vunpack.c.h.b16 %v299
    %v1639 = vunpack.c.l.b16 %v300
    %v1640 = vunpack.c.h.b16 %v300
    %v1641 = vunpack.c.l.b16 %v301
    %v1642 = vunpack.c.h.b16 %v301
    %v1643 = vunpack.c.l.b16 %v302
    %v1644 = vunpack.c.h.b16 %v302
    %v1645 = vunpack.c.l.b16 %v303
    %v1646 = vunpack.c.h.b16 %v303
    %v1647 = vunpack.c.l.b16 %v304
    %v1648 = vunpack.c.h.b16 %v304
    %v1649 = vunpack.c.l.b16 %v305
    %v1650 = vunpack.c.h.b16 %v305
    %v1651 = vunpack.c.l.b16 %v306
    %v1652 = vunpack.c.h.b16 %v306
    %v1653 = vunpack.c.l.b16 %v307
    %v1654 = vunpack.c.h.b16 %v307
    %v1655 = vunpack.c.l.b16 %v308
    %v1656 = vunpack.c.h.b16 %v308
    %v1657 = vunpack.c.l.b16 %v309
    %v1658 = vunpack.c.h.b16 %v309
    %v1659 = vunpack.c.l.b16 %v310
    %v1660 = vunpack.c.h.b16 %v310
    %v1661 = vunpack.c.l.b16 %v311
    %v1662 = vunpack.c.h.b16 %v311
    %v1663 = vunpack.c.l.b16 %v312
    %v1664 = vunpack.c.h.b16 %v312
    %v1665 = vunpack.c.l.b16 %v313
    %v1666 = vunpack.c.h.b16 %v313
    %v1667 = vunpack.c.l.b16 %v314
    %v1668 = vunpack.c.h.b16 %v314
    %v1669 = vunpack.c.l.b16 %v315
    %v1670 = vunpack.c.h.b16 %v315
    %v1671 = vunpack.c.l.b16 %v316
    %v1672 = vunpack.c.h.b16 %v316
    %v1673 = vunpack.c.l.b16 %v317
    %v1674 = vunpack.c.h.b16 %v317
    %v1675 = vunpack.c.l.b16 %v318
    %v1676 = vunpack.c.h.b16 %v318
    %v1677 = vunpack.c.l.b16 %v319
    %v1678 = vunpack.c.h.b16 %v319
    %v1679 = vunpack.c.l.b16 %v320
    %v1680 = vunpack.c.h.b16 %v320
    %v1681 = vunpack.c.l.b16 %v321
    %v1682 = vunpack.c.h.b16 %v321
    %v1683 = vunpack.c.l.b16 %v322
    %v1684 = vunpack.c.h.b16 %v322
    %v1685 = vunpack.c.l.b16 %v323
    %v1686 = vunpack.c.h.b16 %v323
    %v1687 = vunpack.c.l.b16 %v324
    %v1688 = vunpack.c.h.b16 %v324
    %v1689 = vunpack.c.l.b16 %v325
    %v1690 = vunpack.c.h.b16 %v325
    %v1691 = vunpack.c.l.b16 %v326
    %v1692 = vunpack.c.h.b16 %v326
    %v1693 = vunpack.c.l.b16 %v327
    %v1694 = vunpack.c.h.b16 %v327
    %v1695 = vunpack.c.l.b16 %v328
    %v1696 = vunpack.c.h.b16 %v328
    %v1697 = vunpack.c.l.b16 %v329
    %v1698 = vunpack.c.h.b16 %v329
    %v1699 = vunpack.c.l.b16 %v330
    %v1700 = vunpack.c.h.b16 %v330
    %v1701 = vunpack.c.l.b16 %v331
    %v1702 = vunpack.c.h.b16 %v331
    %v1703 = vunpack.c.l.b16 %v332
    %v1704 = vunpack.c.h.b16 %v332
    %v1705 = vunpack.c.l.b16 %v333
    %v1706 = vunpack.c.h.b16 %v333
    %v1707 = vunpack.c.l.b16 %v334
    %v1708 = vunpack.c.h.b16 %v334
    %v1709 = vunpack.c.l.b16 %v335
    %v1710 = vunpack.c.h.b16 %v335
    %v1711 = vunpack.c.l.b16 %v336
    %v1712 = vunpack.c.h.b16 %v336
    %v1713 = vunpack.c.l.b16 %v337
    %v1714 = vunpack.c.h.b16 %v337
    %v1715 = vunpack.c.l.b16 %v338
    %v1716 = vunpack.c.h.b16 %v338
    %v1717 = vunpack.c.l.b16 %v339
    %v1718 = vunpack.c.h.b16 %v339
    %v1719 = vunpack.c.l.b16 %v340
    %v1720 = vunpack.c.h.b16 %v340
    %v1721 = vunpack.c.l.b16 %v341
    %v1722 = vunpack.c.h.b16 %v341
    %v1723 = vunpack.c.l.b16 %v342
    %v1724 = vunpack.c.h.b16 %v342
    %v1725 = vunpack.c.l.b16 %v343
    %v1726 = vunpack.c.h.b16 %v343
    %v1727 = vunpack.c.l.b16 %v344
    %v1728 = vunpack.c.h.b16 %v344
    %v1729 = vunpack.c.l.b16 %v345
    %v1730 = vunpack.c.h.b16 %v345
    %v1731 = vunpack.c.l.b16 %v346
    %v1732 = vunpack.c.h.b16 %v346
    %v1733 = vunpack.c.l.b16 %v347
    %v1734 = vunpack.c.h.b16 %v347
    %v1735 = vunpack.c.l.b16 %v348
    %v1736 = vunpack.c.h.b16 %v348
    %v1737 = vunpack.c.l.b16 %v349
    %v1738 = vunpack.c.h.b16 %v349
    %v1739 = vunpack.c.l.b16 %v350
    %v1740 = vunpack.c.h.b16 %v350
    %v1741 = vunpack.c.l.b16 %v351
    %v1742 = vunpack.c.h.b16 %v351
    %v1743 = vunpack.c.l.b16 %v352
    %v1744 = vunpack.c.h.b16 %v352
    %v1745 = vunpack.c.l.b16 %v353
    %v1746 = vunpack.c.h.b16 %v353
    %v1747 = vunpack.c.l.b16 %v354
    %v1748 = vunpack.c.h.b16 %v354
    %v1749 = vunpack.c.l.b16 %v355
    %v1750 = vunpack.c.h.b16 %v355
    %v1751 = vunpack.c.l.b16 %v356
    %v1752 = vunpack.c.h.b16 %v356
    %v1753 = vunpack.c.l.b16 %v357
    %v1754 = vunpack.c.h.b16 %v357
    %v1755 = vunpack.c.l.b16 %v358
    %v1756 = vunpack.c.h.b16 %v358
    %v1757 = vunpack.c.l.b16 %v359
    %v1758 = vunpack.c.h.b16 %v359
    %v1759 = vunpack.c.l.b16 %v360
    %v1760 = vunpack.c.h.b16 %v360
    %v1761 = vunpack.c.l.b16 %v361
    %v1762 = vunpack.c.h.b16 %v361
    %v1763 = vunpack.c.l.b16 %v362
    %v1764 = vunpack.c.h.b16 %v362
    %v1765 = vunpack.c.l.b16 %v363
    %v1766 = vunpack.c.h.b16 %v363
    %v1767 = vunpack.c.l.b16 %v364
    %v1768 = vunpack.c.h.b16 %v364
    %v1769 = vunpack.c.l.b16 %v365
    %v1770 = vunpack.c.h.b16 %v365
    %v1771 = vunpack.c.l.b16 %v366
    %v1772 = vunpack.c.h.b16 %v366
    %v1773 = vunpack.c.l.b16 %v367
    %v1774 = vunpack.c.h.b16 %v367
    %v1775 = vunpack.c.l.b16 %v368
    %v1776 = vunpack.c.h.b16 %v368
    %v1777 = vunpack.c.l.b16 %v369
    %v1778 = vunpack.c.h.b16 %v369
    %v1779 = vunpack.c.l.b16 %v370
    %v1780 = vunpack.c.h.b16 %v370
    %v1781 = vunpack.c.l.b16 %v371
    %v1782 = vunpack.c.h.b16 %v371
    %v1783 = vunpack.c.l.b16 %v372
    %v1784 = vunpack.c.h.b16 %v372
    %v1785 = vunpack.c.l.b16 %v373
    %v1786 = vunpack.c.h.b16 %v373
    %v1787 = vunpack.c.l.b16 %v374
    %v1788 = vunpack.c.h.b16 %v374
    %v1789 = vunpack.c.l.b16 %v375
    %v1790 = vunpack.c.h.b16 %v375
    %v1791 = vunpack.c.l.b16 %v376
    %v1792 = vunpack.c.h.b16 %v376
    %v1793 = vunpack.c.l.b16 %v377
    %v1794 = vunpack.c.h.b16 %v377
    %v1795 = vunpack.c.l.b16 %v378
    %v1796 = vunpack.c.h.b16 %v378
    %v1797 = vunpack.c.l.b16 %v379
    %v1798 = vunpack.c.h.b16 %v379
    %v1799 = vunpack.c.l.b16 %v380
    %v1800 = vunpack.c.h.b16 %v380
    %v1801 = vunpack.c.l.b16 %v381
    %v1802 = vunpack.c.h.b16 %v381
    %v1803 = vunpack.c.l.b16 %v382
    %v1804 = vunpack.c.h.b16 %v382
    %v1805 = vunpack.c.l.b16 %v383
    %v1806 = vunpack.c.h.b16 %v383
    %v1807 = vunpack.c.l.b16 %v384
    %v1808 = vunpack.c.h.b16 %v384
    %v1809 = vunpack.c.l.b16 %v385
    %v1810 = vunpack.c.h.b16 %v385
    %v1811 = vunpack.c.l.b16 %v386
    %v1812 = vunpack.c.h.b16 %v386
    %v1813 = vunpack.c.l.b16 %v387
    %v1814 = vunpack.c.h.b16 %v387
    %v1815 = vunpack.c.l.b16 %v388
    %v1816 = vunpack.c.h.b16 %v388
    %v1817 = vunpack.c.l.b16 %v389
    %v1818 = vunpack.c.h.b16 %v389
    %v1819 = vunpack.c.l.b16 %v390
    %v1820 = vunpack.c.h.b16 %v390
    %v1821 = vunpack.c.l.b16 %v391
    %v1822 = vunpack.c.h.b16 %v391
    %v1823 = vunpack.c.l.b16 %v392
    %v1824 = vunpack.c.h.b16 %v392
    %v1825 = vunpack.c.l.b16 %v393
    %v1826 = vunpack.c.h.b16 %v393
    %v1827 = vunpack.c.l.b16 %v394
    %v1828 = vunpack.c.h.b16 %v394
    %v1829 = vunpack.c.l.b16 %v395
    %v1830 = vunpack.c.h.b16 %v395
    %v1831 = vunpack.c.l.b16 %v396
    %v1832 = vunpack.c.h.b16 %v396
    %v1833 = vunpack.c.l.b16 %v397
    %v1834 = vunpack.c.h.b16 %v397
    %v1835 = vunpack.c.l.b16 %v398
    %v1836 = vunpack.c.h.b16 %v398
    %v1837 = vunpack.c.l.b16 %v399
    %v1838 = vunpack.c.h.b16 %v399
    %v1839 = vunpack.c.l.b16 %v400
    %v1840 = vunpack.c.h.b16 %v400
    %v1841 = vunpack.c.l.b16 %v401
    %v1842 = vunpack.c.h.b16 %v401
    %v1843 = vunpack.c.l.b16 %v402
    %v1844 = vunpack.c.h.b16 %v402
    %v1845 = vunpack.c.l.b16 %v403
    %v1846 = vunpack.c.h.b16 %v403
    %v1847 = vunpack.c.l.b16 %v404
    %v1848 = vunpack.c.h.b16 %v404
    %v1849 = vunpack.c.l.b16 %v405
    %v1850 = vunpack.c.h.b16 %v405
    %v1851 = vunpack.c.l.b16 %v406
    %v1852 = vunpack.c.h.b16 %v406
    %v1853 = vunpack.c.l.b16 %v407
    %v1854 = vunpack.c.h.b16 %v407
    %v1855 = vunpack.c.l.b16 %v408
    %v1856 = vunpack.c.h.b16 %v408
    %v1857 = vunpack.c.l.b16 %v409
    %v1858 = vunpack.c.h.b16 %v409
    %v1859 = vunpack.c.l.b16 %v410
    %v1860 = vunpack.c.h.b16 %v410
    %v1861 = vunpack.c.l.b16 %v411
    %v1862 = vunpack.c.h.b16 %v411
    %v1863 = vunpack.c.l.b16 %v412
    %v1864 = vunpack.c.h.b16 %v412
    %v1865 = vunpack.c.l.b16 %v413
    %v1866 = vunpack.c.h.b16 %v413
    %v1867 = vunpack.c.l.b16 %v414
    %v1868 = vunpack.c.h.b16 %v414
    %v1869 = vunpack.c.l.b16 %v415
    %v1870 = vunpack.c.h.b16 %v415
    %v1871 = vunpack.c.l.b16 %v416
    %v1872 = vunpack.c.h.b16 %v416
    %v1873 = vunpack.c.l.b16 %v417
    %v1874 = vunpack.c.h.b16 %v417
    %v1875 = vunpack.c.l.b16 %v418
    %v1876 = vunpack.c.h.b16 %v418
    %v1877 = vunpack.c.l.b16 %v419
    %v1878 = vunpack.c.h.b16 %v419
    %v1879 = vunpack.c.l.b16 %v420
    %v1880 = vunpack.c.h.b16 %v420
    %v1881 = vunpack.c.l.b16 %v421
    %v1882 = vunpack.c.h.b16 %v421
    %v1883 = vunpack.c.l.b16 %v422
    %v1884 = vunpack.c.h.b16 %v422
    %v1885 = vunpack.c.l.b16 %v423
    %v1886 = vunpack.c.h.b16 %v423
    %v1887 = vunpack.c.l.b16 %v424
    %v1888 = vunpack.c.h.b16 %v424
    %v1889 = vunpack.c.l.b16 %v425
    %v1890 = vunpack.c.h.b16 %v425
    %v1891 = vunpack.c.l.b16 %v426
    %v1892 = vunpack.c.h.b16 %v426
    %v1893 = vunpack.c.l.b16 %v427
    %v1894 = vunpack.c.h.b16 %v427
    %v1895 = vunpack.c.l.b16 %v428
    %v1896 = vunpack.c.h.b16 %v428
    %v1897 = vunpack.c.l.b16 %v429
    %v1898 = vunpack.c.h.b16 %v429
    %v1899 = vunpack.c.l.b16 %v430
    %v1900 = vunpack.c.h.b16 %v430
    %v1901 = vunpack.c.l.b16 %v431
    %v1902 = vunpack.c.h.b16 %v431
    %v1903 = vunpack.c.l.b16 %v432
    %v1904 = vunpack.c.h.b16 %v432
    %v1905 = vunpack.c.l.b16 %v433
    %v1906 = vunpack.c.h.b16 %v433
    %v1907 = vunpack.c.l.b16 %v434
    %v1908 = vunpack.c.h.b16 %v434
    %v1909 = vunpack.c.l.b16 %v435
    %v1910 = vunpack.c.h.b16 %v435
    %v1911 = vunpack.c.l.b16 %v436
    %v1912 = vunpack.c.h.b16 %v436
    %v1913 = vunpack.c.l.b16 %v437
    %v1914 = vunpack.c.h.b16 %v437
    %v1915 = vunpack.c.l.b16 %v438
    %v1916 = vunpack.c.h.b16 %v438
    %v1917 = vunpack.c.l.b16 %v439
    %v1918 = vunpack.c.h.b16 %v439
    %v1919 = vunpack.c.l.b16 %v440
    %v1920 = vunpack.c.h.b16 %v440
    %v1921 = vunpack.c.l.b16 %v441
    %v1922 = vunpack.c.h.b16 %v441
    %v1923 = vunpack.c.l.b16 %v442
    %v1924 = vunpack.c.h.b16 %v442
    %v1925 = vunpack.c.l.b16 %v443
    %v1926 = vunpack.c.h.b16 %v443
    %v1927 = vunpack.c.l.b16 %v444
    %v1928 = vunpack.c.h.b16 %v444
    %v1929 = vunpack.c.l.b16 %v445
    %v1930 = vunpack.c.h.b16 %v445
    %v1931 = vunpack.c.l.b16 %v446
    %v1932 = vunpack.c.h.b16 %v446
    %v1933 = vunpack.c.l.b16 %v447
    %v1934 = vunpack.c.h.b16 %v447
    %v1935 = vunpack.c.l.b16 %v448
    %v1936 = vunpack.c.h.b16 %v448
    %v1937 = vunpack.c.l.b16 %v449
    %v1938 = vunpack.c.h.b16 %v449
    %v1939 = vunpack.c.l.b16 %v450
    %v1940 = vunpack.c.h.b16 %v450
    %v1941 = vunpack.c.l.b16 %v451
    %v1942 = vunpack.c.h.b16 %v451
    %v1943 = vunpack.c.l.b16 %v452
    %v1944 = vunpack.c.h.b16 %v452
    %v1945 = vunpack.c.l.b16 %v453
    %v1946 = vunpack.c.h.b16 %v453
    %v1947 = vunpack.c.l.b16 %v454
    %v1948 = vunpack.c.h.b16 %v454
    %v1949 = vunpack.c.l.b16 %v455
    %v1950 = vunpack.c.h.b16 %v455
    %v1951 = vunpack.c.l.b16 %v456
    %v1952 = vunpack.c.h.b16 %v456
    %v1953 = vunpack.c.l.b16 %v457
    %v1954 = vunpack.c.h.b16 %v457
    %v1955 = vunpack.c.l.b16 %v458
    %v1956 = vunpack.c.h.b16 %v458
    %v1957 = vunpack.c.l.b16 %v459
    %v1958 = vunpack.c.h.b16 %v459
    %v1959 = vunpack.c.l.b16 %v460
    %v1960 = vunpack.c.h.b16 %v460
    %v1961 = vunpack.c.l.b16 %v461
    %v1962 = vunpack.c.h.b16 %v461
    %v1963 = vunpack.c.l.b16 %v462
    %v1964 = vunpack.c.h.b16 %v462
    %v1965 = vunpack.c.l.b16 %v463
    %v1966 = vunpack.c.h.b16 %v463
    %v1967 = vunpack.c.l.b16 %v464
    %v1968 = vunpack.c.h.b16 %v464
    %v1969 = vunpack.c.l.b16 %v465
    %v1970 = vunpack.c.h.b16 %v465
    %v1971 = vunpack.c.l.b16 %v466
    %v1972 = vunpack.c.h.b16 %v466
    %v1973 = vunpack.c.l.b16 %v467
    %v1974 = vunpack.c.h.b16 %v467
    %v1975 = vunpack.c.l.b16 %v468
    %v1976 = vunpack.c.h.b16 %v468
    %v1977 = vunpack.c.l.b16 %v469
    %v1978 = vunpack.c.h.b16 %v469
    %v1979 = vunpack.c.l.b16 %v470
    %v1980 = vunpack.c.h.b16 %v470
    %v1981 = vunpack.c.l.b16 %v471
    %v1982 = vunpack.c.h.b16 %v471
    %v1983 = vunpack.c.l.b16 %v472
    %v1984 = vunpack.c.h.b16 %v472
    %v1985 = vunpack.c.l.b16 %v473
    %v1986 = vunpack.c.h.b16 %v473
    %v1987 = vunpack.c.l.b16 %v474
    %v1988 = vunpack.c.h.b16 %v474
    %v1989 = vunpack.c.l.b16 %v475
    %v1990 = vunpack.c.h.b16 %v475
    %v1991 = vunpack.c.l.b16 %v476
    %v1992 = vunpack.c.h.b16 %v476
    %v1993 = vunpack.c.l.b16 %v477
    %v1994 = vunpack.c.h.b16 %v477
    %v1995 = vunpack.c.l.b16 %v478
    %v1996 = vunpack.c.h.b16 %v478
    %v1997 = vunpack.c.l.b16 %v479
    %v1998 = vunpack.c.h.b16 %v479
    %v1999 = vunpack.c.l.b16 %v480
    %v2000 = vunpack.c.h.b16 %v480
    %v2001 = vunpack.c.l.b16 %v481
    %v2002 = vunpack.c.h.b16 %v481
    %v2003 = vunpack.c.l.b16 %v482
    %v2004 = vunpack.c.h.b16 %v482
    %v2005 = vunpack.c.l.b16 %v483
    %v2006 = vunpack.c.h.b16 %v483
    %v2007 = vunpack.c.l.b16 %v484
    %v2008 = vunpack.c.h.b16 %v484
    %v2009 = vunpack.c.l.b16 %v485
    %v2010 = vunpack.c.h.b16 %v485
    %v2011 = vunpack.c.l.b16 %v486
    %v2012 = vunpack.c.h.b16 %v486
    %v2013 = vunpack.c.l.b16 %v487
    %v2014 = vunpack.c.h.b16 %v487
    %v2015 = vunpack.c.l.b16 %v488
    %v2016 = vunpack.c.h.b16 %v488
    %v2017 = vunpack.c.l.b16 %v489
    %v2018 = vunpack.c.h.b16 %v489
    %v2019 = vunpack.c.l.b16 %v490
    %v2020 = vunpack.c.h.b16 %v490
    %v2021 = vunpack.c.l.b16 %v491
    %v2022 = vunpack.c.h.b16 %v491
    %v2023 = vunpack.c.l.b16 %v492
    %v2024 = vunpack.c.h.b16 %v492
    %v2025 = vunpack.c.l.b16 %v493
    %v2026 = vunpack.c.h.b16 %v493
    %v2027 = vunpack.c.l.b16 %v494
    %v2028 = vunpack.c.h.b16 %v494
    %v2029 = vunpack.c.l.b16 %v495
    %v2030 = vunpack.c.h.b16 %v495
    %v2031 = vunpack.c.l.b16 %v496
    %v2032 = vunpack.c.h.b16 %v496
    %v2033 = vunpack.c.l.b16 %v497
    %v2034 = vunpack.c.h.b16 %v497
    %v2035 = vunpack.c.l.b16 %v498
    %v2036 = vunpack.c.h.b16 %v498
    %v2037 = vunpack.c.l.b16 %v499
    %v2038 = vunpack.c.h.b16 %v499
    %v2039 = vunpack.c.l.b16 %v500
    %v2040 = vunpack.c.h.b16 %v500
    %v2041 = vunpack.c.l.b16 %v501
    %v2042 = vunpack.c.h.b16 %v501
    %v2043 = vunpack.c.l.b16 %v502
    %v2044 = vunpack.c.h.b16 %v502
    %v2045 = vunpack.c.l.b16 %v503
    %v2046 = vunpack.c.h.b16 %v503
    %v2047 = vunpack.c.l.b16 %v504
    %v2048 = vunpack.c.h.b16 %v504
    %v2049 = vunpack.c.l.b16 %v505
    %v2050 = vunpack.c.h.b16 %v505
    %v2051 = vunpack.c.l.b16 %v506
    %v2052 = vunpack.c.h.b16 %v506
    %v2053 = vunpack.c.l.b16 %v507
    %v2054 = vunpack.c.h.b16 %v507
    %v2055 = vunpack.c.l.b16 %v508
    %v2056 = vunpack.c.h.b16 %v508
    %v2057 = vunpack.c.l.b16 %v509
    %v2058 = vunpack.c.h.b16 %v509
    %v2059 = vunpack.c.l.b16 %v510
    %v2060 = vunpack.c.h.b16 %v510
    %v2061 = vunpack.c.l.b16 %v511
    %v2062 = vunpack.c.h.b16 %v511
    %v2063 = vunpack.c.l.b16 %v512
    %v2064 = vunpack.c.h.b16 %v512
    %v2065 = vunpack.c.l.b16 %v513
    %v2066 = vunpack.c.h.b16 %v513
    %v2067 = vunpack.c.l.b16 %v514
    %v2068 = vunpack.c.h.b16 %v514
    %v2069 = vunpack.c.l.b16 %v515
    %v2070 = vunpack.c.h.b16 %v515
    %v2071 = vunpack.c.l.b16 %v516
    %v2072 = vunpack.c.h.b16 %v516
    %v2073 = vunpack.c.l.b16 %v517
    %v2074 = vunpack.c.h.b16 %v517
    %v2075 = vunpack.c.l.b16 %v518
    %v2076 = vunpack.c.h.b16 %v518
    %v2077 = vunpack.c.l.b16 %v519
    %v2078 = vunpack.c.h.b16 %v519
    %v2079 = vunpack.c.l.b16 %v520
    %v2080 = vunpack.c.h.b16 %v520
    %v2081 = vunpack.c.l.b16 %v521
    %v2082 = vunpack.c.h.b16 %v521
    %v2083 = vunpack.c.l.b16 %v522
    %v2084 = vunpack.c.h.b16 %v522
    %v2085 = vunpack.c.l.b16 %v523
    %v2086 = vunpack.c.h.b16 %v523
    %v2087 = vunpack.c.l.b16 %v524
    %v2088 = vunpack.c.h.b16 %v524
    %v2089 = vunpack.c.l.b16 %v525
    %v2090 = vunpack.c.h.b16 %v525
    %v2091 = vunpack.c.l.b16 %v526
    %v2092 = vunpack.c.h.b16 %v526
    %v2093 = vunpack.c.l.b16 %v527
    %v2094 = vunpack.c.h.b16 %v527
    %v2095 = vunpack.c.l.b16 %v528
    %v2096 = vunpack.c.h.b16 %v528
    %v2097 = vunpack.c.l.b16 %v529
    %v2098 = vunpack.c.h.b16 %v529
    %v2099 = vunpack.c.l.b16 %v530
    %v2100 = vunpack.c.h.b16 %v530
    %v2101 = vunpack.c.l.b16 %v531
    %v2102 = vunpack.c.h.b16 %v531
    %v2103 = vunpack.c.l.b16 %v532
    %v2104 = vunpack.c.h.b16 %v532
    %v2105 = vunpack.c.l.b16 %v533
    %v2106 = vunpack.c.h.b16 %v533
    %v2107 = vunpack.c.l.b16 %v534
    %v2108 = vunpack.c.h.b16 %v534
    %v2109 = vunpack.c.l.b16 %v535
    %v2110 = vunpack.c.h.b16 %v535
    %v2111 = vunpack.c.l.b16 %v536
    %v2112 = vunpack.c.h.b16 %v536
    %v2113 = vunpack.c.l.b16 %v537
    %v2114 = vunpack.c.h.b16 %v537
    %v2115 = vunpack.c.l.b16 %v538
    %v2116 = vunpack.c.h.b16 %v538
    %v2117 = vunpack.c.l.b16 %v539
    %v2118 = vunpack.c.h.b16 %v539
    %v2119 = vunpack.c.l.b16 %v540
    %v2120 = vunpack.c.h.b16 %v540
    %v2121 = vunpack.c.l.b16 %v541
    %v2122 = vunpack.c.h.b16 %v541
    %v2123 = vunpack.c.l.b16 %v542
    %v2124 = vunpack.c.h.b16 %v542
    %v2125 = vunpack.c.l.b16 %v543
    %v2126 = vunpack.c.h.b16 %v543
    %v2127 = vunpack.c.l.b16 %v544
    %v2128 = vunpack.c.h.b16 %v544
    %v2129 = vunpack.c.l.b16 %v545
    %v2130 = vunpack.c.h.b16 %v545
    %v2131 = vunpack.c.l.b16 %v546
    %v2132 = vunpack.c.h.b16 %v546
    %v2133 = vunpack.c.l.b16 %v547
    %v2134 = vunpack.c.h.b16 %v547
    %v2135 = vunpack.c.l.b16 %v548
    %v2136 = vunpack.c.h.b16 %v548
    %v2137 = vunpack.c.l.b16 %v549
    %v2138 = vunpack.c.h.b16 %v549
    %v2139 = vunpack.c.l.b16 %v550
    %v2140 = vunpack.c.h.b16 %v550
    %v2141 = vunpack.c.l.b16 %v551
    %v2142 = vunpack.c.h.b16 %v551
    %v2143 = vunpack.c.l.b16 %v552
    %v2144 = vunpack.c.h.b16 %v552
    %v2145 = vunpack.c.l.b16 %v553
    %v2146 = vunpack.c.h.b16 %v553
    %v2147 = vunpack.c.l.b16 %v554
    %v2148 = vunpack.c.h.b16 %v554
    %v2149 = vunpack.c.l.b16 %v555
    %v2150 = vunpack.c.h.b16 %v555
    %v2151 = vunpack.c.l.b16 %v556
    %v2152 = vunpack.c.h.b16 %v556
    %v2153 = vunpack.c.l.b16 %v557
    %v2154 = vunpack.c.h.b16 %v557
    %v2155 = vunpack.c.l.b16 %v558
    %v2156 = vunpack.c.h.b16 %v558
    %v2157 = vunpack.c.l.b16 %v559
    %v2158 = vunpack.c.h.b16 %v559
    %v2159 = vunpack.c.l.b16 %v560
    %v2160 = vunpack.c.h.b16 %v560
    %v2161 = vunpack.c.l.b16 %v561
    %v2162 = vunpack.c.h.b16 %v561
    %v2163 = vunpack.c.l.b16 %v562
    %v2164 = vunpack.c.h.b16 %v562
    %v2165 = vunpack.c.l.b16 %v563
    %v2166 = vunpack.c.h.b16 %v563
    %v2167 = vunpack.c.l.b16 %v564
    %v2168 = vunpack.c.h.b16 %v564
    %v2169 = vunpack.c.l.b16 %v565
    %v2170 = vunpack.c.h.b16 %v565
    %v2171 = vunpack.c.l.b16 %v566
    %v2172 = vunpack.c.h.b16 %v566
    %v2173 = vunpack.c.l.b16 %v567
    %v2174 = vunpack.c.h.b16 %v567
    %v2175 = vunpack.c.l.b16 %v568
    %v2176 = vunpack.c.h.b16 %v568
    %v2177 = vunpack.c.l.b16 %v569
    %v2178 = vunpack.c.h.b16 %v569
    %v2179 = vunpack.c.l.b16 %v570
    %v2180 = vunpack.c.h.b16 %v570
    %v2181 = vunpack.c.l.b16 %v571
    %v2182 = vunpack.c.h.b16 %v571
    %v2183 = vunpack.c.l.b16 %v572
    %v2184 = vunpack.c.h.b16 %v572
    %v2185 = vunpack.c.l.b16 %v573
    %v2186 = vunpack.c.h.b16 %v573
    %v2187 = vunpack.c.l.b16 %v574
    %v2188 = vunpack.c.h.b16 %v574
    %v2189 = vunpack.c.l.b16 %v575
    %v2190 = vunpack.c.h.b16 %v575
    %v2191 = vunpack.c.l.b16 %v576
    %v2192 = vunpack.c.h.b16 %v576
    %v2193 = vunpack.c.l.b16 %v577
    %v2194 = vunpack.c.h.b16 %v577
    %v2195 = vunpack.c.l.b16 %v578
    %v2196 = vunpack.c.h.b16 %v578
    %v2197 = vunpack.c.l.b16 %v579
    %v2198 = vunpack.c.h.b16 %v579
    %v2199 = vunpack.c.l.b16 %v580
    %v2200 = vunpack.c.h.b16 %v580
    %v2201 = vunpack.c.l.b16 %v581
    %v2202 = vunpack.c.h.b16 %v581
    %v2203 = vunpack.c.l.b16 %v582
    %v2204 = vunpack.c.h.b16 %v582
    %v2205 = vunpack.c.l.b16 %v583
    %v2206 = vunpack.c.h.b16 %v583
    %v2207 = vunpack.c.l.b16 %v584
    %v2208 = vunpack.c.h.b16 %v584
    %v2209 = vunpack.c.l.b16 %v585
    %v2210 = vunpack.c.h.b16 %v585
    %v2211 = vunpack.c.l.b16 %v586
    %v2212 = vunpack.c.h.b16 %v586
    %v2213 = vunpack.c.l.b16 %v587
    %v2214 = vunpack.c.h.b16 %v587
    %v2215 = vunpack.c.l.b16 %v588
    %v2216 = vunpack.c.h.b16 %v588
    %v2217 = vunpack.c.l.b16 %v589
    %v2218 = vunpack.c.h.b16 %v589
    %v2219 = vunpack.c.l.b16 %v590
    %v2220 = vunpack.c.h.b16 %v590
    %v2221 = vunpack.c.l.b16 %v591
    %v2222 = vunpack.c.h.b16 %v591
    %v2223 = vunpack.c.l.b16 %v592
    %v2224 = vunpack.c.h.b16 %v592
    %v2225 = vunpack.c.l.b16 %v593
    %v2226 = vunpack.c.h.b16 %v593
    %v2227 = vunpack.c.l.b16 %v594
    %v2228 = vunpack.c.h.b16 %v594
    %v2229 = vunpack.c.l.b16 %v595
    %v2230 = vunpack.c.h.b16 %v595
    %v2231 = vunpack.c.l.b16 %v596
    %v2232 = vunpack.c.h.b16 %v596
    %v2233 = vunpack.c.l.b16 %v597
    %v2234 = vunpack.c.h.b16 %v597
    %v2235 = vunpack.c.l.b16 %v598
    %v2236 = vunpack.c.h.b16 %v598
    %v2237 = vunpack.c.l.b16 %v599
    %v2238 = vunpack.c.h.b16 %v599
    %v2239 = vunpack.c.l.b16 %v600
    %v2240 = vunpack.c.h.b16 %v600
    %v2241 = vpack.c.b16 %v1233, %v1217
    %v2242 = vpack.c.b16 %v1234, %v1218
    %v2243 = vpack.c.b16 %v1235, %v1219
    %v2244 = vpack.c.b16 %v1236, %v1220
    %v2245 = vpack.c.b16 %v1237, %v1221
    %v2246 = vpack.c.b16 %v1238, %v1222
    %v2247 = vpack.c.b16 %v1239, %v1223
    %v2248 = vpack.c.b16 %v1240, %v1224
    %v2249 = vpack.c.b16 %v1241, %v1225
    %v2250 = vpack.c.b16 %v1242, %v1226
    %v2251 = vpack.c.b16 %v1243, %v1227
    %v2252 = vpack.c.b16 %v1244, %v1228
    %v2253 = vpack.c.b16 %v1245, %v1229
    %v2254 = vpack.c.b16 %v1246, %v1230
    %v2255 = vpack.c.b16 %v1247, %v1231
    %v2256 = vpack.c.b16 %v1248, %v1232
    %v2257 = vpack.c.b16 %v1265, %v1249
    %v2258 = vpack.c.b16 %v1266, %v1250
    %v2259 = vpack.c.b16 %v1267, %v1251
    %v2260 = vpack.c.b16 %v1268, %v1252
    %v2261 = vpack.c.b16 %v1269, %v1253
    %v2262 = vpack.c.b16 %v1270, %v1254
    %v2263 = vpack.c.b16 %v1271, %v1255
    %v2264 = vpack.c.b16 %v1272, %v1256
    %v2265 = vpack.c.b16 %v1273, %v1257
    %v2266 = vpack.c.b16 %v1274, %v1258
    %v2267 = vpack.c.b16 %v1275, %v1259
    %v2268 = vpack.c.b16 %v1276, %v1260
    %v2269 = vpack.c.b16 %v1277, %v1261
    %v2270 = vpack.c.b16 %v1278, %v1262
    %v2271 = vpack.c.b16 %v1279, %v1263
    %v2272 = vpack.c.b16 %v1280, %v1264
    %v2273 = vpack.c.b16 %v1297, %v1281
    %v2274 = vpack.c.b16 %v1298, %v1282
    %v2275 = vpack.c.b16 %v1299, %v1283
    %v2276 = vpack.c.b16 %v1300, %v1284
    %v2277 = vpack.c.b16 %v1301, %v1285
    %v2278 = vpack.c.b16 %v1302, %v1286
    %v2279 = vpack.c.b16 %v1303, %v1287
    %v2280 = vpack.c.b16 %v1304, %v1288
    %v2281 = vpack.c.b16 %v1305, %v1289
    %v2282 = vpack.c.b16 %v1306, %v1290
    %v2283 = vpack.c.b16 %v1307, %v1291
    %v2284 = vpack.c.b16 %v1308, %v1292
    %v2285 = vpack.c.b16 %v1309, %v1293
    %v2286 = vpack.c.b16 %v1310, %v1294
    %v2287 = vpack.c.b16 %v1311, %v1295
    %v2288 = vpack.c.b16 %v1312, %v1296
    %v2289 = vpack.c.b16 %v1329, %v1313
    %v2290 = vpack.c.b16 %v1330, %v1314
    %v2291 = vpack.c.b16 %v1331, %v1315
    %v2292 = vpack.c.b16 %v1332, %v1316
    %v2293 = vpack.c.b16 %v1333, %v1317
    %v2294 = vpack.c.b16 %v1334, %v1318
    %v2295 = vpack.c.b16 %v1335, %v1319
    %v2296 = vpack.c.b16 %v1336, %v1320
    %v2297 = vpack.c.b16 %v1337, %v1321
    %v2298 = vpack.c.b16 %v1338, %v1322
    %v2299 = vpack.c.b16 %v1339, %v1323
    %v2300 = vpack.c.b16 %v1340, %v1324
    %v2301 = vpack.c.b16 %v1341, %v1325
    %v2302 = vpack.c.b16 %v1342, %v1326
    %v2303 = vpack.c.b16 %v1343, %v1327
    %v2304 = vpack.c.b16 %v1344, %v1328
    %v2305 = vpack.c.b16 %v1361, %v1345
    %v2306 = vpack.c.b16 %v1362, %v1346
    %v2307 = vpack.c.b16 %v1363, %v1347
    %v2308 = vpack.c.b16 %v1364, %v1348
    %v2309 = vpack.c.b16 %v1365, %v1349
    %v2310 = vpack.c.b16 %v1366, %v1350
    %v2311 = vpack.c.b16 %v1367, %v1351
    %v2312 = vpack.c.b16 %v1368, %v1352
    %v2313 = vpack.c.b16 %v1369, %v1353
    %v2314 = vpack.c.b16 %v1370, %v1354
    %v2315 = vpack.c.b16 %v1371, %v1355
    %v2316 = vpack.c.b16 %v1372, %v1356
    %v2317 = vpack.c.b16 %v1373, %v1357
    %v2318 = vpack.c.b16 %v1374, %v1358
    %v2319 = vpack.c.b16 %v1375, %v1359
    %v2320 = vpack.c.b16 %v1376, %v1360
    %v2321 = vpack.c.b16 %v1393, %v1377
    %v2322 = vpack.c.b16 %v1394, %v1378
    %v2323 = vpack.c.b16 %v1395, %v1379
    %v2324 = vpack.c.b16 %v1396, %v1380
    %v2325 = vpack.c.b16 %v1397, %v1381
    %v2326 = vpack.c.b16 %v1398, %v1382
    %v2327 = vpack.c.b16 %v1399, %v1383
    %v2328 = vpack.c.b16 %v1400, %v1384
    %v2329 = vpack.c.b16 %v1401, %v1385
    %v2330 = vpack.c.b16 %v1402, %v1386
    %v2331 = vpack.c.b16 %v1403, %v1387
    %v2332 = vpack.c.b16 %v1404, %v1388
    %v2333 = vpack.c.b16 %v1405, %v1389
    %v2334 = vpack.c.b16 %v1406, %v1390
    %v2335 = vpack.c.b16 %v1407, %v1391
    %v2336 = vpack.c.b16 %v1408, %v1392
    %v2337 = vpack.c.b16 %v1425, %v1409
    %v2338 = vpack.c.b16 %v1426, %v1410
    %v2339 = vpack.c.b16 %v1427, %v1411
    %v2340 = vpack.c.b16 %v1428, %v1412
    %v2341 = vpack.c.b16 %v1429, %v1413
    %v2342 = vpack.c.b16 %v1430, %v1414
    %v2343 = vpack.c.b16 %v1431, %v1415
    %v2344 = vpack.c.b16 %v1432, %v1416
    %v2345 = vpack.c.b16 %v1433, %v1417
    %v2346 = vpack.c.b16 %v1434, %v1418
    %v2347 = vpack.c.b16 %v1435, %v1419
    %v2348 = vpack.c.b16 %v1436, %v1420
    %v2349 = vpack.c.b16 %v1437, %v1421
    %v2350 = vpack.c.b16 %v1438, %v1422
    %v2351 = vpack.c.b16 %v1439, %v1423
    %v2352 = vpack.c.b16 %v1440, %v1424
    %v2353 = vpack.c.b16 %v1457, %v1441
    %v2354 = vpack.c.b16 %v1458, %v1442
    %v2355 = vpack.c.b16 %v1459, %v1443
    %v2356 = vpack.c.b16 %v1460, %v1444
    %v2357 = vpack.c.b16 %v1461, %v1445
    %v2358 = vpack.c.b16 %v1462, %v1446
    %v2359 = vpack.c.b16 %v1463, %v1447
    %v2360 = vpack.c.b16 %v1464, %v1448
    %v2361 = vpack.c.b16 %v1465, %v1449
    %v2362 = vpack.c.b16 %v1466, %v1450
    %v2363 = vpack.c.b16 %v1467, %v1451
    %v2364 = vpack.c.b16 %v1468, %v1452
    %v2365 = vpack.c.b16 %v1469, %v1453
    %v2366 = vpack.c.b16 %v1470, %v1454
    %v2367 = vpack.c.b16 %v1471, %v1455
    %v2368 = vpack.c.b16 %v1472, %v1456
    %v2369 = vpack.c.b16 %v1489, %v1473
    %v2370 = vpack.c.b16 %v1490, %v1474
    %v2371 = vpack.c.b16 %v1491, %v1475
    %v2372 = vpack.c.b16 %v1492, %v1476
    %v2373 = vpack.c.b16 %v1493, %v1477
    %v2374 = vpack.c.b16 %v1494, %v1478
    %v2375 = vpack.c.b16 %v1495, %v1479
    %v2376 = vpack.c.b16 %v1496, %v1480
    %v2377 = vpack.c.b16 %v1497, %v1481
    %v2378 = vpack.c.b16 %v1498, %v1482
    %v2379 = vpack.c.b16 %v1499, %v1483
    %v2380 = vpack.c.b16 %v1500, %v1484
    %v2381 = vpack.c.b16 %v1501, %v1485
    %v2382 = vpack.c.b16 %v1502, %v1486
    %v2383 = vpack.c.b16 %v1503, %v1487
    %v2384 = vpack.c.b16 %v1504, %v1488
    %v2385 = vpack.c.b16 %v1521, %v1505
    %v2386 = vpack.c.b16 %v1522, %v1506
    %v2387 = vpack.c.b16 %v1523, %v1507
    %v2388 = vpack.c.b16 %v1524, %v1508
    %v2389 = vpack.c.b16 %v1525, %v1509
    %v2390 = vpack.c.b16 %v1526, %v1510
    %v2391 = vpack.c.b16 %v1527, %v1511
    %v2392 = vpack.c.b16 %v1528, %v1512
    %v2393 = vpack.c.b16 %v1529, %v1513
    %v2394 = vpack.c.b16 %v1530, %v1514
    %v2395 = vpack.c.b16 %v1531, %v1515
    %v2396 = vpack.c.b16 %v1532, %v1516
    %v2397 = vpack.c.b16 %v1533, %v1517
    %v2398 = vpack.c.b16 %v1534, %v1518
    %v2399 = vpack.c.b16 %v1535, %v1519
    %v2400 = vpack.c.b16 %v1536, %v1520
    %v2401 = vpack.c.b16 %v1553, %v1537
    %v2402 = vpack.c.b16 %v1554, %v1538
    %v2403 = vpack.c.b16 %v1555, %v1539
    %v2404 = vpack.c.b16 %v1556, %v1540
    %v2405 = vpack.c.b16 %v1557, %v1541
    %v2406 = vpack.c.b16 %v1558, %v1542
    %v2407 = vpack.c.b16 %v1559, %v1543
    %v2408 = vpack.c.b16 %v1560, %v1544
    %v2409 = vpack.c.b16 %v1561, %v1545
    %v2410 = vpack.c.b16 %v1562, %v1546
    %v2411 = vpack.c.b16 %v1563, %v1547
    %v2412 = vpack.c.b16 %v1564, %v1548
    %v2413 = vpack.c.b16 %v1565, %v1549
    %v2414 = vpack.c.b16 %v1566, %v1550
    %v2415 = vpack.c.b16 %v1567, %v1551
    %v2416 = vpack.c.b16 %v1568, %v1552
    %v2417 = vpack.c.b16 %v1585, %v1569
    %v2418 = vpack.c.b16 %v1586, %v1570
    %v2419 = vpack.c.b16 %v1587, %v1571
    %v2420 = vpack.c.b16 %v1588, %v1572
    %v2421 = vpack.c.b16 %v1589, %v1573
    %v2422 = vpack.c.b16 %v1590, %v1574
    %v2423 = vpack.c.b16 %v1591, %v1575
    %v2424 = vpack.c.b16 %v1592, %v1576
    %v2425 = vpack.c.b16 %v1593, %v1577
    %v2426 = vpack.c.b16 %v1594, %v1578
    %v2427 = vpack.c.b16 %v1595, %v1579
    %v2428 = vpack.c.b16 %v1596, %v1580
    %v2429 = vpack.c.b16 %v1597, %v1581
    %v2430 = vpack.c.b16 %v1598, %v1582
    %v2431 = vpack.c.b16 %v1599, %v1583
    %v2432 = vpack.c.b16 %v1600, %v1584
    %v2433 = vpack.c.b16 %v1617, %v1601
    %v2434 = vpack.c.b16 %v1618, %v1602
    %v2435 = vpack.c.b16 %v1619, %v1603
    %v2436 = vpack.c.b16 %v1620, %v1604
    %v2437 = vpack.c.b16 %v1621, %v1605
    %v2438 = vpack.c.b16 %v1622, %v1606
    %v2439 = vpack.c.b16 %v1623, %v1607
    %v2440 = vpack.c.b16 %v1624, %v1608
    %v2441 = vpack.c.b16 %v1625, %v1609
    %v2442 = vpack.c.b16 %v1626, %v1610
    %v2443 = vpack.c.b16 %v1627, %v1611
    %v2444 = vpack.c.b16 %v1628, %v1612
    %v2445 = vpack.c.b16 %v1629, %v1613
    %v2446 = vpack.c.b16 %v1630, %v1614
    %v2447 = vpack.c.b16 %v1631, %v1615
    %v2448 = vpack.c.b16 %v1632, %v1616
    %v2449 = vpack.c.b16 %v1649, %v1633
    %v2450 = vpack.c.b16 %v1650, %v1634
    %v2451 = vpack.c.b16 %v1651, %v1635
    %v2452 = vpack.c.b16 %v1652, %v1636
    %v2453 = vpack.c.b16 %v1653, %v1637
    %v2454 = vpack.c.b16 %v1654, %v1638
    %v2455 = vpack.c.b16 %v1655, %v1639
    %v2456 = vpack.c.b16 %v1656, %v1640
    %v2457 = vpack.c.b16 %v1657, %v1641
    %v2458 = vpack.c.b16 %v1658, %v1642
    %v2459 = vpack.c.b16 %v1659, %v1643
    %v2460 = vpack.c.b16 %v1660, %v1644
    %v2461 = vpack.c.b16 %v1661, %v1645
    %v2462 = vpack.c.b16 %v1662, %v1646
    %v2463 = vpack.c.b16 %v1663, %v1647
    %v2464 = vpack.c.b16 %v1664, %v1648
    %v2465 = vpack.c.b16 %v1681, %v1665
    %v2466 = vpack.c.b16 %v1682, %v1666
    %v2467 = vpack.c.b16 %v1683, %v1667
    %v2468 = vpack.c.b16 %v1684, %v1668
    %v2469 = vpack.c.b16 %v1685, %v1669
    %v2470 = vpack.c.b16 %v1686, %v1670
    %v2471 = vpack.c.b16 %v1687, %v1671
    %v2472 = vpack.c.b16 %v1688, %v1672
    %v2473 = vpack.c.b16 %v1689, %v1673
    %v2474 = vpack.c.b16 %v1690, %v1674
    %v2475 = vpack.c.b16 %v1691, %v1675
    %v2476 = vpack.c.b16 %v1692, %v1676
    %v2477 = vpack.c.b16 %v1693, %v1677
    %v2478 = vpack.c.b16 %v1694, %v1678
    %v2479 = vpack.c.b16 %v1695, %v1679
    %v2480 = vpack.c.b16 %v1696, %v1680
    %v2481 = vpack.c.b16 %v1713, %v1697
    %v2482 = vpack.c.b16 %v1714, %v1698
    %v2483 = vpack.c.b16 %v1715, %v1699
    %v2484 = vpack.c.b16 %v1716, %v1700
    %v2485 = vpack.c.b16 %v1717, %v1701
    %v2486 = vpack.c.b16 %v1718, %v1702
    %v2487 = vpack.c.b16 %v1719, %v1703
    %v2488 = vpack.c.b16 %v1720, %v1704
    %v2489 = vpack.c.b16 %v1721, %v1705
    %v2490 = vpack.c.b16 %v1722, %v1706
    %v2491 = vpack.c.b16 %v1723, %v1707
    %v2492 = vpack.c.b16 %v1724, %v1708
    %v2493 = vpack.c.b16 %v1725, %v1709
    %v2494 = vpack.c.b16 %v1726, %v1710
    %v2495 = vpack.c.b16 %v1727, %v1711
    %v2496 = vpack.c.b16 %v1728, %v1712
    %v2497 = vpack.c.b16 %v1745, %v1729
    %v2498 = vpack.c.b16 %v1746, %v1730
    %v2499 = vpack.c.b16 %v1747, %v1731
    %v2500 = vpack.c.b16 %v1748, %v1732
    %v2501 = vpack.c.b16 %v1749, %v1733
    %v2502 = vpack.c.b16 %v1750, %v1734
    %v2503 = vpack.c.b16 %v1751, %v1735
    %v2504 = vpack.c.b16 %v1752, %v1736
    %v2505 = vpack.c.b16 %v1753, %v1737
    %v2506 = vpack.c.b16 %v1754, %v1738
    %v2507 = vpack.c.b16 %v1755, %v1739
    %v2508 = vpack.c.b16 %v1756, %v1740
    %v2509 = vpack.c.b16 %v1757, %v1741
    %v2510 = vpack.c.b16 %v1758, %v1742
    %v2511 = vpack.c.b16 %v1759, %v1743
    %v2512 = vpack.c.b16 %v1760, %v1744
    %v2513 = vpack.c.b16 %v1777, %v1761
    %v2514 = vpack.c.b16 %v1778, %v1762
    %v2515 = vpack.c.b16 %v1779, %v1763
    %v2516 = vpack.c.b16 %v1780, %v1764
    %v2517 = vpack.c.b16 %v1781, %v1765
    %v2518 = vpack.c.b16 %v1782, %v1766
    %v2519 = vpack.c.b16 %v1783, %v1767
    %v2520 = vpack.c.b16 %v1784, %v1768
    %v2521 = vpack.c.b16 %v1785, %v1769
    %v2522 = vpack.c.b16 %v1786, %v1770
    %v2523 = vpack.c.b16 %v1787, %v1771
    %v2524 = vpack.c.b16 %v1788, %v1772
    %v2525 = vpack.c.b16 %v1789, %v1773
    %v2526 = vpack.c.b16 %v1790, %v1774
    %v2527 = vpack.c.b16 %v1791, %v1775
    %v2528 = vpack.c.b16 %v1792, %v1776
    %v2529 = vpack.c.b16 %v1809, %v1793
    %v2530 = vpack.c.b16 %v1810, %v1794
    %v2531 = vpack.c.b16 %v1811, %v1795
    %v2532 = vpack.c.b16 %v1812, %v1796
    %v2533 = vpack.c.b16 %v1813, %v1797
    %v2534 = vpack.c.b16 %v1814, %v1798
    %v2535 = vpack.c.b16 %v1815, %v1799
    %v2536 = vpack.c.b16 %v1816, %v1800
    %v2537 = vpack.c.b16 %v1817, %v1801
    %v2538 = vpack.c.b16 %v1818, %v1802
    %v2539 = vpack.c.b16 %v1819, %v1803
    %v2540 = vpack.c.b16 %v1820, %v1804
    %v2541 = vpack.c.b16 %v1821, %v1805
    %v2542 = vpack.c.b16 %v1822, %v1806
    %v2543 = vpack.c.b16 %v1823, %v1807
    %v2544 = vpack.c.b16 %v1824, %v1808
    %v2545 = vpack.c.b16 %v1841, %v1825
    %v2546 = vpack.c.b16 %v1842, %v1826
    %v2547 = vpack.c.b16 %v1843, %v1827
    %v2548 = vpack.c.b16 %v1844, %v1828
    %v2549 = vpack.c.b16 %v1845, %v1829
    %v2550 = vpack.c.b16 %v1846, %v1830
    %v2551 = vpack.c.b16 %v1847, %v1831
    %v2552 = vpack.c.b16 %v1848, %v1832
    %v2553 = vpack.c.b16 %v1849, %v1833
    %v2554 = vpack.c.b16 %v1850, %v1834
    %v2555 = vpack.c.b16 %v1851, %v1835
    %v2556 = vpack.c.b16 %v1852, %v1836
    %v2557 = vpack.c.b16 %v1853, %v1837
    %v2558 = vpack.c.b16 %v1854, %v1838
    %v2559 = vpack.c.b16 %v1855, %v1839
    %v2560 = vpack.c.b16 %v1856, %v1840
    %v2561 = vpack.c.b16 %v1873, %v1857
    %v2562 = vpack.c.b16 %v1874, %v1858
    %v2563 = vpack.c.b16 %v1875, %v1859
    %v2564 = vpack.c.b16 %v1876, %v1860
    %v2565 = vpack.c.b16 %v1877, %v1861
    %v2566 = vpack.c.b16 %v1878, %v1862
    %v2567 = vpack.c.b16 %v1879, %v1863
    %v2568 = vpack.c.b16 %v1880, %v1864
    %v2569 = vpack.c.b16 %v1881, %v1865
    %v2570 = vpack.c.b16 %v1882, %v1866
    %v2571 = vpack.c.b16 %v1883, %v1867
    %v2572 = vpack.c.b16 %v1884, %v1868
    %v2573 = vpack.c.b16 %v1885, %v1869
    %v2574 = vpack.c.b16 %v1886, %v1870
    %v2575 = vpack.c.b16 %v1887, %v1871
    %v2576 = vpack.c.b16 %v1888, %v1872
    %v2577 = vpack.c.b16 %v1905, %v1889
    %v2578 = vpack.c.b16 %v1906, %v1890
    %v2579 = vpack.c.b16 %v1907, %v1891
    %v2580 = vpack.c.b16 %v1908, %v1892
    %v2581 = vpack.c.b16 %v1909, %v1893
    %v2582 = vpack.c.b16 %v1910, %v1894
    %v2583 = vpack.c.b16 %v1911, %v1895
    %v2584 = vpack.c.b16 %v1912, %v1896
    %v2585 = vpack.c.b16 %v1913, %v1897
    %v2586 = vpack.c.b16 %v1914, %v1898
    %v2587 = vpack.c.b16 %v1915, %v1899
    %v2588 = vpack.c.b16 %v1916, %v1900
    %v2589 = vpack.c.b16 %v1917, %v1901
    %v2590 = vpack.c.b16 %v1918, %v1902
    %v2591 = vpack.c.b16 %v1919, %v1903
    %v2592 = vpack.c.b16 %v1920, %v1904
    %v2593 = vpack.c.b16 %v1937, %v1921
    %v2594 = vpack.c.b16 %v1938, %v1922
    %v2595 = vpack.c.b16 %v1939, %v1923
    %v2596 = vpack.c.b16 %v1940, %v1924
    %v2597 = vpack.c.b16 %v1941, %v1925
    %v2598 = vpack.c.b16 %v1942, %v1926
    %v2599 = vpack.c.b16 %v1943, %v1927
    %v2600 = vpack.c.b16 %v1944, %v1928
    %v2601 = vpack.c.b16 %v1945, %v1929
    %v2602 = vpack.c.b16 %v1946, %v1930
    %v2603 = vpack.c.b16 %v1947, %v1931
    %v2604 = vpack.c.b16 %v1948, %v1932
    %v2605 = vpack.c.b16 %v1949, %v1933
    %v2606 = vpack.c.b16 %v1950, %v1934
    %v2607 = vpack.c.b16 %v1951, %v1935
    %v2608 = vpack.c.b16 %v1952, %v1936
    %v2609 = vpack.c.b16 %v1969, %v1953
    %v2610 = vpack.c.b16 %v1970, %v1954
    %v2611 = vpack.c.b16 %v1971, %v1955
    %v2612 = vpack.c.b16 %v1972, %v1956
    %v2613 = vpack.c.b16 %v1973, %v1957
    %v2614 = vpack.c.b16 %v1974, %v1958
    %v2615 = vpack.c.b16 %v1975, %v1959
    %v2616 = vpack.c.b16 %v1976, %v1960
    %v2617 = vpack.c.b16 %v1977, %v1961
    %v2618 = vpack.c.b16 %v1978, %v1962
    %v2619 = vpack.c.b16 %v1979, %v1963
    %v2620 = vpack.c.b16 %v1980, %v1964
    %v2621 = vpack.c.b16 %v1981, %v1965
    %v2622 = vpack.c.b16 %v1982, %v1966
    %v2623 = vpack.c.b16 %v1983, %v1967
    %v2624 = vpack.c.b16 %v1984, %v1968
    %v2625 = vpack.c.b16 %v2001, %v1985
    %v2626 = vpack.c.b16 %v2002, %v1986
    %v2627 = vpack.c.b16 %v2003, %v1987
    %v2628 = vpack.c.b16 %v2004, %v1988
    %v2629 = vpack.c.b16 %v2005, %v1989
    %v2630 = vpack.c.b16 %v2006, %v1990
    %v2631 = vpack.c.b16 %v2007, %v1991
    %v2632 = vpack.c.b16 %v2008, %v1992
    %v2633 = vpack.c.b16 %v2009, %v1993
    %v2634 = vpack.c.b16 %v2010, %v1994
    %v2635 = vpack.c.b16 %v2011, %v1995
    %v2636 = vpack.c.b16 %v2012, %v1996
    %v2637 = vpack.c.b16 %v2013, %v1997
    %v2638 = vpack.c.b16 %v2014, %v1998
    %v2639 = vpack.c.b16 %v2015, %v1999
    %v2640 = vpack.c.b16 %v2016, %v2000
    %v2641 = vpack.c.b16 %v2033, %v2017
    %v2642 = vpack.c.b16 %v2034, %v2018
    %v2643 = vpack.c.b16 %v2035, %v2019
    %v2644 = vpack.c.b16 %v2036, %v2020
    %v2645 = vpack.c.b16 %v2037, %v2021
    %v2646 = vpack.c.b16 %v2038, %v2022
    %v2647 = vpack.c.b16 %v2039, %v2023
    %v2648 = vpack.c.b16 %v2040, %v2024
    %v2649 = vpack.c.b16 %v2041, %v2025
    %v2650 = vpack.c.b16 %v2042, %v2026
    %v2651 = vpack.c.b16 %v2043, %v2027
    %v2652 = vpack.c.b16 %v2044, %v2028
    %v2653 = vpack.c.b16 %v2045, %v2029
    %v2654 = vpack.c.b16 %v2046, %v2030
    %v2655 = vpack.c.b16 %v2047, %v2031
    %v2656 = vpack.c.b16 %v2048, %v2032
    %v2657 = vpack.c.b16 %v2065, %v2049
    %v2658 = vpack.c.b16 %v2066, %v2050
    %v2659 = vpack.c.b16 %v2067, %v2051
    %v2660 = vpack.c.b16 %v2068, %v2052
    %v2661 = vpack.c.b16 %v2069, %v2053
    %v2662 = vpack.c.b16 %v2070, %v2054
    %v2663 = vpack.c.b16 %v2071, %v2055
    %v2664 = vpack.c.b16 %v2072, %v2056
    %v2665 = vpack.c.b16 %v2073, %v2057
    %v2666 = vpack.c.b16 %v2074, %v2058
    %v2667 = vpack.c.b16 %v2075, %v2059
    %v2668 = vpack.c.b16 %v2076, %v2060
    %v2669 = vpack.c.b16 %v2077, %v2061
    %v2670 = vpack.c.b16 %v2078, %v2062
    %v2671 = vpack.c.b16 %v2079, %v2063
    %v2672 = vpack.c.b16 %v2080, %v2064
    %v2673 = vpack.c.b16 %v2097, %v2081
    %v2674 = vpack.c.b16 %v2098, %v2082
    %v2675 = vpack.c.b16 %v2099, %v2083
    %v2676 = vpack.c.b16 %v2100, %v2084
    %v2677 = vpack.c.b16 %v2101, %v2085
    %v2678 = vpack.c.b16 %v2102, %v2086
    %v2679 = vpack.c.b16 %v2103, %v2087
    %v2680 = vpack.c.b16 %v2104, %v2088
    %v2681 = vpack.c.b16 %v2105, %v2089
    %v2682 = vpack.c.b16 %v2106, %v2090
    %v2683 = vpack.c.b16 %v2107, %v2091
    %v2684 = vpack.c.b16 %v2108, %v2092
    %v2685 = vpack.c.b16 %v2109, %v2093
    %v2686 = vpack.c.b16 %v2110, %v2094
    %v2687 = vpack.c.b16 %v2111, %v2095
    %v2688 = vpack.c.b16 %v2112, %v2096
    %v2689 = vpack.c.b16 %v2129, %v2113
    %v2690 = vpack.c.b16 %v2130, %v2114
    %v2691 = vpack.c.b16 %v2131, %v2115
    %v2692 = vpack.c.b16 %v2132, %v2116
    %v2693 = vpack.c.b16 %v2133, %v2117
    %v2694 = vpack.c.b16 %v2134, %v2118
    %v2695 = vpack.c.b16 %v2135, %v2119
    %v2696 = vpack.c.b16 %v2136, %v2120
    %v2697 = vpack.c.b16 %v2137, %v2121
    %v2698 = vpack.c.b16 %v2138, %v2122
    %v2699 = vpack.c.b16 %v2139, %v2123
    %v2700 = vpack.c.b16 %v2140, %v2124
    %v2701 = vpack.c.b16 %v2141, %v2125
    %v2702 = vpack.c.b16 %v2142, %v2126
    %v2703 = vpack.c.b16 %v2143, %v2127
    %v2704 = vpack.c.b16 %v2144, %v2128
    %v2705 = vpack.c.b16 %v2161, %v2145
    %v2706 = vpack.c.b16 %v2162, %v2146
    %v2707 = vpack.c.b16 %v2163, %v2147
    %v2708 = vpack.c.b16 %v2164, %v2148
    %v2709 = vpack.c.b16 %v2165, %v2149
    %v2710 = vpack.c.b16 %v2166, %v2150
    %v2711 = vpack.c.b16 %v2167, %v2151
    %v2712 = vpack.c.b16 %v2168, %v2152
    %v2713 = vpack.c.b16 %v2169, %v2153
    %v2714 = vpack.c.b16 %v2170, %v2154
    %v2715 = vpack.c.b16 %v2171, %v2155
    %v2716 = vpack.c.b16 %v2172, %v2156
    %v2717 = vpack.c.b16 %v2173, %v2157
    %v2718 = vpack.c.b16 %v2174, %v2158
    %v2719 = vpack.c.b16 %v2175, %v2159
    %v2720 = vpack.c.b16 %v2176, %v2160
    %v2721 = vpack.c.b16 %v2193, %v2177
    %v2722 = vpack.c.b16 %v2194, %v2178
    %v2723 = vpack.c.b16 %v2195, %v2179
    %v2724 = vpack.c.b16 %v2196, %v2180
    %v2725 = vpack.c.b16 %v2197, %v2181
    %v2726 = vpack.c.b16 %v2198, %v2182
    %v2727 = vpack.c.b16 %v2199, %v2183
    %v2728 = vpack.c.b16 %v2200, %v2184
    %v2729 = vpack.c.b16 %v2201, %v2185
    %v2730 = vpack.c.b16 %v2202, %v2186
    %v2731 = vpack.c.b16 %v2203, %v2187
    %v2732 = vpack.c.b16 %v2204, %v2188
    %v2733 = vpack.c.b16 %v2205, %v2189
    %v2734 = vpack.c.b16 %v2206, %v2190
    %v2735 = vpack.c.b16 %v2207, %v2191
    %v2736 = vpack.c.b16 %v2208, %v2192
    %v2737 = vpack.c.b16 %v2225, %v2209
    %v2738 = vpack.c.b16 %v2226, %v2210
    %v2739 = vpack.c.b16 %v2227, %v2211
    %v2740 = vpack.c.b16 %v2228, %v2212
    %v2741 = vpack.c.b16 %v2229, %v2213
    %v2742 = vpack.c.b16 %v2230, %v2214
    %v2743 = vpack.c.b16 %v2231, %v2215
    %v2744 = vpack.c.b16 %v2232, %v2216
    %v2745 = vpack.c.b16 %v2233, %v2217
    %v2746 = vpack.c.b16 %v2234, %v2218
    %v2747 = vpack.c.b16 %v2235, %v2219
    %v2748 = vpack.c.b16 %v2236, %v2220
    %v2749 = vpack.c.b16 %v2237, %v2221
    %v2750 = vpack.c.b16 %v2238, %v2222
    %v2751 = vpack.c.b16 %v2239, %v2223
    %v2752 = vpack.c.b16 %v2240, %v2224
    %3265 = vmatprep.subr.bf16.mxu0 %v2242
    %3266 = vmatpush1.bf16.msra.mxu0 %v2241
    %3267 = vmatprep.subr.bf16.mxu0 %v2258
    %3268 = vmatpush1.bf16.msra.mxu0 %v2257
    %3269 = vmatprep.subr.bf16.mxu0 %v2274
    %3270 = vmatpush1.bf16.msra.mxu0 %v2273
    %3271 = vmatprep.subr.bf16.mxu0 %v2290
    %3272 = vmatpush1.bf16.msra.mxu0 %v2289
    %3273 = vmatprep.subr.bf16.mxu0 %v2306
    %3274 = vmatpush1.bf16.msra.mxu0 %v2305
    %3275 = vmatprep.subr.bf16.mxu0 %v2322
    %3276 = vmatpush1.bf16.msra.mxu0 %v2321
    %3277 = vmatprep.subr.bf16.mxu0 %v2338
    %3278 = vmatpush1.bf16.msra.mxu0 %v2337
    %3279 = vmatprep.subr.bf16.mxu0 %v2354
    %3280 = vmatpush1.bf16.msra.mxu0 %v2353
    %3281 = vmatprep.subr.bf16.mxu0 %v2370
    %3282 = vmatpush1.bf16.msra.mxu0 %v2369
    %3283 = vmatprep.subr.bf16.mxu0 %v2386
    %3284 = vmatpush1.bf16.msra.mxu0 %v2385
    %3285 = vmatprep.subr.bf16.mxu0 %v2402
    %3286 = vmatpush1.bf16.msra.mxu0 %v2401
    %3287 = vmatprep.subr.bf16.mxu0 %v2418
    %3288 = vmatpush1.bf16.msra.mxu0 %v2417
    %3289 = vmatprep.subr.bf16.mxu0 %v2434
    %3290 = vmatpush1.bf16.msra.mxu0 %v2433
    %3291 = vmatprep.subr.bf16.mxu0 %v2450
    %3292 = vmatpush1.bf16.msra.mxu0 %v2449
    %3293 = vmatprep.subr.bf16.mxu0 %v2466
    %3294 = vmatpush1.bf16.msra.mxu0 %v2465
    %3295 = vmatprep.subr.bf16.mxu0 %v2482
    %3296 = vmatpush1.bf16.msra.mxu0 %v2481
    %3297 = vmatprep.mubr.bf16.mxu0 %v698
    %3298 = vmatmul.mubr.bf16.gmra.mrb[0].mxu0 %v697
    %v3299 = vpop.f32.mrb[0].mxu0
    %v3300 = vadd.f32 %v608, %v3299
    %v3301 = vpop.f32.mrb[0].mxu0
    %v3302 = vadd.f32 %v612, %v3301
    %v3303 = vpop.f32.mrb[0].mxu0
    %v3304 = vadd.f32 %v608, %v3303
    %v3305 = vpop.f32.mrb[0].mxu0
    %v3306 = vadd.f32 %v612, %v3305
    %3307 = vdwg.mxu0
    %3308 = vmatprep.subr.bf16.mxu0 %v2498
    %3309 = vmatpush1.bf16.msra.mxu0 %v2497
    %3310 = vmatprep.subr.bf16.mxu0 %v2514
    %3311 = vmatpush1.bf16.msra.mxu0 %v2513
    %3312 = vmatprep.subr.bf16.mxu0 %v2530
    %3313 = vmatpush1.bf16.msra.mxu0 %v2529
    %3314 = vmatprep.subr.bf16.mxu0 %v2546
    %3315 = vmatpush1.bf16.msra.mxu0 %v2545
    %3316 = vmatprep.subr.bf16.mxu0 %v2562
    %3317 = vmatpush1.bf16.msra.mxu0 %v2561
    %3318 = vmatprep.subr.bf16.mxu0 %v2578
    %3319 = vmatpush1.bf16.msra.mxu0 %v2577
    %3320 = vmatprep.subr.bf16.mxu0 %v2594
    %3321 = vmatpush1.bf16.msra.mxu0 %v2593
    %3322 = vmatprep.subr.bf16.mxu0 %v2610
    %3323 = vmatpush1.bf16.msra.mxu0 %v2609
    %3324 = vmatprep.subr.bf16.mxu0 %v2626
    %3325 = vmatpush1.bf16.msra.mxu0 %v2625
    %3326 = vmatprep.subr.bf16.mxu0 %v2642
    %3327 = vmatpush1.bf16.msra.mxu0 %v2641
    %3328 = vmatprep.subr.bf16.mxu0 %v2658
    %3329 = vmatpush1.bf16.msra.mxu0 %v2657
    %3330 = vmatprep.subr.bf16.mxu0 %v2674
    %3331 = vmatpush1.bf16.msra.mxu0 %v2673
    %3332 = vmatprep.subr.bf16.mxu0 %v2690
    %3333 = vmatpush1.bf16.msra.mxu0 %v2689
    %3334 = vmatprep.subr.bf16.mxu0 %v2706
    %3335 = vmatpush1.bf16.msra.mxu0 %v2705
    %3336 = vmatprep.subr.bf16.mxu0 %v2722
    %3337 = vmatpush1.bf16.msra.mxu0 %v2721
    %3338 = vmatprep.subr.bf16.mxu0 %v2738
    %3339 = vmatpush1.bf16.msra.mxu0 %v2737
    %3340 = vmatprep.mubr.bf16.mxu0 %v700
    %3341 = vmatmul.mubr.bf16.gmra.mrb[0].mxu0 %v699
    %v3342 = vpop.f32.mrb[0].mxu0
    %v3343 = vadd.f32 %v3300, %v3342
    %v3344 = vpop.f32.mrb[0].mxu0
    %v3345 = vadd.f32 %v3302, %v3344
    %v3346 = vpop.f32.mrb[0].mxu0
    %v3347 = vadd.f32 %v3304, %v3346
    %v3348 = vpop.f32.mrb[0].mxu0
    %v3349 = vadd.f32 %v3306, %v3348
    %3350 = vdwg.mxu0
    %3351 = vmatprep.subr.bf16.mxu0 %v2244
    %3352 = vmatpush1.bf16.msra.mxu0 %v2243
    %3353 = vmatprep.subr.bf16.mxu0 %v2260
    %3354 = vmatpush1.bf16.msra.mxu0 %v2259
    %3355 = vmatprep.subr.bf16.mxu0 %v2276
    %3356 = vmatpush1.bf16.msra.mxu0 %v2275
    %3357 = vmatprep.subr.bf16.mxu0 %v2292
    %3358 = vmatpush1.bf16.msra.mxu0 %v2291
    %3359 = vmatprep.subr.bf16.mxu0 %v2308
    %3360 = vmatpush1.bf16.msra.mxu0 %v2307
    %3361 = vmatprep.subr.bf16.mxu0 %v2324
    %3362 = vmatpush1.bf16.msra.mxu0 %v2323
    %3363 = vmatprep.subr.bf16.mxu0 %v2340
    %3364 = vmatpush1.bf16.msra.mxu0 %v2339
    %3365 = vmatprep.subr.bf16.mxu0 %v2356
    %3366 = vmatpush1.bf16.msra.mxu0 %v2355
    %3367 = vmatprep.subr.bf16.mxu0 %v2372
    %3368 = vmatpush1.bf16.msra.mxu0 %v2371
    %3369 = vmatprep.subr.bf16.mxu0 %v2388
    %3370 = vmatpush1.bf16.msra.mxu0 %v2387
    %3371 = vmatprep.subr.bf16.mxu0 %v2404
    %3372 = vmatpush1.bf16.msra.mxu0 %v2403
    %3373 = vmatprep.subr.bf16.mxu0 %v2420
    %3374 = vmatpush1.bf16.msra.mxu0 %v2419
    %3375 = vmatprep.subr.bf16.mxu0 %v2436
    %3376 = vmatpush1.bf16.msra.mxu0 %v2435
    %3377 = vmatprep.subr.bf16.mxu0 %v2452
    %3378 = vmatpush1.bf16.msra.mxu0 %v2451
    %3379 = vmatprep.subr.bf16.mxu0 %v2468
    %3380 = vmatpush1.bf16.msra.mxu0 %v2467
    %3381 = vmatprep.subr.bf16.mxu0 %v2484
    %3382 = vmatpush1.bf16.msra.mxu0 %v2483
    %3383 = vmatprep.mubr.bf16.mxu0 %v698
    %3384 = vmatmul.mubr.bf16.gmra.mrb[0].mxu0 %v697
    %v3385 = vpop.f32.mrb[0].mxu0
    %v3386 = vadd.f32 %v616, %v3385
    %v3387 = vpop.f32.mrb[0].mxu0
    %v3388 = vadd.f32 %v620, %v3387
    %v3389 = vpop.f32.mrb[0].mxu0
    %v3390 = vadd.f32 %v616, %v3389
    %v3391 = vpop.f32.mrb[0].mxu0
    %v3392 = vadd.f32 %v620, %v3391
    %3393 = vdwg.mxu0
    %3394 = vmatprep.subr.bf16.mxu0 %v2500
    %3395 = vmatpush1.bf16.msra.mxu0 %v2499
    %3396 = vmatprep.subr.bf16.mxu0 %v2516
    %3397 = vmatpush1.bf16.msra.mxu0 %v2515
    %3398 = vmatprep.subr.bf16.mxu0 %v2532
    %3399 = vmatpush1.bf16.msra.mxu0 %v2531
    %3400 = vmatprep.subr.bf16.mxu0 %v2548
    %3401 = vmatpush1.bf16.msra.mxu0 %v2547
    %3402 = vmatprep.subr.bf16.mxu0 %v2564
    %3403 = vmatpush1.bf16.msra.mxu0 %v2563
    %3404 = vmatprep.subr.bf16.mxu0 %v2580
    %3405 = vmatpush1.bf16.msra.mxu0 %v2579
    %3406 = vmatprep.subr.bf16.mxu0 %v2596
    %3407 = vmatpush1.bf16.msra.mxu0 %v2595
    %3408 = vmatprep.subr.bf16.mxu0 %v2612
    %3409 = vmatpush1.bf16.msra.mxu0 %v2611
    %3410 = vmatprep.subr.bf16.mxu0 %v2628
    %3411 = vmatpush1.bf16.msra.mxu0 %v2627
    %3412 = vmatprep.subr.bf16.mxu0 %v2644
    %3413 = vmatpush1.bf16.msra.mxu0 %v2643
    %3414 = vmatprep.subr.bf16.mxu0 %v2660
    %3415 = vmatpush1.bf16.msra.mxu0 %v2659
    %3416 = vmatprep.subr.bf16.mxu0 %v2676
    %3417 = vmatpush1.bf16.msra.mxu0 %v2675
    %3418 = vmatprep.subr.bf16.mxu0 %v2692
    %3419 = vmatpush1.bf16.msra.mxu0 %v2691
    %3420 = vmatprep.subr.bf16.mxu0 %v2708
    %3421 = vmatpush1.bf16.msra.mxu0 %v2707
    %3422 = vmatprep.subr.bf16.mxu0 %v2724
    %3423 = vmatpush1.bf16.msra.mxu0 %v2723
    %3424 = vmatprep.subr.bf16.mxu0 %v2740
    %3425 = vmatpush1.bf16.msra.mxu0 %v2739
    %3426 = vmatprep.mubr.bf16.mxu0 %v700
    %3427 = vmatmul.mubr.bf16.gmra.mrb[0].mxu0 %v699
    %v3428 = vpop.f32.mrb[0].mxu0
    %v3429 = vadd.f32 %v3386, %v3428
    %v3430 = vpop.f32.mrb[0].mxu0
    %v3431 = vadd.f32 %v3388, %v3430
    %v3432 = vpop.f32.mrb[0].mxu0
    %v3433 = vadd.f32 %v3390, %v3432
    %v3434 = vpop.f32.mrb[0].mxu0
    %v3435 = vadd.f32 %v3392, %v3434
    %3436 = vdwg.mxu0
    %3437 = vmatprep.subr.bf16.mxu0 %v2246
    %3438 = vmatpush1.bf16.msra.mxu0 %v2245
    %3439 = vmatprep.subr.bf16.mxu0 %v2262
    %3440 = vmatpush1.bf16.msra.mxu0 %v2261
    %3441 = vmatprep.subr.bf16.mxu0 %v2278
    %3442 = vmatpush1.bf16.msra.mxu0 %v2277
    %3443 = vmatprep.subr.bf16.mxu0 %v2294
    %3444 = vmatpush1.bf16.msra.mxu0 %v2293
    %3445 = vmatprep.subr.bf16.mxu0 %v2310
    %3446 = vmatpush1.bf16.msra.mxu0 %v2309
    %3447 = vmatprep.subr.bf16.mxu0 %v2326
    %3448 = vmatpush1.bf16.msra.mxu0 %v2325
    %3449 = vmatprep.subr.bf16.mxu0 %v2342
    %3450 = vmatpush1.bf16.msra.mxu0 %v2341
    %3451 = vmatprep.subr.bf16.mxu0 %v2358
    %3452 = vmatpush1.bf16.msra.mxu0 %v2357
    %3453 = vmatprep.subr.bf16.mxu0 %v2374
    %3454 = vmatpush1.bf16.msra.mxu0 %v2373
    %3455 = vmatprep.subr.bf16.mxu0 %v2390
    %3456 = vmatpush1.bf16.msra.mxu0 %v2389
    %3457 = vmatprep.subr.bf16.mxu0 %v2406
    %3458 = vmatpush1.bf16.msra.mxu0 %v2405
    %3459 = vmatprep.subr.bf16.mxu0 %v2422
    %3460 = vmatpush1.bf16.msra.mxu0 %v2421
    %3461 = vmatprep.subr.bf16.mxu0 %v2438
    %3462 = vmatpush1.bf16.msra.mxu0 %v2437
    %3463 = vmatprep.subr.bf16.mxu0 %v2454
    %3464 = vmatpush1.bf16.msra.mxu0 %v2453
    %3465 = vmatprep.subr.bf16.mxu0 %v2470
    %3466 = vmatpush1.bf16.msra.mxu0 %v2469
    %3467 = vmatprep.subr.bf16.mxu0 %v2486
    %3468 = vmatpush1.bf16.msra.mxu0 %v2485
    %3469 = vmatprep.mubr.bf16.mxu0 %v698
    %3470 = vmatmul.mubr.bf16.gmra.mrb[0].mxu0 %v697
    %v3471 = vpop.f32.mrb[0].mxu0
    %v3472 = vadd.f32 %v624, %v3471
    %v3473 = vpop.f32.mrb[0].mxu0
    %v3474 = vadd.f32 %v628, %v3473
    %v3475 = vpop.f32.mrb[0].mxu0
    %v3476 = vadd.f32 %v624, %v3475
    %v3477 = vpop.f32.mrb[0].mxu0
    %v3478 = vadd.f32 %v628, %v3477
    %3479 = vdwg.mxu0
    %3480 = vmatprep.subr.bf16.mxu0 %v2502
    %3481 = vmatpush1.bf16.msra.mxu0 %v2501
    %3482 = vmatprep.subr.bf16.mxu0 %v2518
    %3483 = vmatpush1.bf16.msra.mxu0 %v2517
    %3484 = vmatprep.subr.bf16.mxu0 %v2534
    %3485 = vmatpush1.bf16.msra.mxu0 %v2533
    %3486 = vmatprep.subr.bf16.mxu0 %v2550
    %3487 = vmatpush1.bf16.msra.mxu0 %v2549
    %3488 = vmatprep.subr.bf16.mxu0 %v2566
    %3489 = vmatpush1.bf16.msra.mxu0 %v2565
    %3490 = vmatprep.subr.bf16.mxu0 %v2582
    %3491 = vmatpush1.bf16.msra.mxu0 %v2581
    %3492 = vmatprep.subr.bf16.mxu0 %v2598
    %3493 = vmatpush1.bf16.msra.mxu0 %v2597
    %3494 = vmatprep.subr.bf16.mxu0 %v2614
    %3495 = vmatpush1.bf16.msra.mxu0 %v2613
    %3496 = vmatprep.subr.bf16.mxu0 %v2630
    %3497 = vmatpush1.bf16.msra.mxu0 %v2629
    %3498 = vmatprep.subr.bf16.mxu0 %v2646
    %3499 = vmatpush1.bf16.msra.mxu0 %v2645
    %3500 = vmatprep.subr.bf16.mxu0 %v2662
    %3501 = vmatpush1.bf16.msra.mxu0 %v2661
    %3502 = vmatprep.subr.bf16.mxu0 %v2678
    %3503 = vmatpush1.bf16.msra.mxu0 %v2677
    %3504 = vmatprep.subr.bf16.mxu0 %v2694
    %3505 = vmatpush1.bf16.msra.mxu0 %v2693
    %3506 = vmatprep.subr.bf16.mxu0 %v2710
    %3507 = vmatpush1.bf16.msra.mxu0 %v2709
    %3508 = vmatprep.subr.bf16.mxu0 %v2726
    %3509 = vmatpush1.bf16.msra.mxu0 %v2725
    %3510 = vmatprep.subr.bf16.mxu0 %v2742
    %3511 = vmatpush1.bf16.msra.mxu0 %v2741
    %3512 = vmatprep.mubr.bf16.mxu0 %v700
    %3513 = vmatmul.mubr.bf16.gmra.mrb[0].mxu0 %v699
    %v3514 = vpop.f32.mrb[0].mxu0
    %v3515 = vadd.f32 %v3472, %v3514
    %v3516 = vpop.f32.mrb[0].mxu0
    %v3517 = vadd.f32 %v3474, %v3516
    %v3518 = vpop.f32.mrb[0].mxu0
    %v3519 = vadd.f32 %v3476, %v3518
    %v3520 = vpop.f32.mrb[0].mxu0
    %v3521 = vadd.f32 %v3478, %v3520
    %3522 = vdwg.mxu0
    %3523 = vmatprep.subr.bf16.mxu0 %v2248
    %3524 = vmatpush1.bf16.msra.mxu0 %v2247
    %3525 = vmatprep.subr.bf16.mxu0 %v2264
    %3526 = vmatpush1.bf16.msra.mxu0 %v2263
    %3527 = vmatprep.subr.bf16.mxu0 %v2280
    %3528 = vmatpush1.bf16.msra.mxu0 %v2279
    %3529 = vmatprep.subr.bf16.mxu0 %v2296
    %3530 = vmatpush1.bf16.msra.mxu0 %v2295
    %3531 = vmatprep.subr.bf16.mxu0 %v2312
    %3532 = vmatpush1.bf16.msra.mxu0 %v2311
    %3533 = vmatprep.subr.bf16.mxu0 %v2328
    %3534 = vmatpush1.bf16.msra.mxu0 %v2327
    %3535 = vmatprep.subr.bf16.mxu0 %v2344
    %3536 = vmatpush1.bf16.msra.mxu0 %v2343
    %3537 = vmatprep.subr.bf16.mxu0 %v2360
    %3538 = vmatpush1.bf16.msra.mxu0 %v2359
    %3539 = vmatprep.subr.bf16.mxu0 %v2376
    %3540 = vmatpush1.bf16.msra.mxu0 %v2375
    %3541 = vmatprep.subr.bf16.mxu0 %v2392
    %3542 = vmatpush1.bf16.msra.mxu0 %v2391
    %3543 = vmatprep.subr.bf16.mxu0 %v2408
    %3544 = vmatpush1.bf16.msra.mxu0 %v2407
    %3545 = vmatprep.subr.bf16.mxu0 %v2424
    %3546 = vmatpush1.bf16.msra.mxu0 %v2423
    %3547 = vmatprep.subr.bf16.mxu0 %v2440
    %3548 = vmatpush1.bf16.msra.mxu0 %v2439
    %3549 = vmatprep.subr.bf16.mxu0 %v2456
    %3550 = vmatpush1.bf16.msra.mxu0 %v2455
    %3551 = vmatprep.subr.bf16.mxu0 %v2472
    %3552 = vmatpush1.bf16.msra.mxu0 %v2471
    %3553 = vmatprep.subr.bf16.mxu0 %v2488
    %3554 = vmatpush1.bf16.msra.mxu0 %v2487
    %3555 = vmatprep.mubr.bf16.mxu0 %v698
    %3556 = vmatmul.mubr.bf16.gmra.mrb[0].mxu0 %v697
    %v3557 = vpop.f32.mrb[0].mxu0
    %v3558 = vadd.f32 %v632, %v3557
    %v3559 = vpop.f32.mrb[0].mxu0
    %v3560 = vadd.f32 %v636, %v3559
    %v3561 = vpop.f32.mrb[0].mxu0
    %v3562 = vadd.f32 %v632, %v3561
    %v3563 = vpop.f32.mrb[0].mxu0
    %v3564 = vadd.f32 %v636, %v3563
    %3565 = vdwg.mxu0
    %3566 = vmatprep.subr.bf16.mxu0 %v2504
    %3567 = vmatpush1.bf16.msra.mxu0 %v2503
    %3568 = vmatprep.subr.bf16.mxu0 %v2520
    %3569 = vmatpush1.bf16.msra.mxu0 %v2519
    %3570 = vmatprep.subr.bf16.mxu0 %v2536
    %3571 = vmatpush1.bf16.msra.mxu0 %v2535
    %3572 = vmatprep.subr.bf16.mxu0 %v2552
    %3573 = vmatpush1.bf16.msra.mxu0 %v2551
    %3574 = vmatprep.subr.bf16.mxu0 %v2568
    %3575 = vmatpush1.bf16.msra.mxu0 %v2567
    %3576 = vmatprep.subr.bf16.mxu0 %v2584
    %3577 = vmatpush1.bf16.msra.mxu0 %v2583
    %3578 = vmatprep.subr.bf16.mxu0 %v2600
    %3579 = vmatpush1.bf16.msra.mxu0 %v2599
    %3580 = vmatprep.subr.bf16.mxu0 %v2616
    %3581 = vmatpush1.bf16.msra.mxu0 %v2615
    %3582 = vmatprep.subr.bf16.mxu0 %v2632
    %3583 = vmatpush1.bf16.msra.mxu0 %v2631
    %3584 = vmatprep.subr.bf16.mxu0 %v2648
    %3585 = vmatpush1.bf16.msra.mxu0 %v2647
    %3586 = vmatprep.subr.bf16.mxu0 %v2664
    %3587 = vmatpush1.bf16.msra.mxu0 %v2663
    %3588 = vmatprep.subr.bf16.mxu0 %v2680
    %3589 = vmatpush1.bf16.msra.mxu0 %v2679
    %3590 = vmatprep.subr.bf16.mxu0 %v2696
    %3591 = vmatpush1.bf16.msra.mxu0 %v2695
    %3592 = vmatprep.subr.bf16.mxu0 %v2712
    %3593 = vmatpush1.bf16.msra.mxu0 %v2711
    %3594 = vmatprep.subr.bf16.mxu0 %v2728
    %3595 = vmatpush1.bf16.msra.mxu0 %v2727
    %3596 = vmatprep.subr.bf16.mxu0 %v2744
    %3597 = vmatpush1.bf16.msra.mxu0 %v2743
    %3598 = vmatprep.mubr.bf16.mxu0 %v700
    %3599 = vmatmul.mubr.bf16.gmra.mrb[0].mxu0 %v699
    %v3600 = vpop.f32.mrb[0].mxu0
    %v3601 = vadd.f32 %v3558, %v3600
    %v3602 = vpop.f32.mrb[0].mxu0
    %v3603 = vadd.f32 %v3560, %v3602
    %v3604 = vpop.f32.mrb[0].mxu0
    %v3605 = vadd.f32 %v3562, %v3604
    %v3606 = vpop.f32.mrb[0].mxu0
    %v3607 = vadd.f32 %v3564, %v3606
    %3608 = vdwg.mxu0
    %3609 = vmatprep.subr.bf16.mxu0 %v2250
    %3610 = vmatpush1.bf16.msra.mxu0 %v2249
    %3611 = vmatprep.subr.bf16.mxu0 %v2266
    %3612 = vmatpush1.bf16.msra.mxu0 %v2265
    %3613 = vmatprep.subr.bf16.mxu0 %v2282
    %3614 = vmatpush1.bf16.msra.mxu0 %v2281
    %3615 = vmatprep.subr.bf16.mxu0 %v2298
    %3616 = vmatpush1.bf16.msra.mxu0 %v2297
    %3617 = vmatprep.subr.bf16.mxu0 %v2314
    %3618 = vmatpush1.bf16.msra.mxu0 %v2313
    %3619 = vmatprep.subr.bf16.mxu0 %v2330
    %3620 = vmatpush1.bf16.msra.mxu0 %v2329
    %3621 = vmatprep.subr.bf16.mxu0 %v2346
    %3622 = vmatpush1.bf16.msra.mxu0 %v2345
    %3623 = vmatprep.subr.bf16.mxu0 %v2362
    %3624 = vmatpush1.bf16.msra.mxu0 %v2361
    %3625 = vmatprep.subr.bf16.mxu0 %v2378
    %3626 = vmatpush1.bf16.msra.mxu0 %v2377
    %3627 = vmatprep.subr.bf16.mxu0 %v2394
    %3628 = vmatpush1.bf16.msra.mxu0 %v2393
    %3629 = vmatprep.subr.bf16.mxu0 %v2410
    %3630 = vmatpush1.bf16.msra.mxu0 %v2409
    %3631 = vmatprep.subr.bf16.mxu0 %v2426
    %3632 = vmatpush1.bf16.msra.mxu0 %v2425
    %3633 = vmatprep.subr.bf16.mxu0 %v2442
    %3634 = vmatpush1.bf16.msra.mxu0 %v2441
    %3635 = vmatprep.subr.bf16.mxu0 %v2458
    %3636 = vmatpush1.bf16.msra.mxu0 %v2457
    %3637 = vmatprep.subr.bf16.mxu0 %v2474
    %3638 = vmatpush1.bf16.msra.mxu0 %v2473
    %3639 = vmatprep.subr.bf16.mxu0 %v2490
    %3640 = vmatpush1.bf16.msra.mxu0 %v2489
    %3641 = vmatprep.mubr.bf16.mxu0 %v698
    %3642 = vmatmul.mubr.bf16.gmra.mrb[0].mxu0 %v697
    %v3643 = vpop.f32.mrb[0].mxu0
    %v3644 = vadd.f32 %v640, %v3643
    %v3645 = vpop.f32.mrb[0].mxu0
    %v3646 = vadd.f32 %v644, %v3645
    %v3647 = vpop.f32.mrb[0].mxu0
    %v3648 = vadd.f32 %v640, %v3647
    %v3649 = vpop.f32.mrb[0].mxu0
    %v3650 = vadd.f32 %v644, %v3649
    %3651 = vdwg.mxu0
    %3652 = vmatprep.subr.bf16.mxu0 %v2506
    %3653 = vmatpush1.bf16.msra.mxu0 %v2505
    %3654 = vmatprep.subr.bf16.mxu0 %v2522
    %3655 = vmatpush1.bf16.msra.mxu0 %v2521
    %3656 = vmatprep.subr.bf16.mxu0 %v2538
    %3657 = vmatpush1.bf16.msra.mxu0 %v2537
    %3658 = vmatprep.subr.bf16.mxu0 %v2554
    %3659 = vmatpush1.bf16.msra.mxu0 %v2553
    %3660 = vmatprep.subr.bf16.mxu0 %v2570
    %3661 = vmatpush1.bf16.msra.mxu0 %v2569
    %3662 = vmatprep.subr.bf16.mxu0 %v2586
    %3663 = vmatpush1.bf16.msra.mxu0 %v2585
    %3664 = vmatprep.subr.bf16.mxu0 %v2602
    %3665 = vmatpush1.bf16.msra.mxu0 %v2601
    %3666 = vmatprep.subr.bf16.mxu0 %v2618
    %3667 = vmatpush1.bf16.msra.mxu0 %v2617
    %3668 = vmatprep.subr.bf16.mxu0 %v2634
    %3669 = vmatpush1.bf16.msra.mxu0 %v2633
    %3670 = vmatprep.subr.bf16.mxu0 %v2650
    %3671 = vmatpush1.bf16.msra.mxu0 %v2649
    %3672 = vmatprep.subr.bf16.mxu0 %v2666
    %3673 = vmatpush1.bf16.msra.mxu0 %v2665
    %3674 = vmatprep.subr.bf16.mxu0 %v2682
    %3675 = vmatpush1.bf16.msra.mxu0 %v2681
    %3676 = vmatprep.subr.bf16.mxu0 %v2698
    %3677 = vmatpush1.bf16.msra.mxu0 %v2697
    %3678 = vmatprep.subr.bf16.mxu0 %v2714
    %3679 = vmatpush1.bf16.msra.mxu0 %v2713
    %3680 = vmatprep.subr.bf16.mxu0 %v2730
    %3681 = vmatpush1.bf16.msra.mxu0 %v2729
    %3682 = vmatprep.subr.bf16.mxu0 %v2746
    %3683 = vmatpush1.bf16.msra.mxu0 %v2745
    %3684 = vmatprep.mubr.bf16.mxu0 %v700
    %3685 = vmatmul.mubr.bf16.gmra.mrb[0].mxu0 %v699
    %v3686 = vpop.f32.mrb[0].mxu0
    %v3687 = vadd.f32 %v3644, %v3686
    %v3688 = vpop.f32.mrb[0].mxu0
    %v3689 = vadd.f32 %v3646, %v3688
    %v3690 = vpop.f32.mrb[0].mxu0
    %v3691 = vadd.f32 %v3648, %v3690
    %v3692 = vpop.f32.mrb[0].mxu0
    %v3693 = vadd.f32 %v3650, %v3692
    %3694 = vdwg.mxu0
    %3695 = vmatprep.subr.bf16.mxu0 %v2252
    %3696 = vmatpush1.bf16.msra.mxu0 %v2251
    %3697 = vmatprep.subr.bf16.mxu0 %v2268
    %3698 = vmatpush1.bf16.msra.mxu0 %v2267
    %3699 = vmatprep.subr.bf16.mxu0 %v2284
    %3700 = vmatpush1.bf16.msra.mxu0 %v2283
    %3701 = vmatprep.subr.bf16.mxu0 %v2300
    %3702 = vmatpush1.bf16.msra.mxu0 %v2299
    %3703 = vmatprep.subr.bf16.mxu0 %v2316
    %3704 = vmatpush1.bf16.msra.mxu0 %v2315
    %3705 = vmatprep.subr.bf16.mxu0 %v2332
    %3706 = vmatpush1.bf16.msra.mxu0 %v2331
    %3707 = vmatprep.subr.bf16.mxu0 %v2348
    %3708 = vmatpush1.bf16.msra.mxu0 %v2347
    %3709 = vmatprep.subr.bf16.mxu0 %v2364
    %3710 = vmatpush1.bf16.msra.mxu0 %v2363
    %3711 = vmatprep.subr.bf16.mxu0 %v2380
    %3712 = vmatpush1.bf16.msra.mxu0 %v2379
    %3713 = vmatprep.subr.bf16.mxu0 %v2396
    %3714 = vmatpush1.bf16.msra.mxu0 %v2395
    %3715 = vmatprep.subr.bf16.mxu0 %v2412
    %3716 = vmatpush1.bf16.msra.mxu0 %v2411
    %3717 = vmatprep.subr.bf16.mxu0 %v2428
    %3718 = vmatpush1.bf16.msra.mxu0 %v2427
    %3719 = vmatprep.subr.bf16.mxu0 %v2444
    %3720 = vmatpush1.bf16.msra.mxu0 %v2443
    %3721 = vmatprep.subr.bf16.mxu0 %v2460
    %3722 = vmatpush1.bf16.msra.mxu0 %v2459
    %3723 = vmatprep.subr.bf16.mxu0 %v2476
    %3724 = vmatpush1.bf16.msra.mxu0 %v2475
    %3725 = vmatprep.subr.bf16.mxu0 %v2492
    %3726 = vmatpush1.bf16.msra.mxu0 %v2491
    %3727 = vmatprep.mubr.bf16.mxu0 %v698
    %3728 = vmatmul.mubr.bf16.gmra.mrb[0].mxu0 %v697
    %v3729 = vpop.f32.mrb[0].mxu0
    %v3730 = vadd.f32 %v648, %v3729
    %v3731 = vpop.f32.mrb[0].mxu0
    %v3732 = vadd.f32 %v652, %v3731
    %v3733 = vpop.f32.mrb[0].mxu0
    %v3734 = vadd.f32 %v648, %v3733
    %v3735 = vpop.f32.mrb[0].mxu0
    %v3736 = vadd.f32 %v652, %v3735
    %3737 = vdwg.mxu0
    %3738 = vmatprep.subr.bf16.mxu0 %v2508
    %3739 = vmatpush1.bf16.msra.mxu0 %v2507
    %3740 = vmatprep.subr.bf16.mxu0 %v2524
    %3741 = vmatpush1.bf16.msra.mxu0 %v2523
    %3742 = vmatprep.subr.bf16.mxu0 %v2540
    %3743 = vmatpush1.bf16.msra.mxu0 %v2539
    %3744 = vmatprep.subr.bf16.mxu0 %v2556
    %3745 = vmatpush1.bf16.msra.mxu0 %v2555
    %3746 = vmatprep.subr.bf16.mxu0 %v2572
    %3747 = vmatpush1.bf16.msra.mxu0 %v2571
    %3748 = vmatprep.subr.bf16.mxu0 %v2588
    %3749 = vmatpush1.bf16.msra.mxu0 %v2587
    %3750 = vmatprep.subr.bf16.mxu0 %v2604
    %3751 = vmatpush1.bf16.msra.mxu0 %v2603
    %3752 = vmatprep.subr.bf16.mxu0 %v2620
    %3753 = vmatpush1.bf16.msra.mxu0 %v2619
    %3754 = vmatprep.subr.bf16.mxu0 %v2636
    %3755 = vmatpush1.bf16.msra.mxu0 %v2635
    %3756 = vmatprep.subr.bf16.mxu0 %v2652
    %3757 = vmatpush1.bf16.msra.mxu0 %v2651
    %3758 = vmatprep.subr.bf16.mxu0 %v2668
    %3759 = vmatpush1.bf16.msra.mxu0 %v2667
    %3760 = vmatprep.subr.bf16.mxu0 %v2684
    %3761 = vmatpush1.bf16.msra.mxu0 %v2683
    %3762 = vmatprep.subr.bf16.mxu0 %v2700
    %3763 = vmatpush1.bf16.msra.mxu0 %v2699
    %3764 = vmatprep.subr.bf16.mxu0 %v2716
    %3765 = vmatpush1.bf16.msra.mxu0 %v2715
    %3766 = vmatprep.subr.bf16.mxu0 %v2732
    %3767 = vmatpush1.bf16.msra.mxu0 %v2731
    %3768 = vmatprep.subr.bf16.mxu0 %v2748
    %3769 = vmatpush1.bf16.msra.mxu0 %v2747
    %3770 = vmatprep.mubr.bf16.mxu0 %v700
    %3771 = vmatmul.mubr.bf16.gmra.mrb[0].mxu0 %v699
    %v3772 = vpop.f32.mrb[0].mxu0
    %v3773 = vadd.f32 %v3730, %v3772
    %v3774 = vpop.f32.mrb[0].mxu0
    %v3775 = vadd.f32 %v3732, %v3774
    %v3776 = vpop.f32.mrb[0].mxu0
    %v3777 = vadd.f32 %v3734, %v3776
    %v3778 = vpop.f32.mrb[0].mxu0
    %v3779 = vadd.f32 %v3736, %v3778
    %3780 = vdwg.mxu0
    %3781 = vmatprep.subr.bf16.mxu0 %v2254
    %3782 = vmatpush1.bf16.msra.mxu0 %v2253
    %3783 = vmatprep.subr.bf16.mxu0 %v2270
    %3784 = vmatpush1.bf16.msra.mxu0 %v2269
    %3785 = vmatprep.subr.bf16.mxu0 %v2286
    %3786 = vmatpush1.bf16.msra.mxu0 %v2285
    %3787 = vmatprep.subr.bf16.mxu0 %v2302
    %3788 = vmatpush1.bf16.msra.mxu0 %v2301
    %3789 = vmatprep.subr.bf16.mxu0 %v2318
    %3790 = vmatpush1.bf16.msra.mxu0 %v2317
    %3791 = vmatprep.subr.bf16.mxu0 %v2334
    %3792 = vmatpush1.bf16.msra.mxu0 %v2333
    %3793 = vmatprep.subr.bf16.mxu0 %v2350
    %3794 = vmatpush1.bf16.msra.mxu0 %v2349
    %3795 = vmatprep.subr.bf16.mxu0 %v2366
    %3796 = vmatpush1.bf16.msra.mxu0 %v2365
    %3797 = vmatprep.subr.bf16.mxu0 %v2382
    %3798 = vmatpush1.bf16.msra.mxu0 %v2381
    %3799 = vmatprep.subr.bf16.mxu0 %v2398
    %3800 = vmatpush1.bf16.msra.mxu0 %v2397
    %3801 = vmatprep.subr.bf16.mxu0 %v2414
    %3802 = vmatpush1.bf16.msra.mxu0 %v2413
    %3803 = vmatprep.subr.bf16.mxu0 %v2430
    %3804 = vmatpush1.bf16.msra.mxu0 %v2429
    %3805 = vmatprep.subr.bf16.mxu0 %v2446
    %3806 = vmatpush1.bf16.msra.mxu0 %v2445
    %3807 = vmatprep.subr.bf16.mxu0 %v2462
    %3808 = vmatpush1.bf16.msra.mxu0 %v2461
    %3809 = vmatprep.subr.bf16.mxu0 %v2478
    %3810 = vmatpush1.bf16.msra.mxu0 %v2477
    %3811 = vmatprep.subr.bf16.mxu0 %v2494
    %3812 = vmatpush1.bf16.msra.mxu0 %v2493
    %3813 = vmatprep.mubr.bf16.mxu0 %v698
    %3814 = vmatmul.mubr.bf16.gmra.mrb[0].mxu0 %v697
    %v3815 = vpop.f32.mrb[0].mxu0
    %v3816 = vadd.f32 %v656, %v3815
    %v3817 = vpop.f32.mrb[0].mxu0
    %v3818 = vadd.f32 %v660, %v3817
    %v3819 = vpop.f32.mrb[0].mxu0
    %v3820 = vadd.f32 %v656, %v3819
    %v3821 = vpop.f32.mrb[0].mxu0
    %v3822 = vadd.f32 %v660, %v3821
    %3823 = vdwg.mxu0
    %3824 = vmatprep.subr.bf16.mxu0 %v2510
    %3825 = vmatpush1.bf16.msra.mxu0 %v2509
    %3826 = vmatprep.subr.bf16.mxu0 %v2526
    %3827 = vmatpush1.bf16.msra.mxu0 %v2525
    %3828 = vmatprep.subr.bf16.mxu0 %v2542
    %3829 = vmatpush1.bf16.msra.mxu0 %v2541
    %3830 = vmatprep.subr.bf16.mxu0 %v2558
    %3831 = vmatpush1.bf16.msra.mxu0 %v2557
    %3832 = vmatprep.subr.bf16.mxu0 %v2574
    %3833 = vmatpush1.bf16.msra.mxu0 %v2573
    %3834 = vmatprep.subr.bf16.mxu0 %v2590
    %3835 = vmatpush1.bf16.msra.mxu0 %v2589
    %3836 = vmatprep.subr.bf16.mxu0 %v2606
    %3837 = vmatpush1.bf16.msra.mxu0 %v2605
    %3838 = vmatprep.subr.bf16.mxu0 %v2622
    %3839 = vmatpush1.bf16.msra.mxu0 %v2621
    %3840 = vmatprep.subr.bf16.mxu0 %v2638
    %3841 = vmatpush1.bf16.msra.mxu0 %v2637
    %3842 = vmatprep.subr.bf16.mxu0 %v2654
    %3843 = vmatpush1.bf16.msra.mxu0 %v2653
    %3844 = vmatprep.subr.bf16.mxu0 %v2670
    %3845 = vmatpush1.bf16.msra.mxu0 %v2669
    %3846 = vmatprep.subr.bf16.mxu0 %v2686
    %3847 = vmatpush1.bf16.msra.mxu0 %v2685
    %3848 = vmatprep.subr.bf16.mxu0 %v2702
    %3849 = vmatpush1.bf16.msra.mxu0 %v2701
    %3850 = vmatprep.subr.bf16.mxu0 %v2718
    %3851 = vmatpush1.bf16.msra.mxu0 %v2717
    %3852 = vmatprep.subr.bf16.mxu0 %v2734
    %3853 = vmatpush1.bf16.msra.mxu0 %v2733
    %3854 = vmatprep.subr.bf16.mxu0 %v2750
    %3855 = vmatpush1.bf16.msra.mxu0 %v2749
    %3856 = vmatprep.mubr.bf16.mxu0 %v700
    %3857 = vmatmul.mubr.bf16.gmra.mrb[0].mxu0 %v699
    %v3858 = vpop.f32.mrb[0].mxu0
    %v3859 = vadd.f32 %v3816, %v3858
    %v3860 = vpop.f32.mrb[0].mxu0
    %v3861 = vadd.f32 %v3818, %v3860
    %v3862 = vpop.f32.mrb[0].mxu0
    %v3863 = vadd.f32 %v3820, %v3862
    %v3864 = vpop.f32.mrb[0].mxu0
    %v3865 = vadd.f32 %v3822, %v3864
    %3866 = vdwg.mxu0
    %3867 = vmatprep.subr.bf16.mxu0 %v2256
    %3868 = vmatpush1.bf16.msra.mxu0 %v2255
    %3869 = vmatprep.subr.bf16.mxu0 %v2272
    %3870 = vmatpush1.bf16.msra.mxu0 %v2271
    %3871 = vmatprep.subr.bf16.mxu0 %v2288
    %3872 = vmatpush1.bf16.msra.mxu0 %v2287
    %3873 = vmatprep.subr.bf16.mxu0 %v2304
    %3874 = vmatpush1.bf16.msra.mxu0 %v2303
    %3875 = vmatprep.subr.bf16.mxu0 %v2320
    %3876 = vmatpush1.bf16.msra.mxu0 %v2319
    %3877 = vmatprep.subr.bf16.mxu0 %v2336
    %3878 = vmatpush1.bf16.msra.mxu0 %v2335
    %3879 = vmatprep.subr.bf16.mxu0 %v2352
    %3880 = vmatpush1.bf16.msra.mxu0 %v2351
    %3881 = vmatprep.subr.bf16.mxu0 %v2368
    %3882 = vmatpush1.bf16.msra.mxu0 %v2367
    %3883 = vmatprep.subr.bf16.mxu0 %v2384
    %3884 = vmatpush1.bf16.msra.mxu0 %v2383
    %3885 = vmatprep.subr.bf16.mxu0 %v2400
    %3886 = vmatpush1.bf16.msra.mxu0 %v2399
    %3887 = vmatprep.subr.bf16.mxu0 %v2416
    %3888 = vmatpush1.bf16.msra.mxu0 %v2415
    %3889 = vmatprep.subr.bf16.mxu0 %v2432
    %3890 = vmatpush1.bf16.msra.mxu0 %v2431
    %3891 = vmatprep.subr.bf16.mxu0 %v2448
    %3892 = vmatpush1.bf16.msra.mxu0 %v2447
    %3893 = vmatprep.subr.bf16.mxu0 %v2464
    %3894 = vmatpush1.bf16.msra.mxu0 %v2463
    %3895 = vmatprep.subr.bf16.mxu0 %v2480
    %3896 = vmatpush1.bf16.msra.mxu0 %v2479
    %3897 = vmatprep.subr.bf16.mxu0 %v2496
    %3898 = vmatpush1.bf16.msra.mxu0 %v2495
    %3899 = vmatprep.mubr.bf16.mxu0 %v698
    %3900 = vmatmul.mubr.bf16.gmra.mrb[0].mxu0 %v697
    %v3901 = vpop.f32.mrb[0].mxu0
    %v3902 = vadd.f32 %v664, %v3901
    %v3903 = vpop.f32.mrb[0].mxu0
    %v3904 = vadd.f32 %v668, %v3903
    %v3905 = vpop.f32.mrb[0].mxu0
    %v3906 = vadd.f32 %v664, %v3905
    %v3907 = vpop.f32.mrb[0].mxu0
    %v3908 = vadd.f32 %v668, %v3907
    %3909 = vdwg.mxu0
    %3910 = vmatprep.subr.bf16.mxu0 %v2512
    %3911 = vmatpush1.bf16.msra.mxu0 %v2511
    %3912 = vmatprep.subr.bf16.mxu0 %v2528
    %3913 = vmatpush1.bf16.msra.mxu0 %v2527
    %3914 = vmatprep.subr.bf16.mxu0 %v2544
    %3915 = vmatpush1.bf16.msra.mxu0 %v2543
    %3916 = vmatprep.subr.bf16.mxu0 %v2560
    %3917 = vmatpush1.bf16.msra.mxu0 %v2559
    %3918 = vmatprep.subr.bf16.mxu0 %v2576
    %3919 = vmatpush1.bf16.msra.mxu0 %v2575
    %3920 = vmatprep.subr.bf16.mxu0 %v2592
    %3921 = vmatpush1.bf16.msra.mxu0 %v2591
    %3922 = vmatprep.subr.bf16.mxu0 %v2608
    %3923 = vmatpush1.bf16.msra.mxu0 %v2607
    %3924 = vmatprep.subr.bf16.mxu0 %v2624
    %3925 = vmatpush1.bf16.msra.mxu0 %v2623
    %3926 = vmatprep.subr.bf16.mxu0 %v2640
    %3927 = vmatpush1.bf16.msra.mxu0 %v2639
    %3928 = vmatprep.subr.bf16.mxu0 %v2656
    %3929 = vmatpush1.bf16.msra.mxu0 %v2655
    %3930 = vmatprep.subr.bf16.mxu0 %v2672
    %3931 = vmatpush1.bf16.msra.mxu0 %v2671
    %3932 = vmatprep.subr.bf16.mxu0 %v2688
    %3933 = vmatpush1.bf16.msra.mxu0 %v2687
    %3934 = vmatprep.subr.bf16.mxu0 %v2704
    %3935 = vmatpush1.bf16.msra.mxu0 %v2703
    %3936 = vmatprep.subr.bf16.mxu0 %v2720
    %3937 = vmatpush1.bf16.msra.mxu0 %v2719
    %3938 = vmatprep.subr.bf16.mxu0 %v2736
    %3939 = vmatpush1.bf16.msra.mxu0 %v2735
    %3940 = vmatprep.subr.bf16.mxu0 %v2752
    %3941 = vmatpush1.bf16.msra.mxu0 %v2751
    %3942 = vmatprep.mubr.bf16.mxu0 %v700
    %3943 = vmatmul.mubr.bf16.gmra.mrb[0].mxu0 %v699
    %v3944 = vpop.f32.mrb[0].mxu0
    %v3945 = vadd.f32 %v3902, %v3944
    %v3946 = vpop.f32.mrb[0].mxu0
    %v3947 = vadd.f32 %v3904, %v3946
    %v3948 = vpop.f32.mrb[0].mxu0
    %v3949 = vadd.f32 %v3906, %v3948
    %v3950 = vpop.f32.mrb[0].mxu0
    %v3951 = vadd.f32 %v3908, %v3950
    %3952 = vdwg.mxu0
    %v3953 = vmax.f32 %v3343, 0.0
    %v3954 = vmax.f32 %v3345, 0.0
    %v3955 = vmax.f32 %v3429, 0.0
    %v3956 = vmax.f32 %v3431, 0.0
    %v3957 = vmax.f32 %v3515, 0.0
    %v3958 = vmax.f32 %v3517, 0.0
    %v3959 = vmax.f32 %v3601, 0.0
    %v3960 = vmax.f32 %v3603, 0.0
    %v3961 = vmax.f32 %v3687, 0.0
    %v3962 = vmax.f32 %v3689, 0.0
    %v3963 = vmax.f32 %v3773, 0.0
    %v3964 = vmax.f32 %v3775, 0.0
    %v3965 = vmax.f32 %v3859, 0.0
    %v3966 = vmax.f32 %v3861, 0.0
    %v3967 = vmax.f32 %v3945, 0.0
    %v3968 = vmax.f32 %v3947, 0.0
    %v3969 = vmax.f32 %v3347, 0.0
    %v3970 = vmax.f32 %v3349, 0.0
    %v3971 = vmax.f32 %v3433, 0.0
    %v3972 = vmax.f32 %v3435, 0.0
    %v3973 = vmax.f32 %v3519, 0.0
    %v3974 = vmax.f32 %v3521, 0.0
    %v3975 = vmax.f32 %v3605, 0.0
    %v3976 = vmax.f32 %v3607, 0.0
    %v3977 = vmax.f32 %v3691, 0.0
    %v3978 = vmax.f32 %v3693, 0.0
    %v3979 = vmax.f32 %v3777, 0.0
    %v3980 = vmax.f32 %v3779, 0.0
    %v3981 = vmax.f32 %v3863, 0.0
    %v3982 = vmax.f32 %v3865, 0.0
    %v3983 = vmax.f32 %v3949, 0.0
    %v3984 = vmax.f32 %v3951, 0.0
    %v3985 = vpack.c.bf16 %v3969, %v3953
    %v3986 = vpack.c.bf16 %v3970, %v3954
    %v3987 = vpack.c.bf16 %v3971, %v3955
    %v3988 = vpack.c.bf16 %v3972, %v3956
    %v3989 = vpack.c.bf16 %v3973, %v3957
    %v3990 = vpack.c.bf16 %v3974, %v3958
    %v3991 = vpack.c.bf16 %v3975, %v3959
    %v3992 = vpack.c.bf16 %v3976, %v3960
    %v3993 = vpack.c.bf16 %v3977, %v3961
    %v3994 = vpack.c.bf16 %v3978, %v3962
    %v3995 = vpack.c.bf16 %v3979, %v3963
    %v3996 = vpack.c.bf16 %v3980, %v3964
    %v3997 = vpack.c.bf16 %v3981, %v3965
    %v3998 = vpack.c.bf16 %v3982, %v3966
    %v3999 = vpack.c.bf16 %v3983, %v3967
    %v4000 = vpack.c.bf16 %v3984, %v3968
    %v4001 = vld [vmem:[#allocation8] sm:$0xff]
    %v4002 = vld [vmem:[#allocation8 + $0x8] sm:$0xff]
    %v4003 = vld [vmem:[#allocation8 + $0x10] sm:$0xff]
    %v4004 = vld [vmem:[#allocation8 + $0x18] sm:$0xff]
    %v4005 = vld [vmem:[#allocation8 + $0x20] sm:$0xff]
    %v4006 = vld [vmem:[#allocation8 + $0x28] sm:$0xff]
    %v4007 = vld [vmem:[#allocation8 + $0x30] sm:$0xff]
    %v4008 = vld [vmem:[#allocation8 + $0x38] sm:$0xff]
    %v4009 = vld [vmem:[#allocation8 + $0x40] sm:$0xff]
    %v4010 = vld [vmem:[#allocation8 + $0x48] sm:$0xff]
    %v4011 = vld [vmem:[#allocation8 + $0x50] sm:$0xff]
    %v4012 = vld [vmem:[#allocation8 + $0x58] sm:$0xff]
    %v4013 = vld [vmem:[#allocation8 + $0x60] sm:$0xff]
    %v4014 = vld [vmem:[#allocation8 + $0x68] sm:$0xff]
    %v4015 = vld [vmem:[#allocation8 + $0x70] sm:$0xff]
    %v4016 = vld [vmem:[#allocation8 + $0x78] sm:$0xff]
    %v4017 = vld [vmem:[#allocation8 + $0x80] sm:$0xff]
    %v4018 = vld [vmem:[#allocation8 + $0x88] sm:$0xff]
    %v4019 = vld [vmem:[#allocation8 + $0x90] sm:$0xff]
    %v4020 = vld [vmem:[#allocation8 + $0x98] sm:$0xff]
    %v4021 = vld [vmem:[#allocation8 + $0xa0] sm:$0xff]
    %v4022 = vld [vmem:[#allocation8 + $0xa8] sm:$0xff]
    %v4023 = vld [vmem:[#allocation8 + $0xb0] sm:$0xff]
    %v4024 = vld [vmem:[#allocation8 + $0xb8] sm:$0xff]
    %v4025 = vld [vmem:[#allocation8 + $0xc0] sm:$0xff]
    %v4026 = vld [vmem:[#allocation8 + $0xc8] sm:$0xff]
    %v4027 = vld [vmem:[#allocation8 + $0xd0] sm:$0xff]
    %v4028 = vld [vmem:[#allocation8 + $0xd8] sm:$0xff]
    %v4029 = vld [vmem:[#allocation8 + $0xe0] sm:$0xff]
    %v4030 = vld [vmem:[#allocation8 + $0xe8] sm:$0xff]
    %v4031 = vld [vmem:[#allocation8 + $0xf0] sm:$0xff]
    %v4032 = vld [vmem:[#allocation8 + $0xf8] sm:$0xff]
    %v4033 = vld [vmem:[#allocation8 + $0x100] sm:$0xff]
    %v4034 = vld [vmem:[#allocation8 + $0x108] sm:$0xff]
    %v4035 = vld [vmem:[#allocation8 + $0x110] sm:$0xff]
    %v4036 = vld [vmem:[#allocation8 + $0x118] sm:$0xff]
    %v4037 = vld [vmem:[#allocation8 + $0x120] sm:$0xff]
    %v4038 = vld [vmem:[#allocation8 + $0x128] sm:$0xff]
    %v4039 = vld [vmem:[#allocation8 + $0x130] sm:$0xff]
    %v4040 = vld [vmem:[#allocation8 + $0x138] sm:$0xff]
    %v4041 = vld [vmem:[#allocation8 + $0x140] sm:$0xff]
    %v4042 = vld [vmem:[#allocation8 + $0x148] sm:$0xff]
    %v4043 = vld [vmem:[#allocation8 + $0x150] sm:$0xff]
    %v4044 = vld [vmem:[#allocation8 + $0x158] sm:$0xff]
    %v4045 = vld [vmem:[#allocation8 + $0x160] sm:$0xff]
    %v4046 = vld [vmem:[#allocation8 + $0x168] sm:$0xff]
    %v4047 = vld [vmem:[#allocation8 + $0x170] sm:$0xff]
    %v4048 = vld [vmem:[#allocation8 + $0x178] sm:$0xff]
    %v4049 = vld [vmem:[#allocation8 + $0x180] sm:$0xff]
    %v4050 = vld [vmem:[#allocation8 + $0x188] sm:$0xff]
    %v4051 = vld [vmem:[#allocation8 + $0x190] sm:$0xff]
    %v4052 = vld [vmem:[#allocation8 + $0x198] sm:$0xff]
    %v4053 = vld [vmem:[#allocation8 + $0x1a0] sm:$0xff]
    %v4054 = vld [vmem:[#allocation8 + $0x1a8] sm:$0xff]
    %v4055 = vld [vmem:[#allocation8 + $0x1b0] sm:$0xff]
    %v4056 = vld [vmem:[#allocation8 + $0x1b8] sm:$0xff]
    %v4057 = vld [vmem:[#allocation8 + $0x1c0] sm:$0xff]
    %v4058 = vld [vmem:[#allocation8 + $0x1c8] sm:$0xff]
    %v4059 = vld [vmem:[#allocation8 + $0x1d0] sm:$0xff]
    %v4060 = vld [vmem:[#allocation8 + $0x1d8] sm:$0xff]
    %v4061 = vld [vmem:[#allocation8 + $0x1e0] sm:$0xff]
    %v4062 = vld [vmem:[#allocation8 + $0x1e8] sm:$0xff]
    %v4063 = vld [vmem:[#allocation8 + $0x1f0] sm:$0xff]
    %v4064 = vld [vmem:[#allocation8 + $0x1f8] sm:$0xff]
    %v4065 = vld [vmem:[#allocation8 + $0x200] sm:$0xff]
    %v4066 = vld [vmem:[#allocation8 + $0x208] sm:$0xff]
    %v4067 = vld [vmem:[#allocation8 + $0x210] sm:$0xff]
    %v4068 = vld [vmem:[#allocation8 + $0x218] sm:$0xff]
    %v4069 = vld [vmem:[#allocation8 + $0x220] sm:$0xff]
    %v4070 = vld [vmem:[#allocation8 + $0x228] sm:$0xff]
    %v4071 = vld [vmem:[#allocation8 + $0x230] sm:$0xff]
    %v4072 = vld [vmem:[#allocation8 + $0x238] sm:$0xff]
    %v4073 = vld [vmem:[#allocation8 + $0x240] sm:$0xff]
    %v4074 = vld [vmem:[#allocation8 + $0x248] sm:$0xff]
    %v4075 = vld [vmem:[#allocation8 + $0x250] sm:$0xff]
    %v4076 = vld [vmem:[#allocation8 + $0x258] sm:$0xff]
    %v4077 = vld [vmem:[#allocation8 + $0x260] sm:$0xff]
    %v4078 = vld [vmem:[#allocation8 + $0x268] sm:$0xff]
    %v4079 = vld [vmem:[#allocation8 + $0x270] sm:$0xff]
    %v4080 = vld [vmem:[#allocation8 + $0x278] sm:$0xff]
    %v4081 = vld [vmem:[#allocation8 + $0x280] sm:$0xff]
    %v4082 = vld [vmem:[#allocation8 + $0x288] sm:$0xff]
    %v4083 = vld [vmem:[#allocation8 + $0x290] sm:$0xff]
    %v4084 = vld [vmem:[#allocation8 + $0x298] sm:$0xff]
    %v4085 = vld [vmem:[#allocation8 + $0x2a0] sm:$0xff]
    %v4086 = vld [vmem:[#allocation8 + $0x2a8] sm:$0xff]
    %v4087 = vld [vmem:[#allocation8 + $0x2b0] sm:$0xff]
    %v4088 = vld [vmem:[#allocation8 + $0x2b8] sm:$0xff]
    %v4089 = vld [vmem:[#allocation8 + $0x2c0] sm:$0xff]
    %v4090 = vld [vmem:[#allocation8 + $0x2c8] sm:$0xff]
    %v4091 = vld [vmem:[#allocation8 + $0x2d0] sm:$0xff]
    %v4092 = vld [vmem:[#allocation8 + $0x2d8] sm:$0xff]
    %v4093 = vld [vmem:[#allocation8 + $0x2e0] sm:$0xff]
    %v4094 = vld [vmem:[#allocation8 + $0x2e8] sm:$0xff]
    %v4095 = vld [vmem:[#allocation8 + $0x2f0] sm:$0xff]
    %v4096 = vld [vmem:[#allocation8 + $0x2f8] sm:$0xff]
    %v4097 = vld [vmem:[#allocation8 + $0x300] sm:$0xff]
    %v4098 = vld [vmem:[#allocation8 + $0x308] sm:$0xff]
    %v4099 = vld [vmem:[#allocation8 + $0x310] sm:$0xff]
    %v4100 = vld [vmem:[#allocation8 + $0x318] sm:$0xff]
    %v4101 = vld [vmem:[#allocation8 + $0x320] sm:$0xff]
    %v4102 = vld [vmem:[#allocation8 + $0x328] sm:$0xff]
    %v4103 = vld [vmem:[#allocation8 + $0x330] sm:$0xff]
    %v4104 = vld [vmem:[#allocation8 + $0x338] sm:$0xff]
    %v4105 = vld [vmem:[#allocation8 + $0x340] sm:$0xff]
    %v4106 = vld [vmem:[#allocation8 + $0x348] sm:$0xff]
    %v4107 = vld [vmem:[#allocation8 + $0x350] sm:$0xff]
    %v4108 = vld [vmem:[#allocation8 + $0x358] sm:$0xff]
    %v4109 = vld [vmem:[#allocation8 + $0x360] sm:$0xff]
    %v4110 = vld [vmem:[#allocation8 + $0x368] sm:$0xff]
    %v4111 = vld [vmem:[#allocation8 + $0x370] sm:$0xff]
    %v4112 = vld [vmem:[#allocation8 + $0x378] sm:$0xff]
    %v4113 = vld [vmem:[#allocation8 + $0x380] sm:$0xff]
    %v4114 = vld [vmem:[#allocation8 + $0x388] sm:$0xff]
    %v4115 = vld [vmem:[#allocation8 + $0x390] sm:$0xff]
    %v4116 = vld [vmem:[#allocation8 + $0x398] sm:$0xff]
    %v4117 = vld [vmem:[#allocation8 + $0x3a0] sm:$0xff]
    %v4118 = vld [vmem:[#allocation8 + $0x3a8] sm:$0xff]
    %v4119 = vld [vmem:[#allocation8 + $0x3b0] sm:$0xff]
    %v4120 = vld [vmem:[#allocation8 + $0x3b8] sm:$0xff]
    %v4121 = vld [vmem:[#allocation8 + $0x3c0] sm:$0xff]
    %v4122 = vld [vmem:[#allocation8 + $0x3c8] sm:$0xff]
    %v4123 = vld [vmem:[#allocation8 + $0x3d0] sm:$0xff]
    %v4124 = vld [vmem:[#allocation8 + $0x3d8] sm:$0xff]
    %v4125 = vld [vmem:[#allocation8 + $0x3e0] sm:$0xff]
    %v4126 = vld [vmem:[#allocation8 + $0x3e8] sm:$0xff]
    %v4127 = vld [vmem:[#allocation8 + $0x3f0] sm:$0xff]
    %v4128 = vld [vmem:[#allocation8 + $0x3f8] sm:$0xff]
    %v4129 = vld [vmem:[#allocation8 + $0x400] sm:$0xff]
    %v4130 = vld [vmem:[#allocation8 + $0x408] sm:$0xff]
    %v4131 = vld [vmem:[#allocation8 + $0x410] sm:$0xff]
    %v4132 = vld [vmem:[#allocation8 + $0x418] sm:$0xff]
    %v4133 = vld [vmem:[#allocation8 + $0x420] sm:$0xff]
    %v4134 = vld [vmem:[#allocation8 + $0x428] sm:$0xff]
    %v4135 = vld [vmem:[#allocation8 + $0x430] sm:$0xff]
    %v4136 = vld [vmem:[#allocation8 + $0x438] sm:$0xff]
    %v4137 = vld [vmem:[#allocation8 + $0x440] sm:$0xff]
    %v4138 = vld [vmem:[#allocation8 + $0x448] sm:$0xff]
    %v4139 = vld [vmem:[#allocation8 + $0x450] sm:$0xff]
    %v4140 = vld [vmem:[#allocation8 + $0x458] sm:$0xff]
    %v4141 = vld [vmem:[#allocation8 + $0x460] sm:$0xff]
    %v4142 = vld [vmem:[#allocation8 + $0x468] sm:$0xff]
    %v4143 = vld [vmem:[#allocation8 + $0x470] sm:$0xff]
    %v4144 = vld [vmem:[#allocation8 + $0x478] sm:$0xff]
    %v4145 = vld [vmem:[#allocation8 + $0x480] sm:$0xff]
    %v4146 = vld [vmem:[#allocation8 + $0x488] sm:$0xff]
    %v4147 = vld [vmem:[#allocation8 + $0x490] sm:$0xff]
    %v4148 = vld [vmem:[#allocation8 + $0x498] sm:$0xff]
    %v4149 = vld [vmem:[#allocation8 + $0x4a0] sm:$0xff]
    %v4150 = vld [vmem:[#allocation8 + $0x4a8] sm:$0xff]
    %v4151 = vld [vmem:[#allocation8 + $0x4b0] sm:$0xff]
    %v4152 = vld [vmem:[#allocation8 + $0x4b8] sm:$0xff]
    %v4153 = vld [vmem:[#allocation8 + $0x4c0] sm:$0xff]
    %v4154 = vld [vmem:[#allocation8 + $0x4c8] sm:$0xff]
    %v4155 = vld [vmem:[#allocation8 + $0x4d0] sm:$0xff]
    %v4156 = vld [vmem:[#allocation8 + $0x4d8] sm:$0xff]
    %v4157 = vld [vmem:[#allocation8 + $0x4e0] sm:$0xff]
    %v4158 = vld [vmem:[#allocation8 + $0x4e8] sm:$0xff]
    %v4159 = vld [vmem:[#allocation8 + $0x4f0] sm:$0xff]
    %v4160 = vld [vmem:[#allocation8 + $0x4f8] sm:$0xff]
    %v4161 = vld [vmem:[#allocation8 + $0x500] sm:$0xff]
    %v4162 = vld [vmem:[#allocation8 + $0x508] sm:$0xff]
    %v4163 = vld [vmem:[#allocation8 + $0x510] sm:$0xff]
    %v4164 = vld [vmem:[#allocation8 + $0x518] sm:$0xff]
    %v4165 = vld [vmem:[#allocation8 + $0x520] sm:$0xff]
    %v4166 = vld [vmem:[#allocation8 + $0x528] sm:$0xff]
    %v4167 = vld [vmem:[#allocation8 + $0x530] sm:$0xff]
    %v4168 = vld [vmem:[#allocation8 + $0x538] sm:$0xff]
    %v4169 = vld [vmem:[#allocation8 + $0x540] sm:$0xff]
    %v4170 = vld [vmem:[#allocation8 + $0x548] sm:$0xff]
    %v4171 = vld [vmem:[#allocation8 + $0x550] sm:$0xff]
    %v4172 = vld [vmem:[#allocation8 + $0x558] sm:$0xff]
    %v4173 = vld [vmem:[#allocation8 + $0x560] sm:$0xff]
    %v4174 = vld [vmem:[#allocation8 + $0x568] sm:$0xff]
    %v4175 = vld [vmem:[#allocation8 + $0x570] sm:$0xff]
    %v4176 = vld [vmem:[#allocation8 + $0x578] sm:$0xff]
    %v4177 = vld [vmem:[#allocation8 + $0x580] sm:$0xff]
    %v4178 = vld [vmem:[#allocation8 + $0x588] sm:$0xff]
    %v4179 = vld [vmem:[#allocation8 + $0x590] sm:$0xff]
    %v4180 = vld [vmem:[#allocation8 + $0x598] sm:$0xff]
    %v4181 = vld [vmem:[#allocation8 + $0x5a0] sm:$0xff]
    %v4182 = vld [vmem:[#allocation8 + $0x5a8] sm:$0xff]
    %v4183 = vld [vmem:[#allocation8 + $0x5b0] sm:$0xff]
    %v4184 = vld [vmem:[#allocation8 + $0x5b8] sm:$0xff]
    %v4185 = vld [vmem:[#allocation8 + $0x5c0] sm:$0xff]
    %v4186 = vld [vmem:[#allocation8 + $0x5c8] sm:$0xff]
    %v4187 = vld [vmem:[#allocation8 + $0x5d0] sm:$0xff]
    %v4188 = vld [vmem:[#allocation8 + $0x5d8] sm:$0xff]
    %v4189 = vld [vmem:[#allocation8 + $0x5e0] sm:$0xff]
    %v4190 = vld [vmem:[#allocation8 + $0x5e8] sm:$0xff]
    %v4191 = vld [vmem:[#allocation8 + $0x5f0] sm:$0xff]
    %v4192 = vld [vmem:[#allocation8 + $0x5f8] sm:$0xff]
    %v4193 = vld [vmem:[#allocation8 + $0x600] sm:$0xff]
    %v4194 = vld [vmem:[#allocation8 + $0x608] sm:$0xff]
    %v4195 = vld [vmem:[#allocation8 + $0x610] sm:$0xff]
    %v4196 = vld [vmem:[#allocation8 + $0x618] sm:$0xff]
    %v4197 = vld [vmem:[#allocation8 + $0x620] sm:$0xff]
    %v4198 = vld [vmem:[#allocation8 + $0x628] sm:$0xff]
    %v4199 = vld [vmem:[#allocation8 + $0x630] sm:$0xff]
    %v4200 = vld [vmem:[#allocation8 + $0x638] sm:$0xff]
    %v4201 = vld [vmem:[#allocation8 + $0x640] sm:$0xff]
    %v4202 = vld [vmem:[#allocation8 + $0x648] sm:$0xff]
    %v4203 = vld [vmem:[#allocation8 + $0x650] sm:$0xff]
    %v4204 = vld [vmem:[#allocation8 + $0x658] sm:$0xff]
    %v4205 = vld [vmem:[#allocation8 + $0x660] sm:$0xff]
    %v4206 = vld [vmem:[#allocation8 + $0x668] sm:$0xff]
    %v4207 = vld [vmem:[#allocation8 + $0x670] sm:$0xff]
    %v4208 = vld [vmem:[#allocation8 + $0x678] sm:$0xff]
    %v4209 = vld [vmem:[#allocation8 + $0x680] sm:$0xff]
    %v4210 = vld [vmem:[#allocation8 + $0x688] sm:$0xff]
    %v4211 = vld [vmem:[#allocation8 + $0x690] sm:$0xff]
    %v4212 = vld [vmem:[#allocation8 + $0x698] sm:$0xff]
    %v4213 = vld [vmem:[#allocation8 + $0x6a0] sm:$0xff]
    %v4214 = vld [vmem:[#allocation8 + $0x6a8] sm:$0xff]
    %v4215 = vld [vmem:[#allocation8 + $0x6b0] sm:$0xff]
    %v4216 = vld [vmem:[#allocation8 + $0x6b8] sm:$0xff]
    %v4217 = vld [vmem:[#allocation8 + $0x6c0] sm:$0xff]
    %v4218 = vld [vmem:[#allocation8 + $0x6c8] sm:$0xff]
    %v4219 = vld [vmem:[#allocation8 + $0x6d0] sm:$0xff]
    %v4220 = vld [vmem:[#allocation8 + $0x6d8] sm:$0xff]
    %v4221 = vld [vmem:[#allocation8 + $0x6e0] sm:$0xff]
    %v4222 = vld [vmem:[#allocation8 + $0x6e8] sm:$0xff]
    %v4223 = vld [vmem:[#allocation8 + $0x6f0] sm:$0xff]
    %v4224 = vld [vmem:[#allocation8 + $0x6f8] sm:$0xff]
    %v4225 = vld [vmem:[#allocation8 + $0x700] sm:$0xff]
    %v4226 = vld [vmem:[#allocation8 + $0x708] sm:$0xff]
    %v4227 = vld [vmem:[#allocation8 + $0x710] sm:$0xff]
    %v4228 = vld [vmem:[#allocation8 + $0x718] sm:$0xff]
    %v4229 = vld [vmem:[#allocation8 + $0x720] sm:$0xff]
    %v4230 = vld [vmem:[#allocation8 + $0x728] sm:$0xff]
    %v4231 = vld [vmem:[#allocation8 + $0x730] sm:$0xff]
    %v4232 = vld [vmem:[#allocation8 + $0x738] sm:$0xff]
    %v4233 = vld [vmem:[#allocation8 + $0x740] sm:$0xff]
    %v4234 = vld [vmem:[#allocation8 + $0x748] sm:$0xff]
    %v4235 = vld [vmem:[#allocation8 + $0x750] sm:$0xff]
    %v4236 = vld [vmem:[#allocation8 + $0x758] sm:$0xff]
    %v4237 = vld [vmem:[#allocation8 + $0x760] sm:$0xff]
    %v4238 = vld [vmem:[#allocation8 + $0x768] sm:$0xff]
    %v4239 = vld [vmem:[#allocation8 + $0x770] sm:$0xff]
    %v4240 = vld [vmem:[#allocation8 + $0x778] sm:$0xff]
    %v4241 = vld [vmem:[#allocation8 + $0x780] sm:$0xff]
    %v4242 = vld [vmem:[#allocation8 + $0x788] sm:$0xff]
    %v4243 = vld [vmem:[#allocation8 + $0x790] sm:$0xff]
    %v4244 = vld [vmem:[#allocation8 + $0x798] sm:$0xff]
    %v4245 = vld [vmem:[#allocation8 + $0x7a0] sm:$0xff]
    %v4246 = vld [vmem:[#allocation8 + $0x7a8] sm:$0xff]
    %v4247 = vld [vmem:[#allocation8 + $0x7b0] sm:$0xff]
    %v4248 = vld [vmem:[#allocation8 + $0x7b8] sm:$0xff]
    %v4249 = vld [vmem:[#allocation8 + $0x7c0] sm:$0xff]
    %v4250 = vld [vmem:[#allocation8 + $0x7c8] sm:$0xff]
    %v4251 = vld [vmem:[#allocation8 + $0x7d0] sm:$0xff]
    %v4252 = vld [vmem:[#allocation8 + $0x7d8] sm:$0xff]
    %v4253 = vld [vmem:[#allocation8 + $0x7e0] sm:$0xff]
    %v4254 = vld [vmem:[#allocation8 + $0x7e8] sm:$0xff]
    %v4255 = vld [vmem:[#allocation8 + $0x7f0] sm:$0xff]
    %v4256 = vld [vmem:[#allocation8 + $0x7f8] sm:$0xff]
    %v4257 = vld [vmem:[#allocation8 + $0x800] sm:$0xff]
    %v4258 = vld [vmem:[#allocation8 + $0x808] sm:$0xff]
    %v4259 = vld [vmem:[#allocation8 + $0x810] sm:$0xff]
    %v4260 = vld [vmem:[#allocation8 + $0x818] sm:$0xff]
    %v4261 = vld [vmem:[#allocation8 + $0x820] sm:$0xff]
    %v4262 = vld [vmem:[#allocation8 + $0x828] sm:$0xff]
    %v4263 = vld [vmem:[#allocation8 + $0x830] sm:$0xff]
    %v4264 = vld [vmem:[#allocation8 + $0x838] sm:$0xff]
    %v4265 = vld [vmem:[#allocation8 + $0x840] sm:$0xff]
    %v4266 = vld [vmem:[#allocation8 + $0x848] sm:$0xff]
    %v4267 = vld [vmem:[#allocation8 + $0x850] sm:$0xff]
    %v4268 = vld [vmem:[#allocation8 + $0x858] sm:$0xff]
    %v4269 = vld [vmem:[#allocation8 + $0x860] sm:$0xff]
    %v4270 = vld [vmem:[#allocation8 + $0x868] sm:$0xff]
    %v4271 = vld [vmem:[#allocation8 + $0x870] sm:$0xff]
    %v4272 = vld [vmem:[#allocation8 + $0x878] sm:$0xff]
    %v4273 = vld [vmem:[#allocation8 + $0x880] sm:$0xff]
    %v4274 = vld [vmem:[#allocation8 + $0x888] sm:$0xff]
    %v4275 = vld [vmem:[#allocation8 + $0x890] sm:$0xff]
    %v4276 = vld [vmem:[#allocation8 + $0x898] sm:$0xff]
    %v4277 = vld [vmem:[#allocation8 + $0x8a0] sm:$0xff]
    %v4278 = vld [vmem:[#allocation8 + $0x8a8] sm:$0xff]
    %v4279 = vld [vmem:[#allocation8 + $0x8b0] sm:$0xff]
    %v4280 = vld [vmem:[#allocation8 + $0x8b8] sm:$0xff]
    %v4281 = vld [vmem:[#allocation8 + $0x8c0] sm:$0xff]
    %v4282 = vld [vmem:[#allocation8 + $0x8c8] sm:$0xff]
    %v4283 = vld [vmem:[#allocation8 + $0x8d0] sm:$0xff]
    %v4284 = vld [vmem:[#allocation8 + $0x8d8] sm:$0xff]
    %v4285 = vld [vmem:[#allocation8 + $0x8e0] sm:$0xff]
    %v4286 = vld [vmem:[#allocation8 + $0x8e8] sm:$0xff]
    %v4287 = vld [vmem:[#allocation8 + $0x8f0] sm:$0xff]
    %v4288 = vld [vmem:[#allocation8 + $0x8f8] sm:$0xff]
    %v4289 = vld [vmem:[#allocation8 + $0x900] sm:$0xff]
    %v4290 = vld [vmem:[#allocation8 + $0x908] sm:$0xff]
    %v4291 = vld [vmem:[#allocation8 + $0x910] sm:$0xff]
    %v4292 = vld [vmem:[#allocation8 + $0x918] sm:$0xff]
    %v4293 = vld [vmem:[#allocation8 + $0x920] sm:$0xff]
    %v4294 = vld [vmem:[#allocation8 + $0x928] sm:$0xff]
    %v4295 = vld [vmem:[#allocation8 + $0x930] sm:$0xff]
    %v4296 = vld [vmem:[#allocation8 + $0x938] sm:$0xff]
    %v4297 = vld [vmem:[#allocation8 + $0x940] sm:$0xff]
    %v4298 = vld [vmem:[#allocation8 + $0x948] sm:$0xff]
    %v4299 = vld [vmem:[#allocation8 + $0x950] sm:$0xff]
    %v4300 = vld [vmem:[#allocation8 + $0x958] sm:$0xff]
    %v4301 = vld [vmem:[#allocation8 + $0x960] sm:$0xff]
    %v4302 = vld [vmem:[#allocation8 + $0x968] sm:$0xff]
    %v4303 = vld [vmem:[#allocation8 + $0x970] sm:$0xff]
    %v4304 = vld [vmem:[#allocation8 + $0x978] sm:$0xff]
    %v4305 = vld [vmem:[#allocation8 + $0x980] sm:$0xff]
    %v4306 = vld [vmem:[#allocation8 + $0x988] sm:$0xff]
    %v4307 = vld [vmem:[#allocation8 + $0x990] sm:$0xff]
    %v4308 = vld [vmem:[#allocation8 + $0x998] sm:$0xff]
    %v4309 = vld [vmem:[#allocation8 + $0x9a0] sm:$0xff]
    %v4310 = vld [vmem:[#allocation8 + $0x9a8] sm:$0xff]
    %v4311 = vld [vmem:[#allocation8 + $0x9b0] sm:$0xff]
    %v4312 = vld [vmem:[#allocation8 + $0x9b8] sm:$0xff]
    %v4313 = vld [vmem:[#allocation8 + $0x9c0] sm:$0xff]
    %v4314 = vld [vmem:[#allocation8 + $0x9c8] sm:$0xff]
    %v4315 = vld [vmem:[#allocation8 + $0x9d0] sm:$0xff]
    %v4316 = vld [vmem:[#allocation8 + $0x9d8] sm:$0xff]
    %v4317 = vld [vmem:[#allocation8 + $0x9e0] sm:$0xff]
    %v4318 = vld [vmem:[#allocation8 + $0x9e8] sm:$0xff]
    %v4319 = vld [vmem:[#allocation8 + $0x9f0] sm:$0xff]
    %v4320 = vld [vmem:[#allocation8 + $0x9f8] sm:$0xff]
    %v4321 = vld [vmem:[#allocation8 + $0xa00] sm:$0xff]
    %v4322 = vld [vmem:[#allocation8 + $0xa08] sm:$0xff]
    %v4323 = vld [vmem:[#allocation8 + $0xa10] sm:$0xff]
    %v4324 = vld [vmem:[#allocation8 + $0xa18] sm:$0xff]
    %v4325 = vld [vmem:[#allocation8 + $0xa20] sm:$0xff]
    %v4326 = vld [vmem:[#allocation8 + $0xa28] sm:$0xff]
    %v4327 = vld [vmem:[#allocation8 + $0xa30] sm:$0xff]
    %v4328 = vld [vmem:[#allocation8 + $0xa38] sm:$0xff]
    %v4329 = vld [vmem:[#allocation8 + $0xa40] sm:$0xff]
    %v4330 = vld [vmem:[#allocation8 + $0xa48] sm:$0xff]
    %v4331 = vld [vmem:[#allocation8 + $0xa50] sm:$0xff]
    %v4332 = vld [vmem:[#allocation8 + $0xa58] sm:$0xff]
    %v4333 = vld [vmem:[#allocation8 + $0xa60] sm:$0xff]
    %v4334 = vld [vmem:[#allocation8 + $0xa68] sm:$0xff]
    %v4335 = vld [vmem:[#allocation8 + $0xa70] sm:$0xff]
    %v4336 = vld [vmem:[#allocation8 + $0xa78] sm:$0xff]
    %v4337 = vld [vmem:[#allocation8 + $0xa80] sm:$0xff]
    %v4338 = vld [vmem:[#allocation8 + $0xa88] sm:$0xff]
    %v4339 = vld [vmem:[#allocation8 + $0xa90] sm:$0xff]
    %v4340 = vld [vmem:[#allocation8 + $0xa98] sm:$0xff]
    %v4341 = vld [vmem:[#allocation8 + $0xaa0] sm:$0xff]
    %v4342 = vld [vmem:[#allocation8 + $0xaa8] sm:$0xff]
    %v4343 = vld [vmem:[#allocation8 + $0xab0] sm:$0xff]
    %v4344 = vld [vmem:[#allocation8 + $0xab8] sm:$0xff]
    %v4345 = vld [vmem:[#allocation8 + $0xac0] sm:$0xff]
    %v4346 = vld [vmem:[#allocation8 + $0xac8] sm:$0xff]
    %v4347 = vld [vmem:[#allocation8 + $0xad0] sm:$0xff]
    %v4348 = vld [vmem:[#allocation8 + $0xad8] sm:$0xff]
    %v4349 = vld [vmem:[#allocation8 + $0xae0] sm:$0xff]
    %v4350 = vld [vmem:[#allocation8 + $0xae8] sm:$0xff]
    %v4351 = vld [vmem:[#allocation8 + $0xaf0] sm:$0xff]
    %v4352 = vld [vmem:[#allocation8 + $0xaf8] sm:$0xff]
    %v4353 = vld [vmem:[#allocation8 + $0xb00] sm:$0xff]
    %v4354 = vld [vmem:[#allocation8 + $0xb08] sm:$0xff]
    %v4355 = vld [vmem:[#allocation8 + $0xb10] sm:$0xff]
    %v4356 = vld [vmem:[#allocation8 + $0xb18] sm:$0xff]
    %v4357 = vld [vmem:[#allocation8 + $0xb20] sm:$0xff]
    %v4358 = vld [vmem:[#allocation8 + $0xb28] sm:$0xff]
    %v4359 = vld [vmem:[#allocation8 + $0xb30] sm:$0xff]
    %v4360 = vld [vmem:[#allocation8 + $0xb38] sm:$0xff]
    %v4361 = vld [vmem:[#allocation8 + $0xb40] sm:$0xff]
    %v4362 = vld [vmem:[#allocation8 + $0xb48] sm:$0xff]
    %v4363 = vld [vmem:[#allocation8 + $0xb50] sm:$0xff]
    %v4364 = vld [vmem:[#allocation8 + $0xb58] sm:$0xff]
    %v4365 = vld [vmem:[#allocation8 + $0xb60] sm:$0xff]
    %v4366 = vld [vmem:[#allocation8 + $0xb68] sm:$0xff]
    %v4367 = vld [vmem:[#allocation8 + $0xb70] sm:$0xff]
    %v4368 = vld [vmem:[#allocation8 + $0xb78] sm:$0xff]
    %v4369 = vld [vmem:[#allocation8 + $0xb80] sm:$0xff]
    %v4370 = vld [vmem:[#allocation8 + $0xb88] sm:$0xff]
    %v4371 = vld [vmem:[#allocation8 + $0xb90] sm:$0xff]
    %v4372 = vld [vmem:[#allocation8 + $0xb98] sm:$0xff]
    %v4373 = vld [vmem:[#allocation8 + $0xba0] sm:$0xff]
    %v4374 = vld [vmem:[#allocation8 + $0xba8] sm:$0xff]
    %v4375 = vld [vmem:[#allocation8 + $0xbb0] sm:$0xff]
    %v4376 = vld [vmem:[#allocation8 + $0xbb8] sm:$0xff]
    %v4377 = vld [vmem:[#allocation8 + $0xbc0] sm:$0xff]
    %v4378 = vld [vmem:[#allocation8 + $0xbc8] sm:$0xff]
    %v4379 = vld [vmem:[#allocation8 + $0xbd0] sm:$0xff]
    %v4380 = vld [vmem:[#allocation8 + $0xbd8] sm:$0xff]
    %v4381 = vld [vmem:[#allocation8 + $0xbe0] sm:$0xff]
    %v4382 = vld [vmem:[#allocation8 + $0xbe8] sm:$0xff]
    %v4383 = vld [vmem:[#allocation8 + $0xbf0] sm:$0xff]
    %v4384 = vld [vmem:[#allocation8 + $0xbf8] sm:$0xff]
    %v4385 = vld [vmem:[#allocation8 + $0xc00] sm:$0xff]
    %v4386 = vld [vmem:[#allocation8 + $0xc08] sm:$0xff]
    %v4387 = vld [vmem:[#allocation8 + $0xc10] sm:$0xff]
    %v4388 = vld [vmem:[#allocation8 + $0xc18] sm:$0xff]
    %v4389 = vld [vmem:[#allocation8 + $0xc20] sm:$0xff]
    %v4390 = vld [vmem:[#allocation8 + $0xc28] sm:$0xff]
    %v4391 = vld [vmem:[#allocation8 + $0xc30] sm:$0xff]
    %v4392 = vld [vmem:[#allocation8 + $0xc38] sm:$0xff]
    %v4393 = vld [vmem:[#allocation8 + $0xc40] sm:$0xff]
    %v4394 = vld [vmem:[#allocation8 + $0xc48] sm:$0xff]
    %v4395 = vld [vmem:[#allocation8 + $0xc50] sm:$0xff]
    %v4396 = vld [vmem:[#allocation8 + $0xc58] sm:$0xff]
    %v4397 = vld [vmem:[#allocation8 + $0xc60] sm:$0xff]
    %v4398 = vld [vmem:[#allocation8 + $0xc68] sm:$0xff]
    %v4399 = vld [vmem:[#allocation8 + $0xc70] sm:$0xff]
    %v4400 = vld [vmem:[#allocation8 + $0xc78] sm:$0xff]
    %v4401 = vld [vmem:[#allocation8 + $0xc80] sm:$0xff]
    %v4402 = vld [vmem:[#allocation8 + $0xc88] sm:$0xff]
    %v4403 = vld [vmem:[#allocation8 + $0xc90] sm:$0xff]
    %v4404 = vld [vmem:[#allocation8 + $0xc98] sm:$0xff]
    %v4405 = vld [vmem:[#allocation8 + $0xca0] sm:$0xff]
    %v4406 = vld [vmem:[#allocation8 + $0xca8] sm:$0xff]
    %v4407 = vld [vmem:[#allocation8 + $0xcb0] sm:$0xff]
    %v4408 = vld [vmem:[#allocation8 + $0xcb8] sm:$0xff]
    %v4409 = vld [vmem:[#allocation8 + $0xcc0] sm:$0xff]
    %v4410 = vld [vmem:[#allocation8 + $0xcc8] sm:$0xff]
    %v4411 = vld [vmem:[#allocation8 + $0xcd0] sm:$0xff]
    %v4412 = vld [vmem:[#allocation8 + $0xcd8] sm:$0xff]
    %v4413 = vld [vmem:[#allocation8 + $0xce0] sm:$0xff]
    %v4414 = vld [vmem:[#allocation8 + $0xce8] sm:$0xff]
    %v4415 = vld [vmem:[#allocation8 + $0xcf0] sm:$0xff]
    %v4416 = vld [vmem:[#allocation8 + $0xcf8] sm:$0xff]
    %v4417 = vld [vmem:[#allocation8 + $0xd00] sm:$0xff]
    %v4418 = vld [vmem:[#allocation8 + $0xd08] sm:$0xff]
    %v4419 = vld [vmem:[#allocation8 + $0xd10] sm:$0xff]
    %v4420 = vld [vmem:[#allocation8 + $0xd18] sm:$0xff]
    %v4421 = vld [vmem:[#allocation8 + $0xd20] sm:$0xff]
    %v4422 = vld [vmem:[#allocation8 + $0xd28] sm:$0xff]
    %v4423 = vld [vmem:[#allocation8 + $0xd30] sm:$0xff]
    %v4424 = vld [vmem:[#allocation8 + $0xd38] sm:$0xff]
    %v4425 = vld [vmem:[#allocation8 + $0xd40] sm:$0xff]
    %v4426 = vld [vmem:[#allocation8 + $0xd48] sm:$0xff]
    %v4427 = vld [vmem:[#allocation8 + $0xd50] sm:$0xff]
    %v4428 = vld [vmem:[#allocation8 + $0xd58] sm:$0xff]
    %v4429 = vld [vmem:[#allocation8 + $0xd60] sm:$0xff]
    %v4430 = vld [vmem:[#allocation8 + $0xd68] sm:$0xff]
    %v4431 = vld [vmem:[#allocation8 + $0xd70] sm:$0xff]
    %v4432 = vld [vmem:[#allocation8 + $0xd78] sm:$0xff]
    %v4433 = vld [vmem:[#allocation8 + $0xd80] sm:$0xff]
    %v4434 = vld [vmem:[#allocation8 + $0xd88] sm:$0xff]
    %v4435 = vld [vmem:[#allocation8 + $0xd90] sm:$0xff]
    %v4436 = vld [vmem:[#allocation8 + $0xd98] sm:$0xff]
    %v4437 = vld [vmem:[#allocation8 + $0xda0] sm:$0xff]
    %v4438 = vld [vmem:[#allocation8 + $0xda8] sm:$0xff]
    %v4439 = vld [vmem:[#allocation8 + $0xdb0] sm:$0xff]
    %v4440 = vld [vmem:[#allocation8 + $0xdb8] sm:$0xff]
    %v4441 = vld [vmem:[#allocation8 + $0xdc0] sm:$0xff]
    %v4442 = vld [vmem:[#allocation8 + $0xdc8] sm:$0xff]
    %v4443 = vld [vmem:[#allocation8 + $0xdd0] sm:$0xff]
    %v4444 = vld [vmem:[#allocation8 + $0xdd8] sm:$0xff]
    %v4445 = vld [vmem:[#allocation8 + $0xde0] sm:$0xff]
    %v4446 = vld [vmem:[#allocation8 + $0xde8] sm:$0xff]
    %v4447 = vld [vmem:[#allocation8 + $0xdf0] sm:$0xff]
    %v4448 = vld [vmem:[#allocation8 + $0xdf8] sm:$0xff]
    %v4449 = vld [vmem:[#allocation8 + $0xe00] sm:$0xff]
    %v4450 = vld [vmem:[#allocation8 + $0xe08] sm:$0xff]
    %v4451 = vld [vmem:[#allocation8 + $0xe10] sm:$0xff]
    %v4452 = vld [vmem:[#allocation8 + $0xe18] sm:$0xff]
    %v4453 = vld [vmem:[#allocation8 + $0xe20] sm:$0xff]
    %v4454 = vld [vmem:[#allocation8 + $0xe28] sm:$0xff]
    %v4455 = vld [vmem:[#allocation8 + $0xe30] sm:$0xff]
    %v4456 = vld [vmem:[#allocation8 + $0xe38] sm:$0xff]
    %v4457 = vld [vmem:[#allocation8 + $0xe40] sm:$0xff]
    %v4458 = vld [vmem:[#allocation8 + $0xe48] sm:$0xff]
    %v4459 = vld [vmem:[#allocation8 + $0xe50] sm:$0xff]
    %v4460 = vld [vmem:[#allocation8 + $0xe58] sm:$0xff]
    %v4461 = vld [vmem:[#allocation8 + $0xe60] sm:$0xff]
    %v4462 = vld [vmem:[#allocation8 + $0xe68] sm:$0xff]
    %v4463 = vld [vmem:[#allocation8 + $0xe70] sm:$0xff]
    %v4464 = vld [vmem:[#allocation8 + $0xe78] sm:$0xff]
    %v4465 = vld [vmem:[#allocation8 + $0xe80] sm:$0xff]
    %v4466 = vld [vmem:[#allocation8 + $0xe88] sm:$0xff]
    %v4467 = vld [vmem:[#allocation8 + $0xe90] sm:$0xff]
    %v4468 = vld [vmem:[#allocation8 + $0xe98] sm:$0xff]
    %v4469 = vld [vmem:[#allocation8 + $0xea0] sm:$0xff]
    %v4470 = vld [vmem:[#allocation8 + $0xea8] sm:$0xff]
    %v4471 = vld [vmem:[#allocation8 + $0xeb0] sm:$0xff]
    %v4472 = vld [vmem:[#allocation8 + $0xeb8] sm:$0xff]
    %v4473 = vld [vmem:[#allocation8 + $0xec0] sm:$0xff]
    %v4474 = vld [vmem:[#allocation8 + $0xec8] sm:$0xff]
    %v4475 = vld [vmem:[#allocation8 + $0xed0] sm:$0xff]
    %v4476 = vld [vmem:[#allocation8 + $0xed8] sm:$0xff]
    %v4477 = vld [vmem:[#allocation8 + $0xee0] sm:$0xff]
    %v4478 = vld [vmem:[#allocation8 + $0xee8] sm:$0xff]
    %v4479 = vld [vmem:[#allocation8 + $0xef0] sm:$0xff]
    %v4480 = vld [vmem:[#allocation8 + $0xef8] sm:$0xff]
    %v4481 = vld [vmem:[#allocation8 + $0xf00] sm:$0xff]
    %v4482 = vld [vmem:[#allocation8 + $0xf08] sm:$0xff]
    %v4483 = vld [vmem:[#allocation8 + $0xf10] sm:$0xff]
    %v4484 = vld [vmem:[#allocation8 + $0xf18] sm:$0xff]
    %v4485 = vld [vmem:[#allocation8 + $0xf20] sm:$0xff]
    %v4486 = vld [vmem:[#allocation8 + $0xf28] sm:$0xff]
    %v4487 = vld [vmem:[#allocation8 + $0xf30] sm:$0xff]
    %v4488 = vld [vmem:[#allocation8 + $0xf38] sm:$0xff]
    %v4489 = vld [vmem:[#allocation8 + $0xf40] sm:$0xff]
    %v4490 = vld [vmem:[#allocation8 + $0xf48] sm:$0xff]
    %v4491 = vld [vmem:[#allocation8 + $0xf50] sm:$0xff]
    %v4492 = vld [vmem:[#allocation8 + $0xf58] sm:$0xff]
    %v4493 = vld [vmem:[#allocation8 + $0xf60] sm:$0xff]
    %v4494 = vld [vmem:[#allocation8 + $0xf68] sm:$0xff]
    %v4495 = vld [vmem:[#allocation8 + $0xf70] sm:$0xff]
    %v4496 = vld [vmem:[#allocation8 + $0xf78] sm:$0xff]
    %v4497 = vld [vmem:[#allocation8 + $0xf80] sm:$0xff]
    %v4498 = vld [vmem:[#allocation8 + $0xf88] sm:$0xff]
    %v4499 = vld [vmem:[#allocation8 + $0xf90] sm:$0xff]
    %v4500 = vld [vmem:[#allocation8 + $0xf98] sm:$0xff]
    %v4501 = vld [vmem:[#allocation8 + $0xfa0] sm:$0xff]
    %v4502 = vld [vmem:[#allocation8 + $0xfa8] sm:$0xff]
    %v4503 = vld [vmem:[#allocation8 + $0xfb0] sm:$0xff]
    %v4504 = vld [vmem:[#allocation8 + $0xfb8] sm:$0xff]
    %v4505 = vld [vmem:[#allocation8 + $0xfc0] sm:$0xff]
    %v4506 = vld [vmem:[#allocation8 + $0xfc8] sm:$0xff]
    %v4507 = vld [vmem:[#allocation8 + $0xfd0] sm:$0xff]
    %v4508 = vld [vmem:[#allocation8 + $0xfd8] sm:$0xff]
    %v4509 = vld [vmem:[#allocation8 + $0xfe0] sm:$0xff]
    %v4510 = vld [vmem:[#allocation8 + $0xfe8] sm:$0xff]
    %v4511 = vld [vmem:[#allocation8 + $0xff0] sm:$0xff]
    %v4512 = vld [vmem:[#allocation8 + $0xff8] sm:$0xff]
    %v4513 = vld [vmem:[#allocation10] sm:$0xf]
    %v4515 = vlaneseq
    %v4516 = vshrl.u32 %v4515, 7
    %v4517 = vsub.s32 0, %v4516
    %v4518 = vrot.slane %v4513, %v4517
    %v4519 = vlaneseq
    %v4520 = vshrl.u32 %v4519, 7
    %v4521 = vsub.s32 1, %v4520
    %v4522 = vrot.slane %v4513, %v4521
    %v4523 = vlaneseq
    %v4524 = vshrl.u32 %v4523, 7
    %v4525 = vsub.s32 2, %v4524
    %v4526 = vrot.slane %v4513, %v4525
    %v4527 = vlaneseq
    %v4528 = vshrl.u32 %v4527, 7
    %v4529 = vsub.s32 3, %v4528
    %v4530 = vrot.slane %v4513, %v4529
    %v5047 = vunpack.c.l.b16 %v4001
    %v5048 = vunpack.c.h.b16 %v4001
    %v5049 = vunpack.c.l.b16 %v4002
    %v5050 = vunpack.c.h.b16 %v4002
    %v5051 = vunpack.c.l.b16 %v4003
    %v5052 = vunpack.c.h.b16 %v4003
    %v5053 = vunpack.c.l.b16 %v4004
    %v5054 = vunpack.c.h.b16 %v4004
    %v5055 = vunpack.c.l.b16 %v4005
    %v5056 = vunpack.c.h.b16 %v4005
    %v5057 = vunpack.c.l.b16 %v4006
    %v5058 = vunpack.c.h.b16 %v4006
    %v5059 = vunpack.c.l.b16 %v4007
    %v5060 = vunpack.c.h.b16 %v4007
    %v5061 = vunpack.c.l.b16 %v4008
    %v5062 = vunpack.c.h.b16 %v4008
    %v5063 = vunpack.c.l.b16 %v4009
    %v5064 = vunpack.c.h.b16 %v4009
    %v5065 = vunpack.c.l.b16 %v4010
    %v5066 = vunpack.c.h.b16 %v4010
    %v5067 = vunpack.c.l.b16 %v4011
    %v5068 = vunpack.c.h.b16 %v4011
    %v5069 = vunpack.c.l.b16 %v4012
    %v5070 = vunpack.c.h.b16 %v4012
    %v5071 = vunpack.c.l.b16 %v4013
    %v5072 = vunpack.c.h.b16 %v4013
    %v5073 = vunpack.c.l.b16 %v4014
    %v5074 = vunpack.c.h.b16 %v4014
    %v5075 = vunpack.c.l.b16 %v4015
    %v5076 = vunpack.c.h.b16 %v4015
    %v5077 = vunpack.c.l.b16 %v4016
    %v5078 = vunpack.c.h.b16 %v4016
    %v5079 = vunpack.c.l.b16 %v4017
    %v5080 = vunpack.c.h.b16 %v4017
    %v5081 = vunpack.c.l.b16 %v4018
    %v5082 = vunpack.c.h.b16 %v4018
    %v5083 = vunpack.c.l.b16 %v4019
    %v5084 = vunpack.c.h.b16 %v4019
    %v5085 = vunpack.c.l.b16 %v4020
    %v5086 = vunpack.c.h.b16 %v4020
    %v5087 = vunpack.c.l.b16 %v4021
    %v5088 = vunpack.c.h.b16 %v4021
    %v5089 = vunpack.c.l.b16 %v4022
    %v5090 = vunpack.c.h.b16 %v4022
    %v5091 = vunpack.c.l.b16 %v4023
    %v5092 = vunpack.c.h.b16 %v4023
    %v5093 = vunpack.c.l.b16 %v4024
    %v5094 = vunpack.c.h.b16 %v4024
    %v5095 = vunpack.c.l.b16 %v4025
    %v5096 = vunpack.c.h.b16 %v4025
    %v5097 = vunpack.c.l.b16 %v4026
    %v5098 = vunpack.c.h.b16 %v4026
    %v5099 = vunpack.c.l.b16 %v4027
    %v5100 = vunpack.c.h.b16 %v4027
    %v5101 = vunpack.c.l.b16 %v4028
    %v5102 = vunpack.c.h.b16 %v4028
    %v5103 = vunpack.c.l.b16 %v4029
    %v5104 = vunpack.c.h.b16 %v4029
    %v5105 = vunpack.c.l.b16 %v4030
    %v5106 = vunpack.c.h.b16 %v4030
    %v5107 = vunpack.c.l.b16 %v4031
    %v5108 = vunpack.c.h.b16 %v4031
    %v5109 = vunpack.c.l.b16 %v4032
    %v5110 = vunpack.c.h.b16 %v4032
    %v5111 = vunpack.c.l.b16 %v4033
    %v5112 = vunpack.c.h.b16 %v4033
    %v5113 = vunpack.c.l.b16 %v4034
    %v5114 = vunpack.c.h.b16 %v4034
    %v5115 = vunpack.c.l.b16 %v4035
    %v5116 = vunpack.c.h.b16 %v4035
    %v5117 = vunpack.c.l.b16 %v4036
    %v5118 = vunpack.c.h.b16 %v4036
    %v5119 = vunpack.c.l.b16 %v4037
    %v5120 = vunpack.c.h.b16 %v4037
    %v5121 = vunpack.c.l.b16 %v4038
    %v5122 = vunpack.c.h.b16 %v4038
    %v5123 = vunpack.c.l.b16 %v4039
    %v5124 = vunpack.c.h.b16 %v4039
    %v5125 = vunpack.c.l.b16 %v4040
    %v5126 = vunpack.c.h.b16 %v4040
    %v5127 = vunpack.c.l.b16 %v4041
    %v5128 = vunpack.c.h.b16 %v4041
    %v5129 = vunpack.c.l.b16 %v4042
    %v5130 = vunpack.c.h.b16 %v4042
    %v5131 = vunpack.c.l.b16 %v4043
    %v5132 = vunpack.c.h.b16 %v4043
    %v5133 = vunpack.c.l.b16 %v4044
    %v5134 = vunpack.c.h.b16 %v4044
    %v5135 = vunpack.c.l.b16 %v4045
    %v5136 = vunpack.c.h.b16 %v4045
    %v5137 = vunpack.c.l.b16 %v4046
    %v5138 = vunpack.c.h.b16 %v4046
    %v5139 = vunpack.c.l.b16 %v4047
    %v5140 = vunpack.c.h.b16 %v4047
    %v5141 = vunpack.c.l.b16 %v4048
    %v5142 = vunpack.c.h.b16 %v4048
    %v5143 = vunpack.c.l.b16 %v4049
    %v5144 = vunpack.c.h.b16 %v4049
    %v5145 = vunpack.c.l.b16 %v4050
    %v5146 = vunpack.c.h.b16 %v4050
    %v5147 = vunpack.c.l.b16 %v4051
    %v5148 = vunpack.c.h.b16 %v4051
    %v5149 = vunpack.c.l.b16 %v4052
    %v5150 = vunpack.c.h.b16 %v4052
    %v5151 = vunpack.c.l.b16 %v4053
    %v5152 = vunpack.c.h.b16 %v4053
    %v5153 = vunpack.c.l.b16 %v4054
    %v5154 = vunpack.c.h.b16 %v4054
    %v5155 = vunpack.c.l.b16 %v4055
    %v5156 = vunpack.c.h.b16 %v4055
    %v5157 = vunpack.c.l.b16 %v4056
    %v5158 = vunpack.c.h.b16 %v4056
    %v5159 = vunpack.c.l.b16 %v4057
    %v5160 = vunpack.c.h.b16 %v4057
    %v5161 = vunpack.c.l.b16 %v4058
    %v5162 = vunpack.c.h.b16 %v4058
    %v5163 = vunpack.c.l.b16 %v4059
    %v5164 = vunpack.c.h.b16 %v4059
    %v5165 = vunpack.c.l.b16 %v4060
    %v5166 = vunpack.c.h.b16 %v4060
    %v5167 = vunpack.c.l.b16 %v4061
    %v5168 = vunpack.c.h.b16 %v4061
    %v5169 = vunpack.c.l.b16 %v4062
    %v5170 = vunpack.c.h.b16 %v4062
    %v5171 = vunpack.c.l.b16 %v4063
    %v5172 = vunpack.c.h.b16 %v4063
    %v5173 = vunpack.c.l.b16 %v4064
    %v5174 = vunpack.c.h.b16 %v4064
    %v5175 = vunpack.c.l.b16 %v4065
    %v5176 = vunpack.c.h.b16 %v4065
    %v5177 = vunpack.c.l.b16 %v4066
    %v5178 = vunpack.c.h.b16 %v4066
    %v5179 = vunpack.c.l.b16 %v4067
    %v5180 = vunpack.c.h.b16 %v4067
    %v5181 = vunpack.c.l.b16 %v4068
    %v5182 = vunpack.c.h.b16 %v4068
    %v5183 = vunpack.c.l.b16 %v4069
    %v5184 = vunpack.c.h.b16 %v4069
    %v5185 = vunpack.c.l.b16 %v4070
    %v5186 = vunpack.c.h.b16 %v4070
    %v5187 = vunpack.c.l.b16 %v4071
    %v5188 = vunpack.c.h.b16 %v4071
    %v5189 = vunpack.c.l.b16 %v4072
    %v5190 = vunpack.c.h.b16 %v4072
    %v5191 = vunpack.c.l.b16 %v4073
    %v5192 = vunpack.c.h.b16 %v4073
    %v5193 = vunpack.c.l.b16 %v4074
    %v5194 = vunpack.c.h.b16 %v4074
    %v5195 = vunpack.c.l.b16 %v4075
    %v5196 = vunpack.c.h.b16 %v4075
    %v5197 = vunpack.c.l.b16 %v4076
    %v5198 = vunpack.c.h.b16 %v4076
    %v5199 = vunpack.c.l.b16 %v4077
    %v5200 = vunpack.c.h.b16 %v4077
    %v5201 = vunpack.c.l.b16 %v4078
    %v5202 = vunpack.c.h.b16 %v4078
    %v5203 = vunpack.c.l.b16 %v4079
    %v5204 = vunpack.c.h.b16 %v4079
    %v5205 = vunpack.c.l.b16 %v4080
    %v5206 = vunpack.c.h.b16 %v4080
    %v5207 = vunpack.c.l.b16 %v4081
    %v5208 = vunpack.c.h.b16 %v4081
    %v5209 = vunpack.c.l.b16 %v4082
    %v5210 = vunpack.c.h.b16 %v4082
    %v5211 = vunpack.c.l.b16 %v4083
    %v5212 = vunpack.c.h.b16 %v4083
    %v5213 = vunpack.c.l.b16 %v4084
    %v5214 = vunpack.c.h.b16 %v4084
    %v5215 = vunpack.c.l.b16 %v4085
    %v5216 = vunpack.c.h.b16 %v4085
    %v5217 = vunpack.c.l.b16 %v4086
    %v5218 = vunpack.c.h.b16 %v4086
    %v5219 = vunpack.c.l.b16 %v4087
    %v5220 = vunpack.c.h.b16 %v4087
    %v5221 = vunpack.c.l.b16 %v4088
    %v5222 = vunpack.c.h.b16 %v4088
    %v5223 = vunpack.c.l.b16 %v4089
    %v5224 = vunpack.c.h.b16 %v4089
    %v5225 = vunpack.c.l.b16 %v4090
    %v5226 = vunpack.c.h.b16 %v4090
    %v5227 = vunpack.c.l.b16 %v4091
    %v5228 = vunpack.c.h.b16 %v4091
    %v5229 = vunpack.c.l.b16 %v4092
    %v5230 = vunpack.c.h.b16 %v4092
    %v5231 = vunpack.c.l.b16 %v4093
    %v5232 = vunpack.c.h.b16 %v4093
    %v5233 = vunpack.c.l.b16 %v4094
    %v5234 = vunpack.c.h.b16 %v4094
    %v5235 = vunpack.c.l.b16 %v4095
    %v5236 = vunpack.c.h.b16 %v4095
    %v5237 = vunpack.c.l.b16 %v4096
    %v5238 = vunpack.c.h.b16 %v4096
    %v5239 = vunpack.c.l.b16 %v4097
    %v5240 = vunpack.c.h.b16 %v4097
    %v5241 = vunpack.c.l.b16 %v4098
    %v5242 = vunpack.c.h.b16 %v4098
    %v5243 = vunpack.c.l.b16 %v4099
    %v5244 = vunpack.c.h.b16 %v4099
    %v5245 = vunpack.c.l.b16 %v4100
    %v5246 = vunpack.c.h.b16 %v4100
    %v5247 = vunpack.c.l.b16 %v4101
    %v5248 = vunpack.c.h.b16 %v4101
    %v5249 = vunpack.c.l.b16 %v4102
    %v5250 = vunpack.c.h.b16 %v4102
    %v5251 = vunpack.c.l.b16 %v4103
    %v5252 = vunpack.c.h.b16 %v4103
    %v5253 = vunpack.c.l.b16 %v4104
    %v5254 = vunpack.c.h.b16 %v4104
    %v5255 = vunpack.c.l.b16 %v4105
    %v5256 = vunpack.c.h.b16 %v4105
    %v5257 = vunpack.c.l.b16 %v4106
    %v5258 = vunpack.c.h.b16 %v4106
    %v5259 = vunpack.c.l.b16 %v4107
    %v5260 = vunpack.c.h.b16 %v4107
    %v5261 = vunpack.c.l.b16 %v4108
    %v5262 = vunpack.c.h.b16 %v4108
    %v5263 = vunpack.c.l.b16 %v4109
    %v5264 = vunpack.c.h.b16 %v4109
    %v5265 = vunpack.c.l.b16 %v4110
    %v5266 = vunpack.c.h.b16 %v4110
    %v5267 = vunpack.c.l.b16 %v4111
    %v5268 = vunpack.c.h.b16 %v4111
    %v5269 = vunpack.c.l.b16 %v4112
    %v5270 = vunpack.c.h.b16 %v4112
    %v5271 = vunpack.c.l.b16 %v4113
    %v5272 = vunpack.c.h.b16 %v4113
    %v5273 = vunpack.c.l.b16 %v4114
    %v5274 = vunpack.c.h.b16 %v4114
    %v5275 = vunpack.c.l.b16 %v4115
    %v5276 = vunpack.c.h.b16 %v4115
    %v5277 = vunpack.c.l.b16 %v4116
    %v5278 = vunpack.c.h.b16 %v4116
    %v5279 = vunpack.c.l.b16 %v4117
    %v5280 = vunpack.c.h.b16 %v4117
    %v5281 = vunpack.c.l.b16 %v4118
    %v5282 = vunpack.c.h.b16 %v4118
    %v5283 = vunpack.c.l.b16 %v4119
    %v5284 = vunpack.c.h.b16 %v4119
    %v5285 = vunpack.c.l.b16 %v4120
    %v5286 = vunpack.c.h.b16 %v4120
    %v5287 = vunpack.c.l.b16 %v4121
    %v5288 = vunpack.c.h.b16 %v4121
    %v5289 = vunpack.c.l.b16 %v4122
    %v5290 = vunpack.c.h.b16 %v4122
    %v5291 = vunpack.c.l.b16 %v4123
    %v5292 = vunpack.c.h.b16 %v4123
    %v5293 = vunpack.c.l.b16 %v4124
    %v5294 = vunpack.c.h.b16 %v4124
    %v5295 = vunpack.c.l.b16 %v4125
    %v5296 = vunpack.c.h.b16 %v4125
    %v5297 = vunpack.c.l.b16 %v4126
    %v5298 = vunpack.c.h.b16 %v4126
    %v5299 = vunpack.c.l.b16 %v4127
    %v5300 = vunpack.c.h.b16 %v4127
    %v5301 = vunpack.c.l.b16 %v4128
    %v5302 = vunpack.c.h.b16 %v4128
    %v5303 = vunpack.c.l.b16 %v4129
    %v5304 = vunpack.c.h.b16 %v4129
    %v5305 = vunpack.c.l.b16 %v4130
    %v5306 = vunpack.c.h.b16 %v4130
    %v5307 = vunpack.c.l.b16 %v4131
    %v5308 = vunpack.c.h.b16 %v4131
    %v5309 = vunpack.c.l.b16 %v4132
    %v5310 = vunpack.c.h.b16 %v4132
    %v5311 = vunpack.c.l.b16 %v4133
    %v5312 = vunpack.c.h.b16 %v4133
    %v5313 = vunpack.c.l.b16 %v4134
    %v5314 = vunpack.c.h.b16 %v4134
    %v5315 = vunpack.c.l.b16 %v4135
    %v5316 = vunpack.c.h.b16 %v4135
    %v5317 = vunpack.c.l.b16 %v4136
    %v5318 = vunpack.c.h.b16 %v4136
    %v5319 = vunpack.c.l.b16 %v4137
    %v5320 = vunpack.c.h.b16 %v4137
    %v5321 = vunpack.c.l.b16 %v4138
    %v5322 = vunpack.c.h.b16 %v4138
    %v5323 = vunpack.c.l.b16 %v4139
    %v5324 = vunpack.c.h.b16 %v4139
    %v5325 = vunpack.c.l.b16 %v4140
    %v5326 = vunpack.c.h.b16 %v4140
    %v5327 = vunpack.c.l.b16 %v4141
    %v5328 = vunpack.c.h.b16 %v4141
    %v5329 = vunpack.c.l.b16 %v4142
    %v5330 = vunpack.c.h.b16 %v4142
    %v5331 = vunpack.c.l.b16 %v4143
    %v5332 = vunpack.c.h.b16 %v4143
    %v5333 = vunpack.c.l.b16 %v4144
    %v5334 = vunpack.c.h.b16 %v4144
    %v5335 = vunpack.c.l.b16 %v4145
    %v5336 = vunpack.c.h.b16 %v4145
    %v5337 = vunpack.c.l.b16 %v4146
    %v5338 = vunpack.c.h.b16 %v4146
    %v5339 = vunpack.c.l.b16 %v4147
    %v5340 = vunpack.c.h.b16 %v4147
    %v5341 = vunpack.c.l.b16 %v4148
    %v5342 = vunpack.c.h.b16 %v4148
    %v5343 = vunpack.c.l.b16 %v4149
    %v5344 = vunpack.c.h.b16 %v4149
    %v5345 = vunpack.c.l.b16 %v4150
    %v5346 = vunpack.c.h.b16 %v4150
    %v5347 = vunpack.c.l.b16 %v4151
    %v5348 = vunpack.c.h.b16 %v4151
    %v5349 = vunpack.c.l.b16 %v4152
    %v5350 = vunpack.c.h.b16 %v4152
    %v5351 = vunpack.c.l.b16 %v4153
    %v5352 = vunpack.c.h.b16 %v4153
    %v5353 = vunpack.c.l.b16 %v4154
    %v5354 = vunpack.c.h.b16 %v4154
    %v5355 = vunpack.c.l.b16 %v4155
    %v5356 = vunpack.c.h.b16 %v4155
    %v5357 = vunpack.c.l.b16 %v4156
    %v5358 = vunpack.c.h.b16 %v4156
    %v5359 = vunpack.c.l.b16 %v4157
    %v5360 = vunpack.c.h.b16 %v4157
    %v5361 = vunpack.c.l.b16 %v4158
    %v5362 = vunpack.c.h.b16 %v4158
    %v5363 = vunpack.c.l.b16 %v4159
    %v5364 = vunpack.c.h.b16 %v4159
    %v5365 = vunpack.c.l.b16 %v4160
    %v5366 = vunpack.c.h.b16 %v4160
    %v5367 = vunpack.c.l.b16 %v4161
    %v5368 = vunpack.c.h.b16 %v4161
    %v5369 = vunpack.c.l.b16 %v4162
    %v5370 = vunpack.c.h.b16 %v4162
    %v5371 = vunpack.c.l.b16 %v4163
    %v5372 = vunpack.c.h.b16 %v4163
    %v5373 = vunpack.c.l.b16 %v4164
    %v5374 = vunpack.c.h.b16 %v4164
    %v5375 = vunpack.c.l.b16 %v4165
    %v5376 = vunpack.c.h.b16 %v4165
    %v5377 = vunpack.c.l.b16 %v4166
    %v5378 = vunpack.c.h.b16 %v4166
    %v5379 = vunpack.c.l.b16 %v4167
    %v5380 = vunpack.c.h.b16 %v4167
    %v5381 = vunpack.c.l.b16 %v4168
    %v5382 = vunpack.c.h.b16 %v4168
    %v5383 = vunpack.c.l.b16 %v4169
    %v5384 = vunpack.c.h.b16 %v4169
    %v5385 = vunpack.c.l.b16 %v4170
    %v5386 = vunpack.c.h.b16 %v4170
    %v5387 = vunpack.c.l.b16 %v4171
    %v5388 = vunpack.c.h.b16 %v4171
    %v5389 = vunpack.c.l.b16 %v4172
    %v5390 = vunpack.c.h.b16 %v4172
    %v5391 = vunpack.c.l.b16 %v4173
    %v5392 = vunpack.c.h.b16 %v4173
    %v5393 = vunpack.c.l.b16 %v4174
    %v5394 = vunpack.c.h.b16 %v4174
    %v5395 = vunpack.c.l.b16 %v4175
    %v5396 = vunpack.c.h.b16 %v4175
    %v5397 = vunpack.c.l.b16 %v4176
    %v5398 = vunpack.c.h.b16 %v4176
    %v5399 = vunpack.c.l.b16 %v4177
    %v5400 = vunpack.c.h.b16 %v4177
    %v5401 = vunpack.c.l.b16 %v4178
    %v5402 = vunpack.c.h.b16 %v4178
    %v5403 = vunpack.c.l.b16 %v4179
    %v5404 = vunpack.c.h.b16 %v4179
    %v5405 = vunpack.c.l.b16 %v4180
    %v5406 = vunpack.c.h.b16 %v4180
    %v5407 = vunpack.c.l.b16 %v4181
    %v5408 = vunpack.c.h.b16 %v4181
    %v5409 = vunpack.c.l.b16 %v4182
    %v5410 = vunpack.c.h.b16 %v4182
    %v5411 = vunpack.c.l.b16 %v4183
    %v5412 = vunpack.c.h.b16 %v4183
    %v5413 = vunpack.c.l.b16 %v4184
    %v5414 = vunpack.c.h.b16 %v4184
    %v5415 = vunpack.c.l.b16 %v4185
    %v5416 = vunpack.c.h.b16 %v4185
    %v5417 = vunpack.c.l.b16 %v4186
    %v5418 = vunpack.c.h.b16 %v4186
    %v5419 = vunpack.c.l.b16 %v4187
    %v5420 = vunpack.c.h.b16 %v4187
    %v5421 = vunpack.c.l.b16 %v4188
    %v5422 = vunpack.c.h.b16 %v4188
    %v5423 = vunpack.c.l.b16 %v4189
    %v5424 = vunpack.c.h.b16 %v4189
    %v5425 = vunpack.c.l.b16 %v4190
    %v5426 = vunpack.c.h.b16 %v4190
    %v5427 = vunpack.c.l.b16 %v4191
    %v5428 = vunpack.c.h.b16 %v4191
    %v5429 = vunpack.c.l.b16 %v4192
    %v5430 = vunpack.c.h.b16 %v4192
    %v5431 = vunpack.c.l.b16 %v4193
    %v5432 = vunpack.c.h.b16 %v4193
    %v5433 = vunpack.c.l.b16 %v4194
    %v5434 = vunpack.c.h.b16 %v4194
    %v5435 = vunpack.c.l.b16 %v4195
    %v5436 = vunpack.c.h.b16 %v4195
    %v5437 = vunpack.c.l.b16 %v4196
    %v5438 = vunpack.c.h.b16 %v4196
    %v5439 = vunpack.c.l.b16 %v4197
    %v5440 = vunpack.c.h.b16 %v4197
    %v5441 = vunpack.c.l.b16 %v4198
    %v5442 = vunpack.c.h.b16 %v4198
    %v5443 = vunpack.c.l.b16 %v4199
    %v5444 = vunpack.c.h.b16 %v4199
    %v5445 = vunpack.c.l.b16 %v4200
    %v5446 = vunpack.c.h.b16 %v4200
    %v5447 = vunpack.c.l.b16 %v4201
    %v5448 = vunpack.c.h.b16 %v4201
    %v5449 = vunpack.c.l.b16 %v4202
    %v5450 = vunpack.c.h.b16 %v4202
    %v5451 = vunpack.c.l.b16 %v4203
    %v5452 = vunpack.c.h.b16 %v4203
    %v5453 = vunpack.c.l.b16 %v4204
    %v5454 = vunpack.c.h.b16 %v4204
    %v5455 = vunpack.c.l.b16 %v4205
    %v5456 = vunpack.c.h.b16 %v4205
    %v5457 = vunpack.c.l.b16 %v4206
    %v5458 = vunpack.c.h.b16 %v4206
    %v5459 = vunpack.c.l.b16 %v4207
    %v5460 = vunpack.c.h.b16 %v4207
    %v5461 = vunpack.c.l.b16 %v4208
    %v5462 = vunpack.c.h.b16 %v4208
    %v5463 = vunpack.c.l.b16 %v4209
    %v5464 = vunpack.c.h.b16 %v4209
    %v5465 = vunpack.c.l.b16 %v4210
    %v5466 = vunpack.c.h.b16 %v4210
    %v5467 = vunpack.c.l.b16 %v4211
    %v5468 = vunpack.c.h.b16 %v4211
    %v5469 = vunpack.c.l.b16 %v4212
    %v5470 = vunpack.c.h.b16 %v4212
    %v5471 = vunpack.c.l.b16 %v4213
    %v5472 = vunpack.c.h.b16 %v4213
    %v5473 = vunpack.c.l.b16 %v4214
    %v5474 = vunpack.c.h.b16 %v4214
    %v5475 = vunpack.c.l.b16 %v4215
    %v5476 = vunpack.c.h.b16 %v4215
    %v5477 = vunpack.c.l.b16 %v4216
    %v5478 = vunpack.c.h.b16 %v4216
    %v5479 = vunpack.c.l.b16 %v4217
    %v5480 = vunpack.c.h.b16 %v4217
    %v5481 = vunpack.c.l.b16 %v4218
    %v5482 = vunpack.c.h.b16 %v4218
    %v5483 = vunpack.c.l.b16 %v4219
    %v5484 = vunpack.c.h.b16 %v4219
    %v5485 = vunpack.c.l.b16 %v4220
    %v5486 = vunpack.c.h.b16 %v4220
    %v5487 = vunpack.c.l.b16 %v4221
    %v5488 = vunpack.c.h.b16 %v4221
    %v5489 = vunpack.c.l.b16 %v4222
    %v5490 = vunpack.c.h.b16 %v4222
    %v5491 = vunpack.c.l.b16 %v4223
    %v5492 = vunpack.c.h.b16 %v4223
    %v5493 = vunpack.c.l.b16 %v4224
    %v5494 = vunpack.c.h.b16 %v4224
    %v5495 = vunpack.c.l.b16 %v4225
    %v5496 = vunpack.c.h.b16 %v4225
    %v5497 = vunpack.c.l.b16 %v4226
    %v5498 = vunpack.c.h.b16 %v4226
    %v5499 = vunpack.c.l.b16 %v4227
    %v5500 = vunpack.c.h.b16 %v4227
    %v5501 = vunpack.c.l.b16 %v4228
    %v5502 = vunpack.c.h.b16 %v4228
    %v5503 = vunpack.c.l.b16 %v4229
    %v5504 = vunpack.c.h.b16 %v4229
    %v5505 = vunpack.c.l.b16 %v4230
    %v5506 = vunpack.c.h.b16 %v4230
    %v5507 = vunpack.c.l.b16 %v4231
    %v5508 = vunpack.c.h.b16 %v4231
    %v5509 = vunpack.c.l.b16 %v4232
    %v5510 = vunpack.c.h.b16 %v4232
    %v5511 = vunpack.c.l.b16 %v4233
    %v5512 = vunpack.c.h.b16 %v4233
    %v5513 = vunpack.c.l.b16 %v4234
    %v5514 = vunpack.c.h.b16 %v4234
    %v5515 = vunpack.c.l.b16 %v4235
    %v5516 = vunpack.c.h.b16 %v4235
    %v5517 = vunpack.c.l.b16 %v4236
    %v5518 = vunpack.c.h.b16 %v4236
    %v5519 = vunpack.c.l.b16 %v4237
    %v5520 = vunpack.c.h.b16 %v4237
    %v5521 = vunpack.c.l.b16 %v4238
    %v5522 = vunpack.c.h.b16 %v4238
    %v5523 = vunpack.c.l.b16 %v4239
    %v5524 = vunpack.c.h.b16 %v4239
    %v5525 = vunpack.c.l.b16 %v4240
    %v5526 = vunpack.c.h.b16 %v4240
    %v5527 = vunpack.c.l.b16 %v4241
    %v5528 = vunpack.c.h.b16 %v4241
    %v5529 = vunpack.c.l.b16 %v4242
    %v5530 = vunpack.c.h.b16 %v4242
    %v5531 = vunpack.c.l.b16 %v4243
    %v5532 = vunpack.c.h.b16 %v4243
    %v5533 = vunpack.c.l.b16 %v4244
    %v5534 = vunpack.c.h.b16 %v4244
    %v5535 = vunpack.c.l.b16 %v4245
    %v5536 = vunpack.c.h.b16 %v4245
    %v5537 = vunpack.c.l.b16 %v4246
    %v5538 = vunpack.c.h.b16 %v4246
    %v5539 = vunpack.c.l.b16 %v4247
    %v5540 = vunpack.c.h.b16 %v4247
    %v5541 = vunpack.c.l.b16 %v4248
    %v5542 = vunpack.c.h.b16 %v4248
    %v5543 = vunpack.c.l.b16 %v4249
    %v5544 = vunpack.c.h.b16 %v4249
    %v5545 = vunpack.c.l.b16 %v4250
    %v5546 = vunpack.c.h.b16 %v4250
    %v5547 = vunpack.c.l.b16 %v4251
    %v5548 = vunpack.c.h.b16 %v4251
    %v5549 = vunpack.c.l.b16 %v4252
    %v5550 = vunpack.c.h.b16 %v4252
    %v5551 = vunpack.c.l.b16 %v4253
    %v5552 = vunpack.c.h.b16 %v4253
    %v5553 = vunpack.c.l.b16 %v4254
    %v5554 = vunpack.c.h.b16 %v4254
    %v5555 = vunpack.c.l.b16 %v4255
    %v5556 = vunpack.c.h.b16 %v4255
    %v5557 = vunpack.c.l.b16 %v4256
    %v5558 = vunpack.c.h.b16 %v4256
    %v5559 = vunpack.c.l.b16 %v4257
    %v5560 = vunpack.c.h.b16 %v4257
    %v5561 = vunpack.c.l.b16 %v4258
    %v5562 = vunpack.c.h.b16 %v4258
    %v5563 = vunpack.c.l.b16 %v4259
    %v5564 = vunpack.c.h.b16 %v4259
    %v5565 = vunpack.c.l.b16 %v4260
    %v5566 = vunpack.c.h.b16 %v4260
    %v5567 = vunpack.c.l.b16 %v4261
    %v5568 = vunpack.c.h.b16 %v4261
    %v5569 = vunpack.c.l.b16 %v4262
    %v5570 = vunpack.c.h.b16 %v4262
    %v5571 = vunpack.c.l.b16 %v4263
    %v5572 = vunpack.c.h.b16 %v4263
    %v5573 = vunpack.c.l.b16 %v4264
    %v5574 = vunpack.c.h.b16 %v4264
    %v5575 = vunpack.c.l.b16 %v4265
    %v5576 = vunpack.c.h.b16 %v4265
    %v5577 = vunpack.c.l.b16 %v4266
    %v5578 = vunpack.c.h.b16 %v4266
    %v5579 = vunpack.c.l.b16 %v4267
    %v5580 = vunpack.c.h.b16 %v4267
    %v5581 = vunpack.c.l.b16 %v4268
    %v5582 = vunpack.c.h.b16 %v4268
    %v5583 = vunpack.c.l.b16 %v4269
    %v5584 = vunpack.c.h.b16 %v4269
    %v5585 = vunpack.c.l.b16 %v4270
    %v5586 = vunpack.c.h.b16 %v4270
    %v5587 = vunpack.c.l.b16 %v4271
    %v5588 = vunpack.c.h.b16 %v4271
    %v5589 = vunpack.c.l.b16 %v4272
    %v5590 = vunpack.c.h.b16 %v4272
    %v5591 = vunpack.c.l.b16 %v4273
    %v5592 = vunpack.c.h.b16 %v4273
    %v5593 = vunpack.c.l.b16 %v4274
    %v5594 = vunpack.c.h.b16 %v4274
    %v5595 = vunpack.c.l.b16 %v4275
    %v5596 = vunpack.c.h.b16 %v4275
    %v5597 = vunpack.c.l.b16 %v4276
    %v5598 = vunpack.c.h.b16 %v4276
    %v5599 = vunpack.c.l.b16 %v4277
    %v5600 = vunpack.c.h.b16 %v4277
    %v5601 = vunpack.c.l.b16 %v4278
    %v5602 = vunpack.c.h.b16 %v4278
    %v5603 = vunpack.c.l.b16 %v4279
    %v5604 = vunpack.c.h.b16 %v4279
    %v5605 = vunpack.c.l.b16 %v4280
    %v5606 = vunpack.c.h.b16 %v4280
    %v5607 = vunpack.c.l.b16 %v4281
    %v5608 = vunpack.c.h.b16 %v4281
    %v5609 = vunpack.c.l.b16 %v4282
    %v5610 = vunpack.c.h.b16 %v4282
    %v5611 = vunpack.c.l.b16 %v4283
    %v5612 = vunpack.c.h.b16 %v4283
    %v5613 = vunpack.c.l.b16 %v4284
    %v5614 = vunpack.c.h.b16 %v4284
    %v5615 = vunpack.c.l.b16 %v4285
    %v5616 = vunpack.c.h.b16 %v4285
    %v5617 = vunpack.c.l.b16 %v4286
    %v5618 = vunpack.c.h.b16 %v4286
    %v5619 = vunpack.c.l.b16 %v4287
    %v5620 = vunpack.c.h.b16 %v4287
    %v5621 = vunpack.c.l.b16 %v4288
    %v5622 = vunpack.c.h.b16 %v4288
    %v5623 = vunpack.c.l.b16 %v4289
    %v5624 = vunpack.c.h.b16 %v4289
    %v5625 = vunpack.c.l.b16 %v4290
    %v5626 = vunpack.c.h.b16 %v4290
    %v5627 = vunpack.c.l.b16 %v4291
    %v5628 = vunpack.c.h.b16 %v4291
    %v5629 = vunpack.c.l.b16 %v4292
    %v5630 = vunpack.c.h.b16 %v4292
    %v5631 = vunpack.c.l.b16 %v4293
    %v5632 = vunpack.c.h.b16 %v4293
    %v5633 = vunpack.c.l.b16 %v4294
    %v5634 = vunpack.c.h.b16 %v4294
    %v5635 = vunpack.c.l.b16 %v4295
    %v5636 = vunpack.c.h.b16 %v4295
    %v5637 = vunpack.c.l.b16 %v4296
    %v5638 = vunpack.c.h.b16 %v4296
    %v5639 = vunpack.c.l.b16 %v4297
    %v5640 = vunpack.c.h.b16 %v4297
    %v5641 = vunpack.c.l.b16 %v4298
    %v5642 = vunpack.c.h.b16 %v4298
    %v5643 = vunpack.c.l.b16 %v4299
    %v5644 = vunpack.c.h.b16 %v4299
    %v5645 = vunpack.c.l.b16 %v4300
    %v5646 = vunpack.c.h.b16 %v4300
    %v5647 = vunpack.c.l.b16 %v4301
    %v5648 = vunpack.c.h.b16 %v4301
    %v5649 = vunpack.c.l.b16 %v4302
    %v5650 = vunpack.c.h.b16 %v4302
    %v5651 = vunpack.c.l.b16 %v4303
    %v5652 = vunpack.c.h.b16 %v4303
    %v5653 = vunpack.c.l.b16 %v4304
    %v5654 = vunpack.c.h.b16 %v4304
    %v5655 = vunpack.c.l.b16 %v4305
    %v5656 = vunpack.c.h.b16 %v4305
    %v5657 = vunpack.c.l.b16 %v4306
    %v5658 = vunpack.c.h.b16 %v4306
    %v5659 = vunpack.c.l.b16 %v4307
    %v5660 = vunpack.c.h.b16 %v4307
    %v5661 = vunpack.c.l.b16 %v4308
    %v5662 = vunpack.c.h.b16 %v4308
    %v5663 = vunpack.c.l.b16 %v4309
    %v5664 = vunpack.c.h.b16 %v4309
    %v5665 = vunpack.c.l.b16 %v4310
    %v5666 = vunpack.c.h.b16 %v4310
    %v5667 = vunpack.c.l.b16 %v4311
    %v5668 = vunpack.c.h.b16 %v4311
    %v5669 = vunpack.c.l.b16 %v4312
    %v5670 = vunpack.c.h.b16 %v4312
    %v5671 = vunpack.c.l.b16 %v4313
    %v5672 = vunpack.c.h.b16 %v4313
    %v5673 = vunpack.c.l.b16 %v4314
    %v5674 = vunpack.c.h.b16 %v4314
    %v5675 = vunpack.c.l.b16 %v4315
    %v5676 = vunpack.c.h.b16 %v4315
    %v5677 = vunpack.c.l.b16 %v4316
    %v5678 = vunpack.c.h.b16 %v4316
    %v5679 = vunpack.c.l.b16 %v4317
    %v5680 = vunpack.c.h.b16 %v4317
    %v5681 = vunpack.c.l.b16 %v4318
    %v5682 = vunpack.c.h.b16 %v4318
    %v5683 = vunpack.c.l.b16 %v4319
    %v5684 = vunpack.c.h.b16 %v4319
    %v5685 = vunpack.c.l.b16 %v4320
    %v5686 = vunpack.c.h.b16 %v4320
    %v5687 = vunpack.c.l.b16 %v4321
    %v5688 = vunpack.c.h.b16 %v4321
    %v5689 = vunpack.c.l.b16 %v4322
    %v5690 = vunpack.c.h.b16 %v4322
    %v5691 = vunpack.c.l.b16 %v4323
    %v5692 = vunpack.c.h.b16 %v4323
    %v5693 = vunpack.c.l.b16 %v4324
    %v5694 = vunpack.c.h.b16 %v4324
    %v5695 = vunpack.c.l.b16 %v4325
    %v5696 = vunpack.c.h.b16 %v4325
    %v5697 = vunpack.c.l.b16 %v4326
    %v5698 = vunpack.c.h.b16 %v4326
    %v5699 = vunpack.c.l.b16 %v4327
    %v5700 = vunpack.c.h.b16 %v4327
    %v5701 = vunpack.c.l.b16 %v4328
    %v5702 = vunpack.c.h.b16 %v4328
    %v5703 = vunpack.c.l.b16 %v4329
    %v5704 = vunpack.c.h.b16 %v4329
    %v5705 = vunpack.c.l.b16 %v4330
    %v5706 = vunpack.c.h.b16 %v4330
    %v5707 = vunpack.c.l.b16 %v4331
    %v5708 = vunpack.c.h.b16 %v4331
    %v5709 = vunpack.c.l.b16 %v4332
    %v5710 = vunpack.c.h.b16 %v4332
    %v5711 = vunpack.c.l.b16 %v4333
    %v5712 = vunpack.c.h.b16 %v4333
    %v5713 = vunpack.c.l.b16 %v4334
    %v5714 = vunpack.c.h.b16 %v4334
    %v5715 = vunpack.c.l.b16 %v4335
    %v5716 = vunpack.c.h.b16 %v4335
    %v5717 = vunpack.c.l.b16 %v4336
    %v5718 = vunpack.c.h.b16 %v4336
    %v5719 = vunpack.c.l.b16 %v4337
    %v5720 = vunpack.c.h.b16 %v4337
    %v5721 = vunpack.c.l.b16 %v4338
    %v5722 = vunpack.c.h.b16 %v4338
    %v5723 = vunpack.c.l.b16 %v4339
    %v5724 = vunpack.c.h.b16 %v4339
    %v5725 = vunpack.c.l.b16 %v4340
    %v5726 = vunpack.c.h.b16 %v4340
    %v5727 = vunpack.c.l.b16 %v4341
    %v5728 = vunpack.c.h.b16 %v4341
    %v5729 = vunpack.c.l.b16 %v4342
    %v5730 = vunpack.c.h.b16 %v4342
    %v5731 = vunpack.c.l.b16 %v4343
    %v5732 = vunpack.c.h.b16 %v4343
    %v5733 = vunpack.c.l.b16 %v4344
    %v5734 = vunpack.c.h.b16 %v4344
    %v5735 = vunpack.c.l.b16 %v4345
    %v5736 = vunpack.c.h.b16 %v4345
    %v5737 = vunpack.c.l.b16 %v4346
    %v5738 = vunpack.c.h.b16 %v4346
    %v5739 = vunpack.c.l.b16 %v4347
    %v5740 = vunpack.c.h.b16 %v4347
    %v5741 = vunpack.c.l.b16 %v4348
    %v5742 = vunpack.c.h.b16 %v4348
    %v5743 = vunpack.c.l.b16 %v4349
    %v5744 = vunpack.c.h.b16 %v4349
    %v5745 = vunpack.c.l.b16 %v4350
    %v5746 = vunpack.c.h.b16 %v4350
    %v5747 = vunpack.c.l.b16 %v4351
    %v5748 = vunpack.c.h.b16 %v4351
    %v5749 = vunpack.c.l.b16 %v4352
    %v5750 = vunpack.c.h.b16 %v4352
    %v5751 = vunpack.c.l.b16 %v4353
    %v5752 = vunpack.c.h.b16 %v4353
    %v5753 = vunpack.c.l.b16 %v4354
    %v5754 = vunpack.c.h.b16 %v4354
    %v5755 = vunpack.c.l.b16 %v4355
    %v5756 = vunpack.c.h.b16 %v4355
    %v5757 = vunpack.c.l.b16 %v4356
    %v5758 = vunpack.c.h.b16 %v4356
    %v5759 = vunpack.c.l.b16 %v4357
    %v5760 = vunpack.c.h.b16 %v4357
    %v5761 = vunpack.c.l.b16 %v4358
    %v5762 = vunpack.c.h.b16 %v4358
    %v5763 = vunpack.c.l.b16 %v4359
    %v5764 = vunpack.c.h.b16 %v4359
    %v5765 = vunpack.c.l.b16 %v4360
    %v5766 = vunpack.c.h.b16 %v4360
    %v5767 = vunpack.c.l.b16 %v4361
    %v5768 = vunpack.c.h.b16 %v4361
    %v5769 = vunpack.c.l.b16 %v4362
    %v5770 = vunpack.c.h.b16 %v4362
    %v5771 = vunpack.c.l.b16 %v4363
    %v5772 = vunpack.c.h.b16 %v4363
    %v5773 = vunpack.c.l.b16 %v4364
    %v5774 = vunpack.c.h.b16 %v4364
    %v5775 = vunpack.c.l.b16 %v4365
    %v5776 = vunpack.c.h.b16 %v4365
    %v5777 = vunpack.c.l.b16 %v4366
    %v5778 = vunpack.c.h.b16 %v4366
    %v5779 = vunpack.c.l.b16 %v4367
    %v5780 = vunpack.c.h.b16 %v4367
    %v5781 = vunpack.c.l.b16 %v4368
    %v5782 = vunpack.c.h.b16 %v4368
    %v5783 = vunpack.c.l.b16 %v4369
    %v5784 = vunpack.c.h.b16 %v4369
    %v5785 = vunpack.c.l.b16 %v4370
    %v5786 = vunpack.c.h.b16 %v4370
    %v5787 = vunpack.c.l.b16 %v4371
    %v5788 = vunpack.c.h.b16 %v4371
    %v5789 = vunpack.c.l.b16 %v4372
    %v5790 = vunpack.c.h.b16 %v4372
    %v5791 = vunpack.c.l.b16 %v4373
    %v5792 = vunpack.c.h.b16 %v4373
    %v5793 = vunpack.c.l.b16 %v4374
    %v5794 = vunpack.c.h.b16 %v4374
    %v5795 = vunpack.c.l.b16 %v4375
    %v5796 = vunpack.c.h.b16 %v4375
    %v5797 = vunpack.c.l.b16 %v4376
    %v5798 = vunpack.c.h.b16 %v4376
    %v5799 = vunpack.c.l.b16 %v4377
    %v5800 = vunpack.c.h.b16 %v4377
    %v5801 = vunpack.c.l.b16 %v4378
    %v5802 = vunpack.c.h.b16 %v4378
    %v5803 = vunpack.c.l.b16 %v4379
    %v5804 = vunpack.c.h.b16 %v4379
    %v5805 = vunpack.c.l.b16 %v4380
    %v5806 = vunpack.c.h.b16 %v4380
    %v5807 = vunpack.c.l.b16 %v4381
    %v5808 = vunpack.c.h.b16 %v4381
    %v5809 = vunpack.c.l.b16 %v4382
    %v5810 = vunpack.c.h.b16 %v4382
    %v5811 = vunpack.c.l.b16 %v4383
    %v5812 = vunpack.c.h.b16 %v4383
    %v5813 = vunpack.c.l.b16 %v4384
    %v5814 = vunpack.c.h.b16 %v4384
    %v5815 = vunpack.c.l.b16 %v4385
    %v5816 = vunpack.c.h.b16 %v4385
    %v5817 = vunpack.c.l.b16 %v4386
    %v5818 = vunpack.c.h.b16 %v4386
    %v5819 = vunpack.c.l.b16 %v4387
    %v5820 = vunpack.c.h.b16 %v4387
    %v5821 = vunpack.c.l.b16 %v4388
    %v5822 = vunpack.c.h.b16 %v4388
    %v5823 = vunpack.c.l.b16 %v4389
    %v5824 = vunpack.c.h.b16 %v4389
    %v5825 = vunpack.c.l.b16 %v4390
    %v5826 = vunpack.c.h.b16 %v4390
    %v5827 = vunpack.c.l.b16 %v4391
    %v5828 = vunpack.c.h.b16 %v4391
    %v5829 = vunpack.c.l.b16 %v4392
    %v5830 = vunpack.c.h.b16 %v4392
    %v5831 = vunpack.c.l.b16 %v4393
    %v5832 = vunpack.c.h.b16 %v4393
    %v5833 = vunpack.c.l.b16 %v4394
    %v5834 = vunpack.c.h.b16 %v4394
    %v5835 = vunpack.c.l.b16 %v4395
    %v5836 = vunpack.c.h.b16 %v4395
    %v5837 = vunpack.c.l.b16 %v4396
    %v5838 = vunpack.c.h.b16 %v4396
    %v5839 = vunpack.c.l.b16 %v4397
    %v5840 = vunpack.c.h.b16 %v4397
    %v5841 = vunpack.c.l.b16 %v4398
    %v5842 = vunpack.c.h.b16 %v4398
    %v5843 = vunpack.c.l.b16 %v4399
    %v5844 = vunpack.c.h.b16 %v4399
    %v5845 = vunpack.c.l.b16 %v4400
    %v5846 = vunpack.c.h.b16 %v4400
    %v5847 = vunpack.c.l.b16 %v4401
    %v5848 = vunpack.c.h.b16 %v4401
    %v5849 = vunpack.c.l.b16 %v4402
    %v5850 = vunpack.c.h.b16 %v4402
    %v5851 = vunpack.c.l.b16 %v4403
    %v5852 = vunpack.c.h.b16 %v4403
    %v5853 = vunpack.c.l.b16 %v4404
    %v5854 = vunpack.c.h.b16 %v4404
    %v5855 = vunpack.c.l.b16 %v4405
    %v5856 = vunpack.c.h.b16 %v4405
    %v5857 = vunpack.c.l.b16 %v4406
    %v5858 = vunpack.c.h.b16 %v4406
    %v5859 = vunpack.c.l.b16 %v4407
    %v5860 = vunpack.c.h.b16 %v4407
    %v5861 = vunpack.c.l.b16 %v4408
    %v5862 = vunpack.c.h.b16 %v4408
    %v5863 = vunpack.c.l.b16 %v4409
    %v5864 = vunpack.c.h.b16 %v4409
    %v5865 = vunpack.c.l.b16 %v4410
    %v5866 = vunpack.c.h.b16 %v4410
    %v5867 = vunpack.c.l.b16 %v4411
    %v5868 = vunpack.c.h.b16 %v4411
    %v5869 = vunpack.c.l.b16 %v4412
    %v5870 = vunpack.c.h.b16 %v4412
    %v5871 = vunpack.c.l.b16 %v4413
    %v5872 = vunpack.c.h.b16 %v4413
    %v5873 = vunpack.c.l.b16 %v4414
    %v5874 = vunpack.c.h.b16 %v4414
    %v5875 = vunpack.c.l.b16 %v4415
    %v5876 = vunpack.c.h.b16 %v4415
    %v5877 = vunpack.c.l.b16 %v4416
    %v5878 = vunpack.c.h.b16 %v4416
    %v5879 = vunpack.c.l.b16 %v4417
    %v5880 = vunpack.c.h.b16 %v4417
    %v5881 = vunpack.c.l.b16 %v4418
    %v5882 = vunpack.c.h.b16 %v4418
    %v5883 = vunpack.c.l.b16 %v4419
    %v5884 = vunpack.c.h.b16 %v4419
    %v5885 = vunpack.c.l.b16 %v4420
    %v5886 = vunpack.c.h.b16 %v4420
    %v5887 = vunpack.c.l.b16 %v4421
    %v5888 = vunpack.c.h.b16 %v4421
    %v5889 = vunpack.c.l.b16 %v4422
    %v5890 = vunpack.c.h.b16 %v4422
    %v5891 = vunpack.c.l.b16 %v4423
    %v5892 = vunpack.c.h.b16 %v4423
    %v5893 = vunpack.c.l.b16 %v4424
    %v5894 = vunpack.c.h.b16 %v4424
    %v5895 = vunpack.c.l.b16 %v4425
    %v5896 = vunpack.c.h.b16 %v4425
    %v5897 = vunpack.c.l.b16 %v4426
    %v5898 = vunpack.c.h.b16 %v4426
    %v5899 = vunpack.c.l.b16 %v4427
    %v5900 = vunpack.c.h.b16 %v4427
    %v5901 = vunpack.c.l.b16 %v4428
    %v5902 = vunpack.c.h.b16 %v4428
    %v5903 = vunpack.c.l.b16 %v4429
    %v5904 = vunpack.c.h.b16 %v4429
    %v5905 = vunpack.c.l.b16 %v4430
    %v5906 = vunpack.c.h.b16 %v4430
    %v5907 = vunpack.c.l.b16 %v4431
    %v5908 = vunpack.c.h.b16 %v4431
    %v5909 = vunpack.c.l.b16 %v4432
    %v5910 = vunpack.c.h.b16 %v4432
    %v5911 = vunpack.c.l.b16 %v4433
    %v5912 = vunpack.c.h.b16 %v4433
    %v5913 = vunpack.c.l.b16 %v4434
    %v5914 = vunpack.c.h.b16 %v4434
    %v5915 = vunpack.c.l.b16 %v4435
    %v5916 = vunpack.c.h.b16 %v4435
    %v5917 = vunpack.c.l.b16 %v4436
    %v5918 = vunpack.c.h.b16 %v4436
    %v5919 = vunpack.c.l.b16 %v4437
    %v5920 = vunpack.c.h.b16 %v4437
    %v5921 = vunpack.c.l.b16 %v4438
    %v5922 = vunpack.c.h.b16 %v4438
    %v5923 = vunpack.c.l.b16 %v4439
    %v5924 = vunpack.c.h.b16 %v4439
    %v5925 = vunpack.c.l.b16 %v4440
    %v5926 = vunpack.c.h.b16 %v4440
    %v5927 = vunpack.c.l.b16 %v4441
    %v5928 = vunpack.c.h.b16 %v4441
    %v5929 = vunpack.c.l.b16 %v4442
    %v5930 = vunpack.c.h.b16 %v4442
    %v5931 = vunpack.c.l.b16 %v4443
    %v5932 = vunpack.c.h.b16 %v4443
    %v5933 = vunpack.c.l.b16 %v4444
    %v5934 = vunpack.c.h.b16 %v4444
    %v5935 = vunpack.c.l.b16 %v4445
    %v5936 = vunpack.c.h.b16 %v4445
    %v5937 = vunpack.c.l.b16 %v4446
    %v5938 = vunpack.c.h.b16 %v4446
    %v5939 = vunpack.c.l.b16 %v4447
    %v5940 = vunpack.c.h.b16 %v4447
    %v5941 = vunpack.c.l.b16 %v4448
    %v5942 = vunpack.c.h.b16 %v4448
    %v5943 = vunpack.c.l.b16 %v4449
    %v5944 = vunpack.c.h.b16 %v4449
    %v5945 = vunpack.c.l.b16 %v4450
    %v5946 = vunpack.c.h.b16 %v4450
    %v5947 = vunpack.c.l.b16 %v4451
    %v5948 = vunpack.c.h.b16 %v4451
    %v5949 = vunpack.c.l.b16 %v4452
    %v5950 = vunpack.c.h.b16 %v4452
    %v5951 = vunpack.c.l.b16 %v4453
    %v5952 = vunpack.c.h.b16 %v4453
    %v5953 = vunpack.c.l.b16 %v4454
    %v5954 = vunpack.c.h.b16 %v4454
    %v5955 = vunpack.c.l.b16 %v4455
    %v5956 = vunpack.c.h.b16 %v4455
    %v5957 = vunpack.c.l.b16 %v4456
    %v5958 = vunpack.c.h.b16 %v4456
    %v5959 = vunpack.c.l.b16 %v4457
    %v5960 = vunpack.c.h.b16 %v4457
    %v5961 = vunpack.c.l.b16 %v4458
    %v5962 = vunpack.c.h.b16 %v4458
    %v5963 = vunpack.c.l.b16 %v4459
    %v5964 = vunpack.c.h.b16 %v4459
    %v5965 = vunpack.c.l.b16 %v4460
    %v5966 = vunpack.c.h.b16 %v4460
    %v5967 = vunpack.c.l.b16 %v4461
    %v5968 = vunpack.c.h.b16 %v4461
    %v5969 = vunpack.c.l.b16 %v4462
    %v5970 = vunpack.c.h.b16 %v4462
    %v5971 = vunpack.c.l.b16 %v4463
    %v5972 = vunpack.c.h.b16 %v4463
    %v5973 = vunpack.c.l.b16 %v4464
    %v5974 = vunpack.c.h.b16 %v4464
    %v5975 = vunpack.c.l.b16 %v4465
    %v5976 = vunpack.c.h.b16 %v4465
    %v5977 = vunpack.c.l.b16 %v4466
    %v5978 = vunpack.c.h.b16 %v4466
    %v5979 = vunpack.c.l.b16 %v4467
    %v5980 = vunpack.c.h.b16 %v4467
    %v5981 = vunpack.c.l.b16 %v4468
    %v5982 = vunpack.c.h.b16 %v4468
    %v5983 = vunpack.c.l.b16 %v4469
    %v5984 = vunpack.c.h.b16 %v4469
    %v5985 = vunpack.c.l.b16 %v4470
    %v5986 = vunpack.c.h.b16 %v4470
    %v5987 = vunpack.c.l.b16 %v4471
    %v5988 = vunpack.c.h.b16 %v4471
    %v5989 = vunpack.c.l.b16 %v4472
    %v5990 = vunpack.c.h.b16 %v4472
    %v5991 = vunpack.c.l.b16 %v4473
    %v5992 = vunpack.c.h.b16 %v4473
    %v5993 = vunpack.c.l.b16 %v4474
    %v5994 = vunpack.c.h.b16 %v4474
    %v5995 = vunpack.c.l.b16 %v4475
    %v5996 = vunpack.c.h.b16 %v4475
    %v5997 = vunpack.c.l.b16 %v4476
    %v5998 = vunpack.c.h.b16 %v4476
    %v5999 = vunpack.c.l.b16 %v4477
    %v6000 = vunpack.c.h.b16 %v4477
    %v6001 = vunpack.c.l.b16 %v4478
    %v6002 = vunpack.c.h.b16 %v4478
    %v6003 = vunpack.c.l.b16 %v4479
    %v6004 = vunpack.c.h.b16 %v4479
    %v6005 = vunpack.c.l.b16 %v4480
    %v6006 = vunpack.c.h.b16 %v4480
    %v6007 = vunpack.c.l.b16 %v4481
    %v6008 = vunpack.c.h.b16 %v4481
    %v6009 = vunpack.c.l.b16 %v4482
    %v6010 = vunpack.c.h.b16 %v4482
    %v6011 = vunpack.c.l.b16 %v4483
    %v6012 = vunpack.c.h.b16 %v4483
    %v6013 = vunpack.c.l.b16 %v4484
    %v6014 = vunpack.c.h.b16 %v4484
    %v6015 = vunpack.c.l.b16 %v4485
    %v6016 = vunpack.c.h.b16 %v4485
    %v6017 = vunpack.c.l.b16 %v4486
    %v6018 = vunpack.c.h.b16 %v4486
    %v6019 = vunpack.c.l.b16 %v4487
    %v6020 = vunpack.c.h.b16 %v4487
    %v6021 = vunpack.c.l.b16 %v4488
    %v6022 = vunpack.c.h.b16 %v4488
    %v6023 = vunpack.c.l.b16 %v4489
    %v6024 = vunpack.c.h.b16 %v4489
    %v6025 = vunpack.c.l.b16 %v4490
    %v6026 = vunpack.c.h.b16 %v4490
    %v6027 = vunpack.c.l.b16 %v4491
    %v6028 = vunpack.c.h.b16 %v4491
    %v6029 = vunpack.c.l.b16 %v4492
    %v6030 = vunpack.c.h.b16 %v4492
    %v6031 = vunpack.c.l.b16 %v4493
    %v6032 = vunpack.c.h.b16 %v4493
    %v6033 = vunpack.c.l.b16 %v4494
    %v6034 = vunpack.c.h.b16 %v4494
    %v6035 = vunpack.c.l.b16 %v4495
    %v6036 = vunpack.c.h.b16 %v4495
    %v6037 = vunpack.c.l.b16 %v4496
    %v6038 = vunpack.c.h.b16 %v4496
    %v6039 = vunpack.c.l.b16 %v4497
    %v6040 = vunpack.c.h.b16 %v4497
    %v6041 = vunpack.c.l.b16 %v4498
    %v6042 = vunpack.c.h.b16 %v4498
    %v6043 = vunpack.c.l.b16 %v4499
    %v6044 = vunpack.c.h.b16 %v4499
    %v6045 = vunpack.c.l.b16 %v4500
    %v6046 = vunpack.c.h.b16 %v4500
    %v6047 = vunpack.c.l.b16 %v4501
    %v6048 = vunpack.c.h.b16 %v4501
    %v6049 = vunpack.c.l.b16 %v4502
    %v6050 = vunpack.c.h.b16 %v4502
    %v6051 = vunpack.c.l.b16 %v4503
    %v6052 = vunpack.c.h.b16 %v4503
    %v6053 = vunpack.c.l.b16 %v4504
    %v6054 = vunpack.c.h.b16 %v4504
    %v6055 = vunpack.c.l.b16 %v4505
    %v6056 = vunpack.c.h.b16 %v4505
    %v6057 = vunpack.c.l.b16 %v4506
    %v6058 = vunpack.c.h.b16 %v4506
    %v6059 = vunpack.c.l.b16 %v4507
    %v6060 = vunpack.c.h.b16 %v4507
    %v6061 = vunpack.c.l.b16 %v4508
    %v6062 = vunpack.c.h.b16 %v4508
    %v6063 = vunpack.c.l.b16 %v4509
    %v6064 = vunpack.c.h.b16 %v4509
    %v6065 = vunpack.c.l.b16 %v4510
    %v6066 = vunpack.c.h.b16 %v4510
    %v6067 = vunpack.c.l.b16 %v4511
    %v6068 = vunpack.c.h.b16 %v4511
    %v6069 = vunpack.c.l.b16 %v4512
    %v6070 = vunpack.c.h.b16 %v4512
    %v6071 = vpack.c.b16 %v5051, %v5047
    %v6072 = vpack.c.b16 %v5052, %v5048
    %v6073 = vpack.c.b16 %v5053, %v5049
    %v6074 = vpack.c.b16 %v5054, %v5050
    %v6075 = vpack.c.b16 %v5059, %v5055
    %v6076 = vpack.c.b16 %v5060, %v5056
    %v6077 = vpack.c.b16 %v5061, %v5057
    %v6078 = vpack.c.b16 %v5062, %v5058
    %v6079 = vpack.c.b16 %v5067, %v5063
    %v6080 = vpack.c.b16 %v5068, %v5064
    %v6081 = vpack.c.b16 %v5069, %v5065
    %v6082 = vpack.c.b16 %v5070, %v5066
    %v6083 = vpack.c.b16 %v5075, %v5071
    %v6084 = vpack.c.b16 %v5076, %v5072
    %v6085 = vpack.c.b16 %v5077, %v5073
    %v6086 = vpack.c.b16 %v5078, %v5074
    %v6087 = vpack.c.b16 %v5083, %v5079
    %v6088 = vpack.c.b16 %v5084, %v5080
    %v6089 = vpack.c.b16 %v5085, %v5081
    %v6090 = vpack.c.b16 %v5086, %v5082
    %v6091 = vpack.c.b16 %v5091, %v5087
    %v6092 = vpack.c.b16 %v5092, %v5088
    %v6093 = vpack.c.b16 %v5093, %v5089
    %v6094 = vpack.c.b16 %v5094, %v5090
    %v6095 = vpack.c.b16 %v5099, %v5095
    %v6096 = vpack.c.b16 %v5100, %v5096
    %v6097 = vpack.c.b16 %v5101, %v5097
    %v6098 = vpack.c.b16 %v5102, %v5098
    %v6099 = vpack.c.b16 %v5107, %v5103
    %v6100 = vpack.c.b16 %v5108, %v5104
    %v6101 = vpack.c.b16 %v5109, %v5105
    %v6102 = vpack.c.b16 %v5110, %v5106
    %v6103 = vpack.c.b16 %v5115, %v5111
    %v6104 = vpack.c.b16 %v5116, %v5112
    %v6105 = vpack.c.b16 %v5117, %v5113
    %v6106 = vpack.c.b16 %v5118, %v5114
    %v6107 = vpack.c.b16 %v5123, %v5119
    %v6108 = vpack.c.b16 %v5124, %v5120
    %v6109 = vpack.c.b16 %v5125, %v5121
    %v6110 = vpack.c.b16 %v5126, %v5122
    %v6111 = vpack.c.b16 %v5131, %v5127
    %v6112 = vpack.c.b16 %v5132, %v5128
    %v6113 = vpack.c.b16 %v5133, %v5129
    %v6114 = vpack.c.b16 %v5134, %v5130
    %v6115 = vpack.c.b16 %v5139, %v5135
    %v6116 = vpack.c.b16 %v5140, %v5136
    %v6117 = vpack.c.b16 %v5141, %v5137
    %v6118 = vpack.c.b16 %v5142, %v5138
    %v6119 = vpack.c.b16 %v5147, %v5143
    %v6120 = vpack.c.b16 %v5148, %v5144
    %v6121 = vpack.c.b16 %v5149, %v5145
    %v6122 = vpack.c.b16 %v5150, %v5146
    %v6123 = vpack.c.b16 %v5155, %v5151
    %v6124 = vpack.c.b16 %v5156, %v5152
    %v6125 = vpack.c.b16 %v5157, %v5153
    %v6126 = vpack.c.b16 %v5158, %v5154
    %v6127 = vpack.c.b16 %v5163, %v5159
    %v6128 = vpack.c.b16 %v5164, %v5160
    %v6129 = vpack.c.b16 %v5165, %v5161
    %v6130 = vpack.c.b16 %v5166, %v5162
    %v6131 = vpack.c.b16 %v5171, %v5167
    %v6132 = vpack.c.b16 %v5172, %v5168
    %v6133 = vpack.c.b16 %v5173, %v5169
    %v6134 = vpack.c.b16 %v5174, %v5170
    %v6135 = vpack.c.b16 %v5179, %v5175
    %v6136 = vpack.c.b16 %v5180, %v5176
    %v6137 = vpack.c.b16 %v5181, %v5177
    %v6138 = vpack.c.b16 %v5182, %v5178
    %v6139 = vpack.c.b16 %v5187, %v5183
    %v6140 = vpack.c.b16 %v5188, %v5184
    %v6141 = vpack.c.b16 %v5189, %v5185
    %v6142 = vpack.c.b16 %v5190, %v5186
    %v6143 = vpack.c.b16 %v5195, %v5191
    %v6144 = vpack.c.b16 %v5196, %v5192
    %v6145 = vpack.c.b16 %v5197, %v5193
    %v6146 = vpack.c.b16 %v5198, %v5194
    %v6147 = vpack.c.b16 %v5203, %v5199
    %v6148 = vpack.c.b16 %v5204, %v5200
    %v6149 = vpack.c.b16 %v5205, %v5201
    %v6150 = vpack.c.b16 %v5206, %v5202
    %v6151 = vpack.c.b16 %v5211, %v5207
    %v6152 = vpack.c.b16 %v5212, %v5208
    %v6153 = vpack.c.b16 %v5213, %v5209
    %v6154 = vpack.c.b16 %v5214, %v5210
    %v6155 = vpack.c.b16 %v5219, %v5215
    %v6156 = vpack.c.b16 %v5220, %v5216
    %v6157 = vpack.c.b16 %v5221, %v5217
    %v6158 = vpack.c.b16 %v5222, %v5218
    %v6159 = vpack.c.b16 %v5227, %v5223
    %v6160 = vpack.c.b16 %v5228, %v5224
    %v6161 = vpack.c.b16 %v5229, %v5225
    %v6162 = vpack.c.b16 %v5230, %v5226
    %v6163 = vpack.c.b16 %v5235, %v5231
    %v6164 = vpack.c.b16 %v5236, %v5232
    %v6165 = vpack.c.b16 %v5237, %v5233
    %v6166 = vpack.c.b16 %v5238, %v5234
    %v6167 = vpack.c.b16 %v5243, %v5239
    %v6168 = vpack.c.b16 %v5244, %v5240
    %v6169 = vpack.c.b16 %v5245, %v5241
    %v6170 = vpack.c.b16 %v5246, %v5242
    %v6171 = vpack.c.b16 %v5251, %v5247
    %v6172 = vpack.c.b16 %v5252, %v5248
    %v6173 = vpack.c.b16 %v5253, %v5249
    %v6174 = vpack.c.b16 %v5254, %v5250
    %v6175 = vpack.c.b16 %v5259, %v5255
    %v6176 = vpack.c.b16 %v5260, %v5256
    %v6177 = vpack.c.b16 %v5261, %v5257
    %v6178 = vpack.c.b16 %v5262, %v5258
    %v6179 = vpack.c.b16 %v5267, %v5263
    %v6180 = vpack.c.b16 %v5268, %v5264
    %v6181 = vpack.c.b16 %v5269, %v5265
    %v6182 = vpack.c.b16 %v5270, %v5266
    %v6183 = vpack.c.b16 %v5275, %v5271
    %v6184 = vpack.c.b16 %v5276, %v5272
    %v6185 = vpack.c.b16 %v5277, %v5273
    %v6186 = vpack.c.b16 %v5278, %v5274
    %v6187 = vpack.c.b16 %v5283, %v5279
    %v6188 = vpack.c.b16 %v5284, %v5280
    %v6189 = vpack.c.b16 %v5285, %v5281
    %v6190 = vpack.c.b16 %v5286, %v5282
    %v6191 = vpack.c.b16 %v5291, %v5287
    %v6192 = vpack.c.b16 %v5292, %v5288
    %v6193 = vpack.c.b16 %v5293, %v5289
    %v6194 = vpack.c.b16 %v5294, %v5290
    %v6195 = vpack.c.b16 %v5299, %v5295
    %v6196 = vpack.c.b16 %v5300, %v5296
    %v6197 = vpack.c.b16 %v5301, %v5297
    %v6198 = vpack.c.b16 %v5302, %v5298
    %v6199 = vpack.c.b16 %v5307, %v5303
    %v6200 = vpack.c.b16 %v5308, %v5304
    %v6201 = vpack.c.b16 %v5309, %v5305
    %v6202 = vpack.c.b16 %v5310, %v5306
    %v6203 = vpack.c.b16 %v5315, %v5311
    %v6204 = vpack.c.b16 %v5316, %v5312
    %v6205 = vpack.c.b16 %v5317, %v5313
    %v6206 = vpack.c.b16 %v5318, %v5314
    %v6207 = vpack.c.b16 %v5323, %v5319
    %v6208 = vpack.c.b16 %v5324, %v5320
    %v6209 = vpack.c.b16 %v5325, %v5321
    %v6210 = vpack.c.b16 %v5326, %v5322
    %v6211 = vpack.c.b16 %v5331, %v5327
    %v6212 = vpack.c.b16 %v5332, %v5328
    %v6213 = vpack.c.b16 %v5333, %v5329
    %v6214 = vpack.c.b16 %v5334, %v5330
    %v6215 = vpack.c.b16 %v5339, %v5335
    %v6216 = vpack.c.b16 %v5340, %v5336
    %v6217 = vpack.c.b16 %v5341, %v5337
    %v6218 = vpack.c.b16 %v5342, %v5338
    %v6219 = vpack.c.b16 %v5347, %v5343
    %v6220 = vpack.c.b16 %v5348, %v5344
    %v6221 = vpack.c.b16 %v5349, %v5345
    %v6222 = vpack.c.b16 %v5350, %v5346
    %v6223 = vpack.c.b16 %v5355, %v5351
    %v6224 = vpack.c.b16 %v5356, %v5352
    %v6225 = vpack.c.b16 %v5357, %v5353
    %v6226 = vpack.c.b16 %v5358, %v5354
    %v6227 = vpack.c.b16 %v5363, %v5359
    %v6228 = vpack.c.b16 %v5364, %v5360
    %v6229 = vpack.c.b16 %v5365, %v5361
    %v6230 = vpack.c.b16 %v5366, %v5362
    %v6231 = vpack.c.b16 %v5371, %v5367
    %v6232 = vpack.c.b16 %v5372, %v5368
    %v6233 = vpack.c.b16 %v5373, %v5369
    %v6234 = vpack.c.b16 %v5374, %v5370
    %v6235 = vpack.c.b16 %v5379, %v5375
    %v6236 = vpack.c.b16 %v5380, %v5376
    %v6237 = vpack.c.b16 %v5381, %v5377
    %v6238 = vpack.c.b16 %v5382, %v5378
    %v6239 = vpack.c.b16 %v5387, %v5383
    %v6240 = vpack.c.b16 %v5388, %v5384
    %v6241 = vpack.c.b16 %v5389, %v5385
    %v6242 = vpack.c.b16 %v5390, %v5386
    %v6243 = vpack.c.b16 %v5395, %v5391
    %v6244 = vpack.c.b16 %v5396, %v5392
    %v6245 = vpack.c.b16 %v5397, %v5393
    %v6246 = vpack.c.b16 %v5398, %v5394
    %v6247 = vpack.c.b16 %v5403, %v5399
    %v6248 = vpack.c.b16 %v5404, %v5400
    %v6249 = vpack.c.b16 %v5405, %v5401
    %v6250 = vpack.c.b16 %v5406, %v5402
    %v6251 = vpack.c.b16 %v5411, %v5407
    %v6252 = vpack.c.b16 %v5412, %v5408
    %v6253 = vpack.c.b16 %v5413, %v5409
    %v6254 = vpack.c.b16 %v5414, %v5410
    %v6255 = vpack.c.b16 %v5419, %v5415
    %v6256 = vpack.c.b16 %v5420, %v5416
    %v6257 = vpack.c.b16 %v5421, %v5417
    %v6258 = vpack.c.b16 %v5422, %v5418
    %v6259 = vpack.c.b16 %v5427, %v5423
    %v6260 = vpack.c.b16 %v5428, %v5424
    %v6261 = vpack.c.b16 %v5429, %v5425
    %v6262 = vpack.c.b16 %v5430, %v5426
    %v6263 = vpack.c.b16 %v5435, %v5431
    %v6264 = vpack.c.b16 %v5436, %v5432
    %v6265 = vpack.c.b16 %v5437, %v5433
    %v6266 = vpack.c.b16 %v5438, %v5434
    %v6267 = vpack.c.b16 %v5443, %v5439
    %v6268 = vpack.c.b16 %v5444, %v5440
    %v6269 = vpack.c.b16 %v5445, %v5441
    %v6270 = vpack.c.b16 %v5446, %v5442
    %v6271 = vpack.c.b16 %v5451, %v5447
    %v6272 = vpack.c.b16 %v5452, %v5448
    %v6273 = vpack.c.b16 %v5453, %v5449
    %v6274 = vpack.c.b16 %v5454, %v5450
    %v6275 = vpack.c.b16 %v5459, %v5455
    %v6276 = vpack.c.b16 %v5460, %v5456
    %v6277 = vpack.c.b16 %v5461, %v5457
    %v6278 = vpack.c.b16 %v5462, %v5458
    %v6279 = vpack.c.b16 %v5467, %v5463
    %v6280 = vpack.c.b16 %v5468, %v5464
    %v6281 = vpack.c.b16 %v5469, %v5465
    %v6282 = vpack.c.b16 %v5470, %v5466
    %v6283 = vpack.c.b16 %v5475, %v5471
    %v6284 = vpack.c.b16 %v5476, %v5472
    %v6285 = vpack.c.b16 %v5477, %v5473
    %v6286 = vpack.c.b16 %v5478, %v5474
    %v6287 = vpack.c.b16 %v5483, %v5479
    %v6288 = vpack.c.b16 %v5484, %v5480
    %v6289 = vpack.c.b16 %v5485, %v5481
    %v6290 = vpack.c.b16 %v5486, %v5482
    %v6291 = vpack.c.b16 %v5491, %v5487
    %v6292 = vpack.c.b16 %v5492, %v5488
    %v6293 = vpack.c.b16 %v5493, %v5489
    %v6294 = vpack.c.b16 %v5494, %v5490
    %v6295 = vpack.c.b16 %v5499, %v5495
    %v6296 = vpack.c.b16 %v5500, %v5496
    %v6297 = vpack.c.b16 %v5501, %v5497
    %v6298 = vpack.c.b16 %v5502, %v5498
    %v6299 = vpack.c.b16 %v5507, %v5503
    %v6300 = vpack.c.b16 %v5508, %v5504
    %v6301 = vpack.c.b16 %v5509, %v5505
    %v6302 = vpack.c.b16 %v5510, %v5506
    %v6303 = vpack.c.b16 %v5515, %v5511
    %v6304 = vpack.c.b16 %v5516, %v5512
    %v6305 = vpack.c.b16 %v5517, %v5513
    %v6306 = vpack.c.b16 %v5518, %v5514
    %v6307 = vpack.c.b16 %v5523, %v5519
    %v6308 = vpack.c.b16 %v5524, %v5520
    %v6309 = vpack.c.b16 %v5525, %v5521
    %v6310 = vpack.c.b16 %v5526, %v5522
    %v6311 = vpack.c.b16 %v5531, %v5527
    %v6312 = vpack.c.b16 %v5532, %v5528
    %v6313 = vpack.c.b16 %v5533, %v5529
    %v6314 = vpack.c.b16 %v5534, %v5530
    %v6315 = vpack.c.b16 %v5539, %v5535
    %v6316 = vpack.c.b16 %v5540, %v5536
    %v6317 = vpack.c.b16 %v5541, %v5537
    %v6318 = vpack.c.b16 %v5542, %v5538
    %v6319 = vpack.c.b16 %v5547, %v5543
    %v6320 = vpack.c.b16 %v5548, %v5544
    %v6321 = vpack.c.b16 %v5549, %v5545
    %v6322 = vpack.c.b16 %v5550, %v5546
    %v6323 = vpack.c.b16 %v5555, %v5551
    %v6324 = vpack.c.b16 %v5556, %v5552
    %v6325 = vpack.c.b16 %v5557, %v5553
    %v6326 = vpack.c.b16 %v5558, %v5554
    %v6327 = vpack.c.b16 %v5563, %v5559
    %v6328 = vpack.c.b16 %v5564, %v5560
    %v6329 = vpack.c.b16 %v5565, %v5561
    %v6330 = vpack.c.b16 %v5566, %v5562
    %v6331 = vpack.c.b16 %v5571, %v5567
    %v6332 = vpack.c.b16 %v5572, %v5568
    %v6333 = vpack.c.b16 %v5573, %v5569
    %v6334 = vpack.c.b16 %v5574, %v5570
    %v6335 = vpack.c.b16 %v5579, %v5575
    %v6336 = vpack.c.b16 %v5580, %v5576
    %v6337 = vpack.c.b16 %v5581, %v5577
    %v6338 = vpack.c.b16 %v5582, %v5578
    %v6339 = vpack.c.b16 %v5587, %v5583
    %v6340 = vpack.c.b16 %v5588, %v5584
    %v6341 = vpack.c.b16 %v5589, %v5585
    %v6342 = vpack.c.b16 %v5590, %v5586
    %v6343 = vpack.c.b16 %v5595, %v5591
    %v6344 = vpack.c.b16 %v5596, %v5592
    %v6345 = vpack.c.b16 %v5597, %v5593
    %v6346 = vpack.c.b16 %v5598, %v5594
    %v6347 = vpack.c.b16 %v5603, %v5599
    %v6348 = vpack.c.b16 %v5604, %v5600
    %v6349 = vpack.c.b16 %v5605, %v5601
    %v6350 = vpack.c.b16 %v5606, %v5602
    %v6351 = vpack.c.b16 %v5611, %v5607
    %v6352 = vpack.c.b16 %v5612, %v5608
    %v6353 = vpack.c.b16 %v5613, %v5609
    %v6354 = vpack.c.b16 %v5614, %v5610
    %v6355 = vpack.c.b16 %v5619, %v5615
    %v6356 = vpack.c.b16 %v5620, %v5616
    %v6357 = vpack.c.b16 %v5621, %v5617
    %v6358 = vpack.c.b16 %v5622, %v5618
    %v6359 = vpack.c.b16 %v5627, %v5623
    %v6360 = vpack.c.b16 %v5628, %v5624
    %v6361 = vpack.c.b16 %v5629, %v5625
    %v6362 = vpack.c.b16 %v5630, %v5626
    %v6363 = vpack.c.b16 %v5635, %v5631
    %v6364 = vpack.c.b16 %v5636, %v5632
    %v6365 = vpack.c.b16 %v5637, %v5633
    %v6366 = vpack.c.b16 %v5638, %v5634
    %v6367 = vpack.c.b16 %v5643, %v5639
    %v6368 = vpack.c.b16 %v5644, %v5640
    %v6369 = vpack.c.b16 %v5645, %v5641
    %v6370 = vpack.c.b16 %v5646, %v5642
    %v6371 = vpack.c.b16 %v5651, %v5647
    %v6372 = vpack.c.b16 %v5652, %v5648
    %v6373 = vpack.c.b16 %v5653, %v5649
    %v6374 = vpack.c.b16 %v5654, %v5650
    %v6375 = vpack.c.b16 %v5659, %v5655
    %v6376 = vpack.c.b16 %v5660, %v5656
    %v6377 = vpack.c.b16 %v5661, %v5657
    %v6378 = vpack.c.b16 %v5662, %v5658
    %v6379 = vpack.c.b16 %v5667, %v5663
    %v6380 = vpack.c.b16 %v5668, %v5664
    %v6381 = vpack.c.b16 %v5669, %v5665
    %v6382 = vpack.c.b16 %v5670, %v5666
    %v6383 = vpack.c.b16 %v5675, %v5671
    %v6384 = vpack.c.b16 %v5676, %v5672
    %v6385 = vpack.c.b16 %v5677, %v5673
    %v6386 = vpack.c.b16 %v5678, %v5674
    %v6387 = vpack.c.b16 %v5683, %v5679
    %v6388 = vpack.c.b16 %v5684, %v5680
    %v6389 = vpack.c.b16 %v5685, %v5681
    %v6390 = vpack.c.b16 %v5686, %v5682
    %v6391 = vpack.c.b16 %v5691, %v5687
    %v6392 = vpack.c.b16 %v5692, %v5688
    %v6393 = vpack.c.b16 %v5693, %v5689
    %v6394 = vpack.c.b16 %v5694, %v5690
    %v6395 = vpack.c.b16 %v5699, %v5695
    %v6396 = vpack.c.b16 %v5700, %v5696
    %v6397 = vpack.c.b16 %v5701, %v5697
    %v6398 = vpack.c.b16 %v5702, %v5698
    %v6399 = vpack.c.b16 %v5707, %v5703
    %v6400 = vpack.c.b16 %v5708, %v5704
    %v6401 = vpack.c.b16 %v5709, %v5705
    %v6402 = vpack.c.b16 %v5710, %v5706
    %v6403 = vpack.c.b16 %v5715, %v5711
    %v6404 = vpack.c.b16 %v5716, %v5712
    %v6405 = vpack.c.b16 %v5717, %v5713
    %v6406 = vpack.c.b16 %v5718, %v5714
    %v6407 = vpack.c.b16 %v5723, %v5719
    %v6408 = vpack.c.b16 %v5724, %v5720
    %v6409 = vpack.c.b16 %v5725, %v5721
    %v6410 = vpack.c.b16 %v5726, %v5722
    %v6411 = vpack.c.b16 %v5731, %v5727
    %v6412 = vpack.c.b16 %v5732, %v5728
    %v6413 = vpack.c.b16 %v5733, %v5729
    %v6414 = vpack.c.b16 %v5734, %v5730
    %v6415 = vpack.c.b16 %v5739, %v5735
    %v6416 = vpack.c.b16 %v5740, %v5736
    %v6417 = vpack.c.b16 %v5741, %v5737
    %v6418 = vpack.c.b16 %v5742, %v5738
    %v6419 = vpack.c.b16 %v5747, %v5743
    %v6420 = vpack.c.b16 %v5748, %v5744
    %v6421 = vpack.c.b16 %v5749, %v5745
    %v6422 = vpack.c.b16 %v5750, %v5746
    %v6423 = vpack.c.b16 %v5755, %v5751
    %v6424 = vpack.c.b16 %v5756, %v5752
    %v6425 = vpack.c.b16 %v5757, %v5753
    %v6426 = vpack.c.b16 %v5758, %v5754
    %v6427 = vpack.c.b16 %v5763, %v5759
    %v6428 = vpack.c.b16 %v5764, %v5760
    %v6429 = vpack.c.b16 %v5765, %v5761
    %v6430 = vpack.c.b16 %v5766, %v5762
    %v6431 = vpack.c.b16 %v5771, %v5767
    %v6432 = vpack.c.b16 %v5772, %v5768
    %v6433 = vpack.c.b16 %v5773, %v5769
    %v6434 = vpack.c.b16 %v5774, %v5770
    %v6435 = vpack.c.b16 %v5779, %v5775
    %v6436 = vpack.c.b16 %v5780, %v5776
    %v6437 = vpack.c.b16 %v5781, %v5777
    %v6438 = vpack.c.b16 %v5782, %v5778
    %v6439 = vpack.c.b16 %v5787, %v5783
    %v6440 = vpack.c.b16 %v5788, %v5784
    %v6441 = vpack.c.b16 %v5789, %v5785
    %v6442 = vpack.c.b16 %v5790, %v5786
    %v6443 = vpack.c.b16 %v5795, %v5791
    %v6444 = vpack.c.b16 %v5796, %v5792
    %v6445 = vpack.c.b16 %v5797, %v5793
    %v6446 = vpack.c.b16 %v5798, %v5794
    %v6447 = vpack.c.b16 %v5803, %v5799
    %v6448 = vpack.c.b16 %v5804, %v5800
    %v6449 = vpack.c.b16 %v5805, %v5801
    %v6450 = vpack.c.b16 %v5806, %v5802
    %v6451 = vpack.c.b16 %v5811, %v5807
    %v6452 = vpack.c.b16 %v5812, %v5808
    %v6453 = vpack.c.b16 %v5813, %v5809
    %v6454 = vpack.c.b16 %v5814, %v5810
    %v6455 = vpack.c.b16 %v5819, %v5815
    %v6456 = vpack.c.b16 %v5820, %v5816
    %v6457 = vpack.c.b16 %v5821, %v5817
    %v6458 = vpack.c.b16 %v5822, %v5818
    %v6459 = vpack.c.b16 %v5827, %v5823
    %v6460 = vpack.c.b16 %v5828, %v5824
    %v6461 = vpack.c.b16 %v5829, %v5825
    %v6462 = vpack.c.b16 %v5830, %v5826
    %v6463 = vpack.c.b16 %v5835, %v5831
    %v6464 = vpack.c.b16 %v5836, %v5832
    %v6465 = vpack.c.b16 %v5837, %v5833
    %v6466 = vpack.c.b16 %v5838, %v5834
    %v6467 = vpack.c.b16 %v5843, %v5839
    %v6468 = vpack.c.b16 %v5844, %v5840
    %v6469 = vpack.c.b16 %v5845, %v5841
    %v6470 = vpack.c.b16 %v5846, %v5842
    %v6471 = vpack.c.b16 %v5851, %v5847
    %v6472 = vpack.c.b16 %v5852, %v5848
    %v6473 = vpack.c.b16 %v5853, %v5849
    %v6474 = vpack.c.b16 %v5854, %v5850
    %v6475 = vpack.c.b16 %v5859, %v5855
    %v6476 = vpack.c.b16 %v5860, %v5856
    %v6477 = vpack.c.b16 %v5861, %v5857
    %v6478 = vpack.c.b16 %v5862, %v5858
    %v6479 = vpack.c.b16 %v5867, %v5863
    %v6480 = vpack.c.b16 %v5868, %v5864
    %v6481 = vpack.c.b16 %v5869, %v5865
    %v6482 = vpack.c.b16 %v5870, %v5866
    %v6483 = vpack.c.b16 %v5875, %v5871
    %v6484 = vpack.c.b16 %v5876, %v5872
    %v6485 = vpack.c.b16 %v5877, %v5873
    %v6486 = vpack.c.b16 %v5878, %v5874
    %v6487 = vpack.c.b16 %v5883, %v5879
    %v6488 = vpack.c.b16 %v5884, %v5880
    %v6489 = vpack.c.b16 %v5885, %v5881
    %v6490 = vpack.c.b16 %v5886, %v5882
    %v6491 = vpack.c.b16 %v5891, %v5887
    %v6492 = vpack.c.b16 %v5892, %v5888
    %v6493 = vpack.c.b16 %v5893, %v5889
    %v6494 = vpack.c.b16 %v5894, %v5890
    %v6495 = vpack.c.b16 %v5899, %v5895
    %v6496 = vpack.c.b16 %v5900, %v5896
    %v6497 = vpack.c.b16 %v5901, %v5897
    %v6498 = vpack.c.b16 %v5902, %v5898
    %v6499 = vpack.c.b16 %v5907, %v5903
    %v6500 = vpack.c.b16 %v5908, %v5904
    %v6501 = vpack.c.b16 %v5909, %v5905
    %v6502 = vpack.c.b16 %v5910, %v5906
    %v6503 = vpack.c.b16 %v5915, %v5911
    %v6504 = vpack.c.b16 %v5916, %v5912
    %v6505 = vpack.c.b16 %v5917, %v5913
    %v6506 = vpack.c.b16 %v5918, %v5914
    %v6507 = vpack.c.b16 %v5923, %v5919
    %v6508 = vpack.c.b16 %v5924, %v5920
    %v6509 = vpack.c.b16 %v5925, %v5921
    %v6510 = vpack.c.b16 %v5926, %v5922
    %v6511 = vpack.c.b16 %v5931, %v5927
    %v6512 = vpack.c.b16 %v5932, %v5928
    %v6513 = vpack.c.b16 %v5933, %v5929
    %v6514 = vpack.c.b16 %v5934, %v5930
    %v6515 = vpack.c.b16 %v5939, %v5935
    %v6516 = vpack.c.b16 %v5940, %v5936
    %v6517 = vpack.c.b16 %v5941, %v5937
    %v6518 = vpack.c.b16 %v5942, %v5938
    %v6519 = vpack.c.b16 %v5947, %v5943
    %v6520 = vpack.c.b16 %v5948, %v5944
    %v6521 = vpack.c.b16 %v5949, %v5945
    %v6522 = vpack.c.b16 %v5950, %v5946
    %v6523 = vpack.c.b16 %v5955, %v5951
    %v6524 = vpack.c.b16 %v5956, %v5952
    %v6525 = vpack.c.b16 %v5957, %v5953
    %v6526 = vpack.c.b16 %v5958, %v5954
    %v6527 = vpack.c.b16 %v5963, %v5959
    %v6528 = vpack.c.b16 %v5964, %v5960
    %v6529 = vpack.c.b16 %v5965, %v5961
    %v6530 = vpack.c.b16 %v5966, %v5962
    %v6531 = vpack.c.b16 %v5971, %v5967
    %v6532 = vpack.c.b16 %v5972, %v5968
    %v6533 = vpack.c.b16 %v5973, %v5969
    %v6534 = vpack.c.b16 %v5974, %v5970
    %v6535 = vpack.c.b16 %v5979, %v5975
    %v6536 = vpack.c.b16 %v5980, %v5976
    %v6537 = vpack.c.b16 %v5981, %v5977
    %v6538 = vpack.c.b16 %v5982, %v5978
    %v6539 = vpack.c.b16 %v5987, %v5983
    %v6540 = vpack.c.b16 %v5988, %v5984
    %v6541 = vpack.c.b16 %v5989, %v5985
    %v6542 = vpack.c.b16 %v5990, %v5986
    %v6543 = vpack.c.b16 %v5995, %v5991
    %v6544 = vpack.c.b16 %v5996, %v5992
    %v6545 = vpack.c.b16 %v5997, %v5993
    %v6546 = vpack.c.b16 %v5998, %v5994
    %v6547 = vpack.c.b16 %v6003, %v5999
    %v6548 = vpack.c.b16 %v6004, %v6000
    %v6549 = vpack.c.b16 %v6005, %v6001
    %v6550 = vpack.c.b16 %v6006, %v6002
    %v6551 = vpack.c.b16 %v6011, %v6007
    %v6552 = vpack.c.b16 %v6012, %v6008
    %v6553 = vpack.c.b16 %v6013, %v6009
    %v6554 = vpack.c.b16 %v6014, %v6010
    %v6555 = vpack.c.b16 %v6019, %v6015
    %v6556 = vpack.c.b16 %v6020, %v6016
    %v6557 = vpack.c.b16 %v6021, %v6017
    %v6558 = vpack.c.b16 %v6022, %v6018
    %v6559 = vpack.c.b16 %v6027, %v6023
    %v6560 = vpack.c.b16 %v6028, %v6024
    %v6561 = vpack.c.b16 %v6029, %v6025
    %v6562 = vpack.c.b16 %v6030, %v6026
    %v6563 = vpack.c.b16 %v6035, %v6031
    %v6564 = vpack.c.b16 %v6036, %v6032
    %v6565 = vpack.c.b16 %v6037, %v6033
    %v6566 = vpack.c.b16 %v6038, %v6034
    %v6567 = vpack.c.b16 %v6043, %v6039
    %v6568 = vpack.c.b16 %v6044, %v6040
    %v6569 = vpack.c.b16 %v6045, %v6041
    %v6570 = vpack.c.b16 %v6046, %v6042
    %v6571 = vpack.c.b16 %v6051, %v6047
    %v6572 = vpack.c.b16 %v6052, %v6048
    %v6573 = vpack.c.b16 %v6053, %v6049
    %v6574 = vpack.c.b16 %v6054, %v6050
    %v6575 = vpack.c.b16 %v6059, %v6055
    %v6576 = vpack.c.b16 %v6060, %v6056
    %v6577 = vpack.c.b16 %v6061, %v6057
    %v6578 = vpack.c.b16 %v6062, %v6058
    %v6579 = vpack.c.b16 %v6067, %v6063
    %v6580 = vpack.c.b16 %v6068, %v6064
    %v6581 = vpack.c.b16 %v6069, %v6065
    %v6582 = vpack.c.b16 %v6070, %v6066
    %7095 = vmatprep.subr.bf16.mxu0 %v6072
    %7096 = vmatpush1.bf16.msra.mxu0 %v6071
    %7097 = vmatprep.subr.bf16.mxu0 %v6076
    %7098 = vmatpush1.bf16.msra.mxu0 %v6075
    %7099 = vmatprep.subr.bf16.mxu0 %v6080
    %7100 = vmatpush1.bf16.msra.mxu0 %v6079
    %7101 = vmatprep.subr.bf16.mxu0 %v6084
    %7102 = vmatpush1.bf16.msra.mxu0 %v6083
    %7103 = vmatprep.subr.bf16.mxu0 %v6088
    %7104 = vmatpush1.bf16.msra.mxu0 %v6087
    %7105 = vmatprep.subr.bf16.mxu0 %v6092
    %7106 = vmatpush1.bf16.msra.mxu0 %v6091
    %7107 = vmatprep.subr.bf16.mxu0 %v6096
    %7108 = vmatpush1.bf16.msra.mxu0 %v6095
    %7109 = vmatprep.subr.bf16.mxu0 %v6100
    %7110 = vmatpush1.bf16.msra.mxu0 %v6099
    %7111 = vmatprep.subr.bf16.mxu0 %v6104
    %7112 = vmatpush1.bf16.msra.mxu0 %v6103
    %7113 = vmatprep.subr.bf16.mxu0 %v6108
    %7114 = vmatpush1.bf16.msra.mxu0 %v6107
    %7115 = vmatprep.subr.bf16.mxu0 %v6112
    %7116 = vmatpush1.bf16.msra.mxu0 %v6111
    %7117 = vmatprep.subr.bf16.mxu0 %v6116
    %7118 = vmatpush1.bf16.msra.mxu0 %v6115
    %7119 = vmatprep.subr.bf16.mxu0 %v6120
    %7120 = vmatpush1.bf16.msra.mxu0 %v6119
    %7121 = vmatprep.subr.bf16.mxu0 %v6124
    %7122 = vmatpush1.bf16.msra.mxu0 %v6123
    %7123 = vmatprep.subr.bf16.mxu0 %v6128
    %7124 = vmatpush1.bf16.msra.mxu0 %v6127
    %7125 = vmatprep.subr.bf16.mxu0 %v6132
    %7126 = vmatpush1.bf16.msra.mxu0 %v6131
    %7127 = vmatprep.mubr.bf16.mxu0 %v3986
    %7128 = vmatmul.mubr.bf16.gmra.mrb[0].mxu0 %v3985
    %v7129 = vpop.f32.mrb[0].mxu0
    %v7130 = vadd.f32 %v4518, %v7129
    %v7131 = vpop.f32.mrb[0].mxu0
    %v7132 = vadd.f32 %v4522, %v7131
    %v7133 = vpop.f32.mrb[0].mxu0
    %v7134 = vadd.f32 %v4518, %v7133
    %v7135 = vpop.f32.mrb[0].mxu0
    %v7136 = vadd.f32 %v4522, %v7135
    %7137 = vdwg.mxu0
    %7138 = vmatprep.subr.bf16.mxu0 %v6136
    %7139 = vmatpush1.bf16.msra.mxu0 %v6135
    %7140 = vmatprep.subr.bf16.mxu0 %v6140
    %7141 = vmatpush1.bf16.msra.mxu0 %v6139
    %7142 = vmatprep.subr.bf16.mxu0 %v6144
    %7143 = vmatpush1.bf16.msra.mxu0 %v6143
    %7144 = vmatprep.subr.bf16.mxu0 %v6148
    %7145 = vmatpush1.bf16.msra.mxu0 %v6147
    %7146 = vmatprep.subr.bf16.mxu0 %v6152
    %7147 = vmatpush1.bf16.msra.mxu0 %v6151
    %7148 = vmatprep.subr.bf16.mxu0 %v6156
    %7149 = vmatpush1.bf16.msra.mxu0 %v6155
    %7150 = vmatprep.subr.bf16.mxu0 %v6160
    %7151 = vmatpush1.bf16.msra.mxu0 %v6159
    %7152 = vmatprep.subr.bf16.mxu0 %v6164
    %7153 = vmatpush1.bf16.msra.mxu0 %v6163
    %7154 = vmatprep.subr.bf16.mxu0 %v6168
    %7155 = vmatpush1.bf16.msra.mxu0 %v6167
    %7156 = vmatprep.subr.bf16.mxu0 %v6172
    %7157 = vmatpush1.bf16.msra.mxu0 %v6171
    %7158 = vmatprep.subr.bf16.mxu0 %v6176
    %7159 = vmatpush1.bf16.msra.mxu0 %v6175
    %7160 = vmatprep.subr.bf16.mxu0 %v6180
    %7161 = vmatpush1.bf16.msra.mxu0 %v6179
    %7162 = vmatprep.subr.bf16.mxu0 %v6184
    %7163 = vmatpush1.bf16.msra.mxu0 %v6183
    %7164 = vmatprep.subr.bf16.mxu0 %v6188
    %7165 = vmatpush1.bf16.msra.mxu0 %v6187
    %7166 = vmatprep.subr.bf16.mxu0 %v6192
    %7167 = vmatpush1.bf16.msra.mxu0 %v6191
    %7168 = vmatprep.subr.bf16.mxu0 %v6196
    %7169 = vmatpush1.bf16.msra.mxu0 %v6195
    %7170 = vmatprep.mubr.bf16.mxu0 %v3988
    %7171 = vmatmul.mubr.bf16.gmra.mrb[0].mxu0 %v3987
    %v7172 = vpop.f32.mrb[0].mxu0
    %v7173 = vadd.f32 %v7130, %v7172
    %v7174 = vpop.f32.mrb[0].mxu0
    %v7175 = vadd.f32 %v7132, %v7174
    %v7176 = vpop.f32.mrb[0].mxu0
    %v7177 = vadd.f32 %v7134, %v7176
    %v7178 = vpop.f32.mrb[0].mxu0
    %v7179 = vadd.f32 %v7136, %v7178
    %7180 = vdwg.mxu0
    %7181 = vmatprep.subr.bf16.mxu0 %v6200
    %7182 = vmatpush1.bf16.msra.mxu0 %v6199
    %7183 = vmatprep.subr.bf16.mxu0 %v6204
    %7184 = vmatpush1.bf16.msra.mxu0 %v6203
    %7185 = vmatprep.subr.bf16.mxu0 %v6208
    %7186 = vmatpush1.bf16.msra.mxu0 %v6207
    %7187 = vmatprep.subr.bf16.mxu0 %v6212
    %7188 = vmatpush1.bf16.msra.mxu0 %v6211
    %7189 = vmatprep.subr.bf16.mxu0 %v6216
    %7190 = vmatpush1.bf16.msra.mxu0 %v6215
    %7191 = vmatprep.subr.bf16.mxu0 %v6220
    %7192 = vmatpush1.bf16.msra.mxu0 %v6219
    %7193 = vmatprep.subr.bf16.mxu0 %v6224
    %7194 = vmatpush1.bf16.msra.mxu0 %v6223
    %7195 = vmatprep.subr.bf16.mxu0 %v6228
    %7196 = vmatpush1.bf16.msra.mxu0 %v6227
    %7197 = vmatprep.subr.bf16.mxu0 %v6232
    %7198 = vmatpush1.bf16.msra.mxu0 %v6231
    %7199 = vmatprep.subr.bf16.mxu0 %v6236
    %7200 = vmatpush1.bf16.msra.mxu0 %v6235
    %7201 = vmatprep.subr.bf16.mxu0 %v6240
    %7202 = vmatpush1.bf16.msra.mxu0 %v6239
    %7203 = vmatprep.subr.bf16.mxu0 %v6244
    %7204 = vmatpush1.bf16.msra.mxu0 %v6243
    %7205 = vmatprep.subr.bf16.mxu0 %v6248
    %7206 = vmatpush1.bf16.msra.mxu0 %v6247
    %7207 = vmatprep.subr.bf16.mxu0 %v6252
    %7208 = vmatpush1.bf16.msra.mxu0 %v6251
    %7209 = vmatprep.subr.bf16.mxu0 %v6256
    %7210 = vmatpush1.bf16.msra.mxu0 %v6255
    %7211 = vmatprep.subr.bf16.mxu0 %v6260
    %7212 = vmatpush1.bf16.msra.mxu0 %v6259
    %7213 = vmatprep.mubr.bf16.mxu0 %v3990
    %7214 = vmatmul.mubr.bf16.gmra.mrb[0].mxu0 %v3989
    %v7215 = vpop.f32.mrb[0].mxu0
    %v7216 = vadd.f32 %v7173, %v7215
    %v7217 = vpop.f32.mrb[0].mxu0
    %v7218 = vadd.f32 %v7175, %v7217
    %v7219 = vpop.f32.mrb[0].mxu0
    %v7220 = vadd.f32 %v7177, %v7219
    %v7221 = vpop.f32.mrb[0].mxu0
    %v7222 = vadd.f32 %v7179, %v7221
    %7223 = vdwg.mxu0
    %7224 = vmatprep.subr.bf16.mxu0 %v6264
    %7225 = vmatpush1.bf16.msra.mxu0 %v6263
    %7226 = vmatprep.subr.bf16.mxu0 %v6268
    %7227 = vmatpush1.bf16.msra.mxu0 %v6267
    %7228 = vmatprep.subr.bf16.mxu0 %v6272
    %7229 = vmatpush1.bf16.msra.mxu0 %v6271
    %7230 = vmatprep.subr.bf16.mxu0 %v6276
    %7231 = vmatpush1.bf16.msra.mxu0 %v6275
    %7232 = vmatprep.subr.bf16.mxu0 %v6280
    %7233 = vmatpush1.bf16.msra.mxu0 %v6279
    %7234 = vmatprep.subr.bf16.mxu0 %v6284
    %7235 = vmatpush1.bf16.msra.mxu0 %v6283
    %7236 = vmatprep.subr.bf16.mxu0 %v6288
    %7237 = vmatpush1.bf16.msra.mxu0 %v6287
    %7238 = vmatprep.subr.bf16.mxu0 %v6292
    %7239 = vmatpush1.bf16.msra.mxu0 %v6291
    %7240 = vmatprep.subr.bf16.mxu0 %v6296
    %7241 = vmatpush1.bf16.msra.mxu0 %v6295
    %7242 = vmatprep.subr.bf16.mxu0 %v6300
    %7243 = vmatpush1.bf16.msra.mxu0 %v6299
    %7244 = vmatprep.subr.bf16.mxu0 %v6304
    %7245 = vmatpush1.bf16.msra.mxu0 %v6303
    %7246 = vmatprep.subr.bf16.mxu0 %v6308
    %7247 = vmatpush1.bf16.msra.mxu0 %v6307
    %7248 = vmatprep.subr.bf16.mxu0 %v6312
    %7249 = vmatpush1.bf16.msra.mxu0 %v6311
    %7250 = vmatprep.subr.bf16.mxu0 %v6316
    %7251 = vmatpush1.bf16.msra.mxu0 %v6315
    %7252 = vmatprep.subr.bf16.mxu0 %v6320
    %7253 = vmatpush1.bf16.msra.mxu0 %v6319
    %7254 = vmatprep.subr.bf16.mxu0 %v6324
    %7255 = vmatpush1.bf16.msra.mxu0 %v6323
    %7256 = vmatprep.mubr.bf16.mxu0 %v3992
    %7257 = vmatmul.mubr.bf16.gmra.mrb[0].mxu0 %v3991
    %v7258 = vpop.f32.mrb[0].mxu0
    %v7259 = vadd.f32 %v7216, %v7258
    %v7260 = vpop.f32.mrb[0].mxu0
    %v7261 = vadd.f32 %v7218, %v7260
    %v7262 = vpop.f32.mrb[0].mxu0
    %v7263 = vadd.f32 %v7220, %v7262
    %v7264 = vpop.f32.mrb[0].mxu0
    %v7265 = vadd.f32 %v7222, %v7264
    %7266 = vdwg.mxu0
    %7267 = vmatprep.subr.bf16.mxu0 %v6328
    %7268 = vmatpush1.bf16.msra.mxu0 %v6327
    %7269 = vmatprep.subr.bf16.mxu0 %v6332
    %7270 = vmatpush1.bf16.msra.mxu0 %v6331
    %7271 = vmatprep.subr.bf16.mxu0 %v6336
    %7272 = vmatpush1.bf16.msra.mxu0 %v6335
    %7273 = vmatprep.subr.bf16.mxu0 %v6340
    %7274 = vmatpush1.bf16.msra.mxu0 %v6339
    %7275 = vmatprep.subr.bf16.mxu0 %v6344
    %7276 = vmatpush1.bf16.msra.mxu0 %v6343
    %7277 = vmatprep.subr.bf16.mxu0 %v6348
    %7278 = vmatpush1.bf16.msra.mxu0 %v6347
    %7279 = vmatprep.subr.bf16.mxu0 %v6352
    %7280 = vmatpush1.bf16.msra.mxu0 %v6351
    %7281 = vmatprep.subr.bf16.mxu0 %v6356
    %7282 = vmatpush1.bf16.msra.mxu0 %v6355
    %7283 = vmatprep.subr.bf16.mxu0 %v6360
    %7284 = vmatpush1.bf16.msra.mxu0 %v6359
    %7285 = vmatprep.subr.bf16.mxu0 %v6364
    %7286 = vmatpush1.bf16.msra.mxu0 %v6363
    %7287 = vmatprep.subr.bf16.mxu0 %v6368
    %7288 = vmatpush1.bf16.msra.mxu0 %v6367
    %7289 = vmatprep.subr.bf16.mxu0 %v6372
    %7290 = vmatpush1.bf16.msra.mxu0 %v6371
    %7291 = vmatprep.subr.bf16.mxu0 %v6376
    %7292 = vmatpush1.bf16.msra.mxu0 %v6375
    %7293 = vmatprep.subr.bf16.mxu0 %v6380
    %7294 = vmatpush1.bf16.msra.mxu0 %v6379
    %7295 = vmatprep.subr.bf16.mxu0 %v6384
    %7296 = vmatpush1.bf16.msra.mxu0 %v6383
    %7297 = vmatprep.subr.bf16.mxu0 %v6388
    %7298 = vmatpush1.bf16.msra.mxu0 %v6387
    %7299 = vmatprep.mubr.bf16.mxu0 %v3994
    %7300 = vmatmul.mubr.bf16.gmra.mrb[0].mxu0 %v3993
    %v7301 = vpop.f32.mrb[0].mxu0
    %v7302 = vadd.f32 %v7259, %v7301
    %v7303 = vpop.f32.mrb[0].mxu0
    %v7304 = vadd.f32 %v7261, %v7303
    %v7305 = vpop.f32.mrb[0].mxu0
    %v7306 = vadd.f32 %v7263, %v7305
    %v7307 = vpop.f32.mrb[0].mxu0
    %v7308 = vadd.f32 %v7265, %v7307
    %7309 = vdwg.mxu0
    %7310 = vmatprep.subr.bf16.mxu0 %v6392
    %7311 = vmatpush1.bf16.msra.mxu0 %v6391
    %7312 = vmatprep.subr.bf16.mxu0 %v6396
    %7313 = vmatpush1.bf16.msra.mxu0 %v6395
    %7314 = vmatprep.subr.bf16.mxu0 %v6400
    %7315 = vmatpush1.bf16.msra.mxu0 %v6399
    %7316 = vmatprep.subr.bf16.mxu0 %v6404
    %7317 = vmatpush1.bf16.msra.mxu0 %v6403
    %7318 = vmatprep.subr.bf16.mxu0 %v6408
    %7319 = vmatpush1.bf16.msra.mxu0 %v6407
    %7320 = vmatprep.subr.bf16.mxu0 %v6412
    %7321 = vmatpush1.bf16.msra.mxu0 %v6411
    %7322 = vmatprep.subr.bf16.mxu0 %v6416
    %7323 = vmatpush1.bf16.msra.mxu0 %v6415
    %7324 = vmatprep.subr.bf16.mxu0 %v6420
    %7325 = vmatpush1.bf16.msra.mxu0 %v6419
    %7326 = vmatprep.subr.bf16.mxu0 %v6424
    %7327 = vmatpush1.bf16.msra.mxu0 %v6423
    %7328 = vmatprep.subr.bf16.mxu0 %v6428
    %7329 = vmatpush1.bf16.msra.mxu0 %v6427
    %7330 = vmatprep.subr.bf16.mxu0 %v6432
    %7331 = vmatpush1.bf16.msra.mxu0 %v6431
    %7332 = vmatprep.subr.bf16.mxu0 %v6436
    %7333 = vmatpush1.bf16.msra.mxu0 %v6435
    %7334 = vmatprep.subr.bf16.mxu0 %v6440
    %7335 = vmatpush1.bf16.msra.mxu0 %v6439
    %7336 = vmatprep.subr.bf16.mxu0 %v6444
    %7337 = vmatpush1.bf16.msra.mxu0 %v6443
    %7338 = vmatprep.subr.bf16.mxu0 %v6448
    %7339 = vmatpush1.bf16.msra.mxu0 %v6447
    %7340 = vmatprep.subr.bf16.mxu0 %v6452
    %7341 = vmatpush1.bf16.msra.mxu0 %v6451
    %7342 = vmatprep.mubr.bf16.mxu0 %v3996
    %7343 = vmatmul.mubr.bf16.gmra.mrb[0].mxu0 %v3995
    %v7344 = vpop.f32.mrb[0].mxu0
    %v7345 = vadd.f32 %v7302, %v7344
    %v7346 = vpop.f32.mrb[0].mxu0
    %v7347 = vadd.f32 %v7304, %v7346
    %v7348 = vpop.f32.mrb[0].mxu0
    %v7349 = vadd.f32 %v7306, %v7348
    %v7350 = vpop.f32.mrb[0].mxu0
    %v7351 = vadd.f32 %v7308, %v7350
    %7352 = vdwg.mxu0
    %7353 = vmatprep.subr.bf16.mxu0 %v6456
    %7354 = vmatpush1.bf16.msra.mxu0 %v6455
    %7355 = vmatprep.subr.bf16.mxu0 %v6460
    %7356 = vmatpush1.bf16.msra.mxu0 %v6459
    %7357 = vmatprep.subr.bf16.mxu0 %v6464
    %7358 = vmatpush1.bf16.msra.mxu0 %v6463
    %7359 = vmatprep.subr.bf16.mxu0 %v6468
    %7360 = vmatpush1.bf16.msra.mxu0 %v6467
    %7361 = vmatprep.subr.bf16.mxu0 %v6472
    %7362 = vmatpush1.bf16.msra.mxu0 %v6471
    %7363 = vmatprep.subr.bf16.mxu0 %v6476
    %7364 = vmatpush1.bf16.msra.mxu0 %v6475
    %7365 = vmatprep.subr.bf16.mxu0 %v6480
    %7366 = vmatpush1.bf16.msra.mxu0 %v6479
    %7367 = vmatprep.subr.bf16.mxu0 %v6484
    %7368 = vmatpush1.bf16.msra.mxu0 %v6483
    %7369 = vmatprep.subr.bf16.mxu0 %v6488
    %7370 = vmatpush1.bf16.msra.mxu0 %v6487
    %7371 = vmatprep.subr.bf16.mxu0 %v6492
    %7372 = vmatpush1.bf16.msra.mxu0 %v6491
    %7373 = vmatprep.subr.bf16.mxu0 %v6496
    %7374 = vmatpush1.bf16.msra.mxu0 %v6495
    %7375 = vmatprep.subr.bf16.mxu0 %v6500
    %7376 = vmatpush1.bf16.msra.mxu0 %v6499
    %7377 = vmatprep.subr.bf16.mxu0 %v6504
    %7378 = vmatpush1.bf16.msra.mxu0 %v6503
    %7379 = vmatprep.subr.bf16.mxu0 %v6508
    %7380 = vmatpush1.bf16.msra.mxu0 %v6507
    %7381 = vmatprep.subr.bf16.mxu0 %v6512
    %7382 = vmatpush1.bf16.msra.mxu0 %v6511
    %7383 = vmatprep.subr.bf16.mxu0 %v6516
    %7384 = vmatpush1.bf16.msra.mxu0 %v6515
    %7385 = vmatprep.mubr.bf16.mxu0 %v3998
    %7386 = vmatmul.mubr.bf16.gmra.mrb[0].mxu0 %v3997
    %v7387 = vpop.f32.mrb[0].mxu0
    %v7388 = vadd.f32 %v7345, %v7387
    %v7389 = vpop.f32.mrb[0].mxu0
    %v7390 = vadd.f32 %v7347, %v7389
    %v7391 = vpop.f32.mrb[0].mxu0
    %v7392 = vadd.f32 %v7349, %v7391
    %v7393 = vpop.f32.mrb[0].mxu0
    %v7394 = vadd.f32 %v7351, %v7393
    %7395 = vdwg.mxu0
    %7396 = vmatprep.subr.bf16.mxu0 %v6520
    %7397 = vmatpush1.bf16.msra.mxu0 %v6519
    %7398 = vmatprep.subr.bf16.mxu0 %v6524
    %7399 = vmatpush1.bf16.msra.mxu0 %v6523
    %7400 = vmatprep.subr.bf16.mxu0 %v6528
    %7401 = vmatpush1.bf16.msra.mxu0 %v6527
    %7402 = vmatprep.subr.bf16.mxu0 %v6532
    %7403 = vmatpush1.bf16.msra.mxu0 %v6531
    %7404 = vmatprep.subr.bf16.mxu0 %v6536
    %7405 = vmatpush1.bf16.msra.mxu0 %v6535
    %7406 = vmatprep.subr.bf16.mxu0 %v6540
    %7407 = vmatpush1.bf16.msra.mxu0 %v6539
    %7408 = vmatprep.subr.bf16.mxu0 %v6544
    %7409 = vmatpush1.bf16.msra.mxu0 %v6543
    %7410 = vmatprep.subr.bf16.mxu0 %v6548
    %7411 = vmatpush1.bf16.msra.mxu0 %v6547
    %7412 = vmatprep.subr.bf16.mxu0 %v6552
    %7413 = vmatpush1.bf16.msra.mxu0 %v6551
    %7414 = vmatprep.subr.bf16.mxu0 %v6556
    %7415 = vmatpush1.bf16.msra.mxu0 %v6555
    %7416 = vmatprep.subr.bf16.mxu0 %v6560
    %7417 = vmatpush1.bf16.msra.mxu0 %v6559
    %7418 = vmatprep.subr.bf16.mxu0 %v6564
    %7419 = vmatpush1.bf16.msra.mxu0 %v6563
    %7420 = vmatprep.subr.bf16.mxu0 %v6568
    %7421 = vmatpush1.bf16.msra.mxu0 %v6567
    %7422 = vmatprep.subr.bf16.mxu0 %v6572
    %7423 = vmatpush1.bf16.msra.mxu0 %v6571
    %7424 = vmatprep.subr.bf16.mxu0 %v6576
    %7425 = vmatpush1.bf16.msra.mxu0 %v6575
    %7426 = vmatprep.subr.bf16.mxu0 %v6580
    %7427 = vmatpush1.bf16.msra.mxu0 %v6579
    %7428 = vmatprep.mubr.bf16.mxu0 %v4000
    %7429 = vmatmul.mubr.bf16.gmra.mrb[0].mxu0 %v3999
    %v7430 = vpop.f32.mrb[0].mxu0
    %v7431 = vadd.f32 %v7388, %v7430
    %v7432 = vpop.f32.mrb[0].mxu0
    %v7433 = vadd.f32 %v7390, %v7432
    %v7434 = vpop.f32.mrb[0].mxu0
    %v7435 = vadd.f32 %v7392, %v7434
    %v7436 = vpop.f32.mrb[0].mxu0
    %v7437 = vadd.f32 %v7394, %v7436
    %7438 = vdwg.mxu0
    %7439 = vmatprep.subr.bf16.mxu0 %v6074
    %7440 = vmatpush1.bf16.msra.mxu0 %v6073
    %7441 = vmatprep.subr.bf16.mxu0 %v6078
    %7442 = vmatpush1.bf16.msra.mxu0 %v6077
    %7443 = vmatprep.subr.bf16.mxu0 %v6082
    %7444 = vmatpush1.bf16.msra.mxu0 %v6081
    %7445 = vmatprep.subr.bf16.mxu0 %v6086
    %7446 = vmatpush1.bf16.msra.mxu0 %v6085
    %7447 = vmatprep.subr.bf16.mxu0 %v6090
    %7448 = vmatpush1.bf16.msra.mxu0 %v6089
    %7449 = vmatprep.subr.bf16.mxu0 %v6094
    %7450 = vmatpush1.bf16.msra.mxu0 %v6093
    %7451 = vmatprep.subr.bf16.mxu0 %v6098
    %7452 = vmatpush1.bf16.msra.mxu0 %v6097
    %7453 = vmatprep.subr.bf16.mxu0 %v6102
    %7454 = vmatpush1.bf16.msra.mxu0 %v6101
    %7455 = vmatprep.subr.bf16.mxu0 %v6106
    %7456 = vmatpush1.bf16.msra.mxu0 %v6105
    %7457 = vmatprep.subr.bf16.mxu0 %v6110
    %7458 = vmatpush1.bf16.msra.mxu0 %v6109
    %7459 = vmatprep.subr.bf16.mxu0 %v6114
    %7460 = vmatpush1.bf16.msra.mxu0 %v6113
    %7461 = vmatprep.subr.bf16.mxu0 %v6118
    %7462 = vmatpush1.bf16.msra.mxu0 %v6117
    %7463 = vmatprep.subr.bf16.mxu0 %v6122
    %7464 = vmatpush1.bf16.msra.mxu0 %v6121
    %7465 = vmatprep.subr.bf16.mxu0 %v6126
    %7466 = vmatpush1.bf16.msra.mxu0 %v6125
    %7467 = vmatprep.subr.bf16.mxu0 %v6130
    %7468 = vmatpush1.bf16.msra.mxu0 %v6129
    %7469 = vmatprep.subr.bf16.mxu0 %v6134
    %7470 = vmatpush1.bf16.msra.mxu0 %v6133
    %7471 = vmatprep.mubr.bf16.mxu0 %v3986
    %7472 = vmatmul.mubr.bf16.gmra.mrb[0].mxu0 %v3985
    %v7473 = vpop.f32.mrb[0].mxu0
    %v7474 = vadd.f32 %v4526, %v7473
    %v7475 = vpop.f32.mrb[0].mxu0
    %v7476 = vadd.f32 %v4530, %v7475
    %v7477 = vpop.f32.mrb[0].mxu0
    %v7478 = vadd.f32 %v4526, %v7477
    %v7479 = vpop.f32.mrb[0].mxu0
    %v7480 = vadd.f32 %v4530, %v7479
    %7481 = vdwg.mxu0
    %7482 = vmatprep.subr.bf16.mxu0 %v6138
    %7483 = vmatpush1.bf16.msra.mxu0 %v6137
    %7484 = vmatprep.subr.bf16.mxu0 %v6142
    %7485 = vmatpush1.bf16.msra.mxu0 %v6141
    %7486 = vmatprep.subr.bf16.mxu0 %v6146
    %7487 = vmatpush1.bf16.msra.mxu0 %v6145
    %7488 = vmatprep.subr.bf16.mxu0 %v6150
    %7489 = vmatpush1.bf16.msra.mxu0 %v6149
    %7490 = vmatprep.subr.bf16.mxu0 %v6154
    %7491 = vmatpush1.bf16.msra.mxu0 %v6153
    %7492 = vmatprep.subr.bf16.mxu0 %v6158
    %7493 = vmatpush1.bf16.msra.mxu0 %v6157
    %7494 = vmatprep.subr.bf16.mxu0 %v6162
    %7495 = vmatpush1.bf16.msra.mxu0 %v6161
    %7496 = vmatprep.subr.bf16.mxu0 %v6166
    %7497 = vmatpush1.bf16.msra.mxu0 %v6165
    %7498 = vmatprep.subr.bf16.mxu0 %v6170
    %7499 = vmatpush1.bf16.msra.mxu0 %v6169
    %7500 = vmatprep.subr.bf16.mxu0 %v6174
    %7501 = vmatpush1.bf16.msra.mxu0 %v6173
    %7502 = vmatprep.subr.bf16.mxu0 %v6178
    %7503 = vmatpush1.bf16.msra.mxu0 %v6177
    %7504 = vmatprep.subr.bf16.mxu0 %v6182
    %7505 = vmatpush1.bf16.msra.mxu0 %v6181
    %7506 = vmatprep.subr.bf16.mxu0 %v6186
    %7507 = vmatpush1.bf16.msra.mxu0 %v6185
    %7508 = vmatprep.subr.bf16.mxu0 %v6190
    %7509 = vmatpush1.bf16.msra.mxu0 %v6189
    %7510 = vmatprep.subr.bf16.mxu0 %v6194
    %7511 = vmatpush1.bf16.msra.mxu0 %v6193
    %7512 = vmatprep.subr.bf16.mxu0 %v6198
    %7513 = vmatpush1.bf16.msra.mxu0 %v6197
    %7514 = vmatprep.mubr.bf16.mxu0 %v3988
    %7515 = vmatmul.mubr.bf16.gmra.mrb[0].mxu0 %v3987
    %v7516 = vpop.f32.mrb[0].mxu0
    %v7517 = vadd.f32 %v7474, %v7516
    %v7518 = vpop.f32.mrb[0].mxu0
    %v7519 = vadd.f32 %v7476, %v7518
    %v7520 = vpop.f32.mrb[0].mxu0
    %v7521 = vadd.f32 %v7478, %v7520
    %v7522 = vpop.f32.mrb[0].mxu0
    %v7523 = vadd.f32 %v7480, %v7522
    %7524 = vdwg.mxu0
    %7525 = vmatprep.subr.bf16.mxu0 %v6202
    %7526 = vmatpush1.bf16.msra.mxu0 %v6201
    %7527 = vmatprep.subr.bf16.mxu0 %v6206
    %7528 = vmatpush1.bf16.msra.mxu0 %v6205
    %7529 = vmatprep.subr.bf16.mxu0 %v6210
    %7530 = vmatpush1.bf16.msra.mxu0 %v6209
    %7531 = vmatprep.subr.bf16.mxu0 %v6214
    %7532 = vmatpush1.bf16.msra.mxu0 %v6213
    %7533 = vmatprep.subr.bf16.mxu0 %v6218
    %7534 = vmatpush1.bf16.msra.mxu0 %v6217
    %7535 = vmatprep.subr.bf16.mxu0 %v6222
    %7536 = vmatpush1.bf16.msra.mxu0 %v6221
    %7537 = vmatprep.subr.bf16.mxu0 %v6226
    %7538 = vmatpush1.bf16.msra.mxu0 %v6225
    %7539 = vmatprep.subr.bf16.mxu0 %v6230
    %7540 = vmatpush1.bf16.msra.mxu0 %v6229
    %7541 = vmatprep.subr.bf16.mxu0 %v6234
    %7542 = vmatpush1.bf16.msra.mxu0 %v6233
    %7543 = vmatprep.subr.bf16.mxu0 %v6238
    %7544 = vmatpush1.bf16.msra.mxu0 %v6237
    %7545 = vmatprep.subr.bf16.mxu0 %v6242
    %7546 = vmatpush1.bf16.msra.mxu0 %v6241
    %7547 = vmatprep.subr.bf16.mxu0 %v6246
    %7548 = vmatpush1.bf16.msra.mxu0 %v6245
    %7549 = vmatprep.subr.bf16.mxu0 %v6250
    %7550 = vmatpush1.bf16.msra.mxu0 %v6249
    %7551 = vmatprep.subr.bf16.mxu0 %v6254
    %7552 = vmatpush1.bf16.msra.mxu0 %v6253
    %7553 = vmatprep.subr.bf16.mxu0 %v6258
    %7554 = vmatpush1.bf16.msra.mxu0 %v6257
    %7555 = vmatprep.subr.bf16.mxu0 %v6262
    %7556 = vmatpush1.bf16.msra.mxu0 %v6261
    %7557 = vmatprep.mubr.bf16.mxu0 %v3990
    %7558 = vmatmul.mubr.bf16.gmra.mrb[0].mxu0 %v3989
    %v7559 = vpop.f32.mrb[0].mxu0
    %v7560 = vadd.f32 %v7517, %v7559
    %v7561 = vpop.f32.mrb[0].mxu0
    %v7562 = vadd.f32 %v7519, %v7561
    %v7563 = vpop.f32.mrb[0].mxu0
    %v7564 = vadd.f32 %v7521, %v7563
    %v7565 = vpop.f32.mrb[0].mxu0
    %v7566 = vadd.f32 %v7523, %v7565
    %7567 = vdwg.mxu0
    %7568 = vmatprep.subr.bf16.mxu0 %v6266
    %7569 = vmatpush1.bf16.msra.mxu0 %v6265
    %7570 = vmatprep.subr.bf16.mxu0 %v6270
    %7571 = vmatpush1.bf16.msra.mxu0 %v6269
    %7572 = vmatprep.subr.bf16.mxu0 %v6274
    %7573 = vmatpush1.bf16.msra.mxu0 %v6273
    %7574 = vmatprep.subr.bf16.mxu0 %v6278
    %7575 = vmatpush1.bf16.msra.mxu0 %v6277
    %7576 = vmatprep.subr.bf16.mxu0 %v6282
    %7577 = vmatpush1.bf16.msra.mxu0 %v6281
    %7578 = vmatprep.subr.bf16.mxu0 %v6286
    %7579 = vmatpush1.bf16.msra.mxu0 %v6285
    %7580 = vmatprep.subr.bf16.mxu0 %v6290
    %7581 = vmatpush1.bf16.msra.mxu0 %v6289
    %7582 = vmatprep.subr.bf16.mxu0 %v6294
    %7583 = vmatpush1.bf16.msra.mxu0 %v6293
    %7584 = vmatprep.subr.bf16.mxu0 %v6298
    %7585 = vmatpush1.bf16.msra.mxu0 %v6297
    %7586 = vmatprep.subr.bf16.mxu0 %v6302
    %7587 = vmatpush1.bf16.msra.mxu0 %v6301
    %7588 = vmatprep.subr.bf16.mxu0 %v6306
    %7589 = vmatpush1.bf16.msra.mxu0 %v6305
    %7590 = vmatprep.subr.bf16.mxu0 %v6310
    %7591 = vmatpush1.bf16.msra.mxu0 %v6309
    %7592 = vmatprep.subr.bf16.mxu0 %v6314
    %7593 = vmatpush1.bf16.msra.mxu0 %v6313
    %7594 = vmatprep.subr.bf16.mxu0 %v6318
    %7595 = vmatpush1.bf16.msra.mxu0 %v6317
    %7596 = vmatprep.subr.bf16.mxu0 %v6322
    %7597 = vmatpush1.bf16.msra.mxu0 %v6321
    %7598 = vmatprep.subr.bf16.mxu0 %v6326
    %7599 = vmatpush1.bf16.msra.mxu0 %v6325
    %7600 = vmatprep.mubr.bf16.mxu0 %v3992
    %7601 = vmatmul.mubr.bf16.gmra.mrb[0].mxu0 %v3991
    %v7602 = vpop.f32.mrb[0].mxu0
    %v7603 = vadd.f32 %v7560, %v7602
    %v7604 = vpop.f32.mrb[0].mxu0
    %v7605 = vadd.f32 %v7562, %v7604
    %v7606 = vpop.f32.mrb[0].mxu0
    %v7607 = vadd.f32 %v7564, %v7606
    %v7608 = vpop.f32.mrb[0].mxu0
    %v7609 = vadd.f32 %v7566, %v7608
    %7610 = vdwg.mxu0
    %7611 = vmatprep.subr.bf16.mxu0 %v6330
    %7612 = vmatpush1.bf16.msra.mxu0 %v6329
    %7613 = vmatprep.subr.bf16.mxu0 %v6334
    %7614 = vmatpush1.bf16.msra.mxu0 %v6333
    %7615 = vmatprep.subr.bf16.mxu0 %v6338
    %7616 = vmatpush1.bf16.msra.mxu0 %v6337
    %7617 = vmatprep.subr.bf16.mxu0 %v6342
    %7618 = vmatpush1.bf16.msra.mxu0 %v6341
    %7619 = vmatprep.subr.bf16.mxu0 %v6346
    %7620 = vmatpush1.bf16.msra.mxu0 %v6345
    %7621 = vmatprep.subr.bf16.mxu0 %v6350
    %7622 = vmatpush1.bf16.msra.mxu0 %v6349
    %7623 = vmatprep.subr.bf16.mxu0 %v6354
    %7624 = vmatpush1.bf16.msra.mxu0 %v6353
    %7625 = vmatprep.subr.bf16.mxu0 %v6358
    %7626 = vmatpush1.bf16.msra.mxu0 %v6357
    %7627 = vmatprep.subr.bf16.mxu0 %v6362
    %7628 = vmatpush1.bf16.msra.mxu0 %v6361
    %7629 = vmatprep.subr.bf16.mxu0 %v6366
    %7630 = vmatpush1.bf16.msra.mxu0 %v6365
    %7631 = vmatprep.subr.bf16.mxu0 %v6370
    %7632 = vmatpush1.bf16.msra.mxu0 %v6369
    %7633 = vmatprep.subr.bf16.mxu0 %v6374
    %7634 = vmatpush1.bf16.msra.mxu0 %v6373
    %7635 = vmatprep.subr.bf16.mxu0 %v6378
    %7636 = vmatpush1.bf16.msra.mxu0 %v6377
    %7637 = vmatprep.subr.bf16.mxu0 %v6382
    %7638 = vmatpush1.bf16.msra.mxu0 %v6381
    %7639 = vmatprep.subr.bf16.mxu0 %v6386
    %7640 = vmatpush1.bf16.msra.mxu0 %v6385
    %7641 = vmatprep.subr.bf16.mxu0 %v6390
    %7642 = vmatpush1.bf16.msra.mxu0 %v6389
    %7643 = vmatprep.mubr.bf16.mxu0 %v3994
    %7644 = vmatmul.mubr.bf16.gmra.mrb[0].mxu0 %v3993
    %v7645 = vpop.f32.mrb[0].mxu0
    %v7646 = vadd.f32 %v7603, %v7645
    %v7647 = vpop.f32.mrb[0].mxu0
    %v7648 = vadd.f32 %v7605, %v7647
    %v7649 = vpop.f32.mrb[0].mxu0
    %v7650 = vadd.f32 %v7607, %v7649
    %v7651 = vpop.f32.mrb[0].mxu0
    %v7652 = vadd.f32 %v7609, %v7651
    %7653 = vdwg.mxu0
    %7654 = vmatprep.subr.bf16.mxu0 %v6394
    %7655 = vmatpush1.bf16.msra.mxu0 %v6393
    %7656 = vmatprep.subr.bf16.mxu0 %v6398
    %7657 = vmatpush1.bf16.msra.mxu0 %v6397
    %7658 = vmatprep.subr.bf16.mxu0 %v6402
    %7659 = vmatpush1.bf16.msra.mxu0 %v6401
    %7660 = vmatprep.subr.bf16.mxu0 %v6406
    %7661 = vmatpush1.bf16.msra.mxu0 %v6405
    %7662 = vmatprep.subr.bf16.mxu0 %v6410
    %7663 = vmatpush1.bf16.msra.mxu0 %v6409
    %7664 = vmatprep.subr.bf16.mxu0 %v6414
    %7665 = vmatpush1.bf16.msra.mxu0 %v6413
    %7666 = vmatprep.subr.bf16.mxu0 %v6418
    %7667 = vmatpush1.bf16.msra.mxu0 %v6417
    %7668 = vmatprep.subr.bf16.mxu0 %v6422
    %7669 = vmatpush1.bf16.msra.mxu0 %v6421
    %7670 = vmatprep.subr.bf16.mxu0 %v6426
    %7671 = vmatpush1.bf16.msra.mxu0 %v6425
    %7672 = vmatprep.subr.bf16.mxu0 %v6430
    %7673 = vmatpush1.bf16.msra.mxu0 %v6429
    %7674 = vmatprep.subr.bf16.mxu0 %v6434
    %7675 = vmatpush1.bf16.msra.mxu0 %v6433
    %7676 = vmatprep.subr.bf16.mxu0 %v6438
    %7677 = vmatpush1.bf16.msra.mxu0 %v6437
    %7678 = vmatprep.subr.bf16.mxu0 %v6442
    %7679 = vmatpush1.bf16.msra.mxu0 %v6441
    %7680 = vmatprep.subr.bf16.mxu0 %v6446
    %7681 = vmatpush1.bf16.msra.mxu0 %v6445
    %7682 = vmatprep.subr.bf16.mxu0 %v6450
    %7683 = vmatpush1.bf16.msra.mxu0 %v6449
    %7684 = vmatprep.subr.bf16.mxu0 %v6454
    %7685 = vmatpush1.bf16.msra.mxu0 %v6453
    %7686 = vmatprep.mubr.bf16.mxu0 %v3996
    %7687 = vmatmul.mubr.bf16.gmra.mrb[0].mxu0 %v3995
    %v7688 = vpop.f32.mrb[0].mxu0
    %v7689 = vadd.f32 %v7646, %v7688
    %v7690 = vpop.f32.mrb[0].mxu0
    %v7691 = vadd.f32 %v7648, %v7690
    %v7692 = vpop.f32.mrb[0].mxu0
    %v7693 = vadd.f32 %v7650, %v7692
    %v7694 = vpop.f32.mrb[0].mxu0
    %v7695 = vadd.f32 %v7652, %v7694
    %7696 = vdwg.mxu0
    %7697 = vmatprep.subr.bf16.mxu0 %v6458
    %7698 = vmatpush1.bf16.msra.mxu0 %v6457
    %7699 = vmatprep.subr.bf16.mxu0 %v6462
    %7700 = vmatpush1.bf16.msra.mxu0 %v6461
    %7701 = vmatprep.subr.bf16.mxu0 %v6466
    %7702 = vmatpush1.bf16.msra.mxu0 %v6465
    %7703 = vmatprep.subr.bf16.mxu0 %v6470
    %7704 = vmatpush1.bf16.msra.mxu0 %v6469
    %7705 = vmatprep.subr.bf16.mxu0 %v6474
    %7706 = vmatpush1.bf16.msra.mxu0 %v6473
    %7707 = vmatprep.subr.bf16.mxu0 %v6478
    %7708 = vmatpush1.bf16.msra.mxu0 %v6477
    %7709 = vmatprep.subr.bf16.mxu0 %v6482
    %7710 = vmatpush1.bf16.msra.mxu0 %v6481
    %7711 = vmatprep.subr.bf16.mxu0 %v6486
    %7712 = vmatpush1.bf16.msra.mxu0 %v6485
    %7713 = vmatprep.subr.bf16.mxu0 %v6490
    %7714 = vmatpush1.bf16.msra.mxu0 %v6489
    %7715 = vmatprep.subr.bf16.mxu0 %v6494
    %7716 = vmatpush1.bf16.msra.mxu0 %v6493
    %7717 = vmatprep.subr.bf16.mxu0 %v6498
    %7718 = vmatpush1.bf16.msra.mxu0 %v6497
    %7719 = vmatprep.subr.bf16.mxu0 %v6502
    %7720 = vmatpush1.bf16.msra.mxu0 %v6501
    %7721 = vmatprep.subr.bf16.mxu0 %v6506
    %7722 = vmatpush1.bf16.msra.mxu0 %v6505
    %7723 = vmatprep.subr.bf16.mxu0 %v6510
    %7724 = vmatpush1.bf16.msra.mxu0 %v6509
    %7725 = vmatprep.subr.bf16.mxu0 %v6514
    %7726 = vmatpush1.bf16.msra.mxu0 %v6513
    %7727 = vmatprep.subr.bf16.mxu0 %v6518
    %7728 = vmatpush1.bf16.msra.mxu0 %v6517
    %7729 = vmatprep.mubr.bf16.mxu0 %v3998
    %7730 = vmatmul.mubr.bf16.gmra.mrb[0].mxu0 %v3997
    %v7731 = vpop.f32.mrb[0].mxu0
    %v7732 = vadd.f32 %v7689, %v7731
    %v7733 = vpop.f32.mrb[0].mxu0
    %v7734 = vadd.f32 %v7691, %v7733
    %v7735 = vpop.f32.mrb[0].mxu0
    %v7736 = vadd.f32 %v7693, %v7735
    %v7737 = vpop.f32.mrb[0].mxu0
    %v7738 = vadd.f32 %v7695, %v7737
    %7739 = vdwg.mxu0
    %7740 = vmatprep.subr.bf16.mxu0 %v6522
    %7741 = vmatpush1.bf16.msra.mxu0 %v6521
    %7742 = vmatprep.subr.bf16.mxu0 %v6526
    %7743 = vmatpush1.bf16.msra.mxu0 %v6525
    %7744 = vmatprep.subr.bf16.mxu0 %v6530
    %7745 = vmatpush1.bf16.msra.mxu0 %v6529
    %7746 = vmatprep.subr.bf16.mxu0 %v6534
    %7747 = vmatpush1.bf16.msra.mxu0 %v6533
    %7748 = vmatprep.subr.bf16.mxu0 %v6538
    %7749 = vmatpush1.bf16.msra.mxu0 %v6537
    %7750 = vmatprep.subr.bf16.mxu0 %v6542
    %7751 = vmatpush1.bf16.msra.mxu0 %v6541
    %7752 = vmatprep.subr.bf16.mxu0 %v6546
    %7753 = vmatpush1.bf16.msra.mxu0 %v6545
    %7754 = vmatprep.subr.bf16.mxu0 %v6550
    %7755 = vmatpush1.bf16.msra.mxu0 %v6549
    %7756 = vmatprep.subr.bf16.mxu0 %v6554
    %7757 = vmatpush1.bf16.msra.mxu0 %v6553
    %7758 = vmatprep.subr.bf16.mxu0 %v6558
    %7759 = vmatpush1.bf16.msra.mxu0 %v6557
    %7760 = vmatprep.subr.bf16.mxu0 %v6562
    %7761 = vmatpush1.bf16.msra.mxu0 %v6561
    %7762 = vmatprep.subr.bf16.mxu0 %v6566
    %7763 = vmatpush1.bf16.msra.mxu0 %v6565
    %7764 = vmatprep.subr.bf16.mxu0 %v6570
    %7765 = vmatpush1.bf16.msra.mxu0 %v6569
    %7766 = vmatprep.subr.bf16.mxu0 %v6574
    %7767 = vmatpush1.bf16.msra.mxu0 %v6573
    %7768 = vmatprep.subr.bf16.mxu0 %v6578
    %7769 = vmatpush1.bf16.msra.mxu0 %v6577
    %7770 = vmatprep.subr.bf16.mxu0 %v6582
    %7771 = vmatpush1.bf16.msra.mxu0 %v6581
    %7772 = vmatprep.mubr.bf16.mxu0 %v4000
    %7773 = vmatmul.mubr.bf16.gmra.mrb[0].mxu0 %v3999
    %v7774 = vpop.f32.mrb[0].mxu0
    %v7775 = vadd.f32 %v7732, %v7774
    %v7776 = vpop.f32.mrb[0].mxu0
    %v7777 = vadd.f32 %v7734, %v7776
    %v7778 = vpop.f32.mrb[0].mxu0
    %v7779 = vadd.f32 %v7736, %v7778
    %v7780 = vpop.f32.mrb[0].mxu0
    %v7781 = vadd.f32 %v7738, %v7780
    %7782 = vdwg.mxu0
    %7783 = vst [vmem:[#allocation11] sm:$0xff] %v7431
    %7784 = vst [vmem:[#allocation11 + $0x8] sm:$0xff] %v7433
    %7785 = vst [vmem:[#allocation11 + $0x10] sm:$0xff] %v7775
    %7786 = vst [vmem:[#allocation11 + $0x18] sm:$0xff] %v7777
    %7787 = vst [vmem:[#allocation11 + $0x20] sm:$0xff] %v7435
    %7788 = vst [vmem:[#allocation11 + $0x28] sm:$0xff] %v7437
    %7789 = vst [vmem:[#allocation11 + $0x30] sm:$0xff] %v7779
    %7790 = vst [vmem:[#allocation11 + $0x38] sm:$0xff] %v7781
    // Predicated region
    $region42: #{tpu_custom_call.1} parent=1 // pred_check
      _
    $region43: #{tpu_custom_call.1} parent=1 // pred_check_branch
      %7792 = sbr.rel (0) target = $region45
    $region44: #{tpu_custom_call.1} parent=1 // pred_region
      %s7794 = ssub.s32 1024, 1024
      %7795 = vsyncadd [#allocation4], %s7794
      %s7796 = sshll.u32 [#allocation11], 4
      %s7797 = int_to_ptr.vmem [resolvable:$true] %s7796
      %7802 = dma.vmem_to_hbm [thread:$0]  %s7797, 1024, %s5, [#allocation4], 512, 512, 32
    $region45: #{tpu_custom_call.1} parent=1 // pred_fallthru
      _
    // Predicated region
    $region46: #{tpu_custom_call.1} parent=1 // pred_check
      _
    $region47: #{tpu_custom_call.1} parent=1 // pred_check_branch
      %7804 = sbr.rel (0) target = $region49
    $region48: #{tpu_custom_call.1} parent=1 // pred_region
      %7805 = dma.done [#allocation4], 1024
    $region49: #{tpu_custom_call.1} parent=1 // pred_fallthru
      _
    %7806 = vsyncpa [#allocation3], 1
    %7807 = vsyncpa [#allocation6], 1
    %7808 = vsyncpa [#allocation9], 1
    %7809 = vsyncpa [#allocation4], 1

</llo_original>
